<compile_context>
chip_gen: v7x
topology: tpu7x:2x2x1
jax: 0.10.0
libtpu: 0.0.40
codegen_flags: <defaults>
</compile_context>

<pallas_src>
import functools

import jax
import jax.numpy as jnp
from jax.experimental import pallas as pl
from jax.experimental.pallas import tpu as pltpu


EMBED_DIM = 300                    # real Conv1d C_in
C_IN_PAD = 384                     # zero-padded to 3*128 (lane-aligned)
N_FILTERS = 100                    # per original conv (6 convs total)
C_OUT_G = 256                      # per-K group: [static 100 | dyn 100 | pad 56]
N_GROUPS = 3
C_OUT_TOT = N_GROUPS * C_OUT_G     # 768, lane-dense
KMAX = 5                           # widest kernel; all taps live in one window
PAD_MAX = 2                        # max Conv1d padding across the 3 kernel sizes
CONV_CFG = ((3, 1), (4, 2), (5, 2))   # (kernel_size, torch padding)
_NEG = -1e30                       # mask value for out-of-range time positions


# ----------------------------------------------------------------------------
# Fused kernel: im2col -> one matmul -> masked max-pool -> bias+ReLU -> fc
# ----------------------------------------------------------------------------
def _make_fused_kernel(*, L: int, LR: int):
    # Shared time frame: value_g(t) = sum_k x_pad[t + k] @ w_g[k].
    # Valid t ranges:  K=3/pad=1 -> [1, L];  K=4/pad=2 -> [0, L];
    #                  K=5/pad=2 -> [0, L-1].   (LR = L + 1 rows, t = 0..L)
    valid = ((1, L), (0, L), (0, L - 1))

    def kernel(x_ref, w_ref, b_ref, fcw_ref, o_ref, xc_ref):
        # x_ref:  (TB, L_pad, 384) bf16   padded activations
        # w_ref:  (1920, 768)      bf16   merged conv weights (all K, all taps)
        # b_ref:  (1, 768)         f32    merged conv bias
        # fcw_ref:(1, 768)         f32    re-ordered / zero-padded fc weights
        # o_ref:  (TB, 1)          f32    fc output (bias added in wrapper)
        # xc_ref: (TB, LR, 1920)   bf16   im2col scratch
        TB = x_ref.shape[0]

        # 1) Build the im2col tile: KMAX shifted time views, each written at a
        #    lane-aligned offset k*384.  Single copy pass, no f32 RMW per tap.
        for k in range(KMAX):
            xc_ref[:, :, k * C_IN_PAD:(k + 1) * C_IN_PAD] = x_ref[:, k:k + LR, :]

        # 2) All three merged convs as ONE MXU matmul (contraction 1920, f32 acc).
        y = jax.lax.dot_general(
            xc_ref[...], w_ref[...],
            dimension_numbers=(((2,), (0,)), ((), ())),
            preferred_element_type=jnp.float32)            # (TB, LR, 768)

        # 3) Epilogue: mask invalid time rows per group, max over time, then
        #    bias + ReLU on the tiny (TB, 256) result (max/+bias commute, ReLU
        #    monotone), and the 600->1 fc as a VPU multiply + lane reduction.
        t = jax.lax.broadcasted_iota(jnp.int32, (1, LR, 1), 1)
        acc = jnp.zeros((TB, 1), jnp.float32)
        for g, (lo, hi) in enumerate(valid):
            yg = y[:, :, g * C_OUT_G:(g + 1) * C_OUT_G]     # (TB, LR, 256)
            if lo > 0 or hi < LR - 1:
                yg = jnp.where((t >= lo) & (t <= hi), yg, _NEG)
            zg = jnp.max(yg, axis=1) + b_ref[:, g * C_OUT_G:(g + 1) * C_OUT_G]
            zg = jnp.maximum(zg, 0.0)                       # (TB, 256)
            acc = acc + jnp.sum(zg * fcw_ref[:, g * C_OUT_G:(g + 1) * C_OUT_G],
                                axis=1, keepdims=True)
        o_ref[...] = acc

    return kernel


# ----------------------------------------------------------------------------
# Batch-tile / VMEM sizing (derived from the queried VMEM capacity)
# ----------------------------------------------------------------------------
def _tile_and_vmem(B, L_pad, LR):
    cap = 64 * 1024 * 1024
    try:
        cap = int(pltpu.get_tpu_info().vmem_capacity_bytes)
    except Exception:
        pass
    budget = (cap * 3) // 4                    # headroom for Mosaic scratch
    fixed = (2 * KMAX * C_IN_PAD * C_OUT_TOT * 2   # merged weights (2 buffers)
             + 4 * C_OUT_TOT * 4                   # bias + fc weights
             + (2 << 20))                          # misc headroom
    per_row = (2 * L_pad * C_IN_PAD * 2            # double-buffered input tile
               + LR * KMAX * C_IN_PAD * 2          # im2col scratch
               + LR * C_OUT_TOT * 4                # f32 matmul result
               + 2 * C_OUT_TOT * 4 + 64)           # epilogue temps + output
    avail = max(budget - fixed, 8 * per_row)
    tb = max(8, (avail // per_row) // 8 * 8)
    if B <= 8:
        tb = B
    else:
        # keep >= 2 grid steps so both v7x TensorCores get work
        tb = min(tb, ((B + 1) // 2 + 7) // 8 * 8)
        nb = -(-B // tb)
        # rebalance so batch padding stays small
        tb = min(tb, ((-(-B // nb)) + 7) // 8 * 8)
    b_pad = -(-B // tb) * tb
    est = fixed + tb * per_row
    vmem_limit = int(min(cap, max(budget, est + (4 << 20))))
    return tb, b_pad, b_pad // tb, vmem_limit


def _fused_head(x_pad, w_big, b_merged, fc_wm, *, L: int):
    """x_pad: (B, L_pad, 384) bf16 (left pad 2, right pad >= 3, zeros)."""
    B, L_pad, _ = x_pad.shape
    LR = L + 1                                   # shared time rows t = 0..L
    TB, B_pad, nb, vmem_limit = _tile_and_vmem(B, L_pad, LR)
    if B_pad != B:
        x_pad = jnp.pad(x_pad, ((0, B_pad - B), (0, 0), (0, 0)))

    flops = 2 * B_pad * LR * (KMAX * C_IN_PAD) * C_OUT_TOT
    bytes_accessed = (B_pad * L_pad * C_IN_PAD * 2
                      + KMAX * C_IN_PAD * C_OUT_TOT * 2
                      + 2 * C_OUT_TOT * 4 + B_pad * 4)

    out = pl.pallas_call(
        _make_fused_kernel(L=L, LR=LR),
        out_shape=jax.ShapeDtypeStruct((B_pad, 1), jnp.float32),
        grid_spec=pltpu.PrefetchScalarGridSpec(
            num_scalar_prefetch=0,
            grid=(nb,),
            in_specs=[
                pl.BlockSpec((TB, L_pad, C_IN_PAD), lambda i: (i, 0, 0)),
                pl.BlockSpec((KMAX * C_IN_PAD, C_OUT_TOT), lambda i: (0, 0)),
                pl.BlockSpec((1, C_OUT_TOT), lambda i: (0, 0)),
                pl.BlockSpec((1, C_OUT_TOT), lambda i: (0, 0)),
            ],
            out_specs=pl.BlockSpec((TB, 1), lambda i: (i, 0)),
            scratch_shapes=[pltpu.VMEM((TB, LR, KMAX * C_IN_PAD), jnp.bfloat16)],
        ),
        compiler_params=pltpu.CompilerParams(
            dimension_semantics=("parallel",),   # batch tiles split across TCs
            vmem_limit_bytes=vmem_limit,
        ),
        cost_estimate=pl.CostEstimate(
            flops=flops, transcendentals=0, bytes_accessed=bytes_accessed),
    )(x_pad, w_big, b_merged, fc_wm)
    return out[:B, 0]


# ----------------------------------------------------------------------------
# Parameters (deterministic, matching the nn.Module shapes, merged layout)
# ----------------------------------------------------------------------------
def init_params(vocab_size: int, seed: int = 0):
    key = jax.random.PRNGKey(seed)
    ks = jax.random.split(key, 10)
    emb = jax.random.normal(ks[0], (vocab_size, EMBED_DIM), jnp.float32) * 0.1
    emb = jnp.pad(emb, ((0, 0), (0, C_IN_PAD - EMBED_DIM))).astype(jnp.bfloat16)

    # Merged conv weight (5*384, 768): tap k of group g lives at rows
    # [k*384, k*384+300) and columns [g*256, g*256+200); everything else is 0.
    w_big = jnp.zeros((KMAX * C_IN_PAD, C_OUT_TOT), jnp.float32)
    b_merged = jnp.zeros((1, C_OUT_TOT), jnp.float32)
    for g, (K, _) in enumerate(CONV_CFG):
        w_real = jax.random.normal(ks[1 + 2 * g], (K, EMBED_DIM, 2 * N_FILTERS),
                                   jnp.float32) * 0.05
        b_real = jax.random.normal(ks[2 + 2 * g], (2 * N_FILTERS,), jnp.float32) * 0.01
        for k in range(K):
            w_big = w_big.at[k * C_IN_PAD:k * C_IN_PAD + EMBED_DIM,
                             g * C_OUT_G:g * C_OUT_G + 2 * N_FILTERS].set(w_real[k])
        b_merged = b_merged.at[0, g * C_OUT_G:g * C_OUT_G + 2 * N_FILTERS].set(b_real)

    fc_w = jax.random.normal(ks[7], (6 * N_FILTERS, 1), jnp.float32) * 0.05
    fc_b = jax.random.normal(ks[8], (1,), jnp.float32) * 0.01
    # fc weights re-ordered / zero-padded to the kernel's lane-dense pooled
    # layout: group g columns = [z_{g+1} (static) | z_{g+4} (dynamic) | zeros].
    fc_wm = jnp.zeros((1, C_OUT_TOT), jnp.float32)
    for g in range(N_GROUPS):
        fc_wm = fc_wm.at[0, g * C_OUT_G:g * C_OUT_G + N_FILTERS].set(
            fc_w[g * N_FILTERS:(g + 1) * N_FILTERS, 0])
        fc_wm = fc_wm.at[0, g * C_OUT_G + N_FILTERS:g * C_OUT_G + 2 * N_FILTERS].set(
            fc_w[3 * N_FILTERS + g * N_FILTERS:3 * N_FILTERS + (g + 1) * N_FILTERS, 0])

    return {"emb": emb, "w_big": w_big.astype(jnp.bfloat16), "b_merged": b_merged,
            "fc_wm": fc_wm, "fc_w": fc_w, "fc_b": fc_b}


# ----------------------------------------------------------------------------
# Forward pass (glue in plain JAX, everything hot in one Pallas kernel)
# ----------------------------------------------------------------------------
@functools.partial(jax.jit, static_argnames=("training",))
def forward(params, batch_ids, training: bool = False):
    B, L = batch_ids.shape
    # w and w_static share the same weight tensor in __init__, so at inference
    # x_static == x_dynamic: one gather feeds all 6 (merged into 3) convs.
    x = jnp.take(params["emb"], batch_ids, axis=0)             # (B, L, 384) bf16
    # Pad time once: 2 left, >= 3 right (rounded to 8).  TODO(synk): fold the
    # padding into the kernel to avoid this one extra activation pass over HBM.
    L_pad = ((L + PAD_MAX + 3) + 7) // 8 * 8
    x_pad = jnp.pad(x, ((0, 0), (PAD_MAX, L_pad - L - PAD_MAX), (0, 0)))

    y = _fused_head(x_pad, params["w_big"], params["b_merged"],
                    params["fc_wm"], L=L)                      # (B,) f32

    # F.dropout(z, 0.5, training=False) is the identity at inference.
    # TODO(synk): PRNG-based dropout mask on the pooled features for training.
    return y + params["fc_b"][0]                               # matches .squeeze()


# ----------------------------------------------------------------------------
# Pure-JAX reference (mirrors the original 6-conv structure) for validation
# ----------------------------------------------------------------------------
def _reference_forward(params, batch_ids):
    emb = params["emb"].astype(jnp.float32)[:, :EMBED_DIM]
    x = emb[batch_ids]                                         # (B, L, 300) f32
    B, L, _ = x.shape
    W = params["w_big"].astype(jnp.float32)
    bm = params["b_merged"][0]

    zs = []
    for g, (K, pad) in enumerate(CONV_CFG):
        xp = jnp.pad(x, ((0, 0), (pad, pad), (0, 0)))
        L_out = L + 2 * pad - K + 1
        acc = (jnp.zeros((B, L_out, 2 * N_FILTERS), jnp.float32)
               + bm[g * C_OUT_G:g * C_OUT_G + 2 * N_FILTERS])
        for k in range(K):
            wk = W[k * C_IN_PAD:k * C_IN_PAD + EMBED_DIM,
                   g * C_OUT_G:g * C_OUT_G + 2 * N_FILTERS]
            acc = acc + jnp.einsum("blc,cf->blf", xp[:, k:k + L_out, :], wk,
                                   precision=jax.lax.Precision.HIGHEST)
        zs.append(jnp.max(jnp.maximum(acc, 0.0), axis=1))      # (B, 200)

    z = jnp.concatenate(
        [zs[0][:, :N_FILTERS], zs[1][:, :N_FILTERS], zs[2][:, :N_FILTERS],
         zs[0][:, N_FILTERS:], zs[1][:, N_FILTERS:], zs[2][:, N_FILTERS:]], axis=1)
    return jnp.squeeze(z @ params["fc_w"] + params["fc_b"])


if __name__ == "__main__":
    VOCAB = 50
    B, L = 2, 8

    params = init_params(VOCAB)
    batch_ids = jax.random.randint(jax.random.PRNGKey(0), (B, L), 0, VOCAB,
                                   dtype=jnp.int32)

    y = forward(params, batch_ids, training=False)
    jax.block_until_ready(y)
    assert y.shape == (B,), y.shape

    y_ref = _reference_forward(params, batch_ids)
    assert jnp.allclose(y, y_ref, rtol=2e-3, atol=2e-3), (y, y_ref)

    print("KERNEL_OK")
</pallas_src>

<mosaic_0001>
module attributes {stable_mosaic.version = 11 : i64} {
  func.func @kernel(%arg0: i32, %arg1: memref<2x16x384xbf16, #tpu.memory_space<vmem>>, %arg2: memref<1920x768xbf16, #tpu.memory_space<vmem>>, %arg3: memref<1x768xf32, #tpu.memory_space<vmem>>, %arg4: memref<1x768xf32, #tpu.memory_space<vmem>>, %arg5: memref<2x1xf32, #tpu.memory_space<vmem>>, %arg6: memref<2x9x1920xbf16, #tpu.memory_space<vmem>>) attributes {dimension_semantics = [#tpu.dimension_semantics<parallel>], iteration_bounds = array<i64: 1>, scalar_prefetch = 0 : i64, scratch_operands = 1 : i64, tpu.core_type = #tpu.core_type<tc>, window_params = [{transform_indices = @transform_0, window_bounds = array<i64: 2, 16, 384>}, {pipeline_mode = #tpu.pipeline_mode<synchronous>, transform_indices = @transform_1, window_bounds = array<i64: 1920, 768>}, {pipeline_mode = #tpu.pipeline_mode<synchronous>, transform_indices = @transform_2, window_bounds = array<i64: 1, 768>}, {pipeline_mode = #tpu.pipeline_mode<synchronous>, transform_indices = @transform_3, window_bounds = array<i64: 1, 768>}, {transform_indices = @transform_4, window_bounds = array<i64: 2, 1>}]} {
    %c0 = arith.constant 0 : index
    %c0_0 = arith.constant 0 : index
    %c0_1 = arith.constant 0 : index
    %0 = vector.load %arg1[%c0, %c0_0, %c0_1] : memref<2x16x384xbf16, #tpu.memory_space<vmem>>, vector<2x9x384xbf16>
    %c0_2 = arith.constant 0 : index
    %c0_3 = arith.constant 0 : index
    %c0_4 = arith.constant 0 : index
    %1 = vector.load %arg6[%c0_2, %c0_3, %c0_4] : memref<2x9x1920xbf16, #tpu.memory_space<vmem>>, vector<2x9x384xbf16>
    tpu.vector_store %arg6[%c0_2, %c0_3, %c0_4], %0 {strides = array<i32>} : memref<2x9x1920xbf16, #tpu.memory_space<vmem>>, vector<2x9x384xbf16>,
    %c0_5 = arith.constant 0 : index
    %c1 = arith.constant 1 : index
    %c0_6 = arith.constant 0 : index
    %2 = vector.load %arg1[%c0_5, %c1, %c0_6] : memref<2x16x384xbf16, #tpu.memory_space<vmem>>, vector<2x9x384xbf16>
    %c0_7 = arith.constant 0 : index
    %c0_8 = arith.constant 0 : index
    %c384 = arith.constant 384 : index
    %3 = vector.load %arg6[%c0_7, %c0_8, %c384] : memref<2x9x1920xbf16, #tpu.memory_space<vmem>>, vector<2x9x384xbf16>
    tpu.vector_store %arg6[%c0_7, %c0_8, %c384], %2 {strides = array<i32>} : memref<2x9x1920xbf16, #tpu.memory_space<vmem>>, vector<2x9x384xbf16>,
    %c0_9 = arith.constant 0 : index
    %c2 = arith.constant 2 : index
    %c0_10 = arith.constant 0 : index
    %4 = vector.load %arg1[%c0_9, %c2, %c0_10] : memref<2x16x384xbf16, #tpu.memory_space<vmem>>, vector<2x9x384xbf16>
    %c0_11 = arith.constant 0 : index
    %c0_12 = arith.constant 0 : index
    %c768 = arith.constant 768 : index
    %5 = vector.load %arg6[%c0_11, %c0_12, %c768] : memref<2x9x1920xbf16, #tpu.memory_space<vmem>>, vector<2x9x384xbf16>
    tpu.vector_store %arg6[%c0_11, %c0_12, %c768], %4 {strides = array<i32>} : memref<2x9x1920xbf16, #tpu.memory_space<vmem>>, vector<2x9x384xbf16>,
    %c0_13 = arith.constant 0 : index
    %c3 = arith.constant 3 : index
    %c0_14 = arith.constant 0 : index
    %6 = vector.load %arg1[%c0_13, %c3, %c0_14] : memref<2x16x384xbf16, #tpu.memory_space<vmem>>, vector<2x9x384xbf16>
    %c0_15 = arith.constant 0 : index
    %c0_16 = arith.constant 0 : index
    %c1152 = arith.constant 1152 : index
    %7 = vector.load %arg6[%c0_15, %c0_16, %c1152] : memref<2x9x1920xbf16, #tpu.memory_space<vmem>>, vector<2x9x384xbf16>
    tpu.vector_store %arg6[%c0_15, %c0_16, %c1152], %6 {strides = array<i32>} : memref<2x9x1920xbf16, #tpu.memory_space<vmem>>, vector<2x9x384xbf16>,
    %c0_17 = arith.constant 0 : index
    %c4 = arith.constant 4 : index
    %c0_18 = arith.constant 0 : index
    %8 = vector.load %arg1[%c0_17, %c4, %c0_18] : memref<2x16x384xbf16, #tpu.memory_space<vmem>>, vector<2x9x384xbf16>
    %c0_19 = arith.constant 0 : index
    %c0_20 = arith.constant 0 : index
    %c1536 = arith.constant 1536 : index
    %9 = vector.load %arg6[%c0_19, %c0_20, %c1536] : memref<2x9x1920xbf16, #tpu.memory_space<vmem>>, vector<2x9x384xbf16>
    tpu.vector_store %arg6[%c0_19, %c0_20, %c1536], %8 {strides = array<i32>} : memref<2x9x1920xbf16, #tpu.memory_space<vmem>>, vector<2x9x384xbf16>,
    %c0_21 = arith.constant 0 : index
    %c0_22 = arith.constant 0 : index
    %c0_23 = arith.constant 0 : index
    %10 = vector.load %arg6[%c0_21, %c0_22, %c0_23] : memref<2x9x1920xbf16, #tpu.memory_space<vmem>>, vector<2x9x1920xbf16>
    %c0_24 = arith.constant 0 : index
    %c0_25 = arith.constant 0 : index
    %11 = vector.load %arg2[%c0_24, %c0_25] : memref<1920x768xbf16, #tpu.memory_space<vmem>>, vector<1920x768xbf16>
    %cst = arith.constant dense<0.000000e+00> : vector<2x9x768xf32>
    %12 = tpu.matmul %10, %11, %cst {dimension_numbers = #tpu.dot_dimension_numbers<[2], [0], [0, 1], [1], [0, 0, 0, 1, 1, 1], [], []>} : vector<2x9x1920xbf16>, vector<1920x768xbf16>, vector<2x9x768xf32> -> vector<2x9x768xf32>
    %13 = tpu.iota {dimensions = array<i32: 1>} : vector<1x9x1xi32>
    %cst_26 = arith.constant 0.000000e+00 : f32
    %14 = vector.broadcast %cst_26 : f32 to vector<2x1xf32>
    %15 = vector.extract_strided_slice %12 {offsets = [0, 0, 0], sizes = [2, 9, 256], strides = [1, 1, 1]} : vector<2x9x768xf32> to vector<2x9x256xf32>
    %c1_i32 = arith.constant 1 : i32
    %16 = vector.broadcast %c1_i32 : i32 to vector<1x9x1xi32>
    %17 = arith.cmpi sge, %13, %16 : vector<1x9x1xi32>
    %c8_i32 = arith.constant 8 : i32
    %18 = vector.broadcast %c8_i32 : i32 to vector<1x9x1xi32>
    %19 = arith.cmpi sle, %13, %18 : vector<1x9x1xi32>
    %20 = arith.andi %17, %19 : vector<1x9x1xi1>
    %cst_27 = arith.constant -1.000000e+30 : f32
    %21 = vector.shape_cast %20 : vector<1x9x1xi1> to vector<1x9x1xi1>
    %22 = vector.broadcast %21 : vector<1x9x1xi1> to vector<2x9x256xi1>
    %23 = vector.broadcast %cst_27 : f32 to vector<2x9x256xf32>
    %24 = arith.select %22, %15, %23 : vector<2x9x256xi1>, vector<2x9x256xf32>
    %cst_28 = arith.constant dense<0xFF800000> : vector<2x256xf32>
    %25 = vector.multi_reduction <maximumf>, %24, %cst_28 [1] : vector<2x9x256xf32> to vector<2x256xf32>
    %c0_29 = arith.constant 0 : index
    %c0_30 = arith.constant 0 : index
    %26 = vector.load %arg3[%c0_29, %c0_30] : memref<1x768xf32, #tpu.memory_space<vmem>>, vector<1x256xf32>
    %27 = vector.broadcast %26 : vector<1x256xf32> to vector<2x256xf32>
    %28 = arith.addf %25, %27 : vector<2x256xf32>
    %cst_31 = arith.constant 0.000000e+00 : f32
    %29 = vector.broadcast %cst_31 : f32 to vector<2x256xf32>
    %30 = arith.maximumf %28, %29 : vector<2x256xf32>
    %c0_32 = arith.constant 0 : index
    %c0_33 = arith.constant 0 : index
    %31 = vector.load %arg4[%c0_32, %c0_33] : memref<1x768xf32, #tpu.memory_space<vmem>>, vector<1x256xf32>
    %32 = vector.broadcast %31 : vector<1x256xf32> to vector<2x256xf32>
    %33 = arith.mulf %30, %32 : vector<2x256xf32>
    %cst_34 = arith.constant dense<0.000000e+00> : vector<2xf32>
    %34 = vector.multi_reduction <add>, %33, %cst_34 [1] : vector<2x256xf32> to vector<2xf32>
    %35 = vector.shape_cast %34 : vector<2xf32> to vector<2x1xf32>
    %36 = arith.addf %14, %35 : vector<2x1xf32>
    %37 = vector.extract_strided_slice %12 {offsets = [0, 0, 256], sizes = [2, 9, 256], strides = [1, 1, 1]} : vector<2x9x768xf32> to vector<2x9x256xf32>
    %cst_35 = arith.constant dense<0xFF800000> : vector<2x256xf32>
    %38 = vector.multi_reduction <maximumf>, %37, %cst_35 [1] : vector<2x9x256xf32> to vector<2x256xf32>
    %c0_36 = arith.constant 0 : index
    %c256 = arith.constant 256 : index
    %39 = vector.load %arg3[%c0_36, %c256] : memref<1x768xf32, #tpu.memory_space<vmem>>, vector<1x256xf32>
    %40 = vector.broadcast %39 : vector<1x256xf32> to vector<2x256xf32>
    %41 = arith.addf %38, %40 : vector<2x256xf32>
    %cst_37 = arith.constant 0.000000e+00 : f32
    %42 = vector.broadcast %cst_37 : f32 to vector<2x256xf32>
    %43 = arith.maximumf %41, %42 : vector<2x256xf32>
    %c0_38 = arith.constant 0 : index
    %c256_39 = arith.constant 256 : index
    %44 = vector.load %arg4[%c0_38, %c256_39] : memref<1x768xf32, #tpu.memory_space<vmem>>, vector<1x256xf32>
    %45 = vector.broadcast %44 : vector<1x256xf32> to vector<2x256xf32>
    %46 = arith.mulf %43, %45 : vector<2x256xf32>
    %cst_40 = arith.constant dense<0.000000e+00> : vector<2xf32>
    %47 = vector.multi_reduction <add>, %46, %cst_40 [1] : vector<2x256xf32> to vector<2xf32>
    %48 = vector.shape_cast %47 : vector<2xf32> to vector<2x1xf32>
    %49 = arith.addf %36, %48 : vector<2x1xf32>
    %50 = vector.extract_strided_slice %12 {offsets = [0, 0, 512], sizes = [2, 9, 256], strides = [1, 1, 1]} : vector<2x9x768xf32> to vector<2x9x256xf32>
    %c0_i32 = arith.constant 0 : i32
    %51 = vector.broadcast %c0_i32 : i32 to vector<1x9x1xi32>
    %52 = arith.cmpi sge, %13, %51 : vector<1x9x1xi32>
    %c7_i32 = arith.constant 7 : i32
    %53 = vector.broadcast %c7_i32 : i32 to vector<1x9x1xi32>
    %54 = arith.cmpi sle, %13, %53 : vector<1x9x1xi32>
    %55 = arith.andi %52, %54 : vector<1x9x1xi1>
    %cst_41 = arith.constant -1.000000e+30 : f32
    %56 = vector.shape_cast %55 : vector<1x9x1xi1> to vector<1x9x1xi1>
    %57 = vector.broadcast %56 : vector<1x9x1xi1> to vector<2x9x256xi1>
    %58 = vector.broadcast %cst_41 : f32 to vector<2x9x256xf32>
    %59 = arith.select %57, %50, %58 : vector<2x9x256xi1>, vector<2x9x256xf32>
    %cst_42 = arith.constant dense<0xFF800000> : vector<2x256xf32>
    %60 = vector.multi_reduction <maximumf>, %59, %cst_42 [1] : vector<2x9x256xf32> to vector<2x256xf32>
    %c0_43 = arith.constant 0 : index
    %c512 = arith.constant 512 : index
    %61 = vector.load %arg3[%c0_43, %c512] : memref<1x768xf32, #tpu.memory_space<vmem>>, vector<1x256xf32>
    %62 = vector.broadcast %61 : vector<1x256xf32> to vector<2x256xf32>
    %63 = arith.addf %60, %62 : vector<2x256xf32>
    %cst_44 = arith.constant 0.000000e+00 : f32
    %64 = vector.broadcast %cst_44 : f32 to vector<2x256xf32>
    %65 = arith.maximumf %63, %64 : vector<2x256xf32>
    %c0_45 = arith.constant 0 : index
    %c512_46 = arith.constant 512 : index
    %66 = vector.load %arg4[%c0_45, %c512_46] : memref<1x768xf32, #tpu.memory_space<vmem>>, vector<1x256xf32>
    %67 = vector.broadcast %66 : vector<1x256xf32> to vector<2x256xf32>
    %68 = arith.mulf %65, %67 : vector<2x256xf32>
    %cst_47 = arith.constant dense<0.000000e+00> : vector<2xf32>
    %69 = vector.multi_reduction <add>, %68, %cst_47 [1] : vector<2x256xf32> to vector<2xf32>
    %70 = vector.shape_cast %69 : vector<2xf32> to vector<2x1xf32>
    %71 = arith.addf %49, %70 : vector<2x1xf32>
    %c0_48 = arith.constant 0 : index
    %c0_49 = arith.constant 0 : index
    %72 = vector.load %arg5[%c0_48, %c0_49] : memref<2x1xf32, #tpu.memory_space<vmem>>, vector<2x1xf32>
    tpu.vector_store %arg5[%c0_48, %c0_49], %71 {strides = array<i32>} : memref<2x1xf32, #tpu.memory_space<vmem>>, vector<2x1xf32>,
    return
  }
  func.func @transform_0(%arg0: i32) -> (i32, i32, i32) {
    %c0_i32 = arith.constant 0 : i32
    %c0_i32_0 = arith.constant 0 : i32
    %c0_i32_1 = arith.constant 0 : i32
    return %arg0, %c0_i32, %c0_i32_0 : i32, i32, i32
  }
  func.func @transform_1(%arg0: i32) -> (i32, i32) {
    %c0_i32 = arith.constant 0 : i32
    %c0_i32_0 = arith.constant 0 : i32
    %c0_i32_1 = arith.constant 0 : i32
    return %c0_i32, %c0_i32_0 : i32, i32
  }
  func.func @transform_2(%arg0: i32) -> (i32, i32) {
    %c0_i32 = arith.constant 0 : i32
    %c0_i32_0 = arith.constant 0 : i32
    %c0_i32_1 = arith.constant 0 : i32
    return %c0_i32, %c0_i32_0 : i32, i32
  }
  func.func @transform_3(%arg0: i32) -> (i32, i32) {
    %c0_i32 = arith.constant 0 : i32
    %c0_i32_0 = arith.constant 0 : i32
    %c0_i32_1 = arith.constant 0 : i32
    return %c0_i32, %c0_i32_0 : i32, i32
  }
  func.func @transform_4(%arg0: i32) -> (i32, i32) {
    %c0_i32 = arith.constant 0 : i32
    %c0_i32_0 = arith.constant 0 : i32
    return %arg0, %c0_i32 : i32, i32
  }
}

</mosaic_0001>

<llo_original>
// kernel: forward.1
$region0: #{forward.1}
  #allocation0 [shape = 'u32[]', space=smem, size = 0x4, offset = 0x4, fixed_abs, tag = 'smem constant byte address 0x4 - core index']
  #allocation1 [shape = 'u32[144,128]{1,0:T(1,128)}', space=vmem, size = 0x12000, scoped, tag = 'internal scratch']
  #allocation2 [shape = 'bf16[2,9,1920]{2,1,0:T(8,128)(2,1)}', space=vmem, size = 0x1e000, scoped, tag = 'scratch operand']
  %s0 = inlined_call_operand.vmem [shape: bf16[2,16,384], index: 0, kind: input, shape index: {}]
  %s1 = inlined_call_operand.hbm [shape: bf16[1920,768], index: 1, kind: input, shape index: {}]
  %s2 = inlined_call_operand.hbm [shape: f32[1,768], index: 2, kind: input, shape index: {}]
  %s3 = inlined_call_operand.hbm [shape: f32[1,768], index: 3, kind: input, shape index: {}]
  %s4 = inlined_call_operand.vmem [shape: f32[2,1], index: 4, kind: output, shape index: {}]
  %s5 = sld [smem:[#allocation0]]
  $region38: #{forward.1} parent=0
    _
  %s7 = ssub.s32 1, %s5
  %s8 = scalar_select 0, %s7, %s5
  $region1: #{forward.1} parent=0
    #allocation3 [shape = 'u8[2949120]{0}', space=vmem, size = 0x2d0000, scoped, tag = 'input window, operand 1, single buffered']
    #allocation4 [shape = 's32[1]{0}', space=sflag, size = 0x4, scoped, tag = 'scoped memory for forward.1']
    #allocation5 [shape = 'u8[3072]{0}', space=vmem, size = 0xc00, scoped, tag = 'input window, operand 2, single buffered']
    #allocation6 [shape = 's32[1]{0}', space=sflag, size = 0x4, scoped, tag = 'scoped memory for forward.1']
    #allocation7 [shape = 'u8[3072]{0}', space=vmem, size = 0xc00, scoped, tag = 'input window, operand 3, single buffered']
    %9 = vsyncpa [#allocation4], 0
    %10 = vsyncpa [#allocation6], 0
    // Predicated region
    $region2: #{forward.1} parent=1 // pred_check
      _
    $region3: #{forward.1} parent=1 // pred_check_branch
      %12 = sbr.rel (0) target = $region5
    $region4: #{forward.1} parent=1 // pred_region
      _
    $region5: #{forward.1} parent=1 // pred_fallthru
      _
    // Predicated region
    $region6: #{forward.1} parent=1 // pred_check
      _
    $region7: #{forward.1} parent=1 // pred_check_branch
      %14 = sbr.rel (0) target = $region9
    $region8: #{forward.1} parent=1 // pred_region
      %s16 = ssub.s32 92160, 92160
      %17 = vsyncadd [#allocation4], %s16
      %s18 = sshll.u32 [#allocation3], 4
      %s19 = int_to_ptr.vmem [resolvable:$true] %s18
      %24 = dma.hbm_to_vmem [thread:$0]  %s1, 92160, %s19, [#allocation4], 384, 384, 24
    $region9: #{forward.1} parent=1 // pred_fallthru
      _
    // Predicated region
    $region10: #{forward.1} parent=1 // pred_check
      _
    $region11: #{forward.1} parent=1 // pred_check_branch
      %26 = sbr.rel (0) target = $region13
    $region12: #{forward.1} parent=1 // pred_region
      %s28 = ssub.s32 96, 96
      %29 = vsyncadd [#allocation6], %s28
      %s31 = sshll.u32 [#allocation5], 4
      %s32 = int_to_ptr.vmem [resolvable:$true] %s31
      %34 = dma.hbm_to_vmem [thread:$0]  %s2, 96, %s32, [#allocation6]
    $region13: #{forward.1} parent=1 // pred_fallthru
      _
    // Predicated region
    $region14: #{forward.1} parent=1 // pred_check
      _
    $region15: #{forward.1} parent=1 // pred_check_branch
      %36 = sbr.rel (0) target = $region17
    $region16: #{forward.1} parent=1 // pred_region
      %s38 = ssub.s32 96, 96
      %39 = vsyncadd [#allocation6], %s38
      %s41 = sshll.u32 [#allocation7], 4
      %s42 = int_to_ptr.vmem [resolvable:$true] %s41
      %44 = dma.hbm_to_vmem [thread:$0]  %s3, 96, %s42, [#allocation6]
    $region17: #{forward.1} parent=1 // pred_fallthru
      _
    // Predicated region
    $region18: #{forward.1} parent=1 // pred_check
      _
    $region19: #{forward.1} parent=1 // pred_check_branch
      %46 = sbr.rel (0) target = $region21
    $region20: #{forward.1} parent=1 // pred_region
      %47 = dma.done [#allocation4], 92160
    $region21: #{forward.1} parent=1 // pred_fallthru
      _
    // Predicated region
    $region22: #{forward.1} parent=1 // pred_check
      _
    $region23: #{forward.1} parent=1 // pred_check_branch
      %49 = sbr.rel (0) target = $region25
    $region24: #{forward.1} parent=1 // pred_region
      %50 = dma.done [#allocation6], 96
    $region25: #{forward.1} parent=1 // pred_fallthru
      _
    // Predicated region
    $region26: #{forward.1} parent=1 // pred_check
      _
    $region27: #{forward.1} parent=1 // pred_check_branch
      %52 = sbr.rel (0) target = $region29
    $region28: #{forward.1} parent=1 // pred_region
      %53 = dma.done [#allocation6], 96
    $region29: #{forward.1} parent=1 // pred_fallthru
      _
    %v55 = vld [vmem:[%s0] sm:$0xff]
    %v56 = vld [vmem:[%s0 + $0x8] sm:$0xf]
    %v57 = vld [vmem:[%s0 + $0xc] sm:$0x11]
    %v58 = vld [vmem:[%s0 + $0x14] sm:$0x1]
    %v59 = vld [vmem:[%s0 + $0x18] sm:$0xff]
    %v60 = vld [vmem:[%s0 + $0x20] sm:$0xf]
    %v61 = vld [vmem:[%s0 + $0x24] sm:$0x11]
    %v62 = vld [vmem:[%s0 + $0x2c] sm:$0x1]
    %63 = vst [vmem:[#allocation2] sm:$0xff] %v55
    %64 = vst [vmem:[#allocation2 + $0x8] sm:$0xf] %v56
    %vm65 = vcmask 1040384
    %vm66 = vsmask.f32 256
    %vm67 = vmand %vm65, %vm66
    %vm68 = vcmask 1044484
    %vm69 = vsmask.f32 4352
    %vm70 = vmand %vm68, %vm69
    %vm71 = vmor %vm70, %vm67
    %v72 = vld [vmem:[#allocation2 + $0x3c] sm:$0x11]
    %v73 = vsel %vm71, %v57, %v72
    %74 = vst [vmem:[#allocation2 + $0x3c] sm:$0x11] %v73
    %v75 = vld [vmem:[#allocation2 + $0x44] sm:$0x1]
    %v76 = vsel %vm67, %v58, %v75
    %77 = vst [vmem:[#allocation2 + $0x44] sm:$0x1] %v76
    %78 = vst [vmem:[#allocation2 + $0x78] sm:$0xff] %v59
    %79 = vst [vmem:[#allocation2 + $0x80] sm:$0xf] %v60
    %v80 = vld [vmem:[#allocation2 + $0xb4] sm:$0x11]
    %v81 = vsel %vm71, %v61, %v80
    %82 = vst [vmem:[#allocation2 + $0xb4] sm:$0x11] %v81
    %v83 = vld [vmem:[#allocation2 + $0xbc] sm:$0x1]
    %v84 = vsel %vm67, %v62, %v83
    %85 = vst [vmem:[#allocation2 + $0xbc] sm:$0x1] %v84
    %v86 = vld [vmem:[%s0] sm:$0xff]
    %v87 = vld [vmem:[%s0 + $0x8] sm:$0xf]
    %v88 = vld [vmem:[%s0 + $0xc] sm:$0x11]
    %v89 = vld [vmem:[%s0 + $0x14] sm:$0x1]
    %v90 = vld [vmem:[%s0 + $0x18] sm:$0xff]
    %v91 = vld [vmem:[%s0 + $0x20] sm:$0xf]
    %v92 = vld [vmem:[%s0 + $0x24] sm:$0x11]
    %v93 = vld [vmem:[%s0 + $0x2c] sm:$0x1]
    %vm94 = vsmask.f32 3328
    %vm95 = vsmask.f32 7440
    %vm96 = vmor %vm94, %vm95
    %v98 = vshrl.u32 %v86, 16
    %v100 = vrot.slane %v98, 4
    %v101 = vshll.u32 %v86, 16
    %v103 = vrot.slane %v101, 5
    %v104 = vor.u32 %v100, %v103
    %v105 = vrot.slane %v104, 4
    %v107 = vshll.u32 %v88, 16
    %v109 = vrot.slane %v107, 5
    %v110 = vsel %vm96, %v105, %v109
    %v112 = vshrl.u32 %v87, 16
    %v114 = vrot.slane %v112, 4
    %v115 = vshll.u32 %v87, 16
    %v117 = vrot.slane %v115, 5
    %v118 = vor.u32 %v114, %v117
    %v119 = vrot.slane %v118, 4
    %v121 = vshll.u32 %v89, 16
    %v123 = vrot.slane %v121, 5
    %v124 = vsel %vm96, %v119, %v123
    %v125 = vshrl.u32 %v88, 16
    %v127 = vrot.slane %v125, 4
    %v128 = vrot.slane %v127, 4
    %v129 = vshrl.u32 %v89, 16
    %v131 = vrot.slane %v129, 4
    %v132 = vrot.slane %v131, 4
    %v134 = vshrl.u32 %v90, 16
    %v136 = vrot.slane %v134, 4
    %v137 = vshll.u32 %v90, 16
    %v139 = vrot.slane %v137, 5
    %v140 = vor.u32 %v136, %v139
    %v141 = vrot.slane %v140, 4
    %v143 = vshll.u32 %v92, 16
    %v145 = vrot.slane %v143, 5
    %v146 = vsel %vm96, %v141, %v145
    %v148 = vshrl.u32 %v91, 16
    %v150 = vrot.slane %v148, 4
    %v151 = vshll.u32 %v91, 16
    %v153 = vrot.slane %v151, 5
    %v154 = vor.u32 %v150, %v153
    %v155 = vrot.slane %v154, 4
    %v157 = vshll.u32 %v93, 16
    %v159 = vrot.slane %v157, 5
    %v160 = vsel %vm96, %v155, %v159
    %v161 = vshrl.u32 %v92, 16
    %v163 = vrot.slane %v161, 4
    %v164 = vrot.slane %v163, 4
    %v165 = vshrl.u32 %v93, 16
    %v167 = vrot.slane %v165, 4
    %v168 = vrot.slane %v167, 4
    %177 = vst [vmem:[#allocation2 + $0xc] sm:$0xff] %v110
    %178 = vst [vmem:[#allocation2 + $0x14] sm:$0xf] %v124
    %v179 = vld [vmem:[#allocation2 + $0x48] sm:$0x11]
    %v180 = vsel %vm71, %v128, %v179
    %181 = vst [vmem:[#allocation2 + $0x48] sm:$0x11] %v180
    %v182 = vld [vmem:[#allocation2 + $0x50] sm:$0x1]
    %v183 = vsel %vm67, %v132, %v182
    %184 = vst [vmem:[#allocation2 + $0x50] sm:$0x1] %v183
    %185 = vst [vmem:[#allocation2 + $0x84] sm:$0xff] %v146
    %186 = vst [vmem:[#allocation2 + $0x8c] sm:$0xf] %v160
    %v187 = vld [vmem:[#allocation2 + $0xc0] sm:$0x11]
    %v188 = vsel %vm71, %v164, %v187
    %189 = vst [vmem:[#allocation2 + $0xc0] sm:$0x11] %v188
    %v190 = vld [vmem:[#allocation2 + $0xc8] sm:$0x1]
    %v191 = vsel %vm67, %v168, %v190
    %192 = vst [vmem:[#allocation2 + $0xc8] sm:$0x1] %v191
    %v193 = vld [vmem:[%s0] sm:$0xee]
    %v194 = vld [vmem:[%s0 + $0x8] sm:$0xe]
    %v195 = vld [vmem:[%s0 + $0xc] sm:$0x33]
    %v196 = vld [vmem:[%s0 + $0x14] sm:$0x3]
    %v197 = vld [vmem:[%s0 + $0x18] sm:$0xee]
    %v198 = vld [vmem:[%s0 + $0x20] sm:$0xe]
    %v199 = vld [vmem:[%s0 + $0x24] sm:$0x33]
    %v200 = vld [vmem:[%s0 + $0x2c] sm:$0x3]
    %vm209 = vcmask 1042432
    %vm210 = vcmask 1046532
    %vm211 = vmor %vm209, %vm210
    %v212 = vrot.slane %v193, 5
    %v213 = vrot.slane %v212, 4
    %v214 = vrot.slane %v195, 5
    %v215 = vsel %vm211, %v213, %v214
    %v216 = vrot.slane %v194, 5
    %v217 = vrot.slane %v216, 4
    %v218 = vrot.slane %v196, 5
    %v219 = vsel %vm211, %v217, %v218
    %v220 = vrot.slane %v214, 4
    %v221 = vrot.slane %v218, 4
    %v222 = vrot.slane %v197, 5
    %v223 = vrot.slane %v222, 4
    %v224 = vrot.slane %v199, 5
    %v225 = vsel %vm211, %v223, %v224
    %v226 = vrot.slane %v198, 5
    %v227 = vrot.slane %v226, 4
    %v228 = vrot.slane %v200, 5
    %v229 = vsel %vm211, %v227, %v228
    %v230 = vrot.slane %v224, 4
    %v231 = vrot.slane %v228, 4
    %240 = vst [vmem:[#allocation2 + $0x18] sm:$0xff] %v215
    %241 = vst [vmem:[#allocation2 + $0x20] sm:$0xf] %v219
    %v242 = vld [vmem:[#allocation2 + $0x54] sm:$0x11]
    %v243 = vsel %vm71, %v220, %v242
    %244 = vst [vmem:[#allocation2 + $0x54] sm:$0x11] %v243
    %v245 = vld [vmem:[#allocation2 + $0x5c] sm:$0x1]
    %v246 = vsel %vm67, %v221, %v245
    %247 = vst [vmem:[#allocation2 + $0x5c] sm:$0x1] %v246
    %248 = vst [vmem:[#allocation2 + $0x90] sm:$0xff] %v225
    %249 = vst [vmem:[#allocation2 + $0x98] sm:$0xf] %v229
    %v250 = vld [vmem:[#allocation2 + $0xcc] sm:$0x11]
    %v251 = vsel %vm71, %v230, %v250
    %252 = vst [vmem:[#allocation2 + $0xcc] sm:$0x11] %v251
    %v253 = vld [vmem:[#allocation2 + $0xd4] sm:$0x1]
    %v254 = vsel %vm67, %v231, %v253
    %255 = vst [vmem:[#allocation2 + $0xd4] sm:$0x1] %v254
    %v256 = vld [vmem:[%s0] sm:$0xee]
    %v257 = vld [vmem:[%s0 + $0x8] sm:$0xe]
    %v258 = vld [vmem:[%s0 + $0xc] sm:$0x33]
    %v259 = vld [vmem:[%s0 + $0x14] sm:$0x3]
    %v260 = vld [vmem:[%s0 + $0x18] sm:$0xee]
    %v261 = vld [vmem:[%s0 + $0x20] sm:$0xe]
    %v262 = vld [vmem:[%s0 + $0x24] sm:$0x33]
    %v263 = vld [vmem:[%s0 + $0x2c] sm:$0x3]
    %vm264 = vsmask.f32 2304
    %vm265 = vsmask.f32 6416
    %vm266 = vmor %vm264, %vm265
    %v268 = vshrl.u32 %v256, 16
    %v270 = vrot.slane %v268, 5
    %v271 = vshll.u32 %v256, 16
    %v273 = vrot.slane %v271, 6
    %v274 = vor.u32 %v270, %v273
    %v275 = vrot.slane %v274, 4
    %v277 = vshrl.u32 %v258, 16
    %v279 = vrot.slane %v277, 5
    %v280 = vshll.u32 %v258, 16
    %v282 = vrot.slane %v280, 6
    %v283 = vor.u32 %v279, %v282
    %v284 = vsel %vm266, %v275, %v283
    %v286 = vshrl.u32 %v257, 16
    %v288 = vrot.slane %v286, 5
    %v289 = vshll.u32 %v257, 16
    %v291 = vrot.slane %v289, 6
    %v292 = vor.u32 %v288, %v291
    %v293 = vrot.slane %v292, 4
    %v295 = vshrl.u32 %v259, 16
    %v297 = vrot.slane %v295, 5
    %v298 = vshll.u32 %v259, 16
    %v300 = vrot.slane %v298, 6
    %v301 = vor.u32 %v297, %v300
    %v302 = vsel %vm266, %v293, %v301
    %v303 = vrot.slane %v279, 4
    %v304 = vrot.slane %v297, 4
    %v306 = vshrl.u32 %v260, 16
    %v308 = vrot.slane %v306, 5
    %v309 = vshll.u32 %v260, 16
    %v311 = vrot.slane %v309, 6
    %v312 = vor.u32 %v308, %v311
    %v313 = vrot.slane %v312, 4
    %v315 = vshrl.u32 %v262, 16
    %v317 = vrot.slane %v315, 5
    %v318 = vshll.u32 %v262, 16
    %v320 = vrot.slane %v318, 6
    %v321 = vor.u32 %v317, %v320
    %v322 = vsel %vm266, %v313, %v321
    %v324 = vshrl.u32 %v261, 16
    %v326 = vrot.slane %v324, 5
    %v327 = vshll.u32 %v261, 16
    %v329 = vrot.slane %v327, 6
    %v330 = vor.u32 %v326, %v329
    %v331 = vrot.slane %v330, 4
    %v333 = vshrl.u32 %v263, 16
    %v335 = vrot.slane %v333, 5
    %v336 = vshll.u32 %v263, 16
    %v338 = vrot.slane %v336, 6
    %v339 = vor.u32 %v335, %v338
    %v340 = vsel %vm266, %v331, %v339
    %v341 = vrot.slane %v317, 4
    %v342 = vrot.slane %v335, 4
    %351 = vst [vmem:[#allocation2 + $0x24] sm:$0xff] %v284
    %352 = vst [vmem:[#allocation2 + $0x2c] sm:$0xf] %v302
    %v353 = vld [vmem:[#allocation2 + $0x60] sm:$0x11]
    %v354 = vsel %vm71, %v303, %v353
    %355 = vst [vmem:[#allocation2 + $0x60] sm:$0x11] %v354
    %v356 = vld [vmem:[#allocation2 + $0x68] sm:$0x1]
    %v357 = vsel %vm67, %v304, %v356
    %358 = vst [vmem:[#allocation2 + $0x68] sm:$0x1] %v357
    %359 = vst [vmem:[#allocation2 + $0x9c] sm:$0xff] %v322
    %360 = vst [vmem:[#allocation2 + $0xa4] sm:$0xf] %v340
    %v361 = vld [vmem:[#allocation2 + $0xd8] sm:$0x11]
    %v362 = vsel %vm71, %v341, %v361
    %363 = vst [vmem:[#allocation2 + $0xd8] sm:$0x11] %v362
    %v364 = vld [vmem:[#allocation2 + $0xe0] sm:$0x1]
    %v365 = vsel %vm67, %v342, %v364
    %366 = vst [vmem:[#allocation2 + $0xe0] sm:$0x1] %v365
    %v367 = vld [vmem:[%s0] sm:$0xcc]
    %v368 = vld [vmem:[%s0 + $0x8] sm:$0xc]
    %v369 = vld [vmem:[%s0 + $0xc] sm:$0x77]
    %v370 = vld [vmem:[%s0 + $0x14] sm:$0x7]
    %v371 = vld [vmem:[%s0 + $0x18] sm:$0xcc]
    %v372 = vld [vmem:[%s0 + $0x20] sm:$0xc]
    %v373 = vld [vmem:[%s0 + $0x24] sm:$0x77]
    %v374 = vld [vmem:[%s0 + $0x2c] sm:$0x7]
    %vm383 = vcmask 1041408
    %vm384 = vcmask 1045508
    %vm385 = vmor %vm383, %vm384
    %v386 = vrot.slane %v367, 6
    %v387 = vrot.slane %v386, 4
    %v388 = vrot.slane %v369, 6
    %v389 = vsel %vm385, %v387, %v388
    %v390 = vrot.slane %v368, 6
    %v391 = vrot.slane %v390, 4
    %v392 = vrot.slane %v370, 6
    %v393 = vsel %vm385, %v391, %v392
    %v394 = vrot.slane %v388, 4
    %v395 = vrot.slane %v392, 4
    %v396 = vrot.slane %v371, 6
    %v397 = vrot.slane %v396, 4
    %v398 = vrot.slane %v373, 6
    %v399 = vsel %vm385, %v397, %v398
    %v400 = vrot.slane %v372, 6
    %v401 = vrot.slane %v400, 4
    %v402 = vrot.slane %v374, 6
    %v403 = vsel %vm385, %v401, %v402
    %v404 = vrot.slane %v398, 4
    %v405 = vrot.slane %v402, 4
    %414 = vst [vmem:[#allocation2 + $0x30] sm:$0xff] %v389
    %415 = vst [vmem:[#allocation2 + $0x38] sm:$0xf] %v393
    %v416 = vld [vmem:[#allocation2 + $0x6c] sm:$0x11]
    %v417 = vsel %vm71, %v394, %v416
    %418 = vst [vmem:[#allocation2 + $0x6c] sm:$0x11] %v417
    %v419 = vld [vmem:[#allocation2 + $0x74] sm:$0x1]
    %v420 = vsel %vm67, %v395, %v419
    %421 = vst [vmem:[#allocation2 + $0x74] sm:$0x1] %v420
    %422 = vst [vmem:[#allocation2 + $0xa8] sm:$0xff] %v399
    %423 = vst [vmem:[#allocation2 + $0xb0] sm:$0xf] %v403
    %v424 = vld [vmem:[#allocation2 + $0xe4] sm:$0x11]
    %v425 = vsel %vm71, %v404, %v424
    %426 = vst [vmem:[#allocation2 + $0xe4] sm:$0x11] %v425
    %v427 = vld [vmem:[#allocation2 + $0xec] sm:$0x1]
    %v428 = vsel %vm67, %v405, %v427
    %429 = vst [vmem:[#allocation2 + $0xec] sm:$0x1] %v428
    %v430 = vld [vmem:[#allocation2] sm:$0xff]
    %v431 = vld [vmem:[#allocation2 + $0x8] sm:$0xff]
    %v432 = vld [vmem:[#allocation2 + $0x10] sm:$0xff]
    %v433 = vld [vmem:[#allocation2 + $0x18] sm:$0xff]
    %v434 = vld [vmem:[#allocation2 + $0x20] sm:$0xff]
    %v435 = vld [vmem:[#allocation2 + $0x28] sm:$0xff]
    %v436 = vld [vmem:[#allocation2 + $0x30] sm:$0xff]
    %v437 = vld [vmem:[#allocation2 + $0x38] sm:$0xf]
    %v438 = vld [vmem:[#allocation2 + $0x3c] sm:$0x11]
    %v439 = vld [vmem:[#allocation2 + $0x44] sm:$0x11]
    %v440 = vld [vmem:[#allocation2 + $0x4c] sm:$0x11]
    %v441 = vld [vmem:[#allocation2 + $0x54] sm:$0x11]
    %v442 = vld [vmem:[#allocation2 + $0x5c] sm:$0x11]
    %v443 = vld [vmem:[#allocation2 + $0x64] sm:$0x11]
    %v444 = vld [vmem:[#allocation2 + $0x6c] sm:$0x11]
    %v445 = vld [vmem:[#allocation2 + $0x74] sm:$0x1]
    %v446 = vld [vmem:[#allocation2 + $0x78] sm:$0xff]
    %v447 = vld [vmem:[#allocation2 + $0x80] sm:$0xff]
    %v448 = vld [vmem:[#allocation2 + $0x88] sm:$0xff]
    %v449 = vld [vmem:[#allocation2 + $0x90] sm:$0xff]
    %v450 = vld [vmem:[#allocation2 + $0x98] sm:$0xff]
    %v451 = vld [vmem:[#allocation2 + $0xa0] sm:$0xff]
    %v452 = vld [vmem:[#allocation2 + $0xa8] sm:$0xff]
    %v453 = vld [vmem:[#allocation2 + $0xb0] sm:$0xf]
    %v454 = vld [vmem:[#allocation2 + $0xb4] sm:$0x11]
    %v455 = vld [vmem:[#allocation2 + $0xbc] sm:$0x11]
    %v456 = vld [vmem:[#allocation2 + $0xc4] sm:$0x11]
    %v457 = vld [vmem:[#allocation2 + $0xcc] sm:$0x11]
    %v458 = vld [vmem:[#allocation2 + $0xd4] sm:$0x11]
    %v459 = vld [vmem:[#allocation2 + $0xdc] sm:$0x11]
    %v460 = vld [vmem:[#allocation2 + $0xe4] sm:$0x11]
    %v461 = vld [vmem:[#allocation2 + $0xec] sm:$0x1]
    %v462 = vld [vmem:[#allocation3] sm:$0xff]
    %v463 = vld [vmem:[#allocation3 + $0x8] sm:$0xff]
    %v464 = vld [vmem:[#allocation3 + $0x10] sm:$0xff]
    %v465 = vld [vmem:[#allocation3 + $0x18] sm:$0xff]
    %v466 = vld [vmem:[#allocation3 + $0x20] sm:$0xff]
    %v467 = vld [vmem:[#allocation3 + $0x28] sm:$0xff]
    %v468 = vld [vmem:[#allocation3 + $0x30] sm:$0xff]
    %v469 = vld [vmem:[#allocation3 + $0x38] sm:$0xff]
    %v470 = vld [vmem:[#allocation3 + $0x40] sm:$0xff]
    %v471 = vld [vmem:[#allocation3 + $0x48] sm:$0xff]
    %v472 = vld [vmem:[#allocation3 + $0x50] sm:$0xff]
    %v473 = vld [vmem:[#allocation3 + $0x58] sm:$0xff]
    %v474 = vld [vmem:[#allocation3 + $0x60] sm:$0xff]
    %v475 = vld [vmem:[#allocation3 + $0x68] sm:$0xff]
    %v476 = vld [vmem:[#allocation3 + $0x70] sm:$0xff]
    %v477 = vld [vmem:[#allocation3 + $0x78] sm:$0xff]
    %v478 = vld [vmem:[#allocation3 + $0x80] sm:$0xff]
    %v479 = vld [vmem:[#allocation3 + $0x88] sm:$0xff]
    %v480 = vld [vmem:[#allocation3 + $0x90] sm:$0xff]
    %v481 = vld [vmem:[#allocation3 + $0x98] sm:$0xff]
    %v482 = vld [vmem:[#allocation3 + $0xa0] sm:$0xff]
    %v483 = vld [vmem:[#allocation3 + $0xa8] sm:$0xff]
    %v484 = vld [vmem:[#allocation3 + $0xb0] sm:$0xff]
    %v485 = vld [vmem:[#allocation3 + $0xb8] sm:$0xff]
    %v486 = vld [vmem:[#allocation3 + $0xc0] sm:$0xff]
    %v487 = vld [vmem:[#allocation3 + $0xc8] sm:$0xff]
    %v488 = vld [vmem:[#allocation3 + $0xd0] sm:$0xff]
    %v489 = vld [vmem:[#allocation3 + $0xd8] sm:$0xff]
    %v490 = vld [vmem:[#allocation3 + $0xe0] sm:$0xff]
    %v491 = vld [vmem:[#allocation3 + $0xe8] sm:$0xff]
    %v492 = vld [vmem:[#allocation3 + $0xf0] sm:$0xff]
    %v493 = vld [vmem:[#allocation3 + $0xf8] sm:$0xff]
    %v494 = vld [vmem:[#allocation3 + $0x100] sm:$0xff]
    %v495 = vld [vmem:[#allocation3 + $0x108] sm:$0xff]
    %v496 = vld [vmem:[#allocation3 + $0x110] sm:$0xff]
    %v497 = vld [vmem:[#allocation3 + $0x118] sm:$0xff]
    %v498 = vld [vmem:[#allocation3 + $0x120] sm:$0xff]
    %v499 = vld [vmem:[#allocation3 + $0x128] sm:$0xff]
    %v500 = vld [vmem:[#allocation3 + $0x130] sm:$0xff]
    %v501 = vld [vmem:[#allocation3 + $0x138] sm:$0xff]
    %v502 = vld [vmem:[#allocation3 + $0x140] sm:$0xff]
    %v503 = vld [vmem:[#allocation3 + $0x148] sm:$0xff]
    %v504 = vld [vmem:[#allocation3 + $0x150] sm:$0xff]
    %v505 = vld [vmem:[#allocation3 + $0x158] sm:$0xff]
    %v506 = vld [vmem:[#allocation3 + $0x160] sm:$0xff]
    %v507 = vld [vmem:[#allocation3 + $0x168] sm:$0xff]
    %v508 = vld [vmem:[#allocation3 + $0x170] sm:$0xff]
    %v509 = vld [vmem:[#allocation3 + $0x178] sm:$0xff]
    %v510 = vld [vmem:[#allocation3 + $0x180] sm:$0xff]
    %v511 = vld [vmem:[#allocation3 + $0x188] sm:$0xff]
    %v512 = vld [vmem:[#allocation3 + $0x190] sm:$0xff]
    %v513 = vld [vmem:[#allocation3 + $0x198] sm:$0xff]
    %v514 = vld [vmem:[#allocation3 + $0x1a0] sm:$0xff]
    %v515 = vld [vmem:[#allocation3 + $0x1a8] sm:$0xff]
    %v516 = vld [vmem:[#allocation3 + $0x1b0] sm:$0xff]
    %v517 = vld [vmem:[#allocation3 + $0x1b8] sm:$0xff]
    %v518 = vld [vmem:[#allocation3 + $0x1c0] sm:$0xff]
    %v519 = vld [vmem:[#allocation3 + $0x1c8] sm:$0xff]
    %v520 = vld [vmem:[#allocation3 + $0x1d0] sm:$0xff]
    %v521 = vld [vmem:[#allocation3 + $0x1d8] sm:$0xff]
    %v522 = vld [vmem:[#allocation3 + $0x1e0] sm:$0xff]
    %v523 = vld [vmem:[#allocation3 + $0x1e8] sm:$0xff]
    %v524 = vld [vmem:[#allocation3 + $0x1f0] sm:$0xff]
    %v525 = vld [vmem:[#allocation3 + $0x1f8] sm:$0xff]
    %v526 = vld [vmem:[#allocation3 + $0x200] sm:$0xff]
    %v527 = vld [vmem:[#allocation3 + $0x208] sm:$0xff]
    %v528 = vld [vmem:[#allocation3 + $0x210] sm:$0xff]
    %v529 = vld [vmem:[#allocation3 + $0x218] sm:$0xff]
    %v530 = vld [vmem:[#allocation3 + $0x220] sm:$0xff]
    %v531 = vld [vmem:[#allocation3 + $0x228] sm:$0xff]
    %v532 = vld [vmem:[#allocation3 + $0x230] sm:$0xff]
    %v533 = vld [vmem:[#allocation3 + $0x238] sm:$0xff]
    %v534 = vld [vmem:[#allocation3 + $0x240] sm:$0xff]
    %v535 = vld [vmem:[#allocation3 + $0x248] sm:$0xff]
    %v536 = vld [vmem:[#allocation3 + $0x250] sm:$0xff]
    %v537 = vld [vmem:[#allocation3 + $0x258] sm:$0xff]
    %v538 = vld [vmem:[#allocation3 + $0x260] sm:$0xff]
    %v539 = vld [vmem:[#allocation3 + $0x268] sm:$0xff]
    %v540 = vld [vmem:[#allocation3 + $0x270] sm:$0xff]
    %v541 = vld [vmem:[#allocation3 + $0x278] sm:$0xff]
    %v542 = vld [vmem:[#allocation3 + $0x280] sm:$0xff]
    %v543 = vld [vmem:[#allocation3 + $0x288] sm:$0xff]
    %v544 = vld [vmem:[#allocation3 + $0x290] sm:$0xff]
    %v545 = vld [vmem:[#allocation3 + $0x298] sm:$0xff]
    %v546 = vld [vmem:[#allocation3 + $0x2a0] sm:$0xff]
    %v547 = vld [vmem:[#allocation3 + $0x2a8] sm:$0xff]
    %v548 = vld [vmem:[#allocation3 + $0x2b0] sm:$0xff]
    %v549 = vld [vmem:[#allocation3 + $0x2b8] sm:$0xff]
    %v550 = vld [vmem:[#allocation3 + $0x2c0] sm:$0xff]
    %v551 = vld [vmem:[#allocation3 + $0x2c8] sm:$0xff]
    %v552 = vld [vmem:[#allocation3 + $0x2d0] sm:$0xff]
    %v553 = vld [vmem:[#allocation3 + $0x2d8] sm:$0xff]
    %v554 = vld [vmem:[#allocation3 + $0x2e0] sm:$0xff]
    %v555 = vld [vmem:[#allocation3 + $0x2e8] sm:$0xff]
    %v556 = vld [vmem:[#allocation3 + $0x2f0] sm:$0xff]
    %v557 = vld [vmem:[#allocation3 + $0x2f8] sm:$0xff]
    %v558 = vld [vmem:[#allocation3 + $0x300] sm:$0xff]
    %v559 = vld [vmem:[#allocation3 + $0x308] sm:$0xff]
    %v560 = vld [vmem:[#allocation3 + $0x310] sm:$0xff]
    %v561 = vld [vmem:[#allocation3 + $0x318] sm:$0xff]
    %v562 = vld [vmem:[#allocation3 + $0x320] sm:$0xff]
    %v563 = vld [vmem:[#allocation3 + $0x328] sm:$0xff]
    %v564 = vld [vmem:[#allocation3 + $0x330] sm:$0xff]
    %v565 = vld [vmem:[#allocation3 + $0x338] sm:$0xff]
    %v566 = vld [vmem:[#allocation3 + $0x340] sm:$0xff]
    %v567 = vld [vmem:[#allocation3 + $0x348] sm:$0xff]
    %v568 = vld [vmem:[#allocation3 + $0x350] sm:$0xff]
    %v569 = vld [vmem:[#allocation3 + $0x358] sm:$0xff]
    %v570 = vld [vmem:[#allocation3 + $0x360] sm:$0xff]
    %v571 = vld [vmem:[#allocation3 + $0x368] sm:$0xff]
    %v572 = vld [vmem:[#allocation3 + $0x370] sm:$0xff]
    %v573 = vld [vmem:[#allocation3 + $0x378] sm:$0xff]
    %v574 = vld [vmem:[#allocation3 + $0x380] sm:$0xff]
    %v575 = vld [vmem:[#allocation3 + $0x388] sm:$0xff]
    %v576 = vld [vmem:[#allocation3 + $0x390] sm:$0xff]
    %v577 = vld [vmem:[#allocation3 + $0x398] sm:$0xff]
    %v578 = vld [vmem:[#allocation3 + $0x3a0] sm:$0xff]
    %v579 = vld [vmem:[#allocation3 + $0x3a8] sm:$0xff]
    %v580 = vld [vmem:[#allocation3 + $0x3b0] sm:$0xff]
    %v581 = vld [vmem:[#allocation3 + $0x3b8] sm:$0xff]
    %v582 = vld [vmem:[#allocation3 + $0x3c0] sm:$0xff]
    %v583 = vld [vmem:[#allocation3 + $0x3c8] sm:$0xff]
    %v584 = vld [vmem:[#allocation3 + $0x3d0] sm:$0xff]
    %v585 = vld [vmem:[#allocation3 + $0x3d8] sm:$0xff]
    %v586 = vld [vmem:[#allocation3 + $0x3e0] sm:$0xff]
    %v587 = vld [vmem:[#allocation3 + $0x3e8] sm:$0xff]
    %v588 = vld [vmem:[#allocation3 + $0x3f0] sm:$0xff]
    %v589 = vld [vmem:[#allocation3 + $0x3f8] sm:$0xff]
    %v590 = vld [vmem:[#allocation3 + $0x400] sm:$0xff]
    %v591 = vld [vmem:[#allocation3 + $0x408] sm:$0xff]
    %v592 = vld [vmem:[#allocation3 + $0x410] sm:$0xff]
    %v593 = vld [vmem:[#allocation3 + $0x418] sm:$0xff]
    %v594 = vld [vmem:[#allocation3 + $0x420] sm:$0xff]
    %v595 = vld [vmem:[#allocation3 + $0x428] sm:$0xff]
    %v596 = vld [vmem:[#allocation3 + $0x430] sm:$0xff]
    %v597 = vld [vmem:[#allocation3 + $0x438] sm:$0xff]
    %v598 = vld [vmem:[#allocation3 + $0x440] sm:$0xff]
    %v599 = vld [vmem:[#allocation3 + $0x448] sm:$0xff]
    %v600 = vld [vmem:[#allocation3 + $0x450] sm:$0xff]
    %v601 = vld [vmem:[#allocation3 + $0x458] sm:$0xff]
    %v602 = vld [vmem:[#allocation3 + $0x460] sm:$0xff]
    %v603 = vld [vmem:[#allocation3 + $0x468] sm:$0xff]
    %v604 = vld [vmem:[#allocation3 + $0x470] sm:$0xff]
    %v605 = vld [vmem:[#allocation3 + $0x478] sm:$0xff]
    %v606 = vld [vmem:[#allocation3 + $0x480] sm:$0xff]
    %v607 = vld [vmem:[#allocation3 + $0x488] sm:$0xff]
    %v608 = vld [vmem:[#allocation3 + $0x490] sm:$0xff]
    %v609 = vld [vmem:[#allocation3 + $0x498] sm:$0xff]
    %v610 = vld [vmem:[#allocation3 + $0x4a0] sm:$0xff]
    %v611 = vld [vmem:[#allocation3 + $0x4a8] sm:$0xff]
    %v612 = vld [vmem:[#allocation3 + $0x4b0] sm:$0xff]
    %v613 = vld [vmem:[#allocation3 + $0x4b8] sm:$0xff]
    %v614 = vld [vmem:[#allocation3 + $0x4c0] sm:$0xff]
    %v615 = vld [vmem:[#allocation3 + $0x4c8] sm:$0xff]
    %v616 = vld [vmem:[#allocation3 + $0x4d0] sm:$0xff]
    %v617 = vld [vmem:[#allocation3 + $0x4d8] sm:$0xff]
    %v618 = vld [vmem:[#allocation3 + $0x4e0] sm:$0xff]
    %v619 = vld [vmem:[#allocation3 + $0x4e8] sm:$0xff]
    %v620 = vld [vmem:[#allocation3 + $0x4f0] sm:$0xff]
    %v621 = vld [vmem:[#allocation3 + $0x4f8] sm:$0xff]
    %v622 = vld [vmem:[#allocation3 + $0x500] sm:$0xff]
    %v623 = vld [vmem:[#allocation3 + $0x508] sm:$0xff]
    %v624 = vld [vmem:[#allocation3 + $0x510] sm:$0xff]
    %v625 = vld [vmem:[#allocation3 + $0x518] sm:$0xff]
    %v626 = vld [vmem:[#allocation3 + $0x520] sm:$0xff]
    %v627 = vld [vmem:[#allocation3 + $0x528] sm:$0xff]
    %v628 = vld [vmem:[#allocation3 + $0x530] sm:$0xff]
    %v629 = vld [vmem:[#allocation3 + $0x538] sm:$0xff]
    %v630 = vld [vmem:[#allocation3 + $0x540] sm:$0xff]
    %v631 = vld [vmem:[#allocation3 + $0x548] sm:$0xff]
    %v632 = vld [vmem:[#allocation3 + $0x550] sm:$0xff]
    %v633 = vld [vmem:[#allocation3 + $0x558] sm:$0xff]
    %v634 = vld [vmem:[#allocation3 + $0x560] sm:$0xff]
    %v635 = vld [vmem:[#allocation3 + $0x568] sm:$0xff]
    %v636 = vld [vmem:[#allocation3 + $0x570] sm:$0xff]
    %v637 = vld [vmem:[#allocation3 + $0x578] sm:$0xff]
    %v638 = vld [vmem:[#allocation3 + $0x580] sm:$0xff]
    %v639 = vld [vmem:[#allocation3 + $0x588] sm:$0xff]
    %v640 = vld [vmem:[#allocation3 + $0x590] sm:$0xff]
    %v641 = vld [vmem:[#allocation3 + $0x598] sm:$0xff]
    %v642 = vld [vmem:[#allocation3 + $0x5a0] sm:$0xff]
    %v643 = vld [vmem:[#allocation3 + $0x5a8] sm:$0xff]
    %v644 = vld [vmem:[#allocation3 + $0x5b0] sm:$0xff]
    %v645 = vld [vmem:[#allocation3 + $0x5b8] sm:$0xff]
    %v646 = vld [vmem:[#allocation3 + $0x5c0] sm:$0xff]
    %v647 = vld [vmem:[#allocation3 + $0x5c8] sm:$0xff]
    %v648 = vld [vmem:[#allocation3 + $0x5d0] sm:$0xff]
    %v649 = vld [vmem:[#allocation3 + $0x5d8] sm:$0xff]
    %v650 = vld [vmem:[#allocation3 + $0x5e0] sm:$0xff]
    %v651 = vld [vmem:[#allocation3 + $0x5e8] sm:$0xff]
    %v652 = vld [vmem:[#allocation3 + $0x5f0] sm:$0xff]
    %v653 = vld [vmem:[#allocation3 + $0x5f8] sm:$0xff]
    %v654 = vld [vmem:[#allocation3 + $0x600] sm:$0xff]
    %v655 = vld [vmem:[#allocation3 + $0x608] sm:$0xff]
    %v656 = vld [vmem:[#allocation3 + $0x610] sm:$0xff]
    %v657 = vld [vmem:[#allocation3 + $0x618] sm:$0xff]
    %v658 = vld [vmem:[#allocation3 + $0x620] sm:$0xff]
    %v659 = vld [vmem:[#allocation3 + $0x628] sm:$0xff]
    %v660 = vld [vmem:[#allocation3 + $0x630] sm:$0xff]
    %v661 = vld [vmem:[#allocation3 + $0x638] sm:$0xff]
    %v662 = vld [vmem:[#allocation3 + $0x640] sm:$0xff]
    %v663 = vld [vmem:[#allocation3 + $0x648] sm:$0xff]
    %v664 = vld [vmem:[#allocation3 + $0x650] sm:$0xff]
    %v665 = vld [vmem:[#allocation3 + $0x658] sm:$0xff]
    %v666 = vld [vmem:[#allocation3 + $0x660] sm:$0xff]
    %v667 = vld [vmem:[#allocation3 + $0x668] sm:$0xff]
    %v668 = vld [vmem:[#allocation3 + $0x670] sm:$0xff]
    %v669 = vld [vmem:[#allocation3 + $0x678] sm:$0xff]
    %v670 = vld [vmem:[#allocation3 + $0x680] sm:$0xff]
    %v671 = vld [vmem:[#allocation3 + $0x688] sm:$0xff]
    %v672 = vld [vmem:[#allocation3 + $0x690] sm:$0xff]
    %v673 = vld [vmem:[#allocation3 + $0x698] sm:$0xff]
    %v674 = vld [vmem:[#allocation3 + $0x6a0] sm:$0xff]
    %v675 = vld [vmem:[#allocation3 + $0x6a8] sm:$0xff]
    %v676 = vld [vmem:[#allocation3 + $0x6b0] sm:$0xff]
    %v677 = vld [vmem:[#allocation3 + $0x6b8] sm:$0xff]
    %v678 = vld [vmem:[#allocation3 + $0x6c0] sm:$0xff]
    %v679 = vld [vmem:[#allocation3 + $0x6c8] sm:$0xff]
    %v680 = vld [vmem:[#allocation3 + $0x6d0] sm:$0xff]
    %v681 = vld [vmem:[#allocation3 + $0x6d8] sm:$0xff]
    %v682 = vld [vmem:[#allocation3 + $0x6e0] sm:$0xff]
    %v683 = vld [vmem:[#allocation3 + $0x6e8] sm:$0xff]
    %v684 = vld [vmem:[#allocation3 + $0x6f0] sm:$0xff]
    %v685 = vld [vmem:[#allocation3 + $0x6f8] sm:$0xff]
    %v686 = vld [vmem:[#allocation3 + $0x700] sm:$0xff]
    %v687 = vld [vmem:[#allocation3 + $0x708] sm:$0xff]
    %v688 = vld [vmem:[#allocation3 + $0x710] sm:$0xff]
    %v689 = vld [vmem:[#allocation3 + $0x718] sm:$0xff]
    %v690 = vld [vmem:[#allocation3 + $0x720] sm:$0xff]
    %v691 = vld [vmem:[#allocation3 + $0x728] sm:$0xff]
    %v692 = vld [vmem:[#allocation3 + $0x730] sm:$0xff]
    %v693 = vld [vmem:[#allocation3 + $0x738] sm:$0xff]
    %v694 = vld [vmem:[#allocation3 + $0x740] sm:$0xff]
    %v695 = vld [vmem:[#allocation3 + $0x748] sm:$0xff]
    %v696 = vld [vmem:[#allocation3 + $0x750] sm:$0xff]
    %v697 = vld [vmem:[#allocation3 + $0x758] sm:$0xff]
    %v698 = vld [vmem:[#allocation3 + $0x760] sm:$0xff]
    %v699 = vld [vmem:[#allocation3 + $0x768] sm:$0xff]
    %v700 = vld [vmem:[#allocation3 + $0x770] sm:$0xff]
    %v701 = vld [vmem:[#allocation3 + $0x778] sm:$0xff]
    %v702 = vld [vmem:[#allocation3 + $0x780] sm:$0xff]
    %v703 = vld [vmem:[#allocation3 + $0x788] sm:$0xff]
    %v704 = vld [vmem:[#allocation3 + $0x790] sm:$0xff]
    %v705 = vld [vmem:[#allocation3 + $0x798] sm:$0xff]
    %v706 = vld [vmem:[#allocation3 + $0x7a0] sm:$0xff]
    %v707 = vld [vmem:[#allocation3 + $0x7a8] sm:$0xff]
    %v708 = vld [vmem:[#allocation3 + $0x7b0] sm:$0xff]
    %v709 = vld [vmem:[#allocation3 + $0x7b8] sm:$0xff]
    %v710 = vld [vmem:[#allocation3 + $0x7c0] sm:$0xff]
    %v711 = vld [vmem:[#allocation3 + $0x7c8] sm:$0xff]
    %v712 = vld [vmem:[#allocation3 + $0x7d0] sm:$0xff]
    %v713 = vld [vmem:[#allocation3 + $0x7d8] sm:$0xff]
    %v714 = vld [vmem:[#allocation3 + $0x7e0] sm:$0xff]
    %v715 = vld [vmem:[#allocation3 + $0x7e8] sm:$0xff]
    %v716 = vld [vmem:[#allocation3 + $0x7f0] sm:$0xff]
    %v717 = vld [vmem:[#allocation3 + $0x7f8] sm:$0xff]
    %v718 = vld [vmem:[#allocation3 + $0x800] sm:$0xff]
    %v719 = vld [vmem:[#allocation3 + $0x808] sm:$0xff]
    %v720 = vld [vmem:[#allocation3 + $0x810] sm:$0xff]
    %v721 = vld [vmem:[#allocation3 + $0x818] sm:$0xff]
    %v722 = vld [vmem:[#allocation3 + $0x820] sm:$0xff]
    %v723 = vld [vmem:[#allocation3 + $0x828] sm:$0xff]
    %v724 = vld [vmem:[#allocation3 + $0x830] sm:$0xff]
    %v725 = vld [vmem:[#allocation3 + $0x838] sm:$0xff]
    %v726 = vld [vmem:[#allocation3 + $0x840] sm:$0xff]
    %v727 = vld [vmem:[#allocation3 + $0x848] sm:$0xff]
    %v728 = vld [vmem:[#allocation3 + $0x850] sm:$0xff]
    %v729 = vld [vmem:[#allocation3 + $0x858] sm:$0xff]
    %v730 = vld [vmem:[#allocation3 + $0x860] sm:$0xff]
    %v731 = vld [vmem:[#allocation3 + $0x868] sm:$0xff]
    %v732 = vld [vmem:[#allocation3 + $0x870] sm:$0xff]
    %v733 = vld [vmem:[#allocation3 + $0x878] sm:$0xff]
    %v734 = vld [vmem:[#allocation3 + $0x880] sm:$0xff]
    %v735 = vld [vmem:[#allocation3 + $0x888] sm:$0xff]
    %v736 = vld [vmem:[#allocation3 + $0x890] sm:$0xff]
    %v737 = vld [vmem:[#allocation3 + $0x898] sm:$0xff]
    %v738 = vld [vmem:[#allocation3 + $0x8a0] sm:$0xff]
    %v739 = vld [vmem:[#allocation3 + $0x8a8] sm:$0xff]
    %v740 = vld [vmem:[#allocation3 + $0x8b0] sm:$0xff]
    %v741 = vld [vmem:[#allocation3 + $0x8b8] sm:$0xff]
    %v742 = vld [vmem:[#allocation3 + $0x8c0] sm:$0xff]
    %v743 = vld [vmem:[#allocation3 + $0x8c8] sm:$0xff]
    %v744 = vld [vmem:[#allocation3 + $0x8d0] sm:$0xff]
    %v745 = vld [vmem:[#allocation3 + $0x8d8] sm:$0xff]
    %v746 = vld [vmem:[#allocation3 + $0x8e0] sm:$0xff]
    %v747 = vld [vmem:[#allocation3 + $0x8e8] sm:$0xff]
    %v748 = vld [vmem:[#allocation3 + $0x8f0] sm:$0xff]
    %v749 = vld [vmem:[#allocation3 + $0x8f8] sm:$0xff]
    %v750 = vld [vmem:[#allocation3 + $0x900] sm:$0xff]
    %v751 = vld [vmem:[#allocation3 + $0x908] sm:$0xff]
    %v752 = vld [vmem:[#allocation3 + $0x910] sm:$0xff]
    %v753 = vld [vmem:[#allocation3 + $0x918] sm:$0xff]
    %v754 = vld [vmem:[#allocation3 + $0x920] sm:$0xff]
    %v755 = vld [vmem:[#allocation3 + $0x928] sm:$0xff]
    %v756 = vld [vmem:[#allocation3 + $0x930] sm:$0xff]
    %v757 = vld [vmem:[#allocation3 + $0x938] sm:$0xff]
    %v758 = vld [vmem:[#allocation3 + $0x940] sm:$0xff]
    %v759 = vld [vmem:[#allocation3 + $0x948] sm:$0xff]
    %v760 = vld [vmem:[#allocation3 + $0x950] sm:$0xff]
    %v761 = vld [vmem:[#allocation3 + $0x958] sm:$0xff]
    %v762 = vld [vmem:[#allocation3 + $0x960] sm:$0xff]
    %v763 = vld [vmem:[#allocation3 + $0x968] sm:$0xff]
    %v764 = vld [vmem:[#allocation3 + $0x970] sm:$0xff]
    %v765 = vld [vmem:[#allocation3 + $0x978] sm:$0xff]
    %v766 = vld [vmem:[#allocation3 + $0x980] sm:$0xff]
    %v767 = vld [vmem:[#allocation3 + $0x988] sm:$0xff]
    %v768 = vld [vmem:[#allocation3 + $0x990] sm:$0xff]
    %v769 = vld [vmem:[#allocation3 + $0x998] sm:$0xff]
    %v770 = vld [vmem:[#allocation3 + $0x9a0] sm:$0xff]
    %v771 = vld [vmem:[#allocation3 + $0x9a8] sm:$0xff]
    %v772 = vld [vmem:[#allocation3 + $0x9b0] sm:$0xff]
    %v773 = vld [vmem:[#allocation3 + $0x9b8] sm:$0xff]
    %v774 = vld [vmem:[#allocation3 + $0x9c0] sm:$0xff]
    %v775 = vld [vmem:[#allocation3 + $0x9c8] sm:$0xff]
    %v776 = vld [vmem:[#allocation3 + $0x9d0] sm:$0xff]
    %v777 = vld [vmem:[#allocation3 + $0x9d8] sm:$0xff]
    %v778 = vld [vmem:[#allocation3 + $0x9e0] sm:$0xff]
    %v779 = vld [vmem:[#allocation3 + $0x9e8] sm:$0xff]
    %v780 = vld [vmem:[#allocation3 + $0x9f0] sm:$0xff]
    %v781 = vld [vmem:[#allocation3 + $0x9f8] sm:$0xff]
    %v782 = vld [vmem:[#allocation3 + $0xa00] sm:$0xff]
    %v783 = vld [vmem:[#allocation3 + $0xa08] sm:$0xff]
    %v784 = vld [vmem:[#allocation3 + $0xa10] sm:$0xff]
    %v785 = vld [vmem:[#allocation3 + $0xa18] sm:$0xff]
    %v786 = vld [vmem:[#allocation3 + $0xa20] sm:$0xff]
    %v787 = vld [vmem:[#allocation3 + $0xa28] sm:$0xff]
    %v788 = vld [vmem:[#allocation3 + $0xa30] sm:$0xff]
    %v789 = vld [vmem:[#allocation3 + $0xa38] sm:$0xff]
    %v790 = vld [vmem:[#allocation3 + $0xa40] sm:$0xff]
    %v791 = vld [vmem:[#allocation3 + $0xa48] sm:$0xff]
    %v792 = vld [vmem:[#allocation3 + $0xa50] sm:$0xff]
    %v793 = vld [vmem:[#allocation3 + $0xa58] sm:$0xff]
    %v794 = vld [vmem:[#allocation3 + $0xa60] sm:$0xff]
    %v795 = vld [vmem:[#allocation3 + $0xa68] sm:$0xff]
    %v796 = vld [vmem:[#allocation3 + $0xa70] sm:$0xff]
    %v797 = vld [vmem:[#allocation3 + $0xa78] sm:$0xff]
    %v798 = vld [vmem:[#allocation3 + $0xa80] sm:$0xff]
    %v799 = vld [vmem:[#allocation3 + $0xa88] sm:$0xff]
    %v800 = vld [vmem:[#allocation3 + $0xa90] sm:$0xff]
    %v801 = vld [vmem:[#allocation3 + $0xa98] sm:$0xff]
    %v802 = vld [vmem:[#allocation3 + $0xaa0] sm:$0xff]
    %v803 = vld [vmem:[#allocation3 + $0xaa8] sm:$0xff]
    %v804 = vld [vmem:[#allocation3 + $0xab0] sm:$0xff]
    %v805 = vld [vmem:[#allocation3 + $0xab8] sm:$0xff]
    %v806 = vld [vmem:[#allocation3 + $0xac0] sm:$0xff]
    %v807 = vld [vmem:[#allocation3 + $0xac8] sm:$0xff]
    %v808 = vld [vmem:[#allocation3 + $0xad0] sm:$0xff]
    %v809 = vld [vmem:[#allocation3 + $0xad8] sm:$0xff]
    %v810 = vld [vmem:[#allocation3 + $0xae0] sm:$0xff]
    %v811 = vld [vmem:[#allocation3 + $0xae8] sm:$0xff]
    %v812 = vld [vmem:[#allocation3 + $0xaf0] sm:$0xff]
    %v813 = vld [vmem:[#allocation3 + $0xaf8] sm:$0xff]
    %v814 = vld [vmem:[#allocation3 + $0xb00] sm:$0xff]
    %v815 = vld [vmem:[#allocation3 + $0xb08] sm:$0xff]
    %v816 = vld [vmem:[#allocation3 + $0xb10] sm:$0xff]
    %v817 = vld [vmem:[#allocation3 + $0xb18] sm:$0xff]
    %v818 = vld [vmem:[#allocation3 + $0xb20] sm:$0xff]
    %v819 = vld [vmem:[#allocation3 + $0xb28] sm:$0xff]
    %v820 = vld [vmem:[#allocation3 + $0xb30] sm:$0xff]
    %v821 = vld [vmem:[#allocation3 + $0xb38] sm:$0xff]
    %v822 = vld [vmem:[#allocation3 + $0xb40] sm:$0xff]
    %v823 = vld [vmem:[#allocation3 + $0xb48] sm:$0xff]
    %v824 = vld [vmem:[#allocation3 + $0xb50] sm:$0xff]
    %v825 = vld [vmem:[#allocation3 + $0xb58] sm:$0xff]
    %v826 = vld [vmem:[#allocation3 + $0xb60] sm:$0xff]
    %v827 = vld [vmem:[#allocation3 + $0xb68] sm:$0xff]
    %v828 = vld [vmem:[#allocation3 + $0xb70] sm:$0xff]
    %v829 = vld [vmem:[#allocation3 + $0xb78] sm:$0xff]
    %v830 = vld [vmem:[#allocation3 + $0xb80] sm:$0xff]
    %v831 = vld [vmem:[#allocation3 + $0xb88] sm:$0xff]
    %v832 = vld [vmem:[#allocation3 + $0xb90] sm:$0xff]
    %v833 = vld [vmem:[#allocation3 + $0xb98] sm:$0xff]
    %v834 = vld [vmem:[#allocation3 + $0xba0] sm:$0xff]
    %v835 = vld [vmem:[#allocation3 + $0xba8] sm:$0xff]
    %v836 = vld [vmem:[#allocation3 + $0xbb0] sm:$0xff]
    %v837 = vld [vmem:[#allocation3 + $0xbb8] sm:$0xff]
    %v838 = vld [vmem:[#allocation3 + $0xbc0] sm:$0xff]
    %v839 = vld [vmem:[#allocation3 + $0xbc8] sm:$0xff]
    %v840 = vld [vmem:[#allocation3 + $0xbd0] sm:$0xff]
    %v841 = vld [vmem:[#allocation3 + $0xbd8] sm:$0xff]
    %v842 = vld [vmem:[#allocation3 + $0xbe0] sm:$0xff]
    %v843 = vld [vmem:[#allocation3 + $0xbe8] sm:$0xff]
    %v844 = vld [vmem:[#allocation3 + $0xbf0] sm:$0xff]
    %v845 = vld [vmem:[#allocation3 + $0xbf8] sm:$0xff]
    %v846 = vld [vmem:[#allocation3 + $0xc00] sm:$0xff]
    %v847 = vld [vmem:[#allocation3 + $0xc08] sm:$0xff]
    %v848 = vld [vmem:[#allocation3 + $0xc10] sm:$0xff]
    %v849 = vld [vmem:[#allocation3 + $0xc18] sm:$0xff]
    %v850 = vld [vmem:[#allocation3 + $0xc20] sm:$0xff]
    %v851 = vld [vmem:[#allocation3 + $0xc28] sm:$0xff]
    %v852 = vld [vmem:[#allocation3 + $0xc30] sm:$0xff]
    %v853 = vld [vmem:[#allocation3 + $0xc38] sm:$0xff]
    %v854 = vld [vmem:[#allocation3 + $0xc40] sm:$0xff]
    %v855 = vld [vmem:[#allocation3 + $0xc48] sm:$0xff]
    %v856 = vld [vmem:[#allocation3 + $0xc50] sm:$0xff]
    %v857 = vld [vmem:[#allocation3 + $0xc58] sm:$0xff]
    %v858 = vld [vmem:[#allocation3 + $0xc60] sm:$0xff]
    %v859 = vld [vmem:[#allocation3 + $0xc68] sm:$0xff]
    %v860 = vld [vmem:[#allocation3 + $0xc70] sm:$0xff]
    %v861 = vld [vmem:[#allocation3 + $0xc78] sm:$0xff]
    %v862 = vld [vmem:[#allocation3 + $0xc80] sm:$0xff]
    %v863 = vld [vmem:[#allocation3 + $0xc88] sm:$0xff]
    %v864 = vld [vmem:[#allocation3 + $0xc90] sm:$0xff]
    %v865 = vld [vmem:[#allocation3 + $0xc98] sm:$0xff]
    %v866 = vld [vmem:[#allocation3 + $0xca0] sm:$0xff]
    %v867 = vld [vmem:[#allocation3 + $0xca8] sm:$0xff]
    %v868 = vld [vmem:[#allocation3 + $0xcb0] sm:$0xff]
    %v869 = vld [vmem:[#allocation3 + $0xcb8] sm:$0xff]
    %v870 = vld [vmem:[#allocation3 + $0xcc0] sm:$0xff]
    %v871 = vld [vmem:[#allocation3 + $0xcc8] sm:$0xff]
    %v872 = vld [vmem:[#allocation3 + $0xcd0] sm:$0xff]
    %v873 = vld [vmem:[#allocation3 + $0xcd8] sm:$0xff]
    %v874 = vld [vmem:[#allocation3 + $0xce0] sm:$0xff]
    %v875 = vld [vmem:[#allocation3 + $0xce8] sm:$0xff]
    %v876 = vld [vmem:[#allocation3 + $0xcf0] sm:$0xff]
    %v877 = vld [vmem:[#allocation3 + $0xcf8] sm:$0xff]
    %v878 = vld [vmem:[#allocation3 + $0xd00] sm:$0xff]
    %v879 = vld [vmem:[#allocation3 + $0xd08] sm:$0xff]
    %v880 = vld [vmem:[#allocation3 + $0xd10] sm:$0xff]
    %v881 = vld [vmem:[#allocation3 + $0xd18] sm:$0xff]
    %v882 = vld [vmem:[#allocation3 + $0xd20] sm:$0xff]
    %v883 = vld [vmem:[#allocation3 + $0xd28] sm:$0xff]
    %v884 = vld [vmem:[#allocation3 + $0xd30] sm:$0xff]
    %v885 = vld [vmem:[#allocation3 + $0xd38] sm:$0xff]
    %v886 = vld [vmem:[#allocation3 + $0xd40] sm:$0xff]
    %v887 = vld [vmem:[#allocation3 + $0xd48] sm:$0xff]
    %v888 = vld [vmem:[#allocation3 + $0xd50] sm:$0xff]
    %v889 = vld [vmem:[#allocation3 + $0xd58] sm:$0xff]
    %v890 = vld [vmem:[#allocation3 + $0xd60] sm:$0xff]
    %v891 = vld [vmem:[#allocation3 + $0xd68] sm:$0xff]
    %v892 = vld [vmem:[#allocation3 + $0xd70] sm:$0xff]
    %v893 = vld [vmem:[#allocation3 + $0xd78] sm:$0xff]
    %v894 = vld [vmem:[#allocation3 + $0xd80] sm:$0xff]
    %v895 = vld [vmem:[#allocation3 + $0xd88] sm:$0xff]
    %v896 = vld [vmem:[#allocation3 + $0xd90] sm:$0xff]
    %v897 = vld [vmem:[#allocation3 + $0xd98] sm:$0xff]
    %v898 = vld [vmem:[#allocation3 + $0xda0] sm:$0xff]
    %v899 = vld [vmem:[#allocation3 + $0xda8] sm:$0xff]
    %v900 = vld [vmem:[#allocation3 + $0xdb0] sm:$0xff]
    %v901 = vld [vmem:[#allocation3 + $0xdb8] sm:$0xff]
    %v902 = vld [vmem:[#allocation3 + $0xdc0] sm:$0xff]
    %v903 = vld [vmem:[#allocation3 + $0xdc8] sm:$0xff]
    %v904 = vld [vmem:[#allocation3 + $0xdd0] sm:$0xff]
    %v905 = vld [vmem:[#allocation3 + $0xdd8] sm:$0xff]
    %v906 = vld [vmem:[#allocation3 + $0xde0] sm:$0xff]
    %v907 = vld [vmem:[#allocation3 + $0xde8] sm:$0xff]
    %v908 = vld [vmem:[#allocation3 + $0xdf0] sm:$0xff]
    %v909 = vld [vmem:[#allocation3 + $0xdf8] sm:$0xff]
    %v910 = vld [vmem:[#allocation3 + $0xe00] sm:$0xff]
    %v911 = vld [vmem:[#allocation3 + $0xe08] sm:$0xff]
    %v912 = vld [vmem:[#allocation3 + $0xe10] sm:$0xff]
    %v913 = vld [vmem:[#allocation3 + $0xe18] sm:$0xff]
    %v914 = vld [vmem:[#allocation3 + $0xe20] sm:$0xff]
    %v915 = vld [vmem:[#allocation3 + $0xe28] sm:$0xff]
    %v916 = vld [vmem:[#allocation3 + $0xe30] sm:$0xff]
    %v917 = vld [vmem:[#allocation3 + $0xe38] sm:$0xff]
    %v918 = vld [vmem:[#allocation3 + $0xe40] sm:$0xff]
    %v919 = vld [vmem:[#allocation3 + $0xe48] sm:$0xff]
    %v920 = vld [vmem:[#allocation3 + $0xe50] sm:$0xff]
    %v921 = vld [vmem:[#allocation3 + $0xe58] sm:$0xff]
    %v922 = vld [vmem:[#allocation3 + $0xe60] sm:$0xff]
    %v923 = vld [vmem:[#allocation3 + $0xe68] sm:$0xff]
    %v924 = vld [vmem:[#allocation3 + $0xe70] sm:$0xff]
    %v925 = vld [vmem:[#allocation3 + $0xe78] sm:$0xff]
    %v926 = vld [vmem:[#allocation3 + $0xe80] sm:$0xff]
    %v927 = vld [vmem:[#allocation3 + $0xe88] sm:$0xff]
    %v928 = vld [vmem:[#allocation3 + $0xe90] sm:$0xff]
    %v929 = vld [vmem:[#allocation3 + $0xe98] sm:$0xff]
    %v930 = vld [vmem:[#allocation3 + $0xea0] sm:$0xff]
    %v931 = vld [vmem:[#allocation3 + $0xea8] sm:$0xff]
    %v932 = vld [vmem:[#allocation3 + $0xeb0] sm:$0xff]
    %v933 = vld [vmem:[#allocation3 + $0xeb8] sm:$0xff]
    %v934 = vld [vmem:[#allocation3 + $0xec0] sm:$0xff]
    %v935 = vld [vmem:[#allocation3 + $0xec8] sm:$0xff]
    %v936 = vld [vmem:[#allocation3 + $0xed0] sm:$0xff]
    %v937 = vld [vmem:[#allocation3 + $0xed8] sm:$0xff]
    %v938 = vld [vmem:[#allocation3 + $0xee0] sm:$0xff]
    %v939 = vld [vmem:[#allocation3 + $0xee8] sm:$0xff]
    %v940 = vld [vmem:[#allocation3 + $0xef0] sm:$0xff]
    %v941 = vld [vmem:[#allocation3 + $0xef8] sm:$0xff]
    %v942 = vld [vmem:[#allocation3 + $0xf00] sm:$0xff]
    %v943 = vld [vmem:[#allocation3 + $0xf08] sm:$0xff]
    %v944 = vld [vmem:[#allocation3 + $0xf10] sm:$0xff]
    %v945 = vld [vmem:[#allocation3 + $0xf18] sm:$0xff]
    %v946 = vld [vmem:[#allocation3 + $0xf20] sm:$0xff]
    %v947 = vld [vmem:[#allocation3 + $0xf28] sm:$0xff]
    %v948 = vld [vmem:[#allocation3 + $0xf30] sm:$0xff]
    %v949 = vld [vmem:[#allocation3 + $0xf38] sm:$0xff]
    %v950 = vld [vmem:[#allocation3 + $0xf40] sm:$0xff]
    %v951 = vld [vmem:[#allocation3 + $0xf48] sm:$0xff]
    %v952 = vld [vmem:[#allocation3 + $0xf50] sm:$0xff]
    %v953 = vld [vmem:[#allocation3 + $0xf58] sm:$0xff]
    %v954 = vld [vmem:[#allocation3 + $0xf60] sm:$0xff]
    %v955 = vld [vmem:[#allocation3 + $0xf68] sm:$0xff]
    %v956 = vld [vmem:[#allocation3 + $0xf70] sm:$0xff]
    %v957 = vld [vmem:[#allocation3 + $0xf78] sm:$0xff]
    %v958 = vld [vmem:[#allocation3 + $0xf80] sm:$0xff]
    %v959 = vld [vmem:[#allocation3 + $0xf88] sm:$0xff]
    %v960 = vld [vmem:[#allocation3 + $0xf90] sm:$0xff]
    %v961 = vld [vmem:[#allocation3 + $0xf98] sm:$0xff]
    %v962 = vld [vmem:[#allocation3 + $0xfa0] sm:$0xff]
    %v963 = vld [vmem:[#allocation3 + $0xfa8] sm:$0xff]
    %v964 = vld [vmem:[#allocation3 + $0xfb0] sm:$0xff]
    %v965 = vld [vmem:[#allocation3 + $0xfb8] sm:$0xff]
    %v966 = vld [vmem:[#allocation3 + $0xfc0] sm:$0xff]
    %v967 = vld [vmem:[#allocation3 + $0xfc8] sm:$0xff]
    %v968 = vld [vmem:[#allocation3 + $0xfd0] sm:$0xff]
    %v969 = vld [vmem:[#allocation3 + $0xfd8] sm:$0xff]
    %v970 = vld [vmem:[#allocation3 + $0xfe0] sm:$0xff]
    %v971 = vld [vmem:[#allocation3 + $0xfe8] sm:$0xff]
    %v972 = vld [vmem:[#allocation3 + $0xff0] sm:$0xff]
    %v973 = vld [vmem:[#allocation3 + $0xff8] sm:$0xff]
    %v974 = vld [vmem:[#allocation3 + $0x1000] sm:$0xff]
    %v975 = vld [vmem:[#allocation3 + $0x1008] sm:$0xff]
    %v976 = vld [vmem:[#allocation3 + $0x1010] sm:$0xff]
    %v977 = vld [vmem:[#allocation3 + $0x1018] sm:$0xff]
    %v978 = vld [vmem:[#allocation3 + $0x1020] sm:$0xff]
    %v979 = vld [vmem:[#allocation3 + $0x1028] sm:$0xff]
    %v980 = vld [vmem:[#allocation3 + $0x1030] sm:$0xff]
    %v981 = vld [vmem:[#allocation3 + $0x1038] sm:$0xff]
    %v982 = vld [vmem:[#allocation3 + $0x1040] sm:$0xff]
    %v983 = vld [vmem:[#allocation3 + $0x1048] sm:$0xff]
    %v984 = vld [vmem:[#allocation3 + $0x1050] sm:$0xff]
    %v985 = vld [vmem:[#allocation3 + $0x1058] sm:$0xff]
    %v986 = vld [vmem:[#allocation3 + $0x1060] sm:$0xff]
    %v987 = vld [vmem:[#allocation3 + $0x1068] sm:$0xff]
    %v988 = vld [vmem:[#allocation3 + $0x1070] sm:$0xff]
    %v989 = vld [vmem:[#allocation3 + $0x1078] sm:$0xff]
    %v990 = vld [vmem:[#allocation3 + $0x1080] sm:$0xff]
    %v991 = vld [vmem:[#allocation3 + $0x1088] sm:$0xff]
    %v992 = vld [vmem:[#allocation3 + $0x1090] sm:$0xff]
    %v993 = vld [vmem:[#allocation3 + $0x1098] sm:$0xff]
    %v994 = vld [vmem:[#allocation3 + $0x10a0] sm:$0xff]
    %v995 = vld [vmem:[#allocation3 + $0x10a8] sm:$0xff]
    %v996 = vld [vmem:[#allocation3 + $0x10b0] sm:$0xff]
    %v997 = vld [vmem:[#allocation3 + $0x10b8] sm:$0xff]
    %v998 = vld [vmem:[#allocation3 + $0x10c0] sm:$0xff]
    %v999 = vld [vmem:[#allocation3 + $0x10c8] sm:$0xff]
    %v1000 = vld [vmem:[#allocation3 + $0x10d0] sm:$0xff]
    %v1001 = vld [vmem:[#allocation3 + $0x10d8] sm:$0xff]
    %v1002 = vld [vmem:[#allocation3 + $0x10e0] sm:$0xff]
    %v1003 = vld [vmem:[#allocation3 + $0x10e8] sm:$0xff]
    %v1004 = vld [vmem:[#allocation3 + $0x10f0] sm:$0xff]
    %v1005 = vld [vmem:[#allocation3 + $0x10f8] sm:$0xff]
    %v1006 = vld [vmem:[#allocation3 + $0x1100] sm:$0xff]
    %v1007 = vld [vmem:[#allocation3 + $0x1108] sm:$0xff]
    %v1008 = vld [vmem:[#allocation3 + $0x1110] sm:$0xff]
    %v1009 = vld [vmem:[#allocation3 + $0x1118] sm:$0xff]
    %v1010 = vld [vmem:[#allocation3 + $0x1120] sm:$0xff]
    %v1011 = vld [vmem:[#allocation3 + $0x1128] sm:$0xff]
    %v1012 = vld [vmem:[#allocation3 + $0x1130] sm:$0xff]
    %v1013 = vld [vmem:[#allocation3 + $0x1138] sm:$0xff]
    %v1014 = vld [vmem:[#allocation3 + $0x1140] sm:$0xff]
    %v1015 = vld [vmem:[#allocation3 + $0x1148] sm:$0xff]
    %v1016 = vld [vmem:[#allocation3 + $0x1150] sm:$0xff]
    %v1017 = vld [vmem:[#allocation3 + $0x1158] sm:$0xff]
    %v1018 = vld [vmem:[#allocation3 + $0x1160] sm:$0xff]
    %v1019 = vld [vmem:[#allocation3 + $0x1168] sm:$0xff]
    %v1020 = vld [vmem:[#allocation3 + $0x1170] sm:$0xff]
    %v1021 = vld [vmem:[#allocation3 + $0x1178] sm:$0xff]
    %v1022 = vld [vmem:[#allocation3 + $0x1180] sm:$0xff]
    %v1023 = vld [vmem:[#allocation3 + $0x1188] sm:$0xff]
    %v1024 = vld [vmem:[#allocation3 + $0x1190] sm:$0xff]
    %v1025 = vld [vmem:[#allocation3 + $0x1198] sm:$0xff]
    %v1026 = vld [vmem:[#allocation3 + $0x11a0] sm:$0xff]
    %v1027 = vld [vmem:[#allocation3 + $0x11a8] sm:$0xff]
    %v1028 = vld [vmem:[#allocation3 + $0x11b0] sm:$0xff]
    %v1029 = vld [vmem:[#allocation3 + $0x11b8] sm:$0xff]
    %v1030 = vld [vmem:[#allocation3 + $0x11c0] sm:$0xff]
    %v1031 = vld [vmem:[#allocation3 + $0x11c8] sm:$0xff]
    %v1032 = vld [vmem:[#allocation3 + $0x11d0] sm:$0xff]
    %v1033 = vld [vmem:[#allocation3 + $0x11d8] sm:$0xff]
    %v1034 = vld [vmem:[#allocation3 + $0x11e0] sm:$0xff]
    %v1035 = vld [vmem:[#allocation3 + $0x11e8] sm:$0xff]
    %v1036 = vld [vmem:[#allocation3 + $0x11f0] sm:$0xff]
    %v1037 = vld [vmem:[#allocation3 + $0x11f8] sm:$0xff]
    %v1038 = vld [vmem:[#allocation3 + $0x1200] sm:$0xff]
    %v1039 = vld [vmem:[#allocation3 + $0x1208] sm:$0xff]
    %v1040 = vld [vmem:[#allocation3 + $0x1210] sm:$0xff]
    %v1041 = vld [vmem:[#allocation3 + $0x1218] sm:$0xff]
    %v1042 = vld [vmem:[#allocation3 + $0x1220] sm:$0xff]
    %v1043 = vld [vmem:[#allocation3 + $0x1228] sm:$0xff]
    %v1044 = vld [vmem:[#allocation3 + $0x1230] sm:$0xff]
    %v1045 = vld [vmem:[#allocation3 + $0x1238] sm:$0xff]
    %v1046 = vld [vmem:[#allocation3 + $0x1240] sm:$0xff]
    %v1047 = vld [vmem:[#allocation3 + $0x1248] sm:$0xff]
    %v1048 = vld [vmem:[#allocation3 + $0x1250] sm:$0xff]
    %v1049 = vld [vmem:[#allocation3 + $0x1258] sm:$0xff]
    %v1050 = vld [vmem:[#allocation3 + $0x1260] sm:$0xff]
    %v1051 = vld [vmem:[#allocation3 + $0x1268] sm:$0xff]
    %v1052 = vld [vmem:[#allocation3 + $0x1270] sm:$0xff]
    %v1053 = vld [vmem:[#allocation3 + $0x1278] sm:$0xff]
    %v1054 = vld [vmem:[#allocation3 + $0x1280] sm:$0xff]
    %v1055 = vld [vmem:[#allocation3 + $0x1288] sm:$0xff]
    %v1056 = vld [vmem:[#allocation3 + $0x1290] sm:$0xff]
    %v1057 = vld [vmem:[#allocation3 + $0x1298] sm:$0xff]
    %v1058 = vld [vmem:[#allocation3 + $0x12a0] sm:$0xff]
    %v1059 = vld [vmem:[#allocation3 + $0x12a8] sm:$0xff]
    %v1060 = vld [vmem:[#allocation3 + $0x12b0] sm:$0xff]
    %v1061 = vld [vmem:[#allocation3 + $0x12b8] sm:$0xff]
    %v1062 = vld [vmem:[#allocation3 + $0x12c0] sm:$0xff]
    %v1063 = vld [vmem:[#allocation3 + $0x12c8] sm:$0xff]
    %v1064 = vld [vmem:[#allocation3 + $0x12d0] sm:$0xff]
    %v1065 = vld [vmem:[#allocation3 + $0x12d8] sm:$0xff]
    %v1066 = vld [vmem:[#allocation3 + $0x12e0] sm:$0xff]
    %v1067 = vld [vmem:[#allocation3 + $0x12e8] sm:$0xff]
    %v1068 = vld [vmem:[#allocation3 + $0x12f0] sm:$0xff]
    %v1069 = vld [vmem:[#allocation3 + $0x12f8] sm:$0xff]
    %v1070 = vld [vmem:[#allocation3 + $0x1300] sm:$0xff]
    %v1071 = vld [vmem:[#allocation3 + $0x1308] sm:$0xff]
    %v1072 = vld [vmem:[#allocation3 + $0x1310] sm:$0xff]
    %v1073 = vld [vmem:[#allocation3 + $0x1318] sm:$0xff]
    %v1074 = vld [vmem:[#allocation3 + $0x1320] sm:$0xff]
    %v1075 = vld [vmem:[#allocation3 + $0x1328] sm:$0xff]
    %v1076 = vld [vmem:[#allocation3 + $0x1330] sm:$0xff]
    %v1077 = vld [vmem:[#allocation3 + $0x1338] sm:$0xff]
    %v1078 = vld [vmem:[#allocation3 + $0x1340] sm:$0xff]
    %v1079 = vld [vmem:[#allocation3 + $0x1348] sm:$0xff]
    %v1080 = vld [vmem:[#allocation3 + $0x1350] sm:$0xff]
    %v1081 = vld [vmem:[#allocation3 + $0x1358] sm:$0xff]
    %v1082 = vld [vmem:[#allocation3 + $0x1360] sm:$0xff]
    %v1083 = vld [vmem:[#allocation3 + $0x1368] sm:$0xff]
    %v1084 = vld [vmem:[#allocation3 + $0x1370] sm:$0xff]
    %v1085 = vld [vmem:[#allocation3 + $0x1378] sm:$0xff]
    %v1086 = vld [vmem:[#allocation3 + $0x1380] sm:$0xff]
    %v1087 = vld [vmem:[#allocation3 + $0x1388] sm:$0xff]
    %v1088 = vld [vmem:[#allocation3 + $0x1390] sm:$0xff]
    %v1089 = vld [vmem:[#allocation3 + $0x1398] sm:$0xff]
    %v1090 = vld [vmem:[#allocation3 + $0x13a0] sm:$0xff]
    %v1091 = vld [vmem:[#allocation3 + $0x13a8] sm:$0xff]
    %v1092 = vld [vmem:[#allocation3 + $0x13b0] sm:$0xff]
    %v1093 = vld [vmem:[#allocation3 + $0x13b8] sm:$0xff]
    %v1094 = vld [vmem:[#allocation3 + $0x13c0] sm:$0xff]
    %v1095 = vld [vmem:[#allocation3 + $0x13c8] sm:$0xff]
    %v1096 = vld [vmem:[#allocation3 + $0x13d0] sm:$0xff]
    %v1097 = vld [vmem:[#allocation3 + $0x13d8] sm:$0xff]
    %v1098 = vld [vmem:[#allocation3 + $0x13e0] sm:$0xff]
    %v1099 = vld [vmem:[#allocation3 + $0x13e8] sm:$0xff]
    %v1100 = vld [vmem:[#allocation3 + $0x13f0] sm:$0xff]
    %v1101 = vld [vmem:[#allocation3 + $0x13f8] sm:$0xff]
    %v1102 = vld [vmem:[#allocation3 + $0x1400] sm:$0xff]
    %v1103 = vld [vmem:[#allocation3 + $0x1408] sm:$0xff]
    %v1104 = vld [vmem:[#allocation3 + $0x1410] sm:$0xff]
    %v1105 = vld [vmem:[#allocation3 + $0x1418] sm:$0xff]
    %v1106 = vld [vmem:[#allocation3 + $0x1420] sm:$0xff]
    %v1107 = vld [vmem:[#allocation3 + $0x1428] sm:$0xff]
    %v1108 = vld [vmem:[#allocation3 + $0x1430] sm:$0xff]
    %v1109 = vld [vmem:[#allocation3 + $0x1438] sm:$0xff]
    %v1110 = vld [vmem:[#allocation3 + $0x1440] sm:$0xff]
    %v1111 = vld [vmem:[#allocation3 + $0x1448] sm:$0xff]
    %v1112 = vld [vmem:[#allocation3 + $0x1450] sm:$0xff]
    %v1113 = vld [vmem:[#allocation3 + $0x1458] sm:$0xff]
    %v1114 = vld [vmem:[#allocation3 + $0x1460] sm:$0xff]
    %v1115 = vld [vmem:[#allocation3 + $0x1468] sm:$0xff]
    %v1116 = vld [vmem:[#allocation3 + $0x1470] sm:$0xff]
    %v1117 = vld [vmem:[#allocation3 + $0x1478] sm:$0xff]
    %v1118 = vld [vmem:[#allocation3 + $0x1480] sm:$0xff]
    %v1119 = vld [vmem:[#allocation3 + $0x1488] sm:$0xff]
    %v1120 = vld [vmem:[#allocation3 + $0x1490] sm:$0xff]
    %v1121 = vld [vmem:[#allocation3 + $0x1498] sm:$0xff]
    %v1122 = vld [vmem:[#allocation3 + $0x14a0] sm:$0xff]
    %v1123 = vld [vmem:[#allocation3 + $0x14a8] sm:$0xff]
    %v1124 = vld [vmem:[#allocation3 + $0x14b0] sm:$0xff]
    %v1125 = vld [vmem:[#allocation3 + $0x14b8] sm:$0xff]
    %v1126 = vld [vmem:[#allocation3 + $0x14c0] sm:$0xff]
    %v1127 = vld [vmem:[#allocation3 + $0x14c8] sm:$0xff]
    %v1128 = vld [vmem:[#allocation3 + $0x14d0] sm:$0xff]
    %v1129 = vld [vmem:[#allocation3 + $0x14d8] sm:$0xff]
    %v1130 = vld [vmem:[#allocation3 + $0x14e0] sm:$0xff]
    %v1131 = vld [vmem:[#allocation3 + $0x14e8] sm:$0xff]
    %v1132 = vld [vmem:[#allocation3 + $0x14f0] sm:$0xff]
    %v1133 = vld [vmem:[#allocation3 + $0x14f8] sm:$0xff]
    %v1134 = vld [vmem:[#allocation3 + $0x1500] sm:$0xff]
    %v1135 = vld [vmem:[#allocation3 + $0x1508] sm:$0xff]
    %v1136 = vld [vmem:[#allocation3 + $0x1510] sm:$0xff]
    %v1137 = vld [vmem:[#allocation3 + $0x1518] sm:$0xff]
    %v1138 = vld [vmem:[#allocation3 + $0x1520] sm:$0xff]
    %v1139 = vld [vmem:[#allocation3 + $0x1528] sm:$0xff]
    %v1140 = vld [vmem:[#allocation3 + $0x1530] sm:$0xff]
    %v1141 = vld [vmem:[#allocation3 + $0x1538] sm:$0xff]
    %v1142 = vld [vmem:[#allocation3 + $0x1540] sm:$0xff]
    %v1143 = vld [vmem:[#allocation3 + $0x1548] sm:$0xff]
    %v1144 = vld [vmem:[#allocation3 + $0x1550] sm:$0xff]
    %v1145 = vld [vmem:[#allocation3 + $0x1558] sm:$0xff]
    %v1146 = vld [vmem:[#allocation3 + $0x1560] sm:$0xff]
    %v1147 = vld [vmem:[#allocation3 + $0x1568] sm:$0xff]
    %v1148 = vld [vmem:[#allocation3 + $0x1570] sm:$0xff]
    %v1149 = vld [vmem:[#allocation3 + $0x1578] sm:$0xff]
    %v1150 = vld [vmem:[#allocation3 + $0x1580] sm:$0xff]
    %v1151 = vld [vmem:[#allocation3 + $0x1588] sm:$0xff]
    %v1152 = vld [vmem:[#allocation3 + $0x1590] sm:$0xff]
    %v1153 = vld [vmem:[#allocation3 + $0x1598] sm:$0xff]
    %v1154 = vld [vmem:[#allocation3 + $0x15a0] sm:$0xff]
    %v1155 = vld [vmem:[#allocation3 + $0x15a8] sm:$0xff]
    %v1156 = vld [vmem:[#allocation3 + $0x15b0] sm:$0xff]
    %v1157 = vld [vmem:[#allocation3 + $0x15b8] sm:$0xff]
    %v1158 = vld [vmem:[#allocation3 + $0x15c0] sm:$0xff]
    %v1159 = vld [vmem:[#allocation3 + $0x15c8] sm:$0xff]
    %v1160 = vld [vmem:[#allocation3 + $0x15d0] sm:$0xff]
    %v1161 = vld [vmem:[#allocation3 + $0x15d8] sm:$0xff]
    %v1162 = vld [vmem:[#allocation3 + $0x15e0] sm:$0xff]
    %v1163 = vld [vmem:[#allocation3 + $0x15e8] sm:$0xff]
    %v1164 = vld [vmem:[#allocation3 + $0x15f0] sm:$0xff]
    %v1165 = vld [vmem:[#allocation3 + $0x15f8] sm:$0xff]
    %v1166 = vld [vmem:[#allocation3 + $0x1600] sm:$0xff]
    %v1167 = vld [vmem:[#allocation3 + $0x1608] sm:$0xff]
    %v1168 = vld [vmem:[#allocation3 + $0x1610] sm:$0xff]
    %v1169 = vld [vmem:[#allocation3 + $0x1618] sm:$0xff]
    %v1170 = vld [vmem:[#allocation3 + $0x1620] sm:$0xff]
    %v1171 = vld [vmem:[#allocation3 + $0x1628] sm:$0xff]
    %v1172 = vld [vmem:[#allocation3 + $0x1630] sm:$0xff]
    %v1173 = vld [vmem:[#allocation3 + $0x1638] sm:$0xff]
    %v1174 = vld [vmem:[#allocation3 + $0x1640] sm:$0xff]
    %v1175 = vld [vmem:[#allocation3 + $0x1648] sm:$0xff]
    %v1176 = vld [vmem:[#allocation3 + $0x1650] sm:$0xff]
    %v1177 = vld [vmem:[#allocation3 + $0x1658] sm:$0xff]
    %v1178 = vld [vmem:[#allocation3 + $0x1660] sm:$0xff]
    %v1179 = vld [vmem:[#allocation3 + $0x1668] sm:$0xff]
    %v1180 = vld [vmem:[#allocation3 + $0x1670] sm:$0xff]
    %v1181 = vld [vmem:[#allocation3 + $0x1678] sm:$0xff]
    %v1215 = vunpack.c.l.s4 1966171168
    %v1216 = vunpack.c.0.s8 %v1215
    %v1217 = vlaneseq
    %v1218 = vshrl.u32 %v1217, 7
    %v1219 = vsub.s32 %v1216, %v1218
    %v1220 = vrot.slane %v430, %v1219
    %v1222 = vunpack.c.l.s4 1966171168
    %v1223 = vunpack.c.0.s8 %v1222
    %v1224 = vlaneseq
    %v1225 = vshrl.u32 %v1224, 7
    %v1226 = vsub.s32 %v1223, %v1225
    %v1227 = vrot.slane %v431, %v1226
    %v1229 = vunpack.c.l.s4 1966171168
    %v1230 = vunpack.c.0.s8 %v1229
    %v1231 = vlaneseq
    %v1232 = vshrl.u32 %v1231, 7
    %v1233 = vsub.s32 %v1230, %v1232
    %v1234 = vrot.slane %v432, %v1233
    %v1236 = vunpack.c.l.s4 1966171168
    %v1237 = vunpack.c.0.s8 %v1236
    %v1238 = vlaneseq
    %v1239 = vshrl.u32 %v1238, 7
    %v1240 = vsub.s32 %v1237, %v1239
    %v1241 = vrot.slane %v433, %v1240
    %v1242 = vcombine.low %v1220, %v1227
    %v1243 = vcombine.high %v1220, %v1227
    %v1244 = vcombine.low %v1234, %v1241
    %v1245 = vcombine.high %v1234, %v1241
    %v1247 = vunpack.c.l.s4 1966171168
    %v1248 = vunpack.c.0.s8 %v1247
    %v1249 = vlaneseq
    %v1250 = vshrl.u32 %v1249, 7
    %v1251 = vsub.s32 %v1248, %v1250
    %v1252 = vrot.slane %v1242, %v1251
    %v1254 = vunpack.c.l.s4 1966171168
    %v1255 = vunpack.c.0.s8 %v1254
    %v1256 = vlaneseq
    %v1257 = vshrl.u32 %v1256, 7
    %v1258 = vsub.s32 %v1255, %v1257
    %v1259 = vrot.slane %v1243, %v1258
    %v1261 = vunpack.c.l.s4 1966171168
    %v1262 = vunpack.c.0.s8 %v1261
    %v1263 = vlaneseq
    %v1264 = vshrl.u32 %v1263, 7
    %v1265 = vsub.s32 %v1262, %v1264
    %v1266 = vrot.slane %v1244, %v1265
    %v1268 = vunpack.c.l.s4 1966171168
    %v1269 = vunpack.c.0.s8 %v1268
    %v1270 = vlaneseq
    %v1271 = vshrl.u32 %v1270, 7
    %v1272 = vsub.s32 %v1269, %v1271
    %v1273 = vrot.slane %v1245, %v1272
    %v1274 = vcombine.low %v1252, %v1266
    %v1275 = vcombine.high %v1252, %v1266
    %v1276 = vcombine.low %v1259, %v1273
    %v1277 = vcombine.high %v1259, %v1273
    %v1279 = vunpack.c.l.s4 1966171168
    %v1280 = vunpack.c.0.s8 %v1279
    %v1281 = vlaneseq
    %v1282 = vshrl.u32 %v1281, 7
    %v1283 = vsub.s32 %v1280, %v1282
    %v1284 = vrot.slane %v434, %v1283
    %v1286 = vunpack.c.l.s4 1966171168
    %v1287 = vunpack.c.0.s8 %v1286
    %v1288 = vlaneseq
    %v1289 = vshrl.u32 %v1288, 7
    %v1290 = vsub.s32 %v1287, %v1289
    %v1291 = vrot.slane %v435, %v1290
    %v1293 = vunpack.c.l.s4 1966171168
    %v1294 = vunpack.c.0.s8 %v1293
    %v1295 = vlaneseq
    %v1296 = vshrl.u32 %v1295, 7
    %v1297 = vsub.s32 %v1294, %v1296
    %v1298 = vrot.slane %v436, %v1297
    %v1300 = vunpack.c.l.s4 1966171168
    %v1301 = vunpack.c.0.s8 %v1300
    %v1302 = vlaneseq
    %v1303 = vshrl.u32 %v1302, 7
    %v1304 = vsub.s32 %v1301, %v1303
    %v1305 = vrot.slane %v437, %v1304
    %v1306 = vcombine.low %v1284, %v1291
    %v1307 = vcombine.high %v1284, %v1291
    %v1308 = vcombine.low %v1298, %v1305
    %v1309 = vcombine.high %v1298, %v1305
    %v1311 = vunpack.c.l.s4 1966171168
    %v1312 = vunpack.c.0.s8 %v1311
    %v1313 = vlaneseq
    %v1314 = vshrl.u32 %v1313, 7
    %v1315 = vsub.s32 %v1312, %v1314
    %v1316 = vrot.slane %v1306, %v1315
    %v1318 = vunpack.c.l.s4 1966171168
    %v1319 = vunpack.c.0.s8 %v1318
    %v1320 = vlaneseq
    %v1321 = vshrl.u32 %v1320, 7
    %v1322 = vsub.s32 %v1319, %v1321
    %v1323 = vrot.slane %v1307, %v1322
    %v1325 = vunpack.c.l.s4 1966171168
    %v1326 = vunpack.c.0.s8 %v1325
    %v1327 = vlaneseq
    %v1328 = vshrl.u32 %v1327, 7
    %v1329 = vsub.s32 %v1326, %v1328
    %v1330 = vrot.slane %v1308, %v1329
    %v1332 = vunpack.c.l.s4 1966171168
    %v1333 = vunpack.c.0.s8 %v1332
    %v1334 = vlaneseq
    %v1335 = vshrl.u32 %v1334, 7
    %v1336 = vsub.s32 %v1333, %v1335
    %v1337 = vrot.slane %v1309, %v1336
    %v1338 = vcombine.low %v1316, %v1330
    %v1339 = vcombine.high %v1316, %v1330
    %v1340 = vcombine.low %v1323, %v1337
    %v1341 = vcombine.high %v1323, %v1337
    %v1343 = vunpack.c.l.s4 1966171168
    %v1344 = vunpack.c.0.s8 %v1343
    %v1345 = vlaneseq
    %v1346 = vshrl.u32 %v1345, 7
    %v1347 = vsub.s32 %v1344, %v1346
    %v1348 = vrot.slane %v438, %v1347
    %v1350 = vunpack.c.l.s4 1966171168
    %v1351 = vunpack.c.0.s8 %v1350
    %v1352 = vlaneseq
    %v1353 = vshrl.u32 %v1352, 7
    %v1354 = vsub.s32 %v1351, %v1353
    %v1355 = vrot.slane %v439, %v1354
    %v1357 = vunpack.c.l.s4 1966171168
    %v1358 = vunpack.c.0.s8 %v1357
    %v1359 = vlaneseq
    %v1360 = vshrl.u32 %v1359, 7
    %v1361 = vsub.s32 %v1358, %v1360
    %v1362 = vrot.slane %v440, %v1361
    %v1364 = vunpack.c.l.s4 1966171168
    %v1365 = vunpack.c.0.s8 %v1364
    %v1366 = vlaneseq
    %v1367 = vshrl.u32 %v1366, 7
    %v1368 = vsub.s32 %v1365, %v1367
    %v1369 = vrot.slane %v441, %v1368
    %v1370 = vcombine.low %v1348, %v1355
    %v1371 = vcombine.low %v1362, %v1369
    %v1373 = vunpack.c.l.s4 1966171168
    %v1374 = vunpack.c.0.s8 %v1373
    %v1375 = vlaneseq
    %v1376 = vshrl.u32 %v1375, 7
    %v1377 = vsub.s32 %v1374, %v1376
    %v1378 = vrot.slane %v1370, %v1377
    %v1380 = vunpack.c.l.s4 1966171168
    %v1381 = vunpack.c.0.s8 %v1380
    %v1382 = vlaneseq
    %v1383 = vshrl.u32 %v1382, 7
    %v1384 = vsub.s32 %v1381, %v1383
    %v1385 = vrot.slane %v1371, %v1384
    %v1386 = vcombine.low %v1378, %v1385
    %v1388 = vunpack.c.l.s4 1966171168
    %v1389 = vunpack.c.0.s8 %v1388
    %v1390 = vlaneseq
    %v1391 = vshrl.u32 %v1390, 7
    %v1392 = vsub.s32 %v1389, %v1391
    %v1393 = vrot.slane %v442, %v1392
    %v1395 = vunpack.c.l.s4 1966171168
    %v1396 = vunpack.c.0.s8 %v1395
    %v1397 = vlaneseq
    %v1398 = vshrl.u32 %v1397, 7
    %v1399 = vsub.s32 %v1396, %v1398
    %v1400 = vrot.slane %v443, %v1399
    %v1402 = vunpack.c.l.s4 1966171168
    %v1403 = vunpack.c.0.s8 %v1402
    %v1404 = vlaneseq
    %v1405 = vshrl.u32 %v1404, 7
    %v1406 = vsub.s32 %v1403, %v1405
    %v1407 = vrot.slane %v444, %v1406
    %v1409 = vunpack.c.l.s4 1966171168
    %v1410 = vunpack.c.0.s8 %v1409
    %v1411 = vlaneseq
    %v1412 = vshrl.u32 %v1411, 7
    %v1413 = vsub.s32 %v1410, %v1412
    %v1414 = vrot.slane %v445, %v1413
    %v1415 = vcombine.low %v1393, %v1400
    %v1416 = vcombine.low %v1407, %v1414
    %v1418 = vunpack.c.l.s4 1966171168
    %v1419 = vunpack.c.0.s8 %v1418
    %v1420 = vlaneseq
    %v1421 = vshrl.u32 %v1420, 7
    %v1422 = vsub.s32 %v1419, %v1421
    %v1423 = vrot.slane %v1415, %v1422
    %v1425 = vunpack.c.l.s4 1966171168
    %v1426 = vunpack.c.0.s8 %v1425
    %v1427 = vlaneseq
    %v1428 = vshrl.u32 %v1427, 7
    %v1429 = vsub.s32 %v1426, %v1428
    %v1430 = vrot.slane %v1416, %v1429
    %v1431 = vcombine.low %v1423, %v1430
    %v1433 = vunpack.c.l.s4 1966171168
    %v1434 = vunpack.c.0.s8 %v1433
    %v1435 = vlaneseq
    %v1436 = vshrl.u32 %v1435, 7
    %v1437 = vsub.s32 %v1434, %v1436
    %v1438 = vrot.slane %v446, %v1437
    %v1440 = vunpack.c.l.s4 1966171168
    %v1441 = vunpack.c.0.s8 %v1440
    %v1442 = vlaneseq
    %v1443 = vshrl.u32 %v1442, 7
    %v1444 = vsub.s32 %v1441, %v1443
    %v1445 = vrot.slane %v447, %v1444
    %v1447 = vunpack.c.l.s4 1966171168
    %v1448 = vunpack.c.0.s8 %v1447
    %v1449 = vlaneseq
    %v1450 = vshrl.u32 %v1449, 7
    %v1451 = vsub.s32 %v1448, %v1450
    %v1452 = vrot.slane %v448, %v1451
    %v1454 = vunpack.c.l.s4 1966171168
    %v1455 = vunpack.c.0.s8 %v1454
    %v1456 = vlaneseq
    %v1457 = vshrl.u32 %v1456, 7
    %v1458 = vsub.s32 %v1455, %v1457
    %v1459 = vrot.slane %v449, %v1458
    %v1460 = vcombine.low %v1438, %v1445
    %v1461 = vcombine.high %v1438, %v1445
    %v1462 = vcombine.low %v1452, %v1459
    %v1463 = vcombine.high %v1452, %v1459
    %v1465 = vunpack.c.l.s4 1966171168
    %v1466 = vunpack.c.0.s8 %v1465
    %v1467 = vlaneseq
    %v1468 = vshrl.u32 %v1467, 7
    %v1469 = vsub.s32 %v1466, %v1468
    %v1470 = vrot.slane %v1460, %v1469
    %v1472 = vunpack.c.l.s4 1966171168
    %v1473 = vunpack.c.0.s8 %v1472
    %v1474 = vlaneseq
    %v1475 = vshrl.u32 %v1474, 7
    %v1476 = vsub.s32 %v1473, %v1475
    %v1477 = vrot.slane %v1461, %v1476
    %v1479 = vunpack.c.l.s4 1966171168
    %v1480 = vunpack.c.0.s8 %v1479
    %v1481 = vlaneseq
    %v1482 = vshrl.u32 %v1481, 7
    %v1483 = vsub.s32 %v1480, %v1482
    %v1484 = vrot.slane %v1462, %v1483
    %v1486 = vunpack.c.l.s4 1966171168
    %v1487 = vunpack.c.0.s8 %v1486
    %v1488 = vlaneseq
    %v1489 = vshrl.u32 %v1488, 7
    %v1490 = vsub.s32 %v1487, %v1489
    %v1491 = vrot.slane %v1463, %v1490
    %v1492 = vcombine.low %v1470, %v1484
    %v1493 = vcombine.high %v1470, %v1484
    %v1494 = vcombine.low %v1477, %v1491
    %v1495 = vcombine.high %v1477, %v1491
    %v1497 = vunpack.c.l.s4 1966171168
    %v1498 = vunpack.c.0.s8 %v1497
    %v1499 = vlaneseq
    %v1500 = vshrl.u32 %v1499, 7
    %v1501 = vsub.s32 %v1498, %v1500
    %v1502 = vrot.slane %v450, %v1501
    %v1504 = vunpack.c.l.s4 1966171168
    %v1505 = vunpack.c.0.s8 %v1504
    %v1506 = vlaneseq
    %v1507 = vshrl.u32 %v1506, 7
    %v1508 = vsub.s32 %v1505, %v1507
    %v1509 = vrot.slane %v451, %v1508
    %v1511 = vunpack.c.l.s4 1966171168
    %v1512 = vunpack.c.0.s8 %v1511
    %v1513 = vlaneseq
    %v1514 = vshrl.u32 %v1513, 7
    %v1515 = vsub.s32 %v1512, %v1514
    %v1516 = vrot.slane %v452, %v1515
    %v1518 = vunpack.c.l.s4 1966171168
    %v1519 = vunpack.c.0.s8 %v1518
    %v1520 = vlaneseq
    %v1521 = vshrl.u32 %v1520, 7
    %v1522 = vsub.s32 %v1519, %v1521
    %v1523 = vrot.slane %v453, %v1522
    %v1524 = vcombine.low %v1502, %v1509
    %v1525 = vcombine.high %v1502, %v1509
    %v1526 = vcombine.low %v1516, %v1523
    %v1527 = vcombine.high %v1516, %v1523
    %v1529 = vunpack.c.l.s4 1966171168
    %v1530 = vunpack.c.0.s8 %v1529
    %v1531 = vlaneseq
    %v1532 = vshrl.u32 %v1531, 7
    %v1533 = vsub.s32 %v1530, %v1532
    %v1534 = vrot.slane %v1524, %v1533
    %v1536 = vunpack.c.l.s4 1966171168
    %v1537 = vunpack.c.0.s8 %v1536
    %v1538 = vlaneseq
    %v1539 = vshrl.u32 %v1538, 7
    %v1540 = vsub.s32 %v1537, %v1539
    %v1541 = vrot.slane %v1525, %v1540
    %v1543 = vunpack.c.l.s4 1966171168
    %v1544 = vunpack.c.0.s8 %v1543
    %v1545 = vlaneseq
    %v1546 = vshrl.u32 %v1545, 7
    %v1547 = vsub.s32 %v1544, %v1546
    %v1548 = vrot.slane %v1526, %v1547
    %v1550 = vunpack.c.l.s4 1966171168
    %v1551 = vunpack.c.0.s8 %v1550
    %v1552 = vlaneseq
    %v1553 = vshrl.u32 %v1552, 7
    %v1554 = vsub.s32 %v1551, %v1553
    %v1555 = vrot.slane %v1527, %v1554
    %v1556 = vcombine.low %v1534, %v1548
    %v1557 = vcombine.high %v1534, %v1548
    %v1558 = vcombine.low %v1541, %v1555
    %v1559 = vcombine.high %v1541, %v1555
    %v1561 = vunpack.c.l.s4 1966171168
    %v1562 = vunpack.c.0.s8 %v1561
    %v1563 = vlaneseq
    %v1564 = vshrl.u32 %v1563, 7
    %v1565 = vsub.s32 %v1562, %v1564
    %v1566 = vrot.slane %v454, %v1565
    %v1568 = vunpack.c.l.s4 1966171168
    %v1569 = vunpack.c.0.s8 %v1568
    %v1570 = vlaneseq
    %v1571 = vshrl.u32 %v1570, 7
    %v1572 = vsub.s32 %v1569, %v1571
    %v1573 = vrot.slane %v455, %v1572
    %v1575 = vunpack.c.l.s4 1966171168
    %v1576 = vunpack.c.0.s8 %v1575
    %v1577 = vlaneseq
    %v1578 = vshrl.u32 %v1577, 7
    %v1579 = vsub.s32 %v1576, %v1578
    %v1580 = vrot.slane %v456, %v1579
    %v1582 = vunpack.c.l.s4 1966171168
    %v1583 = vunpack.c.0.s8 %v1582
    %v1584 = vlaneseq
    %v1585 = vshrl.u32 %v1584, 7
    %v1586 = vsub.s32 %v1583, %v1585
    %v1587 = vrot.slane %v457, %v1586
    %v1588 = vcombine.low %v1566, %v1573
    %v1589 = vcombine.low %v1580, %v1587
    %v1591 = vunpack.c.l.s4 1966171168
    %v1592 = vunpack.c.0.s8 %v1591
    %v1593 = vlaneseq
    %v1594 = vshrl.u32 %v1593, 7
    %v1595 = vsub.s32 %v1592, %v1594
    %v1596 = vrot.slane %v1588, %v1595
    %v1598 = vunpack.c.l.s4 1966171168
    %v1599 = vunpack.c.0.s8 %v1598
    %v1600 = vlaneseq
    %v1601 = vshrl.u32 %v1600, 7
    %v1602 = vsub.s32 %v1599, %v1601
    %v1603 = vrot.slane %v1589, %v1602
    %v1604 = vcombine.low %v1596, %v1603
    %v1606 = vunpack.c.l.s4 1966171168
    %v1607 = vunpack.c.0.s8 %v1606
    %v1608 = vlaneseq
    %v1609 = vshrl.u32 %v1608, 7
    %v1610 = vsub.s32 %v1607, %v1609
    %v1611 = vrot.slane %v458, %v1610
    %v1613 = vunpack.c.l.s4 1966171168
    %v1614 = vunpack.c.0.s8 %v1613
    %v1615 = vlaneseq
    %v1616 = vshrl.u32 %v1615, 7
    %v1617 = vsub.s32 %v1614, %v1616
    %v1618 = vrot.slane %v459, %v1617
    %v1620 = vunpack.c.l.s4 1966171168
    %v1621 = vunpack.c.0.s8 %v1620
    %v1622 = vlaneseq
    %v1623 = vshrl.u32 %v1622, 7
    %v1624 = vsub.s32 %v1621, %v1623
    %v1625 = vrot.slane %v460, %v1624
    %v1627 = vunpack.c.l.s4 1966171168
    %v1628 = vunpack.c.0.s8 %v1627
    %v1629 = vlaneseq
    %v1630 = vshrl.u32 %v1629, 7
    %v1631 = vsub.s32 %v1628, %v1630
    %v1632 = vrot.slane %v461, %v1631
    %v1633 = vcombine.low %v1611, %v1618
    %v1634 = vcombine.low %v1625, %v1632
    %v1636 = vunpack.c.l.s4 1966171168
    %v1637 = vunpack.c.0.s8 %v1636
    %v1638 = vlaneseq
    %v1639 = vshrl.u32 %v1638, 7
    %v1640 = vsub.s32 %v1637, %v1639
    %v1641 = vrot.slane %v1633, %v1640
    %v1643 = vunpack.c.l.s4 1966171168
    %v1644 = vunpack.c.0.s8 %v1643
    %v1645 = vlaneseq
    %v1646 = vshrl.u32 %v1645, 7
    %v1647 = vsub.s32 %v1644, %v1646
    %v1648 = vrot.slane %v1634, %v1647
    %v1649 = vcombine.low %v1641, %v1648
    %v1650 = vunpack.i.l.s16 %v1274
    %v1651 = vunpack.i.l.s16 %v1338
    %v1652 = vunpack.i.h.s16 %v1274
    %v1653 = vunpack.i.h.s16 %v1338
    %v1654 = vunpack.i.l.s16 %v1276
    %v1655 = vunpack.i.l.s16 %v1340
    %v1656 = vunpack.i.h.s16 %v1276
    %v1657 = vunpack.i.h.s16 %v1340
    %v1658 = vunpack.i.l.s16 %v1275
    %v1659 = vunpack.i.l.s16 %v1339
    %v1660 = vunpack.i.h.s16 %v1275
    %v1661 = vunpack.i.h.s16 %v1339
    %v1662 = vunpack.i.l.s16 %v1277
    %v1663 = vunpack.i.l.s16 %v1341
    %v1664 = vunpack.i.h.s16 %v1277
    %v1665 = vunpack.i.h.s16 %v1341
    %v1666 = vunpack.i.l.s16 %v1386
    %v1667 = vunpack.i.l.s16 %v1431
    %v1668 = vunpack.i.l.s16 %v1492
    %v1669 = vunpack.i.l.s16 %v1556
    %v1670 = vunpack.i.h.s16 %v1492
    %v1671 = vunpack.i.h.s16 %v1556
    %v1672 = vunpack.i.l.s16 %v1494
    %v1673 = vunpack.i.l.s16 %v1558
    %v1674 = vunpack.i.h.s16 %v1494
    %v1675 = vunpack.i.h.s16 %v1558
    %v1676 = vunpack.i.l.s16 %v1493
    %v1677 = vunpack.i.l.s16 %v1557
    %v1678 = vunpack.i.h.s16 %v1493
    %v1679 = vunpack.i.h.s16 %v1557
    %v1680 = vunpack.i.l.s16 %v1495
    %v1681 = vunpack.i.l.s16 %v1559
    %v1682 = vunpack.i.h.s16 %v1495
    %v1683 = vunpack.i.h.s16 %v1559
    %v1684 = vunpack.i.l.s16 %v1604
    %v1685 = vunpack.i.l.s16 %v1649
    %v1686 = vpack.i.b16 %v1652, %v1650
    %v1687 = vpack.i.b16 %v1653, %v1651
    %v1688 = vpack.i.b16 %v1656, %v1654
    %v1689 = vpack.i.b16 %v1657, %v1655
    %v1690 = vpack.i.b16 %v1660, %v1658
    %v1691 = vpack.i.b16 %v1661, %v1659
    %v1692 = vpack.i.b16 %v1664, %v1662
    %v1693 = vpack.i.b16 %v1665, %v1663
    %v1694 = vpack.i.b16 %v1668, %v1666
    %v1695 = vpack.i.b16 %v1669, %v1667
    %v1696 = vpack.i.b16 %v1672, %v1670
    %v1697 = vpack.i.b16 %v1673, %v1671
    %v1698 = vpack.i.b16 %v1676, %v1674
    %v1699 = vpack.i.b16 %v1677, %v1675
    %v1700 = vpack.i.b16 %v1680, %v1678
    %v1701 = vpack.i.b16 %v1681, %v1679
    %v1702 = vpack.i.b16 %v1684, %v1682
    %v1703 = vpack.i.b16 %v1685, %v1683
    %v1704 = vcombine.low %v1686, %v1688
    %v1705 = vcombine.high %v1686, %v1688
    %v1706 = vcombine.low %v1690, %v1692
    %v1707 = vcombine.high %v1690, %v1692
    %v1708 = vcombine.low %v1694, %v1696
    %v1709 = vcombine.high %v1694, %v1696
    %v1710 = vcombine.low %v1698, %v1700
    %v1711 = vcombine.high %v1698, %v1700
    %v1713 = vunpack.c.l.s4 1966171168
    %v1714 = vunpack.c.0.s8 %v1713
    %v1715 = vlaneseq
    %v1716 = vshrl.u32 %v1715, 7
    %v1717 = vsub.s32 %v1714, %v1716
    %v1718 = vrot.slane %v1704, %v1717
    %v1720 = vunpack.c.l.s4 1966171168
    %v1721 = vunpack.c.0.s8 %v1720
    %v1722 = vlaneseq
    %v1723 = vshrl.u32 %v1722, 7
    %v1724 = vsub.s32 %v1721, %v1723
    %v1725 = vrot.slane %v1705, %v1724
    %v1727 = vunpack.c.l.s4 1966171168
    %v1728 = vunpack.c.0.s8 %v1727
    %v1729 = vlaneseq
    %v1730 = vshrl.u32 %v1729, 7
    %v1731 = vsub.s32 %v1728, %v1730
    %v1732 = vrot.slane %v1706, %v1731
    %v1734 = vunpack.c.l.s4 1966171168
    %v1735 = vunpack.c.0.s8 %v1734
    %v1736 = vlaneseq
    %v1737 = vshrl.u32 %v1736, 7
    %v1738 = vsub.s32 %v1735, %v1737
    %v1739 = vrot.slane %v1707, %v1738
    %v1741 = vunpack.c.l.s4 1966171168
    %v1742 = vunpack.c.0.s8 %v1741
    %v1743 = vlaneseq
    %v1744 = vshrl.u32 %v1743, 7
    %v1745 = vsub.s32 %v1742, %v1744
    %v1746 = vrot.slane %v1708, %v1745
    %v1748 = vunpack.c.l.s4 1966171168
    %v1749 = vunpack.c.0.s8 %v1748
    %v1750 = vlaneseq
    %v1751 = vshrl.u32 %v1750, 7
    %v1752 = vsub.s32 %v1749, %v1751
    %v1753 = vrot.slane %v1709, %v1752
    %v1755 = vunpack.c.l.s4 1966171168
    %v1756 = vunpack.c.0.s8 %v1755
    %v1757 = vlaneseq
    %v1758 = vshrl.u32 %v1757, 7
    %v1759 = vsub.s32 %v1756, %v1758
    %v1760 = vrot.slane %v1710, %v1759
    %v1762 = vunpack.c.l.s4 1966171168
    %v1763 = vunpack.c.0.s8 %v1762
    %v1764 = vlaneseq
    %v1765 = vshrl.u32 %v1764, 7
    %v1766 = vsub.s32 %v1763, %v1765
    %v1767 = vrot.slane %v1711, %v1766
    %v1768 = vcombine.low %v1718, %v1732
    %v1769 = vcombine.high %v1718, %v1732
    %v1770 = vcombine.low %v1725, %v1739
    %v1771 = vcombine.high %v1725, %v1739
    %v1772 = vcombine.low %v1746, %v1760
    %v1773 = vcombine.high %v1746, %v1760
    %v1774 = vcombine.low %v1753, %v1767
    %v1775 = vcombine.high %v1753, %v1767
    %v1777 = vunpack.c.l.s4 1966171168
    %v1778 = vunpack.c.0.s8 %v1777
    %v1779 = vlaneseq
    %v1780 = vshrl.u32 %v1779, 7
    %v1781 = vsub.s32 %v1778, %v1780
    %v1782 = vrot.slane %v1768, %v1781
    %v1784 = vunpack.c.l.s4 1966171168
    %v1785 = vunpack.c.0.s8 %v1784
    %v1786 = vlaneseq
    %v1787 = vshrl.u32 %v1786, 7
    %v1788 = vsub.s32 %v1785, %v1787
    %v1789 = vrot.slane %v1770, %v1788
    %v1791 = vunpack.c.l.s4 1966171168
    %v1792 = vunpack.c.0.s8 %v1791
    %v1793 = vlaneseq
    %v1794 = vshrl.u32 %v1793, 7
    %v1795 = vsub.s32 %v1792, %v1794
    %v1796 = vrot.slane %v1769, %v1795
    %v1798 = vunpack.c.l.s4 1966171168
    %v1799 = vunpack.c.0.s8 %v1798
    %v1800 = vlaneseq
    %v1801 = vshrl.u32 %v1800, 7
    %v1802 = vsub.s32 %v1799, %v1801
    %v1803 = vrot.slane %v1771, %v1802
    %v1805 = vunpack.c.l.s4 1966171168
    %v1806 = vunpack.c.0.s8 %v1805
    %v1807 = vlaneseq
    %v1808 = vshrl.u32 %v1807, 7
    %v1809 = vsub.s32 %v1806, %v1808
    %v1810 = vrot.slane %v1772, %v1809
    %v1812 = vunpack.c.l.s4 1966171168
    %v1813 = vunpack.c.0.s8 %v1812
    %v1814 = vlaneseq
    %v1815 = vshrl.u32 %v1814, 7
    %v1816 = vsub.s32 %v1813, %v1815
    %v1817 = vrot.slane %v1774, %v1816
    %v1819 = vunpack.c.l.s4 1966171168
    %v1820 = vunpack.c.0.s8 %v1819
    %v1821 = vlaneseq
    %v1822 = vshrl.u32 %v1821, 7
    %v1823 = vsub.s32 %v1820, %v1822
    %v1824 = vrot.slane %v1773, %v1823
    %v1826 = vunpack.c.l.s4 1966171168
    %v1827 = vunpack.c.0.s8 %v1826
    %v1828 = vlaneseq
    %v1829 = vshrl.u32 %v1828, 7
    %v1830 = vsub.s32 %v1827, %v1829
    %v1831 = vrot.slane %v1775, %v1830
    %v1832 = vcombine.low %v1782, %v1810
    %v1833 = vcombine.high %v1782, %v1810
    %v1834 = vcombine.low %v1789, %v1817
    %v1835 = vcombine.high %v1789, %v1817
    %v1836 = vcombine.low %v1796, %v1824
    %v1837 = vcombine.high %v1796, %v1824
    %v1838 = vcombine.low %v1803, %v1831
    %v1839 = vcombine.high %v1803, %v1831
    %v1840 = vcombine.low %v1687, %v1689
    %v1841 = vcombine.high %v1687, %v1689
    %v1842 = vcombine.low %v1691, %v1693
    %v1843 = vcombine.high %v1691, %v1693
    %v1844 = vcombine.low %v1695, %v1697
    %v1845 = vcombine.high %v1695, %v1697
    %v1846 = vcombine.low %v1699, %v1701
    %v1847 = vcombine.high %v1699, %v1701
    %v1849 = vunpack.c.l.s4 1966171168
    %v1850 = vunpack.c.0.s8 %v1849
    %v1851 = vlaneseq
    %v1852 = vshrl.u32 %v1851, 7
    %v1853 = vsub.s32 %v1850, %v1852
    %v1854 = vrot.slane %v1840, %v1853
    %v1856 = vunpack.c.l.s4 1966171168
    %v1857 = vunpack.c.0.s8 %v1856
    %v1858 = vlaneseq
    %v1859 = vshrl.u32 %v1858, 7
    %v1860 = vsub.s32 %v1857, %v1859
    %v1861 = vrot.slane %v1841, %v1860
    %v1863 = vunpack.c.l.s4 1966171168
    %v1864 = vunpack.c.0.s8 %v1863
    %v1865 = vlaneseq
    %v1866 = vshrl.u32 %v1865, 7
    %v1867 = vsub.s32 %v1864, %v1866
    %v1868 = vrot.slane %v1842, %v1867
    %v1870 = vunpack.c.l.s4 1966171168
    %v1871 = vunpack.c.0.s8 %v1870
    %v1872 = vlaneseq
    %v1873 = vshrl.u32 %v1872, 7
    %v1874 = vsub.s32 %v1871, %v1873
    %v1875 = vrot.slane %v1843, %v1874
    %v1877 = vunpack.c.l.s4 1966171168
    %v1878 = vunpack.c.0.s8 %v1877
    %v1879 = vlaneseq
    %v1880 = vshrl.u32 %v1879, 7
    %v1881 = vsub.s32 %v1878, %v1880
    %v1882 = vrot.slane %v1844, %v1881
    %v1884 = vunpack.c.l.s4 1966171168
    %v1885 = vunpack.c.0.s8 %v1884
    %v1886 = vlaneseq
    %v1887 = vshrl.u32 %v1886, 7
    %v1888 = vsub.s32 %v1885, %v1887
    %v1889 = vrot.slane %v1845, %v1888
    %v1891 = vunpack.c.l.s4 1966171168
    %v1892 = vunpack.c.0.s8 %v1891
    %v1893 = vlaneseq
    %v1894 = vshrl.u32 %v1893, 7
    %v1895 = vsub.s32 %v1892, %v1894
    %v1896 = vrot.slane %v1846, %v1895
    %v1898 = vunpack.c.l.s4 1966171168
    %v1899 = vunpack.c.0.s8 %v1898
    %v1900 = vlaneseq
    %v1901 = vshrl.u32 %v1900, 7
    %v1902 = vsub.s32 %v1899, %v1901
    %v1903 = vrot.slane %v1847, %v1902
    %v1904 = vcombine.low %v1854, %v1868
    %v1905 = vcombine.high %v1854, %v1868
    %v1906 = vcombine.low %v1861, %v1875
    %v1907 = vcombine.high %v1861, %v1875
    %v1908 = vcombine.low %v1882, %v1896
    %v1909 = vcombine.high %v1882, %v1896
    %v1910 = vcombine.low %v1889, %v1903
    %v1911 = vcombine.high %v1889, %v1903
    %v1913 = vunpack.c.l.s4 1966171168
    %v1914 = vunpack.c.0.s8 %v1913
    %v1915 = vlaneseq
    %v1916 = vshrl.u32 %v1915, 7
    %v1917 = vsub.s32 %v1914, %v1916
    %v1918 = vrot.slane %v1904, %v1917
    %v1920 = vunpack.c.l.s4 1966171168
    %v1921 = vunpack.c.0.s8 %v1920
    %v1922 = vlaneseq
    %v1923 = vshrl.u32 %v1922, 7
    %v1924 = vsub.s32 %v1921, %v1923
    %v1925 = vrot.slane %v1906, %v1924
    %v1927 = vunpack.c.l.s4 1966171168
    %v1928 = vunpack.c.0.s8 %v1927
    %v1929 = vlaneseq
    %v1930 = vshrl.u32 %v1929, 7
    %v1931 = vsub.s32 %v1928, %v1930
    %v1932 = vrot.slane %v1905, %v1931
    %v1934 = vunpack.c.l.s4 1966171168
    %v1935 = vunpack.c.0.s8 %v1934
    %v1936 = vlaneseq
    %v1937 = vshrl.u32 %v1936, 7
    %v1938 = vsub.s32 %v1935, %v1937
    %v1939 = vrot.slane %v1907, %v1938
    %v1941 = vunpack.c.l.s4 1966171168
    %v1942 = vunpack.c.0.s8 %v1941
    %v1943 = vlaneseq
    %v1944 = vshrl.u32 %v1943, 7
    %v1945 = vsub.s32 %v1942, %v1944
    %v1946 = vrot.slane %v1908, %v1945
    %v1948 = vunpack.c.l.s4 1966171168
    %v1949 = vunpack.c.0.s8 %v1948
    %v1950 = vlaneseq
    %v1951 = vshrl.u32 %v1950, 7
    %v1952 = vsub.s32 %v1949, %v1951
    %v1953 = vrot.slane %v1910, %v1952
    %v1955 = vunpack.c.l.s4 1966171168
    %v1956 = vunpack.c.0.s8 %v1955
    %v1957 = vlaneseq
    %v1958 = vshrl.u32 %v1957, 7
    %v1959 = vsub.s32 %v1956, %v1958
    %v1960 = vrot.slane %v1909, %v1959
    %v1962 = vunpack.c.l.s4 1966171168
    %v1963 = vunpack.c.0.s8 %v1962
    %v1964 = vlaneseq
    %v1965 = vshrl.u32 %v1964, 7
    %v1966 = vsub.s32 %v1963, %v1965
    %v1967 = vrot.slane %v1911, %v1966
    %v1968 = vcombine.low %v1918, %v1946
    %v1969 = vcombine.high %v1918, %v1946
    %v1970 = vcombine.low %v1925, %v1953
    %v1971 = vcombine.high %v1925, %v1953
    %v1972 = vcombine.low %v1932, %v1960
    %v1973 = vcombine.high %v1932, %v1960
    %v1974 = vcombine.low %v1939, %v1967
    %v1975 = vcombine.high %v1702, %v1702
    %v1977 = vunpack.c.l.s4 1966171168
    %v1978 = vunpack.c.0.s8 %v1977
    %v1979 = vlaneseq
    %v1980 = vshrl.u32 %v1979, 7
    %v1981 = vsub.s32 %v1978, %v1980
    %v1982 = vrot.slane %v1702, %v1981
    %v1984 = vunpack.c.l.s4 1966171168
    %v1985 = vunpack.c.0.s8 %v1984
    %v1986 = vlaneseq
    %v1987 = vshrl.u32 %v1986, 7
    %v1988 = vsub.s32 %v1985, %v1987
    %v1989 = vrot.slane %v1975, %v1988
    %v1990 = vcombine.high %v1982, %v1982
    %v1991 = vcombine.high %v1989, %v1989
    %v1993 = vunpack.c.l.s4 1966171168
    %v1994 = vunpack.c.0.s8 %v1993
    %v1995 = vlaneseq
    %v1996 = vshrl.u32 %v1995, 7
    %v1997 = vsub.s32 %v1994, %v1996
    %v1998 = vrot.slane %v1982, %v1997
    %v2000 = vunpack.c.l.s4 1966171168
    %v2001 = vunpack.c.0.s8 %v2000
    %v2002 = vlaneseq
    %v2003 = vshrl.u32 %v2002, 7
    %v2004 = vsub.s32 %v2001, %v2003
    %v2005 = vrot.slane %v1989, %v2004
    %v2007 = vunpack.c.l.s4 1966171168
    %v2008 = vunpack.c.0.s8 %v2007
    %v2009 = vlaneseq
    %v2010 = vshrl.u32 %v2009, 7
    %v2011 = vsub.s32 %v2008, %v2010
    %v2012 = vrot.slane %v1990, %v2011
    %v2014 = vunpack.c.l.s4 1966171168
    %v2015 = vunpack.c.0.s8 %v2014
    %v2016 = vlaneseq
    %v2017 = vshrl.u32 %v2016, 7
    %v2018 = vsub.s32 %v2015, %v2017
    %v2019 = vrot.slane %v1991, %v2018
    %v2020 = vcombine.high %v1998, %v1998
    %v2021 = vcombine.high %v2005, %v2005
    %v2022 = vcombine.high %v2012, %v2012
    %v2023 = vcombine.high %v2019, %v2019
    %v2024 = vcombine.high %v1703, %v1703
    %v2026 = vunpack.c.l.s4 1966171168
    %v2027 = vunpack.c.0.s8 %v2026
    %v2028 = vlaneseq
    %v2029 = vshrl.u32 %v2028, 7
    %v2030 = vsub.s32 %v2027, %v2029
    %v2031 = vrot.slane %v1703, %v2030
    %v2033 = vunpack.c.l.s4 1966171168
    %v2034 = vunpack.c.0.s8 %v2033
    %v2035 = vlaneseq
    %v2036 = vshrl.u32 %v2035, 7
    %v2037 = vsub.s32 %v2034, %v2036
    %v2038 = vrot.slane %v2024, %v2037
    %v2039 = vcombine.high %v2031, %v2031
    %v2040 = vcombine.high %v2038, %v2038
    %v2042 = vunpack.c.l.s4 1966171168
    %v2043 = vunpack.c.0.s8 %v2042
    %v2044 = vlaneseq
    %v2045 = vshrl.u32 %v2044, 7
    %v2046 = vsub.s32 %v2043, %v2045
    %v2047 = vrot.slane %v2031, %v2046
    %v2049 = vunpack.c.l.s4 1966171168
    %v2050 = vunpack.c.0.s8 %v2049
    %v2051 = vlaneseq
    %v2052 = vshrl.u32 %v2051, 7
    %v2053 = vsub.s32 %v2050, %v2052
    %v2054 = vrot.slane %v2038, %v2053
    %v2056 = vunpack.c.l.s4 1966171168
    %v2057 = vunpack.c.0.s8 %v2056
    %v2058 = vlaneseq
    %v2059 = vshrl.u32 %v2058, 7
    %v2060 = vsub.s32 %v2057, %v2059
    %v2061 = vrot.slane %v2039, %v2060
    %v2063 = vunpack.c.l.s4 1966171168
    %v2064 = vunpack.c.0.s8 %v2063
    %v2065 = vlaneseq
    %v2066 = vshrl.u32 %v2065, 7
    %v2067 = vsub.s32 %v2064, %v2066
    %v2068 = vrot.slane %v2040, %v2067
    %v2069 = vcombine.high %v2047, %v2047
    %v2070 = vcombine.high %v2054, %v2054
    %v2071 = vcombine.high %v2061, %v2061
    %v2822 = vunpack.c.l.b16 %v462
    %v2823 = vunpack.c.h.b16 %v462
    %v2824 = vunpack.c.l.b16 %v463
    %v2825 = vunpack.c.h.b16 %v463
    %v2826 = vunpack.c.l.b16 %v464
    %v2827 = vunpack.c.h.b16 %v464
    %v2828 = vunpack.c.l.b16 %v465
    %v2829 = vunpack.c.h.b16 %v465
    %v2830 = vunpack.c.l.b16 %v466
    %v2831 = vunpack.c.h.b16 %v466
    %v2832 = vunpack.c.l.b16 %v467
    %v2833 = vunpack.c.h.b16 %v467
    %v2834 = vunpack.c.l.b16 %v468
    %v2835 = vunpack.c.h.b16 %v468
    %v2836 = vunpack.c.l.b16 %v469
    %v2837 = vunpack.c.h.b16 %v469
    %v2838 = vunpack.c.l.b16 %v470
    %v2839 = vunpack.c.h.b16 %v470
    %v2840 = vunpack.c.l.b16 %v471
    %v2841 = vunpack.c.h.b16 %v471
    %v2842 = vunpack.c.l.b16 %v472
    %v2843 = vunpack.c.h.b16 %v472
    %v2844 = vunpack.c.l.b16 %v473
    %v2845 = vunpack.c.h.b16 %v473
    %v2846 = vunpack.c.l.b16 %v474
    %v2847 = vunpack.c.h.b16 %v474
    %v2848 = vunpack.c.l.b16 %v475
    %v2849 = vunpack.c.h.b16 %v475
    %v2850 = vunpack.c.l.b16 %v476
    %v2851 = vunpack.c.h.b16 %v476
    %v2852 = vunpack.c.l.b16 %v477
    %v2853 = vunpack.c.h.b16 %v477
    %v2854 = vunpack.c.l.b16 %v478
    %v2855 = vunpack.c.h.b16 %v478
    %v2856 = vunpack.c.l.b16 %v479
    %v2857 = vunpack.c.h.b16 %v479
    %v2858 = vunpack.c.l.b16 %v480
    %v2859 = vunpack.c.h.b16 %v480
    %v2860 = vunpack.c.l.b16 %v481
    %v2861 = vunpack.c.h.b16 %v481
    %v2862 = vunpack.c.l.b16 %v482
    %v2863 = vunpack.c.h.b16 %v482
    %v2864 = vunpack.c.l.b16 %v483
    %v2865 = vunpack.c.h.b16 %v483
    %v2866 = vunpack.c.l.b16 %v484
    %v2867 = vunpack.c.h.b16 %v484
    %v2868 = vunpack.c.l.b16 %v485
    %v2869 = vunpack.c.h.b16 %v485
    %v2870 = vunpack.c.l.b16 %v486
    %v2871 = vunpack.c.h.b16 %v486
    %v2872 = vunpack.c.l.b16 %v487
    %v2873 = vunpack.c.h.b16 %v487
    %v2874 = vunpack.c.l.b16 %v488
    %v2875 = vunpack.c.h.b16 %v488
    %v2876 = vunpack.c.l.b16 %v489
    %v2877 = vunpack.c.h.b16 %v489
    %v2878 = vunpack.c.l.b16 %v490
    %v2879 = vunpack.c.h.b16 %v490
    %v2880 = vunpack.c.l.b16 %v491
    %v2881 = vunpack.c.h.b16 %v491
    %v2882 = vunpack.c.l.b16 %v492
    %v2883 = vunpack.c.h.b16 %v492
    %v2884 = vunpack.c.l.b16 %v493
    %v2885 = vunpack.c.h.b16 %v493
    %v2886 = vunpack.c.l.b16 %v494
    %v2887 = vunpack.c.h.b16 %v494
    %v2888 = vunpack.c.l.b16 %v495
    %v2889 = vunpack.c.h.b16 %v495
    %v2890 = vunpack.c.l.b16 %v496
    %v2891 = vunpack.c.h.b16 %v496
    %v2892 = vunpack.c.l.b16 %v497
    %v2893 = vunpack.c.h.b16 %v497
    %v2894 = vunpack.c.l.b16 %v498
    %v2895 = vunpack.c.h.b16 %v498
    %v2896 = vunpack.c.l.b16 %v499
    %v2897 = vunpack.c.h.b16 %v499
    %v2898 = vunpack.c.l.b16 %v500
    %v2899 = vunpack.c.h.b16 %v500
    %v2900 = vunpack.c.l.b16 %v501
    %v2901 = vunpack.c.h.b16 %v501
    %v2902 = vunpack.c.l.b16 %v502
    %v2903 = vunpack.c.h.b16 %v502
    %v2904 = vunpack.c.l.b16 %v503
    %v2905 = vunpack.c.h.b16 %v503
    %v2906 = vunpack.c.l.b16 %v504
    %v2907 = vunpack.c.h.b16 %v504
    %v2908 = vunpack.c.l.b16 %v505
    %v2909 = vunpack.c.h.b16 %v505
    %v2910 = vunpack.c.l.b16 %v506
    %v2911 = vunpack.c.h.b16 %v506
    %v2912 = vunpack.c.l.b16 %v507
    %v2913 = vunpack.c.h.b16 %v507
    %v2914 = vunpack.c.l.b16 %v508
    %v2915 = vunpack.c.h.b16 %v508
    %v2916 = vunpack.c.l.b16 %v509
    %v2917 = vunpack.c.h.b16 %v509
    %v2918 = vunpack.c.l.b16 %v510
    %v2919 = vunpack.c.h.b16 %v510
    %v2920 = vunpack.c.l.b16 %v511
    %v2921 = vunpack.c.h.b16 %v511
    %v2922 = vunpack.c.l.b16 %v512
    %v2923 = vunpack.c.h.b16 %v512
    %v2924 = vunpack.c.l.b16 %v513
    %v2925 = vunpack.c.h.b16 %v513
    %v2926 = vunpack.c.l.b16 %v514
    %v2927 = vunpack.c.h.b16 %v514
    %v2928 = vunpack.c.l.b16 %v515
    %v2929 = vunpack.c.h.b16 %v515
    %v2930 = vunpack.c.l.b16 %v516
    %v2931 = vunpack.c.h.b16 %v516
    %v2932 = vunpack.c.l.b16 %v517
    %v2933 = vunpack.c.h.b16 %v517
    %v2934 = vunpack.c.l.b16 %v518
    %v2935 = vunpack.c.h.b16 %v518
    %v2936 = vunpack.c.l.b16 %v519
    %v2937 = vunpack.c.h.b16 %v519
    %v2938 = vunpack.c.l.b16 %v520
    %v2939 = vunpack.c.h.b16 %v520
    %v2940 = vunpack.c.l.b16 %v521
    %v2941 = vunpack.c.h.b16 %v521
    %v2942 = vunpack.c.l.b16 %v522
    %v2943 = vunpack.c.h.b16 %v522
    %v2944 = vunpack.c.l.b16 %v523
    %v2945 = vunpack.c.h.b16 %v523
    %v2946 = vunpack.c.l.b16 %v524
    %v2947 = vunpack.c.h.b16 %v524
    %v2948 = vunpack.c.l.b16 %v525
    %v2949 = vunpack.c.h.b16 %v525
    %v2950 = vunpack.c.l.b16 %v526
    %v2951 = vunpack.c.h.b16 %v526
    %v2952 = vunpack.c.l.b16 %v527
    %v2953 = vunpack.c.h.b16 %v527
    %v2954 = vunpack.c.l.b16 %v528
    %v2955 = vunpack.c.h.b16 %v528
    %v2956 = vunpack.c.l.b16 %v529
    %v2957 = vunpack.c.h.b16 %v529
    %v2958 = vunpack.c.l.b16 %v530
    %v2959 = vunpack.c.h.b16 %v530
    %v2960 = vunpack.c.l.b16 %v531
    %v2961 = vunpack.c.h.b16 %v531
    %v2962 = vunpack.c.l.b16 %v532
    %v2963 = vunpack.c.h.b16 %v532
    %v2964 = vunpack.c.l.b16 %v533
    %v2965 = vunpack.c.h.b16 %v533
    %v2966 = vunpack.c.l.b16 %v534
    %v2967 = vunpack.c.h.b16 %v534
    %v2968 = vunpack.c.l.b16 %v535
    %v2969 = vunpack.c.h.b16 %v535
    %v2970 = vunpack.c.l.b16 %v536
    %v2971 = vunpack.c.h.b16 %v536
    %v2972 = vunpack.c.l.b16 %v537
    %v2973 = vunpack.c.h.b16 %v537
    %v2974 = vunpack.c.l.b16 %v538
    %v2975 = vunpack.c.h.b16 %v538
    %v2976 = vunpack.c.l.b16 %v539
    %v2977 = vunpack.c.h.b16 %v539
    %v2978 = vunpack.c.l.b16 %v540
    %v2979 = vunpack.c.h.b16 %v540
    %v2980 = vunpack.c.l.b16 %v541
    %v2981 = vunpack.c.h.b16 %v541
    %v2982 = vunpack.c.l.b16 %v542
    %v2983 = vunpack.c.h.b16 %v542
    %v2984 = vunpack.c.l.b16 %v543
    %v2985 = vunpack.c.h.b16 %v543
    %v2986 = vunpack.c.l.b16 %v544
    %v2987 = vunpack.c.h.b16 %v544
    %v2988 = vunpack.c.l.b16 %v545
    %v2989 = vunpack.c.h.b16 %v545
    %v2990 = vunpack.c.l.b16 %v546
    %v2991 = vunpack.c.h.b16 %v546
    %v2992 = vunpack.c.l.b16 %v547
    %v2993 = vunpack.c.h.b16 %v547
    %v2994 = vunpack.c.l.b16 %v548
    %v2995 = vunpack.c.h.b16 %v548
    %v2996 = vunpack.c.l.b16 %v549
    %v2997 = vunpack.c.h.b16 %v549
    %v2998 = vunpack.c.l.b16 %v550
    %v2999 = vunpack.c.h.b16 %v550
    %v3000 = vunpack.c.l.b16 %v551
    %v3001 = vunpack.c.h.b16 %v551
    %v3002 = vunpack.c.l.b16 %v552
    %v3003 = vunpack.c.h.b16 %v552
    %v3004 = vunpack.c.l.b16 %v553
    %v3005 = vunpack.c.h.b16 %v553
    %v3006 = vunpack.c.l.b16 %v554
    %v3007 = vunpack.c.h.b16 %v554
    %v3008 = vunpack.c.l.b16 %v555
    %v3009 = vunpack.c.h.b16 %v555
    %v3010 = vunpack.c.l.b16 %v556
    %v3011 = vunpack.c.h.b16 %v556
    %v3012 = vunpack.c.l.b16 %v557
    %v3013 = vunpack.c.h.b16 %v557
    %v3014 = vunpack.c.l.b16 %v558
    %v3015 = vunpack.c.h.b16 %v558
    %v3016 = vunpack.c.l.b16 %v559
    %v3017 = vunpack.c.h.b16 %v559
    %v3018 = vunpack.c.l.b16 %v560
    %v3019 = vunpack.c.h.b16 %v560
    %v3020 = vunpack.c.l.b16 %v561
    %v3021 = vunpack.c.h.b16 %v561
    %v3022 = vunpack.c.l.b16 %v562
    %v3023 = vunpack.c.h.b16 %v562
    %v3024 = vunpack.c.l.b16 %v563
    %v3025 = vunpack.c.h.b16 %v563
    %v3026 = vunpack.c.l.b16 %v564
    %v3027 = vunpack.c.h.b16 %v564
    %v3028 = vunpack.c.l.b16 %v565
    %v3029 = vunpack.c.h.b16 %v565
    %v3030 = vunpack.c.l.b16 %v566
    %v3031 = vunpack.c.h.b16 %v566
    %v3032 = vunpack.c.l.b16 %v567
    %v3033 = vunpack.c.h.b16 %v567
    %v3034 = vunpack.c.l.b16 %v568
    %v3035 = vunpack.c.h.b16 %v568
    %v3036 = vunpack.c.l.b16 %v569
    %v3037 = vunpack.c.h.b16 %v569
    %v3038 = vunpack.c.l.b16 %v570
    %v3039 = vunpack.c.h.b16 %v570
    %v3040 = vunpack.c.l.b16 %v571
    %v3041 = vunpack.c.h.b16 %v571
    %v3042 = vunpack.c.l.b16 %v572
    %v3043 = vunpack.c.h.b16 %v572
    %v3044 = vunpack.c.l.b16 %v573
    %v3045 = vunpack.c.h.b16 %v573
    %v3046 = vunpack.c.l.b16 %v574
    %v3047 = vunpack.c.h.b16 %v574
    %v3048 = vunpack.c.l.b16 %v575
    %v3049 = vunpack.c.h.b16 %v575
    %v3050 = vunpack.c.l.b16 %v576
    %v3051 = vunpack.c.h.b16 %v576
    %v3052 = vunpack.c.l.b16 %v577
    %v3053 = vunpack.c.h.b16 %v577
    %v3054 = vunpack.c.l.b16 %v578
    %v3055 = vunpack.c.h.b16 %v578
    %v3056 = vunpack.c.l.b16 %v579
    %v3057 = vunpack.c.h.b16 %v579
    %v3058 = vunpack.c.l.b16 %v580
    %v3059 = vunpack.c.h.b16 %v580
    %v3060 = vunpack.c.l.b16 %v581
    %v3061 = vunpack.c.h.b16 %v581
    %v3062 = vunpack.c.l.b16 %v582
    %v3063 = vunpack.c.h.b16 %v582
    %v3064 = vunpack.c.l.b16 %v583
    %v3065 = vunpack.c.h.b16 %v583
    %v3066 = vunpack.c.l.b16 %v584
    %v3067 = vunpack.c.h.b16 %v584
    %v3068 = vunpack.c.l.b16 %v585
    %v3069 = vunpack.c.h.b16 %v585
    %v3070 = vunpack.c.l.b16 %v586
    %v3071 = vunpack.c.h.b16 %v586
    %v3072 = vunpack.c.l.b16 %v587
    %v3073 = vunpack.c.h.b16 %v587
    %v3074 = vunpack.c.l.b16 %v588
    %v3075 = vunpack.c.h.b16 %v588
    %v3076 = vunpack.c.l.b16 %v589
    %v3077 = vunpack.c.h.b16 %v589
    %v3078 = vunpack.c.l.b16 %v590
    %v3079 = vunpack.c.h.b16 %v590
    %v3080 = vunpack.c.l.b16 %v591
    %v3081 = vunpack.c.h.b16 %v591
    %v3082 = vunpack.c.l.b16 %v592
    %v3083 = vunpack.c.h.b16 %v592
    %v3084 = vunpack.c.l.b16 %v593
    %v3085 = vunpack.c.h.b16 %v593
    %v3086 = vunpack.c.l.b16 %v594
    %v3087 = vunpack.c.h.b16 %v594
    %v3088 = vunpack.c.l.b16 %v595
    %v3089 = vunpack.c.h.b16 %v595
    %v3090 = vunpack.c.l.b16 %v596
    %v3091 = vunpack.c.h.b16 %v596
    %v3092 = vunpack.c.l.b16 %v597
    %v3093 = vunpack.c.h.b16 %v597
    %v3094 = vunpack.c.l.b16 %v598
    %v3095 = vunpack.c.h.b16 %v598
    %v3096 = vunpack.c.l.b16 %v599
    %v3097 = vunpack.c.h.b16 %v599
    %v3098 = vunpack.c.l.b16 %v600
    %v3099 = vunpack.c.h.b16 %v600
    %v3100 = vunpack.c.l.b16 %v601
    %v3101 = vunpack.c.h.b16 %v601
    %v3102 = vunpack.c.l.b16 %v602
    %v3103 = vunpack.c.h.b16 %v602
    %v3104 = vunpack.c.l.b16 %v603
    %v3105 = vunpack.c.h.b16 %v603
    %v3106 = vunpack.c.l.b16 %v604
    %v3107 = vunpack.c.h.b16 %v604
    %v3108 = vunpack.c.l.b16 %v605
    %v3109 = vunpack.c.h.b16 %v605
    %v3110 = vunpack.c.l.b16 %v606
    %v3111 = vunpack.c.h.b16 %v606
    %v3112 = vunpack.c.l.b16 %v607
    %v3113 = vunpack.c.h.b16 %v607
    %v3114 = vunpack.c.l.b16 %v608
    %v3115 = vunpack.c.h.b16 %v608
    %v3116 = vunpack.c.l.b16 %v609
    %v3117 = vunpack.c.h.b16 %v609
    %v3118 = vunpack.c.l.b16 %v610
    %v3119 = vunpack.c.h.b16 %v610
    %v3120 = vunpack.c.l.b16 %v611
    %v3121 = vunpack.c.h.b16 %v611
    %v3122 = vunpack.c.l.b16 %v612
    %v3123 = vunpack.c.h.b16 %v612
    %v3124 = vunpack.c.l.b16 %v613
    %v3125 = vunpack.c.h.b16 %v613
    %v3126 = vunpack.c.l.b16 %v614
    %v3127 = vunpack.c.h.b16 %v614
    %v3128 = vunpack.c.l.b16 %v615
    %v3129 = vunpack.c.h.b16 %v615
    %v3130 = vunpack.c.l.b16 %v616
    %v3131 = vunpack.c.h.b16 %v616
    %v3132 = vunpack.c.l.b16 %v617
    %v3133 = vunpack.c.h.b16 %v617
    %v3134 = vunpack.c.l.b16 %v618
    %v3135 = vunpack.c.h.b16 %v618
    %v3136 = vunpack.c.l.b16 %v619
    %v3137 = vunpack.c.h.b16 %v619
    %v3138 = vunpack.c.l.b16 %v620
    %v3139 = vunpack.c.h.b16 %v620
    %v3140 = vunpack.c.l.b16 %v621
    %v3141 = vunpack.c.h.b16 %v621
    %v3142 = vunpack.c.l.b16 %v622
    %v3143 = vunpack.c.h.b16 %v622
    %v3144 = vunpack.c.l.b16 %v623
    %v3145 = vunpack.c.h.b16 %v623
    %v3146 = vunpack.c.l.b16 %v624
    %v3147 = vunpack.c.h.b16 %v624
    %v3148 = vunpack.c.l.b16 %v625
    %v3149 = vunpack.c.h.b16 %v625
    %v3150 = vunpack.c.l.b16 %v626
    %v3151 = vunpack.c.h.b16 %v626
    %v3152 = vunpack.c.l.b16 %v627
    %v3153 = vunpack.c.h.b16 %v627
    %v3154 = vunpack.c.l.b16 %v628
    %v3155 = vunpack.c.h.b16 %v628
    %v3156 = vunpack.c.l.b16 %v629
    %v3157 = vunpack.c.h.b16 %v629
    %v3158 = vunpack.c.l.b16 %v630
    %v3159 = vunpack.c.h.b16 %v630
    %v3160 = vunpack.c.l.b16 %v631
    %v3161 = vunpack.c.h.b16 %v631
    %v3162 = vunpack.c.l.b16 %v632
    %v3163 = vunpack.c.h.b16 %v632
    %v3164 = vunpack.c.l.b16 %v633
    %v3165 = vunpack.c.h.b16 %v633
    %v3166 = vunpack.c.l.b16 %v634
    %v3167 = vunpack.c.h.b16 %v634
    %v3168 = vunpack.c.l.b16 %v635
    %v3169 = vunpack.c.h.b16 %v635
    %v3170 = vunpack.c.l.b16 %v636
    %v3171 = vunpack.c.h.b16 %v636
    %v3172 = vunpack.c.l.b16 %v637
    %v3173 = vunpack.c.h.b16 %v637
    %v3174 = vunpack.c.l.b16 %v638
    %v3175 = vunpack.c.h.b16 %v638
    %v3176 = vunpack.c.l.b16 %v639
    %v3177 = vunpack.c.h.b16 %v639
    %v3178 = vunpack.c.l.b16 %v640
    %v3179 = vunpack.c.h.b16 %v640
    %v3180 = vunpack.c.l.b16 %v641
    %v3181 = vunpack.c.h.b16 %v641
    %v3182 = vunpack.c.l.b16 %v642
    %v3183 = vunpack.c.h.b16 %v642
    %v3184 = vunpack.c.l.b16 %v643
    %v3185 = vunpack.c.h.b16 %v643
    %v3186 = vunpack.c.l.b16 %v644
    %v3187 = vunpack.c.h.b16 %v644
    %v3188 = vunpack.c.l.b16 %v645
    %v3189 = vunpack.c.h.b16 %v645
    %v3190 = vunpack.c.l.b16 %v646
    %v3191 = vunpack.c.h.b16 %v646
    %v3192 = vunpack.c.l.b16 %v647
    %v3193 = vunpack.c.h.b16 %v647
    %v3194 = vunpack.c.l.b16 %v648
    %v3195 = vunpack.c.h.b16 %v648
    %v3196 = vunpack.c.l.b16 %v649
    %v3197 = vunpack.c.h.b16 %v649
    %v3198 = vunpack.c.l.b16 %v650
    %v3199 = vunpack.c.h.b16 %v650
    %v3200 = vunpack.c.l.b16 %v651
    %v3201 = vunpack.c.h.b16 %v651
    %v3202 = vunpack.c.l.b16 %v652
    %v3203 = vunpack.c.h.b16 %v652
    %v3204 = vunpack.c.l.b16 %v653
    %v3205 = vunpack.c.h.b16 %v653
    %v3206 = vunpack.c.l.b16 %v654
    %v3207 = vunpack.c.h.b16 %v654
    %v3208 = vunpack.c.l.b16 %v655
    %v3209 = vunpack.c.h.b16 %v655
    %v3210 = vunpack.c.l.b16 %v656
    %v3211 = vunpack.c.h.b16 %v656
    %v3212 = vunpack.c.l.b16 %v657
    %v3213 = vunpack.c.h.b16 %v657
    %v3214 = vunpack.c.l.b16 %v658
    %v3215 = vunpack.c.h.b16 %v658
    %v3216 = vunpack.c.l.b16 %v659
    %v3217 = vunpack.c.h.b16 %v659
    %v3218 = vunpack.c.l.b16 %v660
    %v3219 = vunpack.c.h.b16 %v660
    %v3220 = vunpack.c.l.b16 %v661
    %v3221 = vunpack.c.h.b16 %v661
    %v3222 = vunpack.c.l.b16 %v662
    %v3223 = vunpack.c.h.b16 %v662
    %v3224 = vunpack.c.l.b16 %v663
    %v3225 = vunpack.c.h.b16 %v663
    %v3226 = vunpack.c.l.b16 %v664
    %v3227 = vunpack.c.h.b16 %v664
    %v3228 = vunpack.c.l.b16 %v665
    %v3229 = vunpack.c.h.b16 %v665
    %v3230 = vunpack.c.l.b16 %v666
    %v3231 = vunpack.c.h.b16 %v666
    %v3232 = vunpack.c.l.b16 %v667
    %v3233 = vunpack.c.h.b16 %v667
    %v3234 = vunpack.c.l.b16 %v668
    %v3235 = vunpack.c.h.b16 %v668
    %v3236 = vunpack.c.l.b16 %v669
    %v3237 = vunpack.c.h.b16 %v669
    %v3238 = vunpack.c.l.b16 %v670
    %v3239 = vunpack.c.h.b16 %v670
    %v3240 = vunpack.c.l.b16 %v671
    %v3241 = vunpack.c.h.b16 %v671
    %v3242 = vunpack.c.l.b16 %v672
    %v3243 = vunpack.c.h.b16 %v672
    %v3244 = vunpack.c.l.b16 %v673
    %v3245 = vunpack.c.h.b16 %v673
    %v3246 = vunpack.c.l.b16 %v674
    %v3247 = vunpack.c.h.b16 %v674
    %v3248 = vunpack.c.l.b16 %v675
    %v3249 = vunpack.c.h.b16 %v675
    %v3250 = vunpack.c.l.b16 %v676
    %v3251 = vunpack.c.h.b16 %v676
    %v3252 = vunpack.c.l.b16 %v677
    %v3253 = vunpack.c.h.b16 %v677
    %v3254 = vunpack.c.l.b16 %v678
    %v3255 = vunpack.c.h.b16 %v678
    %v3256 = vunpack.c.l.b16 %v679
    %v3257 = vunpack.c.h.b16 %v679
    %v3258 = vunpack.c.l.b16 %v680
    %v3259 = vunpack.c.h.b16 %v680
    %v3260 = vunpack.c.l.b16 %v681
    %v3261 = vunpack.c.h.b16 %v681
    %v3262 = vunpack.c.l.b16 %v682
    %v3263 = vunpack.c.h.b16 %v682
    %v3264 = vunpack.c.l.b16 %v683
    %v3265 = vunpack.c.h.b16 %v683
    %v3266 = vunpack.c.l.b16 %v684
    %v3267 = vunpack.c.h.b16 %v684
    %v3268 = vunpack.c.l.b16 %v685
    %v3269 = vunpack.c.h.b16 %v685
    %v3270 = vunpack.c.l.b16 %v686
    %v3271 = vunpack.c.h.b16 %v686
    %v3272 = vunpack.c.l.b16 %v687
    %v3273 = vunpack.c.h.b16 %v687
    %v3274 = vunpack.c.l.b16 %v688
    %v3275 = vunpack.c.h.b16 %v688
    %v3276 = vunpack.c.l.b16 %v689
    %v3277 = vunpack.c.h.b16 %v689
    %v3278 = vunpack.c.l.b16 %v690
    %v3279 = vunpack.c.h.b16 %v690
    %v3280 = vunpack.c.l.b16 %v691
    %v3281 = vunpack.c.h.b16 %v691
    %v3282 = vunpack.c.l.b16 %v692
    %v3283 = vunpack.c.h.b16 %v692
    %v3284 = vunpack.c.l.b16 %v693
    %v3285 = vunpack.c.h.b16 %v693
    %v3286 = vunpack.c.l.b16 %v694
    %v3287 = vunpack.c.h.b16 %v694
    %v3288 = vunpack.c.l.b16 %v695
    %v3289 = vunpack.c.h.b16 %v695
    %v3290 = vunpack.c.l.b16 %v696
    %v3291 = vunpack.c.h.b16 %v696
    %v3292 = vunpack.c.l.b16 %v697
    %v3293 = vunpack.c.h.b16 %v697
    %v3294 = vunpack.c.l.b16 %v698
    %v3295 = vunpack.c.h.b16 %v698
    %v3296 = vunpack.c.l.b16 %v699
    %v3297 = vunpack.c.h.b16 %v699
    %v3298 = vunpack.c.l.b16 %v700
    %v3299 = vunpack.c.h.b16 %v700
    %v3300 = vunpack.c.l.b16 %v701
    %v3301 = vunpack.c.h.b16 %v701
    %v3302 = vunpack.c.l.b16 %v702
    %v3303 = vunpack.c.h.b16 %v702
    %v3304 = vunpack.c.l.b16 %v703
    %v3305 = vunpack.c.h.b16 %v703
    %v3306 = vunpack.c.l.b16 %v704
    %v3307 = vunpack.c.h.b16 %v704
    %v3308 = vunpack.c.l.b16 %v705
    %v3309 = vunpack.c.h.b16 %v705
    %v3310 = vunpack.c.l.b16 %v706
    %v3311 = vunpack.c.h.b16 %v706
    %v3312 = vunpack.c.l.b16 %v707
    %v3313 = vunpack.c.h.b16 %v707
    %v3314 = vunpack.c.l.b16 %v708
    %v3315 = vunpack.c.h.b16 %v708
    %v3316 = vunpack.c.l.b16 %v709
    %v3317 = vunpack.c.h.b16 %v709
    %v3318 = vunpack.c.l.b16 %v710
    %v3319 = vunpack.c.h.b16 %v710
    %v3320 = vunpack.c.l.b16 %v711
    %v3321 = vunpack.c.h.b16 %v711
    %v3322 = vunpack.c.l.b16 %v712
    %v3323 = vunpack.c.h.b16 %v712
    %v3324 = vunpack.c.l.b16 %v713
    %v3325 = vunpack.c.h.b16 %v713
    %v3326 = vunpack.c.l.b16 %v714
    %v3327 = vunpack.c.h.b16 %v714
    %v3328 = vunpack.c.l.b16 %v715
    %v3329 = vunpack.c.h.b16 %v715
    %v3330 = vunpack.c.l.b16 %v716
    %v3331 = vunpack.c.h.b16 %v716
    %v3332 = vunpack.c.l.b16 %v717
    %v3333 = vunpack.c.h.b16 %v717
    %v3334 = vunpack.c.l.b16 %v718
    %v3335 = vunpack.c.h.b16 %v718
    %v3336 = vunpack.c.l.b16 %v719
    %v3337 = vunpack.c.h.b16 %v719
    %v3338 = vunpack.c.l.b16 %v720
    %v3339 = vunpack.c.h.b16 %v720
    %v3340 = vunpack.c.l.b16 %v721
    %v3341 = vunpack.c.h.b16 %v721
    %v3342 = vunpack.c.l.b16 %v722
    %v3343 = vunpack.c.h.b16 %v722
    %v3344 = vunpack.c.l.b16 %v723
    %v3345 = vunpack.c.h.b16 %v723
    %v3346 = vunpack.c.l.b16 %v724
    %v3347 = vunpack.c.h.b16 %v724
    %v3348 = vunpack.c.l.b16 %v725
    %v3349 = vunpack.c.h.b16 %v725
    %v3350 = vunpack.c.l.b16 %v726
    %v3351 = vunpack.c.h.b16 %v726
    %v3352 = vunpack.c.l.b16 %v727
    %v3353 = vunpack.c.h.b16 %v727
    %v3354 = vunpack.c.l.b16 %v728
    %v3355 = vunpack.c.h.b16 %v728
    %v3356 = vunpack.c.l.b16 %v729
    %v3357 = vunpack.c.h.b16 %v729
    %v3358 = vunpack.c.l.b16 %v730
    %v3359 = vunpack.c.h.b16 %v730
    %v3360 = vunpack.c.l.b16 %v731
    %v3361 = vunpack.c.h.b16 %v731
    %v3362 = vunpack.c.l.b16 %v732
    %v3363 = vunpack.c.h.b16 %v732
    %v3364 = vunpack.c.l.b16 %v733
    %v3365 = vunpack.c.h.b16 %v733
    %v3366 = vunpack.c.l.b16 %v734
    %v3367 = vunpack.c.h.b16 %v734
    %v3368 = vunpack.c.l.b16 %v735
    %v3369 = vunpack.c.h.b16 %v735
    %v3370 = vunpack.c.l.b16 %v736
    %v3371 = vunpack.c.h.b16 %v736
    %v3372 = vunpack.c.l.b16 %v737
    %v3373 = vunpack.c.h.b16 %v737
    %v3374 = vunpack.c.l.b16 %v738
    %v3375 = vunpack.c.h.b16 %v738
    %v3376 = vunpack.c.l.b16 %v739
    %v3377 = vunpack.c.h.b16 %v739
    %v3378 = vunpack.c.l.b16 %v740
    %v3379 = vunpack.c.h.b16 %v740
    %v3380 = vunpack.c.l.b16 %v741
    %v3381 = vunpack.c.h.b16 %v741
    %v3382 = vunpack.c.l.b16 %v742
    %v3383 = vunpack.c.h.b16 %v742
    %v3384 = vunpack.c.l.b16 %v743
    %v3385 = vunpack.c.h.b16 %v743
    %v3386 = vunpack.c.l.b16 %v744
    %v3387 = vunpack.c.h.b16 %v744
    %v3388 = vunpack.c.l.b16 %v745
    %v3389 = vunpack.c.h.b16 %v745
    %v3390 = vunpack.c.l.b16 %v746
    %v3391 = vunpack.c.h.b16 %v746
    %v3392 = vunpack.c.l.b16 %v747
    %v3393 = vunpack.c.h.b16 %v747
    %v3394 = vunpack.c.l.b16 %v748
    %v3395 = vunpack.c.h.b16 %v748
    %v3396 = vunpack.c.l.b16 %v749
    %v3397 = vunpack.c.h.b16 %v749
    %v3398 = vunpack.c.l.b16 %v750
    %v3399 = vunpack.c.h.b16 %v750
    %v3400 = vunpack.c.l.b16 %v751
    %v3401 = vunpack.c.h.b16 %v751
    %v3402 = vunpack.c.l.b16 %v752
    %v3403 = vunpack.c.h.b16 %v752
    %v3404 = vunpack.c.l.b16 %v753
    %v3405 = vunpack.c.h.b16 %v753
    %v3406 = vunpack.c.l.b16 %v754
    %v3407 = vunpack.c.h.b16 %v754
    %v3408 = vunpack.c.l.b16 %v755
    %v3409 = vunpack.c.h.b16 %v755
    %v3410 = vunpack.c.l.b16 %v756
    %v3411 = vunpack.c.h.b16 %v756
    %v3412 = vunpack.c.l.b16 %v757
    %v3413 = vunpack.c.h.b16 %v757
    %v3414 = vunpack.c.l.b16 %v758
    %v3415 = vunpack.c.h.b16 %v758
    %v3416 = vunpack.c.l.b16 %v759
    %v3417 = vunpack.c.h.b16 %v759
    %v3418 = vunpack.c.l.b16 %v760
    %v3419 = vunpack.c.h.b16 %v760
    %v3420 = vunpack.c.l.b16 %v761
    %v3421 = vunpack.c.h.b16 %v761
    %v3422 = vunpack.c.l.b16 %v762
    %v3423 = vunpack.c.h.b16 %v762
    %v3424 = vunpack.c.l.b16 %v763
    %v3425 = vunpack.c.h.b16 %v763
    %v3426 = vunpack.c.l.b16 %v764
    %v3427 = vunpack.c.h.b16 %v764
    %v3428 = vunpack.c.l.b16 %v765
    %v3429 = vunpack.c.h.b16 %v765
    %v3430 = vunpack.c.l.b16 %v766
    %v3431 = vunpack.c.h.b16 %v766
    %v3432 = vunpack.c.l.b16 %v767
    %v3433 = vunpack.c.h.b16 %v767
    %v3434 = vunpack.c.l.b16 %v768
    %v3435 = vunpack.c.h.b16 %v768
    %v3436 = vunpack.c.l.b16 %v769
    %v3437 = vunpack.c.h.b16 %v769
    %v3438 = vunpack.c.l.b16 %v770
    %v3439 = vunpack.c.h.b16 %v770
    %v3440 = vunpack.c.l.b16 %v771
    %v3441 = vunpack.c.h.b16 %v771
    %v3442 = vunpack.c.l.b16 %v772
    %v3443 = vunpack.c.h.b16 %v772
    %v3444 = vunpack.c.l.b16 %v773
    %v3445 = vunpack.c.h.b16 %v773
    %v3446 = vunpack.c.l.b16 %v774
    %v3447 = vunpack.c.h.b16 %v774
    %v3448 = vunpack.c.l.b16 %v775
    %v3449 = vunpack.c.h.b16 %v775
    %v3450 = vunpack.c.l.b16 %v776
    %v3451 = vunpack.c.h.b16 %v776
    %v3452 = vunpack.c.l.b16 %v777
    %v3453 = vunpack.c.h.b16 %v777
    %v3454 = vunpack.c.l.b16 %v778
    %v3455 = vunpack.c.h.b16 %v778
    %v3456 = vunpack.c.l.b16 %v779
    %v3457 = vunpack.c.h.b16 %v779
    %v3458 = vunpack.c.l.b16 %v780
    %v3459 = vunpack.c.h.b16 %v780
    %v3460 = vunpack.c.l.b16 %v781
    %v3461 = vunpack.c.h.b16 %v781
    %v3462 = vunpack.c.l.b16 %v782
    %v3463 = vunpack.c.h.b16 %v782
    %v3464 = vunpack.c.l.b16 %v783
    %v3465 = vunpack.c.h.b16 %v783
    %v3466 = vunpack.c.l.b16 %v784
    %v3467 = vunpack.c.h.b16 %v784
    %v3468 = vunpack.c.l.b16 %v785
    %v3469 = vunpack.c.h.b16 %v785
    %v3470 = vunpack.c.l.b16 %v786
    %v3471 = vunpack.c.h.b16 %v786
    %v3472 = vunpack.c.l.b16 %v787
    %v3473 = vunpack.c.h.b16 %v787
    %v3474 = vunpack.c.l.b16 %v788
    %v3475 = vunpack.c.h.b16 %v788
    %v3476 = vunpack.c.l.b16 %v789
    %v3477 = vunpack.c.h.b16 %v789
    %v3478 = vunpack.c.l.b16 %v790
    %v3479 = vunpack.c.h.b16 %v790
    %v3480 = vunpack.c.l.b16 %v791
    %v3481 = vunpack.c.h.b16 %v791
    %v3482 = vunpack.c.l.b16 %v792
    %v3483 = vunpack.c.h.b16 %v792
    %v3484 = vunpack.c.l.b16 %v793
    %v3485 = vunpack.c.h.b16 %v793
    %v3486 = vunpack.c.l.b16 %v794
    %v3487 = vunpack.c.h.b16 %v794
    %v3488 = vunpack.c.l.b16 %v795
    %v3489 = vunpack.c.h.b16 %v795
    %v3490 = vunpack.c.l.b16 %v796
    %v3491 = vunpack.c.h.b16 %v796
    %v3492 = vunpack.c.l.b16 %v797
    %v3493 = vunpack.c.h.b16 %v797
    %v3494 = vunpack.c.l.b16 %v798
    %v3495 = vunpack.c.h.b16 %v798
    %v3496 = vunpack.c.l.b16 %v799
    %v3497 = vunpack.c.h.b16 %v799
    %v3498 = vunpack.c.l.b16 %v800
    %v3499 = vunpack.c.h.b16 %v800
    %v3500 = vunpack.c.l.b16 %v801
    %v3501 = vunpack.c.h.b16 %v801
    %v3502 = vunpack.c.l.b16 %v802
    %v3503 = vunpack.c.h.b16 %v802
    %v3504 = vunpack.c.l.b16 %v803
    %v3505 = vunpack.c.h.b16 %v803
    %v3506 = vunpack.c.l.b16 %v804
    %v3507 = vunpack.c.h.b16 %v804
    %v3508 = vunpack.c.l.b16 %v805
    %v3509 = vunpack.c.h.b16 %v805
    %v3510 = vunpack.c.l.b16 %v806
    %v3511 = vunpack.c.h.b16 %v806
    %v3512 = vunpack.c.l.b16 %v807
    %v3513 = vunpack.c.h.b16 %v807
    %v3514 = vunpack.c.l.b16 %v808
    %v3515 = vunpack.c.h.b16 %v808
    %v3516 = vunpack.c.l.b16 %v809
    %v3517 = vunpack.c.h.b16 %v809
    %v3518 = vunpack.c.l.b16 %v810
    %v3519 = vunpack.c.h.b16 %v810
    %v3520 = vunpack.c.l.b16 %v811
    %v3521 = vunpack.c.h.b16 %v811
    %v3522 = vunpack.c.l.b16 %v812
    %v3523 = vunpack.c.h.b16 %v812
    %v3524 = vunpack.c.l.b16 %v813
    %v3525 = vunpack.c.h.b16 %v813
    %v3526 = vunpack.c.l.b16 %v814
    %v3527 = vunpack.c.h.b16 %v814
    %v3528 = vunpack.c.l.b16 %v815
    %v3529 = vunpack.c.h.b16 %v815
    %v3530 = vunpack.c.l.b16 %v816
    %v3531 = vunpack.c.h.b16 %v816
    %v3532 = vunpack.c.l.b16 %v817
    %v3533 = vunpack.c.h.b16 %v817
    %v3534 = vunpack.c.l.b16 %v818
    %v3535 = vunpack.c.h.b16 %v818
    %v3536 = vunpack.c.l.b16 %v819
    %v3537 = vunpack.c.h.b16 %v819
    %v3538 = vunpack.c.l.b16 %v820
    %v3539 = vunpack.c.h.b16 %v820
    %v3540 = vunpack.c.l.b16 %v821
    %v3541 = vunpack.c.h.b16 %v821
    %v3542 = vunpack.c.l.b16 %v822
    %v3543 = vunpack.c.h.b16 %v822
    %v3544 = vunpack.c.l.b16 %v823
    %v3545 = vunpack.c.h.b16 %v823
    %v3546 = vunpack.c.l.b16 %v824
    %v3547 = vunpack.c.h.b16 %v824
    %v3548 = vunpack.c.l.b16 %v825
    %v3549 = vunpack.c.h.b16 %v825
    %v3550 = vunpack.c.l.b16 %v826
    %v3551 = vunpack.c.h.b16 %v826
    %v3552 = vunpack.c.l.b16 %v827
    %v3553 = vunpack.c.h.b16 %v827
    %v3554 = vunpack.c.l.b16 %v828
    %v3555 = vunpack.c.h.b16 %v828
    %v3556 = vunpack.c.l.b16 %v829
    %v3557 = vunpack.c.h.b16 %v829
    %v3558 = vunpack.c.l.b16 %v830
    %v3559 = vunpack.c.h.b16 %v830
    %v3560 = vunpack.c.l.b16 %v831
    %v3561 = vunpack.c.h.b16 %v831
    %v3562 = vunpack.c.l.b16 %v832
    %v3563 = vunpack.c.h.b16 %v832
    %v3564 = vunpack.c.l.b16 %v833
    %v3565 = vunpack.c.h.b16 %v833
    %v3566 = vunpack.c.l.b16 %v834
    %v3567 = vunpack.c.h.b16 %v834
    %v3568 = vunpack.c.l.b16 %v835
    %v3569 = vunpack.c.h.b16 %v835
    %v3570 = vunpack.c.l.b16 %v836
    %v3571 = vunpack.c.h.b16 %v836
    %v3572 = vunpack.c.l.b16 %v837
    %v3573 = vunpack.c.h.b16 %v837
    %v3574 = vunpack.c.l.b16 %v838
    %v3575 = vunpack.c.h.b16 %v838
    %v3576 = vunpack.c.l.b16 %v839
    %v3577 = vunpack.c.h.b16 %v839
    %v3578 = vunpack.c.l.b16 %v840
    %v3579 = vunpack.c.h.b16 %v840
    %v3580 = vunpack.c.l.b16 %v841
    %v3581 = vunpack.c.h.b16 %v841
    %v3582 = vunpack.c.l.b16 %v842
    %v3583 = vunpack.c.h.b16 %v842
    %v3584 = vunpack.c.l.b16 %v843
    %v3585 = vunpack.c.h.b16 %v843
    %v3586 = vunpack.c.l.b16 %v844
    %v3587 = vunpack.c.h.b16 %v844
    %v3588 = vunpack.c.l.b16 %v845
    %v3589 = vunpack.c.h.b16 %v845
    %v3590 = vunpack.c.l.b16 %v846
    %v3591 = vunpack.c.h.b16 %v846
    %v3592 = vunpack.c.l.b16 %v847
    %v3593 = vunpack.c.h.b16 %v847
    %v3594 = vunpack.c.l.b16 %v848
    %v3595 = vunpack.c.h.b16 %v848
    %v3596 = vunpack.c.l.b16 %v849
    %v3597 = vunpack.c.h.b16 %v849
    %v3598 = vunpack.c.l.b16 %v850
    %v3599 = vunpack.c.h.b16 %v850
    %v3600 = vunpack.c.l.b16 %v851
    %v3601 = vunpack.c.h.b16 %v851
    %v3602 = vunpack.c.l.b16 %v852
    %v3603 = vunpack.c.h.b16 %v852
    %v3604 = vunpack.c.l.b16 %v853
    %v3605 = vunpack.c.h.b16 %v853
    %v3606 = vunpack.c.l.b16 %v854
    %v3607 = vunpack.c.h.b16 %v854
    %v3608 = vunpack.c.l.b16 %v855
    %v3609 = vunpack.c.h.b16 %v855
    %v3610 = vunpack.c.l.b16 %v856
    %v3611 = vunpack.c.h.b16 %v856
    %v3612 = vunpack.c.l.b16 %v857
    %v3613 = vunpack.c.h.b16 %v857
    %v3614 = vunpack.c.l.b16 %v858
    %v3615 = vunpack.c.h.b16 %v858
    %v3616 = vunpack.c.l.b16 %v859
    %v3617 = vunpack.c.h.b16 %v859
    %v3618 = vunpack.c.l.b16 %v860
    %v3619 = vunpack.c.h.b16 %v860
    %v3620 = vunpack.c.l.b16 %v861
    %v3621 = vunpack.c.h.b16 %v861
    %v3622 = vunpack.c.l.b16 %v862
    %v3623 = vunpack.c.h.b16 %v862
    %v3624 = vunpack.c.l.b16 %v863
    %v3625 = vunpack.c.h.b16 %v863
    %v3626 = vunpack.c.l.b16 %v864
    %v3627 = vunpack.c.h.b16 %v864
    %v3628 = vunpack.c.l.b16 %v865
    %v3629 = vunpack.c.h.b16 %v865
    %v3630 = vunpack.c.l.b16 %v866
    %v3631 = vunpack.c.h.b16 %v866
    %v3632 = vunpack.c.l.b16 %v867
    %v3633 = vunpack.c.h.b16 %v867
    %v3634 = vunpack.c.l.b16 %v868
    %v3635 = vunpack.c.h.b16 %v868
    %v3636 = vunpack.c.l.b16 %v869
    %v3637 = vunpack.c.h.b16 %v869
    %v3638 = vunpack.c.l.b16 %v870
    %v3639 = vunpack.c.h.b16 %v870
    %v3640 = vunpack.c.l.b16 %v871
    %v3641 = vunpack.c.h.b16 %v871
    %v3642 = vunpack.c.l.b16 %v872
    %v3643 = vunpack.c.h.b16 %v872
    %v3644 = vunpack.c.l.b16 %v873
    %v3645 = vunpack.c.h.b16 %v873
    %v3646 = vunpack.c.l.b16 %v874
    %v3647 = vunpack.c.h.b16 %v874
    %v3648 = vunpack.c.l.b16 %v875
    %v3649 = vunpack.c.h.b16 %v875
    %v3650 = vunpack.c.l.b16 %v876
    %v3651 = vunpack.c.h.b16 %v876
    %v3652 = vunpack.c.l.b16 %v877
    %v3653 = vunpack.c.h.b16 %v877
    %v3654 = vunpack.c.l.b16 %v878
    %v3655 = vunpack.c.h.b16 %v878
    %v3656 = vunpack.c.l.b16 %v879
    %v3657 = vunpack.c.h.b16 %v879
    %v3658 = vunpack.c.l.b16 %v880
    %v3659 = vunpack.c.h.b16 %v880
    %v3660 = vunpack.c.l.b16 %v881
    %v3661 = vunpack.c.h.b16 %v881
    %v3662 = vunpack.c.l.b16 %v882
    %v3663 = vunpack.c.h.b16 %v882
    %v3664 = vunpack.c.l.b16 %v883
    %v3665 = vunpack.c.h.b16 %v883
    %v3666 = vunpack.c.l.b16 %v884
    %v3667 = vunpack.c.h.b16 %v884
    %v3668 = vunpack.c.l.b16 %v885
    %v3669 = vunpack.c.h.b16 %v885
    %v3670 = vunpack.c.l.b16 %v886
    %v3671 = vunpack.c.h.b16 %v886
    %v3672 = vunpack.c.l.b16 %v887
    %v3673 = vunpack.c.h.b16 %v887
    %v3674 = vunpack.c.l.b16 %v888
    %v3675 = vunpack.c.h.b16 %v888
    %v3676 = vunpack.c.l.b16 %v889
    %v3677 = vunpack.c.h.b16 %v889
    %v3678 = vunpack.c.l.b16 %v890
    %v3679 = vunpack.c.h.b16 %v890
    %v3680 = vunpack.c.l.b16 %v891
    %v3681 = vunpack.c.h.b16 %v891
    %v3682 = vunpack.c.l.b16 %v892
    %v3683 = vunpack.c.h.b16 %v892
    %v3684 = vunpack.c.l.b16 %v893
    %v3685 = vunpack.c.h.b16 %v893
    %v3686 = vunpack.c.l.b16 %v894
    %v3687 = vunpack.c.h.b16 %v894
    %v3688 = vunpack.c.l.b16 %v895
    %v3689 = vunpack.c.h.b16 %v895
    %v3690 = vunpack.c.l.b16 %v896
    %v3691 = vunpack.c.h.b16 %v896
    %v3692 = vunpack.c.l.b16 %v897
    %v3693 = vunpack.c.h.b16 %v897
    %v3694 = vunpack.c.l.b16 %v898
    %v3695 = vunpack.c.h.b16 %v898
    %v3696 = vunpack.c.l.b16 %v899
    %v3697 = vunpack.c.h.b16 %v899
    %v3698 = vunpack.c.l.b16 %v900
    %v3699 = vunpack.c.h.b16 %v900
    %v3700 = vunpack.c.l.b16 %v901
    %v3701 = vunpack.c.h.b16 %v901
    %v3702 = vunpack.c.l.b16 %v902
    %v3703 = vunpack.c.h.b16 %v902
    %v3704 = vunpack.c.l.b16 %v903
    %v3705 = vunpack.c.h.b16 %v903
    %v3706 = vunpack.c.l.b16 %v904
    %v3707 = vunpack.c.h.b16 %v904
    %v3708 = vunpack.c.l.b16 %v905
    %v3709 = vunpack.c.h.b16 %v905
    %v3710 = vunpack.c.l.b16 %v906
    %v3711 = vunpack.c.h.b16 %v906
    %v3712 = vunpack.c.l.b16 %v907
    %v3713 = vunpack.c.h.b16 %v907
    %v3714 = vunpack.c.l.b16 %v908
    %v3715 = vunpack.c.h.b16 %v908
    %v3716 = vunpack.c.l.b16 %v909
    %v3717 = vunpack.c.h.b16 %v909
    %v3718 = vunpack.c.l.b16 %v910
    %v3719 = vunpack.c.h.b16 %v910
    %v3720 = vunpack.c.l.b16 %v911
    %v3721 = vunpack.c.h.b16 %v911
    %v3722 = vunpack.c.l.b16 %v912
    %v3723 = vunpack.c.h.b16 %v912
    %v3724 = vunpack.c.l.b16 %v913
    %v3725 = vunpack.c.h.b16 %v913
    %v3726 = vunpack.c.l.b16 %v914
    %v3727 = vunpack.c.h.b16 %v914
    %v3728 = vunpack.c.l.b16 %v915
    %v3729 = vunpack.c.h.b16 %v915
    %v3730 = vunpack.c.l.b16 %v916
    %v3731 = vunpack.c.h.b16 %v916
    %v3732 = vunpack.c.l.b16 %v917
    %v3733 = vunpack.c.h.b16 %v917
    %v3734 = vunpack.c.l.b16 %v918
    %v3735 = vunpack.c.h.b16 %v918
    %v3736 = vunpack.c.l.b16 %v919
    %v3737 = vunpack.c.h.b16 %v919
    %v3738 = vunpack.c.l.b16 %v920
    %v3739 = vunpack.c.h.b16 %v920
    %v3740 = vunpack.c.l.b16 %v921
    %v3741 = vunpack.c.h.b16 %v921
    %v3742 = vunpack.c.l.b16 %v922
    %v3743 = vunpack.c.h.b16 %v922
    %v3744 = vunpack.c.l.b16 %v923
    %v3745 = vunpack.c.h.b16 %v923
    %v3746 = vunpack.c.l.b16 %v924
    %v3747 = vunpack.c.h.b16 %v924
    %v3748 = vunpack.c.l.b16 %v925
    %v3749 = vunpack.c.h.b16 %v925
    %v3750 = vunpack.c.l.b16 %v926
    %v3751 = vunpack.c.h.b16 %v926
    %v3752 = vunpack.c.l.b16 %v927
    %v3753 = vunpack.c.h.b16 %v927
    %v3754 = vunpack.c.l.b16 %v928
    %v3755 = vunpack.c.h.b16 %v928
    %v3756 = vunpack.c.l.b16 %v929
    %v3757 = vunpack.c.h.b16 %v929
    %v3758 = vunpack.c.l.b16 %v930
    %v3759 = vunpack.c.h.b16 %v930
    %v3760 = vunpack.c.l.b16 %v931
    %v3761 = vunpack.c.h.b16 %v931
    %v3762 = vunpack.c.l.b16 %v932
    %v3763 = vunpack.c.h.b16 %v932
    %v3764 = vunpack.c.l.b16 %v933
    %v3765 = vunpack.c.h.b16 %v933
    %v3766 = vunpack.c.l.b16 %v934
    %v3767 = vunpack.c.h.b16 %v934
    %v3768 = vunpack.c.l.b16 %v935
    %v3769 = vunpack.c.h.b16 %v935
    %v3770 = vunpack.c.l.b16 %v936
    %v3771 = vunpack.c.h.b16 %v936
    %v3772 = vunpack.c.l.b16 %v937
    %v3773 = vunpack.c.h.b16 %v937
    %v3774 = vunpack.c.l.b16 %v938
    %v3775 = vunpack.c.h.b16 %v938
    %v3776 = vunpack.c.l.b16 %v939
    %v3777 = vunpack.c.h.b16 %v939
    %v3778 = vunpack.c.l.b16 %v940
    %v3779 = vunpack.c.h.b16 %v940
    %v3780 = vunpack.c.l.b16 %v941
    %v3781 = vunpack.c.h.b16 %v941
    %v3782 = vunpack.c.l.b16 %v942
    %v3783 = vunpack.c.h.b16 %v942
    %v3784 = vunpack.c.l.b16 %v943
    %v3785 = vunpack.c.h.b16 %v943
    %v3786 = vunpack.c.l.b16 %v944
    %v3787 = vunpack.c.h.b16 %v944
    %v3788 = vunpack.c.l.b16 %v945
    %v3789 = vunpack.c.h.b16 %v945
    %v3790 = vunpack.c.l.b16 %v946
    %v3791 = vunpack.c.h.b16 %v946
    %v3792 = vunpack.c.l.b16 %v947
    %v3793 = vunpack.c.h.b16 %v947
    %v3794 = vunpack.c.l.b16 %v948
    %v3795 = vunpack.c.h.b16 %v948
    %v3796 = vunpack.c.l.b16 %v949
    %v3797 = vunpack.c.h.b16 %v949
    %v3798 = vunpack.c.l.b16 %v950
    %v3799 = vunpack.c.h.b16 %v950
    %v3800 = vunpack.c.l.b16 %v951
    %v3801 = vunpack.c.h.b16 %v951
    %v3802 = vunpack.c.l.b16 %v952
    %v3803 = vunpack.c.h.b16 %v952
    %v3804 = vunpack.c.l.b16 %v953
    %v3805 = vunpack.c.h.b16 %v953
    %v3806 = vunpack.c.l.b16 %v954
    %v3807 = vunpack.c.h.b16 %v954
    %v3808 = vunpack.c.l.b16 %v955
    %v3809 = vunpack.c.h.b16 %v955
    %v3810 = vunpack.c.l.b16 %v956
    %v3811 = vunpack.c.h.b16 %v956
    %v3812 = vunpack.c.l.b16 %v957
    %v3813 = vunpack.c.h.b16 %v957
    %v3814 = vunpack.c.l.b16 %v958
    %v3815 = vunpack.c.h.b16 %v958
    %v3816 = vunpack.c.l.b16 %v959
    %v3817 = vunpack.c.h.b16 %v959
    %v3818 = vunpack.c.l.b16 %v960
    %v3819 = vunpack.c.h.b16 %v960
    %v3820 = vunpack.c.l.b16 %v961
    %v3821 = vunpack.c.h.b16 %v961
    %v3822 = vunpack.c.l.b16 %v962
    %v3823 = vunpack.c.h.b16 %v962
    %v3824 = vunpack.c.l.b16 %v963
    %v3825 = vunpack.c.h.b16 %v963
    %v3826 = vunpack.c.l.b16 %v964
    %v3827 = vunpack.c.h.b16 %v964
    %v3828 = vunpack.c.l.b16 %v965
    %v3829 = vunpack.c.h.b16 %v965
    %v3830 = vunpack.c.l.b16 %v966
    %v3831 = vunpack.c.h.b16 %v966
    %v3832 = vunpack.c.l.b16 %v967
    %v3833 = vunpack.c.h.b16 %v967
    %v3834 = vunpack.c.l.b16 %v968
    %v3835 = vunpack.c.h.b16 %v968
    %v3836 = vunpack.c.l.b16 %v969
    %v3837 = vunpack.c.h.b16 %v969
    %v3838 = vunpack.c.l.b16 %v970
    %v3839 = vunpack.c.h.b16 %v970
    %v3840 = vunpack.c.l.b16 %v971
    %v3841 = vunpack.c.h.b16 %v971
    %v3842 = vunpack.c.l.b16 %v972
    %v3843 = vunpack.c.h.b16 %v972
    %v3844 = vunpack.c.l.b16 %v973
    %v3845 = vunpack.c.h.b16 %v973
    %v3846 = vunpack.c.l.b16 %v974
    %v3847 = vunpack.c.h.b16 %v974
    %v3848 = vunpack.c.l.b16 %v975
    %v3849 = vunpack.c.h.b16 %v975
    %v3850 = vunpack.c.l.b16 %v976
    %v3851 = vunpack.c.h.b16 %v976
    %v3852 = vunpack.c.l.b16 %v977
    %v3853 = vunpack.c.h.b16 %v977
    %v3854 = vunpack.c.l.b16 %v978
    %v3855 = vunpack.c.h.b16 %v978
    %v3856 = vunpack.c.l.b16 %v979
    %v3857 = vunpack.c.h.b16 %v979
    %v3858 = vunpack.c.l.b16 %v980
    %v3859 = vunpack.c.h.b16 %v980
    %v3860 = vunpack.c.l.b16 %v981
    %v3861 = vunpack.c.h.b16 %v981
    %v3862 = vunpack.c.l.b16 %v982
    %v3863 = vunpack.c.h.b16 %v982
    %v3864 = vunpack.c.l.b16 %v983
    %v3865 = vunpack.c.h.b16 %v983
    %v3866 = vunpack.c.l.b16 %v984
    %v3867 = vunpack.c.h.b16 %v984
    %v3868 = vunpack.c.l.b16 %v985
    %v3869 = vunpack.c.h.b16 %v985
    %v3870 = vunpack.c.l.b16 %v986
    %v3871 = vunpack.c.h.b16 %v986
    %v3872 = vunpack.c.l.b16 %v987
    %v3873 = vunpack.c.h.b16 %v987
    %v3874 = vunpack.c.l.b16 %v988
    %v3875 = vunpack.c.h.b16 %v988
    %v3876 = vunpack.c.l.b16 %v989
    %v3877 = vunpack.c.h.b16 %v989
    %v3878 = vunpack.c.l.b16 %v990
    %v3879 = vunpack.c.h.b16 %v990
    %v3880 = vunpack.c.l.b16 %v991
    %v3881 = vunpack.c.h.b16 %v991
    %v3882 = vunpack.c.l.b16 %v992
    %v3883 = vunpack.c.h.b16 %v992
    %v3884 = vunpack.c.l.b16 %v993
    %v3885 = vunpack.c.h.b16 %v993
    %v3886 = vunpack.c.l.b16 %v994
    %v3887 = vunpack.c.h.b16 %v994
    %v3888 = vunpack.c.l.b16 %v995
    %v3889 = vunpack.c.h.b16 %v995
    %v3890 = vunpack.c.l.b16 %v996
    %v3891 = vunpack.c.h.b16 %v996
    %v3892 = vunpack.c.l.b16 %v997
    %v3893 = vunpack.c.h.b16 %v997
    %v3894 = vunpack.c.l.b16 %v998
    %v3895 = vunpack.c.h.b16 %v998
    %v3896 = vunpack.c.l.b16 %v999
    %v3897 = vunpack.c.h.b16 %v999
    %v3898 = vunpack.c.l.b16 %v1000
    %v3899 = vunpack.c.h.b16 %v1000
    %v3900 = vunpack.c.l.b16 %v1001
    %v3901 = vunpack.c.h.b16 %v1001
    %v3902 = vunpack.c.l.b16 %v1002
    %v3903 = vunpack.c.h.b16 %v1002
    %v3904 = vunpack.c.l.b16 %v1003
    %v3905 = vunpack.c.h.b16 %v1003
    %v3906 = vunpack.c.l.b16 %v1004
    %v3907 = vunpack.c.h.b16 %v1004
    %v3908 = vunpack.c.l.b16 %v1005
    %v3909 = vunpack.c.h.b16 %v1005
    %v3910 = vunpack.c.l.b16 %v1006
    %v3911 = vunpack.c.h.b16 %v1006
    %v3912 = vunpack.c.l.b16 %v1007
    %v3913 = vunpack.c.h.b16 %v1007
    %v3914 = vunpack.c.l.b16 %v1008
    %v3915 = vunpack.c.h.b16 %v1008
    %v3916 = vunpack.c.l.b16 %v1009
    %v3917 = vunpack.c.h.b16 %v1009
    %v3918 = vunpack.c.l.b16 %v1010
    %v3919 = vunpack.c.h.b16 %v1010
    %v3920 = vunpack.c.l.b16 %v1011
    %v3921 = vunpack.c.h.b16 %v1011
    %v3922 = vunpack.c.l.b16 %v1012
    %v3923 = vunpack.c.h.b16 %v1012
    %v3924 = vunpack.c.l.b16 %v1013
    %v3925 = vunpack.c.h.b16 %v1013
    %v3926 = vunpack.c.l.b16 %v1014
    %v3927 = vunpack.c.h.b16 %v1014
    %v3928 = vunpack.c.l.b16 %v1015
    %v3929 = vunpack.c.h.b16 %v1015
    %v3930 = vunpack.c.l.b16 %v1016
    %v3931 = vunpack.c.h.b16 %v1016
    %v3932 = vunpack.c.l.b16 %v1017
    %v3933 = vunpack.c.h.b16 %v1017
    %v3934 = vunpack.c.l.b16 %v1018
    %v3935 = vunpack.c.h.b16 %v1018
    %v3936 = vunpack.c.l.b16 %v1019
    %v3937 = vunpack.c.h.b16 %v1019
    %v3938 = vunpack.c.l.b16 %v1020
    %v3939 = vunpack.c.h.b16 %v1020
    %v3940 = vunpack.c.l.b16 %v1021
    %v3941 = vunpack.c.h.b16 %v1021
    %v3942 = vunpack.c.l.b16 %v1022
    %v3943 = vunpack.c.h.b16 %v1022
    %v3944 = vunpack.c.l.b16 %v1023
    %v3945 = vunpack.c.h.b16 %v1023
    %v3946 = vunpack.c.l.b16 %v1024
    %v3947 = vunpack.c.h.b16 %v1024
    %v3948 = vunpack.c.l.b16 %v1025
    %v3949 = vunpack.c.h.b16 %v1025
    %v3950 = vunpack.c.l.b16 %v1026
    %v3951 = vunpack.c.h.b16 %v1026
    %v3952 = vunpack.c.l.b16 %v1027
    %v3953 = vunpack.c.h.b16 %v1027
    %v3954 = vunpack.c.l.b16 %v1028
    %v3955 = vunpack.c.h.b16 %v1028
    %v3956 = vunpack.c.l.b16 %v1029
    %v3957 = vunpack.c.h.b16 %v1029
    %v3958 = vunpack.c.l.b16 %v1030
    %v3959 = vunpack.c.h.b16 %v1030
    %v3960 = vunpack.c.l.b16 %v1031
    %v3961 = vunpack.c.h.b16 %v1031
    %v3962 = vunpack.c.l.b16 %v1032
    %v3963 = vunpack.c.h.b16 %v1032
    %v3964 = vunpack.c.l.b16 %v1033
    %v3965 = vunpack.c.h.b16 %v1033
    %v3966 = vunpack.c.l.b16 %v1034
    %v3967 = vunpack.c.h.b16 %v1034
    %v3968 = vunpack.c.l.b16 %v1035
    %v3969 = vunpack.c.h.b16 %v1035
    %v3970 = vunpack.c.l.b16 %v1036
    %v3971 = vunpack.c.h.b16 %v1036
    %v3972 = vunpack.c.l.b16 %v1037
    %v3973 = vunpack.c.h.b16 %v1037
    %v3974 = vunpack.c.l.b16 %v1038
    %v3975 = vunpack.c.h.b16 %v1038
    %v3976 = vunpack.c.l.b16 %v1039
    %v3977 = vunpack.c.h.b16 %v1039
    %v3978 = vunpack.c.l.b16 %v1040
    %v3979 = vunpack.c.h.b16 %v1040
    %v3980 = vunpack.c.l.b16 %v1041
    %v3981 = vunpack.c.h.b16 %v1041
    %v3982 = vunpack.c.l.b16 %v1042
    %v3983 = vunpack.c.h.b16 %v1042
    %v3984 = vunpack.c.l.b16 %v1043
    %v3985 = vunpack.c.h.b16 %v1043
    %v3986 = vunpack.c.l.b16 %v1044
    %v3987 = vunpack.c.h.b16 %v1044
    %v3988 = vunpack.c.l.b16 %v1045
    %v3989 = vunpack.c.h.b16 %v1045
    %v3990 = vunpack.c.l.b16 %v1046
    %v3991 = vunpack.c.h.b16 %v1046
    %v3992 = vunpack.c.l.b16 %v1047
    %v3993 = vunpack.c.h.b16 %v1047
    %v3994 = vunpack.c.l.b16 %v1048
    %v3995 = vunpack.c.h.b16 %v1048
    %v3996 = vunpack.c.l.b16 %v1049
    %v3997 = vunpack.c.h.b16 %v1049
    %v3998 = vunpack.c.l.b16 %v1050
    %v3999 = vunpack.c.h.b16 %v1050
    %v4000 = vunpack.c.l.b16 %v1051
    %v4001 = vunpack.c.h.b16 %v1051
    %v4002 = vunpack.c.l.b16 %v1052
    %v4003 = vunpack.c.h.b16 %v1052
    %v4004 = vunpack.c.l.b16 %v1053
    %v4005 = vunpack.c.h.b16 %v1053
    %v4006 = vunpack.c.l.b16 %v1054
    %v4007 = vunpack.c.h.b16 %v1054
    %v4008 = vunpack.c.l.b16 %v1055
    %v4009 = vunpack.c.h.b16 %v1055
    %v4010 = vunpack.c.l.b16 %v1056
    %v4011 = vunpack.c.h.b16 %v1056
    %v4012 = vunpack.c.l.b16 %v1057
    %v4013 = vunpack.c.h.b16 %v1057
    %v4014 = vunpack.c.l.b16 %v1058
    %v4015 = vunpack.c.h.b16 %v1058
    %v4016 = vunpack.c.l.b16 %v1059
    %v4017 = vunpack.c.h.b16 %v1059
    %v4018 = vunpack.c.l.b16 %v1060
    %v4019 = vunpack.c.h.b16 %v1060
    %v4020 = vunpack.c.l.b16 %v1061
    %v4021 = vunpack.c.h.b16 %v1061
    %v4022 = vunpack.c.l.b16 %v1062
    %v4023 = vunpack.c.h.b16 %v1062
    %v4024 = vunpack.c.l.b16 %v1063
    %v4025 = vunpack.c.h.b16 %v1063
    %v4026 = vunpack.c.l.b16 %v1064
    %v4027 = vunpack.c.h.b16 %v1064
    %v4028 = vunpack.c.l.b16 %v1065
    %v4029 = vunpack.c.h.b16 %v1065
    %v4030 = vunpack.c.l.b16 %v1066
    %v4031 = vunpack.c.h.b16 %v1066
    %v4032 = vunpack.c.l.b16 %v1067
    %v4033 = vunpack.c.h.b16 %v1067
    %v4034 = vunpack.c.l.b16 %v1068
    %v4035 = vunpack.c.h.b16 %v1068
    %v4036 = vunpack.c.l.b16 %v1069
    %v4037 = vunpack.c.h.b16 %v1069
    %v4038 = vunpack.c.l.b16 %v1070
    %v4039 = vunpack.c.h.b16 %v1070
    %v4040 = vunpack.c.l.b16 %v1071
    %v4041 = vunpack.c.h.b16 %v1071
    %v4042 = vunpack.c.l.b16 %v1072
    %v4043 = vunpack.c.h.b16 %v1072
    %v4044 = vunpack.c.l.b16 %v1073
    %v4045 = vunpack.c.h.b16 %v1073
    %v4046 = vunpack.c.l.b16 %v1074
    %v4047 = vunpack.c.h.b16 %v1074
    %v4048 = vunpack.c.l.b16 %v1075
    %v4049 = vunpack.c.h.b16 %v1075
    %v4050 = vunpack.c.l.b16 %v1076
    %v4051 = vunpack.c.h.b16 %v1076
    %v4052 = vunpack.c.l.b16 %v1077
    %v4053 = vunpack.c.h.b16 %v1077
    %v4054 = vunpack.c.l.b16 %v1078
    %v4055 = vunpack.c.h.b16 %v1078
    %v4056 = vunpack.c.l.b16 %v1079
    %v4057 = vunpack.c.h.b16 %v1079
    %v4058 = vunpack.c.l.b16 %v1080
    %v4059 = vunpack.c.h.b16 %v1080
    %v4060 = vunpack.c.l.b16 %v1081
    %v4061 = vunpack.c.h.b16 %v1081
    %v4062 = vunpack.c.l.b16 %v1082
    %v4063 = vunpack.c.h.b16 %v1082
    %v4064 = vunpack.c.l.b16 %v1083
    %v4065 = vunpack.c.h.b16 %v1083
    %v4066 = vunpack.c.l.b16 %v1084
    %v4067 = vunpack.c.h.b16 %v1084
    %v4068 = vunpack.c.l.b16 %v1085
    %v4069 = vunpack.c.h.b16 %v1085
    %v4070 = vunpack.c.l.b16 %v1086
    %v4071 = vunpack.c.h.b16 %v1086
    %v4072 = vunpack.c.l.b16 %v1087
    %v4073 = vunpack.c.h.b16 %v1087
    %v4074 = vunpack.c.l.b16 %v1088
    %v4075 = vunpack.c.h.b16 %v1088
    %v4076 = vunpack.c.l.b16 %v1089
    %v4077 = vunpack.c.h.b16 %v1089
    %v4078 = vunpack.c.l.b16 %v1090
    %v4079 = vunpack.c.h.b16 %v1090
    %v4080 = vunpack.c.l.b16 %v1091
    %v4081 = vunpack.c.h.b16 %v1091
    %v4082 = vunpack.c.l.b16 %v1092
    %v4083 = vunpack.c.h.b16 %v1092
    %v4084 = vunpack.c.l.b16 %v1093
    %v4085 = vunpack.c.h.b16 %v1093
    %v4086 = vunpack.c.l.b16 %v1094
    %v4087 = vunpack.c.h.b16 %v1094
    %v4088 = vunpack.c.l.b16 %v1095
    %v4089 = vunpack.c.h.b16 %v1095
    %v4090 = vunpack.c.l.b16 %v1096
    %v4091 = vunpack.c.h.b16 %v1096
    %v4092 = vunpack.c.l.b16 %v1097
    %v4093 = vunpack.c.h.b16 %v1097
    %v4094 = vunpack.c.l.b16 %v1098
    %v4095 = vunpack.c.h.b16 %v1098
    %v4096 = vunpack.c.l.b16 %v1099
    %v4097 = vunpack.c.h.b16 %v1099
    %v4098 = vunpack.c.l.b16 %v1100
    %v4099 = vunpack.c.h.b16 %v1100
    %v4100 = vunpack.c.l.b16 %v1101
    %v4101 = vunpack.c.h.b16 %v1101
    %v4102 = vunpack.c.l.b16 %v1102
    %v4103 = vunpack.c.h.b16 %v1102
    %v4104 = vunpack.c.l.b16 %v1103
    %v4105 = vunpack.c.h.b16 %v1103
    %v4106 = vunpack.c.l.b16 %v1104
    %v4107 = vunpack.c.h.b16 %v1104
    %v4108 = vunpack.c.l.b16 %v1105
    %v4109 = vunpack.c.h.b16 %v1105
    %v4110 = vunpack.c.l.b16 %v1106
    %v4111 = vunpack.c.h.b16 %v1106
    %v4112 = vunpack.c.l.b16 %v1107
    %v4113 = vunpack.c.h.b16 %v1107
    %v4114 = vunpack.c.l.b16 %v1108
    %v4115 = vunpack.c.h.b16 %v1108
    %v4116 = vunpack.c.l.b16 %v1109
    %v4117 = vunpack.c.h.b16 %v1109
    %v4118 = vunpack.c.l.b16 %v1110
    %v4119 = vunpack.c.h.b16 %v1110
    %v4120 = vunpack.c.l.b16 %v1111
    %v4121 = vunpack.c.h.b16 %v1111
    %v4122 = vunpack.c.l.b16 %v1112
    %v4123 = vunpack.c.h.b16 %v1112
    %v4124 = vunpack.c.l.b16 %v1113
    %v4125 = vunpack.c.h.b16 %v1113
    %v4126 = vunpack.c.l.b16 %v1114
    %v4127 = vunpack.c.h.b16 %v1114
    %v4128 = vunpack.c.l.b16 %v1115
    %v4129 = vunpack.c.h.b16 %v1115
    %v4130 = vunpack.c.l.b16 %v1116
    %v4131 = vunpack.c.h.b16 %v1116
    %v4132 = vunpack.c.l.b16 %v1117
    %v4133 = vunpack.c.h.b16 %v1117
    %v4134 = vunpack.c.l.b16 %v1118
    %v4135 = vunpack.c.h.b16 %v1118
    %v4136 = vunpack.c.l.b16 %v1119
    %v4137 = vunpack.c.h.b16 %v1119
    %v4138 = vunpack.c.l.b16 %v1120
    %v4139 = vunpack.c.h.b16 %v1120
    %v4140 = vunpack.c.l.b16 %v1121
    %v4141 = vunpack.c.h.b16 %v1121
    %v4142 = vunpack.c.l.b16 %v1122
    %v4143 = vunpack.c.h.b16 %v1122
    %v4144 = vunpack.c.l.b16 %v1123
    %v4145 = vunpack.c.h.b16 %v1123
    %v4146 = vunpack.c.l.b16 %v1124
    %v4147 = vunpack.c.h.b16 %v1124
    %v4148 = vunpack.c.l.b16 %v1125
    %v4149 = vunpack.c.h.b16 %v1125
    %v4150 = vunpack.c.l.b16 %v1126
    %v4151 = vunpack.c.h.b16 %v1126
    %v4152 = vunpack.c.l.b16 %v1127
    %v4153 = vunpack.c.h.b16 %v1127
    %v4154 = vunpack.c.l.b16 %v1128
    %v4155 = vunpack.c.h.b16 %v1128
    %v4156 = vunpack.c.l.b16 %v1129
    %v4157 = vunpack.c.h.b16 %v1129
    %v4158 = vunpack.c.l.b16 %v1130
    %v4159 = vunpack.c.h.b16 %v1130
    %v4160 = vunpack.c.l.b16 %v1131
    %v4161 = vunpack.c.h.b16 %v1131
    %v4162 = vunpack.c.l.b16 %v1132
    %v4163 = vunpack.c.h.b16 %v1132
    %v4164 = vunpack.c.l.b16 %v1133
    %v4165 = vunpack.c.h.b16 %v1133
    %v4166 = vunpack.c.l.b16 %v1134
    %v4167 = vunpack.c.h.b16 %v1134
    %v4168 = vunpack.c.l.b16 %v1135
    %v4169 = vunpack.c.h.b16 %v1135
    %v4170 = vunpack.c.l.b16 %v1136
    %v4171 = vunpack.c.h.b16 %v1136
    %v4172 = vunpack.c.l.b16 %v1137
    %v4173 = vunpack.c.h.b16 %v1137
    %v4174 = vunpack.c.l.b16 %v1138
    %v4175 = vunpack.c.h.b16 %v1138
    %v4176 = vunpack.c.l.b16 %v1139
    %v4177 = vunpack.c.h.b16 %v1139
    %v4178 = vunpack.c.l.b16 %v1140
    %v4179 = vunpack.c.h.b16 %v1140
    %v4180 = vunpack.c.l.b16 %v1141
    %v4181 = vunpack.c.h.b16 %v1141
    %v4182 = vunpack.c.l.b16 %v1142
    %v4183 = vunpack.c.h.b16 %v1142
    %v4184 = vunpack.c.l.b16 %v1143
    %v4185 = vunpack.c.h.b16 %v1143
    %v4186 = vunpack.c.l.b16 %v1144
    %v4187 = vunpack.c.h.b16 %v1144
    %v4188 = vunpack.c.l.b16 %v1145
    %v4189 = vunpack.c.h.b16 %v1145
    %v4190 = vunpack.c.l.b16 %v1146
    %v4191 = vunpack.c.h.b16 %v1146
    %v4192 = vunpack.c.l.b16 %v1147
    %v4193 = vunpack.c.h.b16 %v1147
    %v4194 = vunpack.c.l.b16 %v1148
    %v4195 = vunpack.c.h.b16 %v1148
    %v4196 = vunpack.c.l.b16 %v1149
    %v4197 = vunpack.c.h.b16 %v1149
    %v4198 = vunpack.c.l.b16 %v1150
    %v4199 = vunpack.c.h.b16 %v1150
    %v4200 = vunpack.c.l.b16 %v1151
    %v4201 = vunpack.c.h.b16 %v1151
    %v4202 = vunpack.c.l.b16 %v1152
    %v4203 = vunpack.c.h.b16 %v1152
    %v4204 = vunpack.c.l.b16 %v1153
    %v4205 = vunpack.c.h.b16 %v1153
    %v4206 = vunpack.c.l.b16 %v1154
    %v4207 = vunpack.c.h.b16 %v1154
    %v4208 = vunpack.c.l.b16 %v1155
    %v4209 = vunpack.c.h.b16 %v1155
    %v4210 = vunpack.c.l.b16 %v1156
    %v4211 = vunpack.c.h.b16 %v1156
    %v4212 = vunpack.c.l.b16 %v1157
    %v4213 = vunpack.c.h.b16 %v1157
    %v4214 = vunpack.c.l.b16 %v1158
    %v4215 = vunpack.c.h.b16 %v1158
    %v4216 = vunpack.c.l.b16 %v1159
    %v4217 = vunpack.c.h.b16 %v1159
    %v4218 = vunpack.c.l.b16 %v1160
    %v4219 = vunpack.c.h.b16 %v1160
    %v4220 = vunpack.c.l.b16 %v1161
    %v4221 = vunpack.c.h.b16 %v1161
    %v4222 = vunpack.c.l.b16 %v1162
    %v4223 = vunpack.c.h.b16 %v1162
    %v4224 = vunpack.c.l.b16 %v1163
    %v4225 = vunpack.c.h.b16 %v1163
    %v4226 = vunpack.c.l.b16 %v1164
    %v4227 = vunpack.c.h.b16 %v1164
    %v4228 = vunpack.c.l.b16 %v1165
    %v4229 = vunpack.c.h.b16 %v1165
    %v4230 = vunpack.c.l.b16 %v1166
    %v4231 = vunpack.c.h.b16 %v1166
    %v4232 = vunpack.c.l.b16 %v1167
    %v4233 = vunpack.c.h.b16 %v1167
    %v4234 = vunpack.c.l.b16 %v1168
    %v4235 = vunpack.c.h.b16 %v1168
    %v4236 = vunpack.c.l.b16 %v1169
    %v4237 = vunpack.c.h.b16 %v1169
    %v4238 = vunpack.c.l.b16 %v1170
    %v4239 = vunpack.c.h.b16 %v1170
    %v4240 = vunpack.c.l.b16 %v1171
    %v4241 = vunpack.c.h.b16 %v1171
    %v4242 = vunpack.c.l.b16 %v1172
    %v4243 = vunpack.c.h.b16 %v1172
    %v4244 = vunpack.c.l.b16 %v1173
    %v4245 = vunpack.c.h.b16 %v1173
    %v4246 = vunpack.c.l.b16 %v1174
    %v4247 = vunpack.c.h.b16 %v1174
    %v4248 = vunpack.c.l.b16 %v1175
    %v4249 = vunpack.c.h.b16 %v1175
    %v4250 = vunpack.c.l.b16 %v1176
    %v4251 = vunpack.c.h.b16 %v1176
    %v4252 = vunpack.c.l.b16 %v1177
    %v4253 = vunpack.c.h.b16 %v1177
    %v4254 = vunpack.c.l.b16 %v1178
    %v4255 = vunpack.c.h.b16 %v1178
    %v4256 = vunpack.c.l.b16 %v1179
    %v4257 = vunpack.c.h.b16 %v1179
    %v4258 = vunpack.c.l.b16 %v1180
    %v4259 = vunpack.c.h.b16 %v1180
    %v4260 = vunpack.c.l.b16 %v1181
    %v4261 = vunpack.c.h.b16 %v1181
    %v4262 = vpack.c.b16 %v2828, %v2822
    %v4263 = vpack.c.b16 %v2829, %v2823
    %v4264 = vpack.c.b16 %v2830, %v2824
    %v4265 = vpack.c.b16 %v2831, %v2825
    %v4266 = vpack.c.b16 %v2832, %v2826
    %v4267 = vpack.c.b16 %v2833, %v2827
    %v4268 = vpack.c.b16 %v2840, %v2834
    %v4269 = vpack.c.b16 %v2841, %v2835
    %v4270 = vpack.c.b16 %v2842, %v2836
    %v4271 = vpack.c.b16 %v2843, %v2837
    %v4272 = vpack.c.b16 %v2844, %v2838
    %v4273 = vpack.c.b16 %v2845, %v2839
    %v4274 = vpack.c.b16 %v2852, %v2846
    %v4275 = vpack.c.b16 %v2853, %v2847
    %v4276 = vpack.c.b16 %v2854, %v2848
    %v4277 = vpack.c.b16 %v2855, %v2849
    %v4278 = vpack.c.b16 %v2856, %v2850
    %v4279 = vpack.c.b16 %v2857, %v2851
    %v4280 = vpack.c.b16 %v2864, %v2858
    %v4281 = vpack.c.b16 %v2865, %v2859
    %v4282 = vpack.c.b16 %v2866, %v2860
    %v4283 = vpack.c.b16 %v2867, %v2861
    %v4284 = vpack.c.b16 %v2868, %v2862
    %v4285 = vpack.c.b16 %v2869, %v2863
    %v4286 = vpack.c.b16 %v2876, %v2870
    %v4287 = vpack.c.b16 %v2877, %v2871
    %v4288 = vpack.c.b16 %v2878, %v2872
    %v4289 = vpack.c.b16 %v2879, %v2873
    %v4290 = vpack.c.b16 %v2880, %v2874
    %v4291 = vpack.c.b16 %v2881, %v2875
    %v4292 = vpack.c.b16 %v2888, %v2882
    %v4293 = vpack.c.b16 %v2889, %v2883
    %v4294 = vpack.c.b16 %v2890, %v2884
    %v4295 = vpack.c.b16 %v2891, %v2885
    %v4296 = vpack.c.b16 %v2892, %v2886
    %v4297 = vpack.c.b16 %v2893, %v2887
    %v4298 = vpack.c.b16 %v2900, %v2894
    %v4299 = vpack.c.b16 %v2901, %v2895
    %v4300 = vpack.c.b16 %v2902, %v2896
    %v4301 = vpack.c.b16 %v2903, %v2897
    %v4302 = vpack.c.b16 %v2904, %v2898
    %v4303 = vpack.c.b16 %v2905, %v2899
    %v4304 = vpack.c.b16 %v2912, %v2906
    %v4305 = vpack.c.b16 %v2913, %v2907
    %v4306 = vpack.c.b16 %v2914, %v2908
    %v4307 = vpack.c.b16 %v2915, %v2909
    %v4308 = vpack.c.b16 %v2916, %v2910
    %v4309 = vpack.c.b16 %v2917, %v2911
    %v4310 = vpack.c.b16 %v2924, %v2918
    %v4311 = vpack.c.b16 %v2925, %v2919
    %v4312 = vpack.c.b16 %v2926, %v2920
    %v4313 = vpack.c.b16 %v2927, %v2921
    %v4314 = vpack.c.b16 %v2928, %v2922
    %v4315 = vpack.c.b16 %v2929, %v2923
    %v4316 = vpack.c.b16 %v2936, %v2930
    %v4317 = vpack.c.b16 %v2937, %v2931
    %v4318 = vpack.c.b16 %v2938, %v2932
    %v4319 = vpack.c.b16 %v2939, %v2933
    %v4320 = vpack.c.b16 %v2940, %v2934
    %v4321 = vpack.c.b16 %v2941, %v2935
    %v4322 = vpack.c.b16 %v2948, %v2942
    %v4323 = vpack.c.b16 %v2949, %v2943
    %v4324 = vpack.c.b16 %v2950, %v2944
    %v4325 = vpack.c.b16 %v2951, %v2945
    %v4326 = vpack.c.b16 %v2952, %v2946
    %v4327 = vpack.c.b16 %v2953, %v2947
    %v4328 = vpack.c.b16 %v2960, %v2954
    %v4329 = vpack.c.b16 %v2961, %v2955
    %v4330 = vpack.c.b16 %v2962, %v2956
    %v4331 = vpack.c.b16 %v2963, %v2957
    %v4332 = vpack.c.b16 %v2964, %v2958
    %v4333 = vpack.c.b16 %v2965, %v2959
    %v4334 = vpack.c.b16 %v2972, %v2966
    %v4335 = vpack.c.b16 %v2973, %v2967
    %v4336 = vpack.c.b16 %v2974, %v2968
    %v4337 = vpack.c.b16 %v2975, %v2969
    %v4338 = vpack.c.b16 %v2976, %v2970
    %v4339 = vpack.c.b16 %v2977, %v2971
    %v4340 = vpack.c.b16 %v2984, %v2978
    %v4341 = vpack.c.b16 %v2985, %v2979
    %v4342 = vpack.c.b16 %v2986, %v2980
    %v4343 = vpack.c.b16 %v2987, %v2981
    %v4344 = vpack.c.b16 %v2988, %v2982
    %v4345 = vpack.c.b16 %v2989, %v2983
    %v4346 = vpack.c.b16 %v2996, %v2990
    %v4347 = vpack.c.b16 %v2997, %v2991
    %v4348 = vpack.c.b16 %v2998, %v2992
    %v4349 = vpack.c.b16 %v2999, %v2993
    %v4350 = vpack.c.b16 %v3000, %v2994
    %v4351 = vpack.c.b16 %v3001, %v2995
    %v4352 = vpack.c.b16 %v3008, %v3002
    %v4353 = vpack.c.b16 %v3009, %v3003
    %v4354 = vpack.c.b16 %v3010, %v3004
    %v4355 = vpack.c.b16 %v3011, %v3005
    %v4356 = vpack.c.b16 %v3012, %v3006
    %v4357 = vpack.c.b16 %v3013, %v3007
    %v4358 = vpack.c.b16 %v3020, %v3014
    %v4359 = vpack.c.b16 %v3021, %v3015
    %v4360 = vpack.c.b16 %v3022, %v3016
    %v4361 = vpack.c.b16 %v3023, %v3017
    %v4362 = vpack.c.b16 %v3024, %v3018
    %v4363 = vpack.c.b16 %v3025, %v3019
    %v4364 = vpack.c.b16 %v3032, %v3026
    %v4365 = vpack.c.b16 %v3033, %v3027
    %v4366 = vpack.c.b16 %v3034, %v3028
    %v4367 = vpack.c.b16 %v3035, %v3029
    %v4368 = vpack.c.b16 %v3036, %v3030
    %v4369 = vpack.c.b16 %v3037, %v3031
    %v4370 = vpack.c.b16 %v3044, %v3038
    %v4371 = vpack.c.b16 %v3045, %v3039
    %v4372 = vpack.c.b16 %v3046, %v3040
    %v4373 = vpack.c.b16 %v3047, %v3041
    %v4374 = vpack.c.b16 %v3048, %v3042
    %v4375 = vpack.c.b16 %v3049, %v3043
    %v4376 = vpack.c.b16 %v3056, %v3050
    %v4377 = vpack.c.b16 %v3057, %v3051
    %v4378 = vpack.c.b16 %v3058, %v3052
    %v4379 = vpack.c.b16 %v3059, %v3053
    %v4380 = vpack.c.b16 %v3060, %v3054
    %v4381 = vpack.c.b16 %v3061, %v3055
    %v4382 = vpack.c.b16 %v3068, %v3062
    %v4383 = vpack.c.b16 %v3069, %v3063
    %v4384 = vpack.c.b16 %v3070, %v3064
    %v4385 = vpack.c.b16 %v3071, %v3065
    %v4386 = vpack.c.b16 %v3072, %v3066
    %v4387 = vpack.c.b16 %v3073, %v3067
    %v4388 = vpack.c.b16 %v3080, %v3074
    %v4389 = vpack.c.b16 %v3081, %v3075
    %v4390 = vpack.c.b16 %v3082, %v3076
    %v4391 = vpack.c.b16 %v3083, %v3077
    %v4392 = vpack.c.b16 %v3084, %v3078
    %v4393 = vpack.c.b16 %v3085, %v3079
    %v4394 = vpack.c.b16 %v3092, %v3086
    %v4395 = vpack.c.b16 %v3093, %v3087
    %v4396 = vpack.c.b16 %v3094, %v3088
    %v4397 = vpack.c.b16 %v3095, %v3089
    %v4398 = vpack.c.b16 %v3096, %v3090
    %v4399 = vpack.c.b16 %v3097, %v3091
    %v4400 = vpack.c.b16 %v3104, %v3098
    %v4401 = vpack.c.b16 %v3105, %v3099
    %v4402 = vpack.c.b16 %v3106, %v3100
    %v4403 = vpack.c.b16 %v3107, %v3101
    %v4404 = vpack.c.b16 %v3108, %v3102
    %v4405 = vpack.c.b16 %v3109, %v3103
    %v4406 = vpack.c.b16 %v3116, %v3110
    %v4407 = vpack.c.b16 %v3117, %v3111
    %v4408 = vpack.c.b16 %v3118, %v3112
    %v4409 = vpack.c.b16 %v3119, %v3113
    %v4410 = vpack.c.b16 %v3120, %v3114
    %v4411 = vpack.c.b16 %v3121, %v3115
    %v4412 = vpack.c.b16 %v3128, %v3122
    %v4413 = vpack.c.b16 %v3129, %v3123
    %v4414 = vpack.c.b16 %v3130, %v3124
    %v4415 = vpack.c.b16 %v3131, %v3125
    %v4416 = vpack.c.b16 %v3132, %v3126
    %v4417 = vpack.c.b16 %v3133, %v3127
    %v4418 = vpack.c.b16 %v3140, %v3134
    %v4419 = vpack.c.b16 %v3141, %v3135
    %v4420 = vpack.c.b16 %v3142, %v3136
    %v4421 = vpack.c.b16 %v3143, %v3137
    %v4422 = vpack.c.b16 %v3144, %v3138
    %v4423 = vpack.c.b16 %v3145, %v3139
    %v4424 = vpack.c.b16 %v3152, %v3146
    %v4425 = vpack.c.b16 %v3153, %v3147
    %v4426 = vpack.c.b16 %v3154, %v3148
    %v4427 = vpack.c.b16 %v3155, %v3149
    %v4428 = vpack.c.b16 %v3156, %v3150
    %v4429 = vpack.c.b16 %v3157, %v3151
    %v4430 = vpack.c.b16 %v3164, %v3158
    %v4431 = vpack.c.b16 %v3165, %v3159
    %v4432 = vpack.c.b16 %v3166, %v3160
    %v4433 = vpack.c.b16 %v3167, %v3161
    %v4434 = vpack.c.b16 %v3168, %v3162
    %v4435 = vpack.c.b16 %v3169, %v3163
    %v4436 = vpack.c.b16 %v3176, %v3170
    %v4437 = vpack.c.b16 %v3177, %v3171
    %v4438 = vpack.c.b16 %v3178, %v3172
    %v4439 = vpack.c.b16 %v3179, %v3173
    %v4440 = vpack.c.b16 %v3180, %v3174
    %v4441 = vpack.c.b16 %v3181, %v3175
    %v4442 = vpack.c.b16 %v3188, %v3182
    %v4443 = vpack.c.b16 %v3189, %v3183
    %v4444 = vpack.c.b16 %v3190, %v3184
    %v4445 = vpack.c.b16 %v3191, %v3185
    %v4446 = vpack.c.b16 %v3192, %v3186
    %v4447 = vpack.c.b16 %v3193, %v3187
    %v4448 = vpack.c.b16 %v3200, %v3194
    %v4449 = vpack.c.b16 %v3201, %v3195
    %v4450 = vpack.c.b16 %v3202, %v3196
    %v4451 = vpack.c.b16 %v3203, %v3197
    %v4452 = vpack.c.b16 %v3204, %v3198
    %v4453 = vpack.c.b16 %v3205, %v3199
    %v4454 = vpack.c.b16 %v3212, %v3206
    %v4455 = vpack.c.b16 %v3213, %v3207
    %v4456 = vpack.c.b16 %v3214, %v3208
    %v4457 = vpack.c.b16 %v3215, %v3209
    %v4458 = vpack.c.b16 %v3216, %v3210
    %v4459 = vpack.c.b16 %v3217, %v3211
    %v4460 = vpack.c.b16 %v3224, %v3218
    %v4461 = vpack.c.b16 %v3225, %v3219
    %v4462 = vpack.c.b16 %v3226, %v3220
    %v4463 = vpack.c.b16 %v3227, %v3221
    %v4464 = vpack.c.b16 %v3228, %v3222
    %v4465 = vpack.c.b16 %v3229, %v3223
    %v4466 = vpack.c.b16 %v3236, %v3230
    %v4467 = vpack.c.b16 %v3237, %v3231
    %v4468 = vpack.c.b16 %v3238, %v3232
    %v4469 = vpack.c.b16 %v3239, %v3233
    %v4470 = vpack.c.b16 %v3240, %v3234
    %v4471 = vpack.c.b16 %v3241, %v3235
    %v4472 = vpack.c.b16 %v3248, %v3242
    %v4473 = vpack.c.b16 %v3249, %v3243
    %v4474 = vpack.c.b16 %v3250, %v3244
    %v4475 = vpack.c.b16 %v3251, %v3245
    %v4476 = vpack.c.b16 %v3252, %v3246
    %v4477 = vpack.c.b16 %v3253, %v3247
    %v4478 = vpack.c.b16 %v3260, %v3254
    %v4479 = vpack.c.b16 %v3261, %v3255
    %v4480 = vpack.c.b16 %v3262, %v3256
    %v4481 = vpack.c.b16 %v3263, %v3257
    %v4482 = vpack.c.b16 %v3264, %v3258
    %v4483 = vpack.c.b16 %v3265, %v3259
    %v4484 = vpack.c.b16 %v3272, %v3266
    %v4485 = vpack.c.b16 %v3273, %v3267
    %v4486 = vpack.c.b16 %v3274, %v3268
    %v4487 = vpack.c.b16 %v3275, %v3269
    %v4488 = vpack.c.b16 %v3276, %v3270
    %v4489 = vpack.c.b16 %v3277, %v3271
    %v4490 = vpack.c.b16 %v3284, %v3278
    %v4491 = vpack.c.b16 %v3285, %v3279
    %v4492 = vpack.c.b16 %v3286, %v3280
    %v4493 = vpack.c.b16 %v3287, %v3281
    %v4494 = vpack.c.b16 %v3288, %v3282
    %v4495 = vpack.c.b16 %v3289, %v3283
    %v4496 = vpack.c.b16 %v3296, %v3290
    %v4497 = vpack.c.b16 %v3297, %v3291
    %v4498 = vpack.c.b16 %v3298, %v3292
    %v4499 = vpack.c.b16 %v3299, %v3293
    %v4500 = vpack.c.b16 %v3300, %v3294
    %v4501 = vpack.c.b16 %v3301, %v3295
    %v4502 = vpack.c.b16 %v3308, %v3302
    %v4503 = vpack.c.b16 %v3309, %v3303
    %v4504 = vpack.c.b16 %v3310, %v3304
    %v4505 = vpack.c.b16 %v3311, %v3305
    %v4506 = vpack.c.b16 %v3312, %v3306
    %v4507 = vpack.c.b16 %v3313, %v3307
    %v4508 = vpack.c.b16 %v3320, %v3314
    %v4509 = vpack.c.b16 %v3321, %v3315
    %v4510 = vpack.c.b16 %v3322, %v3316
    %v4511 = vpack.c.b16 %v3323, %v3317
    %v4512 = vpack.c.b16 %v3324, %v3318
    %v4513 = vpack.c.b16 %v3325, %v3319
    %v4514 = vpack.c.b16 %v3332, %v3326
    %v4515 = vpack.c.b16 %v3333, %v3327
    %v4516 = vpack.c.b16 %v3334, %v3328
    %v4517 = vpack.c.b16 %v3335, %v3329
    %v4518 = vpack.c.b16 %v3336, %v3330
    %v4519 = vpack.c.b16 %v3337, %v3331
    %v4520 = vpack.c.b16 %v3344, %v3338
    %v4521 = vpack.c.b16 %v3345, %v3339
    %v4522 = vpack.c.b16 %v3346, %v3340
    %v4523 = vpack.c.b16 %v3347, %v3341
    %v4524 = vpack.c.b16 %v3348, %v3342
    %v4525 = vpack.c.b16 %v3349, %v3343
    %v4526 = vpack.c.b16 %v3356, %v3350
    %v4527 = vpack.c.b16 %v3357, %v3351
    %v4528 = vpack.c.b16 %v3358, %v3352
    %v4529 = vpack.c.b16 %v3359, %v3353
    %v4530 = vpack.c.b16 %v3360, %v3354
    %v4531 = vpack.c.b16 %v3361, %v3355
    %v4532 = vpack.c.b16 %v3368, %v3362
    %v4533 = vpack.c.b16 %v3369, %v3363
    %v4534 = vpack.c.b16 %v3370, %v3364
    %v4535 = vpack.c.b16 %v3371, %v3365
    %v4536 = vpack.c.b16 %v3372, %v3366
    %v4537 = vpack.c.b16 %v3373, %v3367
    %v4538 = vpack.c.b16 %v3380, %v3374
    %v4539 = vpack.c.b16 %v3381, %v3375
    %v4540 = vpack.c.b16 %v3382, %v3376
    %v4541 = vpack.c.b16 %v3383, %v3377
    %v4542 = vpack.c.b16 %v3384, %v3378
    %v4543 = vpack.c.b16 %v3385, %v3379
    %v4544 = vpack.c.b16 %v3392, %v3386
    %v4545 = vpack.c.b16 %v3393, %v3387
    %v4546 = vpack.c.b16 %v3394, %v3388
    %v4547 = vpack.c.b16 %v3395, %v3389
    %v4548 = vpack.c.b16 %v3396, %v3390
    %v4549 = vpack.c.b16 %v3397, %v3391
    %v4550 = vpack.c.b16 %v3404, %v3398
    %v4551 = vpack.c.b16 %v3405, %v3399
    %v4552 = vpack.c.b16 %v3406, %v3400
    %v4553 = vpack.c.b16 %v3407, %v3401
    %v4554 = vpack.c.b16 %v3408, %v3402
    %v4555 = vpack.c.b16 %v3409, %v3403
    %v4556 = vpack.c.b16 %v3416, %v3410
    %v4557 = vpack.c.b16 %v3417, %v3411
    %v4558 = vpack.c.b16 %v3418, %v3412
    %v4559 = vpack.c.b16 %v3419, %v3413
    %v4560 = vpack.c.b16 %v3420, %v3414
    %v4561 = vpack.c.b16 %v3421, %v3415
    %v4562 = vpack.c.b16 %v3428, %v3422
    %v4563 = vpack.c.b16 %v3429, %v3423
    %v4564 = vpack.c.b16 %v3430, %v3424
    %v4565 = vpack.c.b16 %v3431, %v3425
    %v4566 = vpack.c.b16 %v3432, %v3426
    %v4567 = vpack.c.b16 %v3433, %v3427
    %v4568 = vpack.c.b16 %v3440, %v3434
    %v4569 = vpack.c.b16 %v3441, %v3435
    %v4570 = vpack.c.b16 %v3442, %v3436
    %v4571 = vpack.c.b16 %v3443, %v3437
    %v4572 = vpack.c.b16 %v3444, %v3438
    %v4573 = vpack.c.b16 %v3445, %v3439
    %v4574 = vpack.c.b16 %v3452, %v3446
    %v4575 = vpack.c.b16 %v3453, %v3447
    %v4576 = vpack.c.b16 %v3454, %v3448
    %v4577 = vpack.c.b16 %v3455, %v3449
    %v4578 = vpack.c.b16 %v3456, %v3450
    %v4579 = vpack.c.b16 %v3457, %v3451
    %v4580 = vpack.c.b16 %v3464, %v3458
    %v4581 = vpack.c.b16 %v3465, %v3459
    %v4582 = vpack.c.b16 %v3466, %v3460
    %v4583 = vpack.c.b16 %v3467, %v3461
    %v4584 = vpack.c.b16 %v3468, %v3462
    %v4585 = vpack.c.b16 %v3469, %v3463
    %v4586 = vpack.c.b16 %v3476, %v3470
    %v4587 = vpack.c.b16 %v3477, %v3471
    %v4588 = vpack.c.b16 %v3478, %v3472
    %v4589 = vpack.c.b16 %v3479, %v3473
    %v4590 = vpack.c.b16 %v3480, %v3474
    %v4591 = vpack.c.b16 %v3481, %v3475
    %v4592 = vpack.c.b16 %v3488, %v3482
    %v4593 = vpack.c.b16 %v3489, %v3483
    %v4594 = vpack.c.b16 %v3490, %v3484
    %v4595 = vpack.c.b16 %v3491, %v3485
    %v4596 = vpack.c.b16 %v3492, %v3486
    %v4597 = vpack.c.b16 %v3493, %v3487
    %v4598 = vpack.c.b16 %v3500, %v3494
    %v4599 = vpack.c.b16 %v3501, %v3495
    %v4600 = vpack.c.b16 %v3502, %v3496
    %v4601 = vpack.c.b16 %v3503, %v3497
    %v4602 = vpack.c.b16 %v3504, %v3498
    %v4603 = vpack.c.b16 %v3505, %v3499
    %v4604 = vpack.c.b16 %v3512, %v3506
    %v4605 = vpack.c.b16 %v3513, %v3507
    %v4606 = vpack.c.b16 %v3514, %v3508
    %v4607 = vpack.c.b16 %v3515, %v3509
    %v4608 = vpack.c.b16 %v3516, %v3510
    %v4609 = vpack.c.b16 %v3517, %v3511
    %v4610 = vpack.c.b16 %v3524, %v3518
    %v4611 = vpack.c.b16 %v3525, %v3519
    %v4612 = vpack.c.b16 %v3526, %v3520
    %v4613 = vpack.c.b16 %v3527, %v3521
    %v4614 = vpack.c.b16 %v3528, %v3522
    %v4615 = vpack.c.b16 %v3529, %v3523
    %v4616 = vpack.c.b16 %v3536, %v3530
    %v4617 = vpack.c.b16 %v3537, %v3531
    %v4618 = vpack.c.b16 %v3538, %v3532
    %v4619 = vpack.c.b16 %v3539, %v3533
    %v4620 = vpack.c.b16 %v3540, %v3534
    %v4621 = vpack.c.b16 %v3541, %v3535
    %v4622 = vpack.c.b16 %v3548, %v3542
    %v4623 = vpack.c.b16 %v3549, %v3543
    %v4624 = vpack.c.b16 %v3550, %v3544
    %v4625 = vpack.c.b16 %v3551, %v3545
    %v4626 = vpack.c.b16 %v3552, %v3546
    %v4627 = vpack.c.b16 %v3553, %v3547
    %v4628 = vpack.c.b16 %v3560, %v3554
    %v4629 = vpack.c.b16 %v3561, %v3555
    %v4630 = vpack.c.b16 %v3562, %v3556
    %v4631 = vpack.c.b16 %v3563, %v3557
    %v4632 = vpack.c.b16 %v3564, %v3558
    %v4633 = vpack.c.b16 %v3565, %v3559
    %v4634 = vpack.c.b16 %v3572, %v3566
    %v4635 = vpack.c.b16 %v3573, %v3567
    %v4636 = vpack.c.b16 %v3574, %v3568
    %v4637 = vpack.c.b16 %v3575, %v3569
    %v4638 = vpack.c.b16 %v3576, %v3570
    %v4639 = vpack.c.b16 %v3577, %v3571
    %v4640 = vpack.c.b16 %v3584, %v3578
    %v4641 = vpack.c.b16 %v3585, %v3579
    %v4642 = vpack.c.b16 %v3586, %v3580
    %v4643 = vpack.c.b16 %v3587, %v3581
    %v4644 = vpack.c.b16 %v3588, %v3582
    %v4645 = vpack.c.b16 %v3589, %v3583
    %v4646 = vpack.c.b16 %v3596, %v3590
    %v4647 = vpack.c.b16 %v3597, %v3591
    %v4648 = vpack.c.b16 %v3598, %v3592
    %v4649 = vpack.c.b16 %v3599, %v3593
    %v4650 = vpack.c.b16 %v3600, %v3594
    %v4651 = vpack.c.b16 %v3601, %v3595
    %v4652 = vpack.c.b16 %v3608, %v3602
    %v4653 = vpack.c.b16 %v3609, %v3603
    %v4654 = vpack.c.b16 %v3610, %v3604
    %v4655 = vpack.c.b16 %v3611, %v3605
    %v4656 = vpack.c.b16 %v3612, %v3606
    %v4657 = vpack.c.b16 %v3613, %v3607
    %v4658 = vpack.c.b16 %v3620, %v3614
    %v4659 = vpack.c.b16 %v3621, %v3615
    %v4660 = vpack.c.b16 %v3622, %v3616
    %v4661 = vpack.c.b16 %v3623, %v3617
    %v4662 = vpack.c.b16 %v3624, %v3618
    %v4663 = vpack.c.b16 %v3625, %v3619
    %v4664 = vpack.c.b16 %v3632, %v3626
    %v4665 = vpack.c.b16 %v3633, %v3627
    %v4666 = vpack.c.b16 %v3634, %v3628
    %v4667 = vpack.c.b16 %v3635, %v3629
    %v4668 = vpack.c.b16 %v3636, %v3630
    %v4669 = vpack.c.b16 %v3637, %v3631
    %v4670 = vpack.c.b16 %v3644, %v3638
    %v4671 = vpack.c.b16 %v3645, %v3639
    %v4672 = vpack.c.b16 %v3646, %v3640
    %v4673 = vpack.c.b16 %v3647, %v3641
    %v4674 = vpack.c.b16 %v3648, %v3642
    %v4675 = vpack.c.b16 %v3649, %v3643
    %v4676 = vpack.c.b16 %v3656, %v3650
    %v4677 = vpack.c.b16 %v3657, %v3651
    %v4678 = vpack.c.b16 %v3658, %v3652
    %v4679 = vpack.c.b16 %v3659, %v3653
    %v4680 = vpack.c.b16 %v3660, %v3654
    %v4681 = vpack.c.b16 %v3661, %v3655
    %v4682 = vpack.c.b16 %v3668, %v3662
    %v4683 = vpack.c.b16 %v3669, %v3663
    %v4684 = vpack.c.b16 %v3670, %v3664
    %v4685 = vpack.c.b16 %v3671, %v3665
    %v4686 = vpack.c.b16 %v3672, %v3666
    %v4687 = vpack.c.b16 %v3673, %v3667
    %v4688 = vpack.c.b16 %v3680, %v3674
    %v4689 = vpack.c.b16 %v3681, %v3675
    %v4690 = vpack.c.b16 %v3682, %v3676
    %v4691 = vpack.c.b16 %v3683, %v3677
    %v4692 = vpack.c.b16 %v3684, %v3678
    %v4693 = vpack.c.b16 %v3685, %v3679
    %v4694 = vpack.c.b16 %v3692, %v3686
    %v4695 = vpack.c.b16 %v3693, %v3687
    %v4696 = vpack.c.b16 %v3694, %v3688
    %v4697 = vpack.c.b16 %v3695, %v3689
    %v4698 = vpack.c.b16 %v3696, %v3690
    %v4699 = vpack.c.b16 %v3697, %v3691
    %v4700 = vpack.c.b16 %v3704, %v3698
    %v4701 = vpack.c.b16 %v3705, %v3699
    %v4702 = vpack.c.b16 %v3706, %v3700
    %v4703 = vpack.c.b16 %v3707, %v3701
    %v4704 = vpack.c.b16 %v3708, %v3702
    %v4705 = vpack.c.b16 %v3709, %v3703
    %v4706 = vpack.c.b16 %v3716, %v3710
    %v4707 = vpack.c.b16 %v3717, %v3711
    %v4708 = vpack.c.b16 %v3718, %v3712
    %v4709 = vpack.c.b16 %v3719, %v3713
    %v4710 = vpack.c.b16 %v3720, %v3714
    %v4711 = vpack.c.b16 %v3721, %v3715
    %v4712 = vpack.c.b16 %v3728, %v3722
    %v4713 = vpack.c.b16 %v3729, %v3723
    %v4714 = vpack.c.b16 %v3730, %v3724
    %v4715 = vpack.c.b16 %v3731, %v3725
    %v4716 = vpack.c.b16 %v3732, %v3726
    %v4717 = vpack.c.b16 %v3733, %v3727
    %v4718 = vpack.c.b16 %v3740, %v3734
    %v4719 = vpack.c.b16 %v3741, %v3735
    %v4720 = vpack.c.b16 %v3742, %v3736
    %v4721 = vpack.c.b16 %v3743, %v3737
    %v4722 = vpack.c.b16 %v3744, %v3738
    %v4723 = vpack.c.b16 %v3745, %v3739
    %v4724 = vpack.c.b16 %v3752, %v3746
    %v4725 = vpack.c.b16 %v3753, %v3747
    %v4726 = vpack.c.b16 %v3754, %v3748
    %v4727 = vpack.c.b16 %v3755, %v3749
    %v4728 = vpack.c.b16 %v3756, %v3750
    %v4729 = vpack.c.b16 %v3757, %v3751
    %v4730 = vpack.c.b16 %v3764, %v3758
    %v4731 = vpack.c.b16 %v3765, %v3759
    %v4732 = vpack.c.b16 %v3766, %v3760
    %v4733 = vpack.c.b16 %v3767, %v3761
    %v4734 = vpack.c.b16 %v3768, %v3762
    %v4735 = vpack.c.b16 %v3769, %v3763
    %v4736 = vpack.c.b16 %v3776, %v3770
    %v4737 = vpack.c.b16 %v3777, %v3771
    %v4738 = vpack.c.b16 %v3778, %v3772
    %v4739 = vpack.c.b16 %v3779, %v3773
    %v4740 = vpack.c.b16 %v3780, %v3774
    %v4741 = vpack.c.b16 %v3781, %v3775
    %v4742 = vpack.c.b16 %v3788, %v3782
    %v4743 = vpack.c.b16 %v3789, %v3783
    %v4744 = vpack.c.b16 %v3790, %v3784
    %v4745 = vpack.c.b16 %v3791, %v3785
    %v4746 = vpack.c.b16 %v3792, %v3786
    %v4747 = vpack.c.b16 %v3793, %v3787
    %v4748 = vpack.c.b16 %v3800, %v3794
    %v4749 = vpack.c.b16 %v3801, %v3795
    %v4750 = vpack.c.b16 %v3802, %v3796
    %v4751 = vpack.c.b16 %v3803, %v3797
    %v4752 = vpack.c.b16 %v3804, %v3798
    %v4753 = vpack.c.b16 %v3805, %v3799
    %v4754 = vpack.c.b16 %v3812, %v3806
    %v4755 = vpack.c.b16 %v3813, %v3807
    %v4756 = vpack.c.b16 %v3814, %v3808
    %v4757 = vpack.c.b16 %v3815, %v3809
    %v4758 = vpack.c.b16 %v3816, %v3810
    %v4759 = vpack.c.b16 %v3817, %v3811
    %v4760 = vpack.c.b16 %v3824, %v3818
    %v4761 = vpack.c.b16 %v3825, %v3819
    %v4762 = vpack.c.b16 %v3826, %v3820
    %v4763 = vpack.c.b16 %v3827, %v3821
    %v4764 = vpack.c.b16 %v3828, %v3822
    %v4765 = vpack.c.b16 %v3829, %v3823
    %v4766 = vpack.c.b16 %v3836, %v3830
    %v4767 = vpack.c.b16 %v3837, %v3831
    %v4768 = vpack.c.b16 %v3838, %v3832
    %v4769 = vpack.c.b16 %v3839, %v3833
    %v4770 = vpack.c.b16 %v3840, %v3834
    %v4771 = vpack.c.b16 %v3841, %v3835
    %v4772 = vpack.c.b16 %v3848, %v3842
    %v4773 = vpack.c.b16 %v3849, %v3843
    %v4774 = vpack.c.b16 %v3850, %v3844
    %v4775 = vpack.c.b16 %v3851, %v3845
    %v4776 = vpack.c.b16 %v3852, %v3846
    %v4777 = vpack.c.b16 %v3853, %v3847
    %v4778 = vpack.c.b16 %v3860, %v3854
    %v4779 = vpack.c.b16 %v3861, %v3855
    %v4780 = vpack.c.b16 %v3862, %v3856
    %v4781 = vpack.c.b16 %v3863, %v3857
    %v4782 = vpack.c.b16 %v3864, %v3858
    %v4783 = vpack.c.b16 %v3865, %v3859
    %v4784 = vpack.c.b16 %v3872, %v3866
    %v4785 = vpack.c.b16 %v3873, %v3867
    %v4786 = vpack.c.b16 %v3874, %v3868
    %v4787 = vpack.c.b16 %v3875, %v3869
    %v4788 = vpack.c.b16 %v3876, %v3870
    %v4789 = vpack.c.b16 %v3877, %v3871
    %v4790 = vpack.c.b16 %v3884, %v3878
    %v4791 = vpack.c.b16 %v3885, %v3879
    %v4792 = vpack.c.b16 %v3886, %v3880
    %v4793 = vpack.c.b16 %v3887, %v3881
    %v4794 = vpack.c.b16 %v3888, %v3882
    %v4795 = vpack.c.b16 %v3889, %v3883
    %v4796 = vpack.c.b16 %v3896, %v3890
    %v4797 = vpack.c.b16 %v3897, %v3891
    %v4798 = vpack.c.b16 %v3898, %v3892
    %v4799 = vpack.c.b16 %v3899, %v3893
    %v4800 = vpack.c.b16 %v3900, %v3894
    %v4801 = vpack.c.b16 %v3901, %v3895
    %v4802 = vpack.c.b16 %v3908, %v3902
    %v4803 = vpack.c.b16 %v3909, %v3903
    %v4804 = vpack.c.b16 %v3910, %v3904
    %v4805 = vpack.c.b16 %v3911, %v3905
    %v4806 = vpack.c.b16 %v3912, %v3906
    %v4807 = vpack.c.b16 %v3913, %v3907
    %v4808 = vpack.c.b16 %v3920, %v3914
    %v4809 = vpack.c.b16 %v3921, %v3915
    %v4810 = vpack.c.b16 %v3922, %v3916
    %v4811 = vpack.c.b16 %v3923, %v3917
    %v4812 = vpack.c.b16 %v3924, %v3918
    %v4813 = vpack.c.b16 %v3925, %v3919
    %v4814 = vpack.c.b16 %v3932, %v3926
    %v4815 = vpack.c.b16 %v3933, %v3927
    %v4816 = vpack.c.b16 %v3934, %v3928
    %v4817 = vpack.c.b16 %v3935, %v3929
    %v4818 = vpack.c.b16 %v3936, %v3930
    %v4819 = vpack.c.b16 %v3937, %v3931
    %v4820 = vpack.c.b16 %v3944, %v3938
    %v4821 = vpack.c.b16 %v3945, %v3939
    %v4822 = vpack.c.b16 %v3946, %v3940
    %v4823 = vpack.c.b16 %v3947, %v3941
    %v4824 = vpack.c.b16 %v3948, %v3942
    %v4825 = vpack.c.b16 %v3949, %v3943
    %v4826 = vpack.c.b16 %v3956, %v3950
    %v4827 = vpack.c.b16 %v3957, %v3951
    %v4828 = vpack.c.b16 %v3958, %v3952
    %v4829 = vpack.c.b16 %v3959, %v3953
    %v4830 = vpack.c.b16 %v3960, %v3954
    %v4831 = vpack.c.b16 %v3961, %v3955
    %v4832 = vpack.c.b16 %v3968, %v3962
    %v4833 = vpack.c.b16 %v3969, %v3963
    %v4834 = vpack.c.b16 %v3970, %v3964
    %v4835 = vpack.c.b16 %v3971, %v3965
    %v4836 = vpack.c.b16 %v3972, %v3966
    %v4837 = vpack.c.b16 %v3973, %v3967
    %v4838 = vpack.c.b16 %v3980, %v3974
    %v4839 = vpack.c.b16 %v3981, %v3975
    %v4840 = vpack.c.b16 %v3982, %v3976
    %v4841 = vpack.c.b16 %v3983, %v3977
    %v4842 = vpack.c.b16 %v3984, %v3978
    %v4843 = vpack.c.b16 %v3985, %v3979
    %v4844 = vpack.c.b16 %v3992, %v3986
    %v4845 = vpack.c.b16 %v3993, %v3987
    %v4846 = vpack.c.b16 %v3994, %v3988
    %v4847 = vpack.c.b16 %v3995, %v3989
    %v4848 = vpack.c.b16 %v3996, %v3990
    %v4849 = vpack.c.b16 %v3997, %v3991
    %v4850 = vpack.c.b16 %v4004, %v3998
    %v4851 = vpack.c.b16 %v4005, %v3999
    %v4852 = vpack.c.b16 %v4006, %v4000
    %v4853 = vpack.c.b16 %v4007, %v4001
    %v4854 = vpack.c.b16 %v4008, %v4002
    %v4855 = vpack.c.b16 %v4009, %v4003
    %v4856 = vpack.c.b16 %v4016, %v4010
    %v4857 = vpack.c.b16 %v4017, %v4011
    %v4858 = vpack.c.b16 %v4018, %v4012
    %v4859 = vpack.c.b16 %v4019, %v4013
    %v4860 = vpack.c.b16 %v4020, %v4014
    %v4861 = vpack.c.b16 %v4021, %v4015
    %v4862 = vpack.c.b16 %v4028, %v4022
    %v4863 = vpack.c.b16 %v4029, %v4023
    %v4864 = vpack.c.b16 %v4030, %v4024
    %v4865 = vpack.c.b16 %v4031, %v4025
    %v4866 = vpack.c.b16 %v4032, %v4026
    %v4867 = vpack.c.b16 %v4033, %v4027
    %v4868 = vpack.c.b16 %v4040, %v4034
    %v4869 = vpack.c.b16 %v4041, %v4035
    %v4870 = vpack.c.b16 %v4042, %v4036
    %v4871 = vpack.c.b16 %v4043, %v4037
    %v4872 = vpack.c.b16 %v4044, %v4038
    %v4873 = vpack.c.b16 %v4045, %v4039
    %v4874 = vpack.c.b16 %v4052, %v4046
    %v4875 = vpack.c.b16 %v4053, %v4047
    %v4876 = vpack.c.b16 %v4054, %v4048
    %v4877 = vpack.c.b16 %v4055, %v4049
    %v4878 = vpack.c.b16 %v4056, %v4050
    %v4879 = vpack.c.b16 %v4057, %v4051
    %v4880 = vpack.c.b16 %v4064, %v4058
    %v4881 = vpack.c.b16 %v4065, %v4059
    %v4882 = vpack.c.b16 %v4066, %v4060
    %v4883 = vpack.c.b16 %v4067, %v4061
    %v4884 = vpack.c.b16 %v4068, %v4062
    %v4885 = vpack.c.b16 %v4069, %v4063
    %v4886 = vpack.c.b16 %v4076, %v4070
    %v4887 = vpack.c.b16 %v4077, %v4071
    %v4888 = vpack.c.b16 %v4078, %v4072
    %v4889 = vpack.c.b16 %v4079, %v4073
    %v4890 = vpack.c.b16 %v4080, %v4074
    %v4891 = vpack.c.b16 %v4081, %v4075
    %v4892 = vpack.c.b16 %v4088, %v4082
    %v4893 = vpack.c.b16 %v4089, %v4083
    %v4894 = vpack.c.b16 %v4090, %v4084
    %v4895 = vpack.c.b16 %v4091, %v4085
    %v4896 = vpack.c.b16 %v4092, %v4086
    %v4897 = vpack.c.b16 %v4093, %v4087
    %v4898 = vpack.c.b16 %v4100, %v4094
    %v4899 = vpack.c.b16 %v4101, %v4095
    %v4900 = vpack.c.b16 %v4102, %v4096
    %v4901 = vpack.c.b16 %v4103, %v4097
    %v4902 = vpack.c.b16 %v4104, %v4098
    %v4903 = vpack.c.b16 %v4105, %v4099
    %v4904 = vpack.c.b16 %v4112, %v4106
    %v4905 = vpack.c.b16 %v4113, %v4107
    %v4906 = vpack.c.b16 %v4114, %v4108
    %v4907 = vpack.c.b16 %v4115, %v4109
    %v4908 = vpack.c.b16 %v4116, %v4110
    %v4909 = vpack.c.b16 %v4117, %v4111
    %v4910 = vpack.c.b16 %v4124, %v4118
    %v4911 = vpack.c.b16 %v4125, %v4119
    %v4912 = vpack.c.b16 %v4126, %v4120
    %v4913 = vpack.c.b16 %v4127, %v4121
    %v4914 = vpack.c.b16 %v4128, %v4122
    %v4915 = vpack.c.b16 %v4129, %v4123
    %v4916 = vpack.c.b16 %v4136, %v4130
    %v4917 = vpack.c.b16 %v4137, %v4131
    %v4918 = vpack.c.b16 %v4138, %v4132
    %v4919 = vpack.c.b16 %v4139, %v4133
    %v4920 = vpack.c.b16 %v4140, %v4134
    %v4921 = vpack.c.b16 %v4141, %v4135
    %v4922 = vpack.c.b16 %v4148, %v4142
    %v4923 = vpack.c.b16 %v4149, %v4143
    %v4924 = vpack.c.b16 %v4150, %v4144
    %v4925 = vpack.c.b16 %v4151, %v4145
    %v4926 = vpack.c.b16 %v4152, %v4146
    %v4927 = vpack.c.b16 %v4153, %v4147
    %v4928 = vpack.c.b16 %v4160, %v4154
    %v4929 = vpack.c.b16 %v4161, %v4155
    %v4930 = vpack.c.b16 %v4162, %v4156
    %v4931 = vpack.c.b16 %v4163, %v4157
    %v4932 = vpack.c.b16 %v4164, %v4158
    %v4933 = vpack.c.b16 %v4165, %v4159
    %v4934 = vpack.c.b16 %v4172, %v4166
    %v4935 = vpack.c.b16 %v4173, %v4167
    %v4936 = vpack.c.b16 %v4174, %v4168
    %v4937 = vpack.c.b16 %v4175, %v4169
    %v4938 = vpack.c.b16 %v4176, %v4170
    %v4939 = vpack.c.b16 %v4177, %v4171
    %v4940 = vpack.c.b16 %v4184, %v4178
    %v4941 = vpack.c.b16 %v4185, %v4179
    %v4942 = vpack.c.b16 %v4186, %v4180
    %v4943 = vpack.c.b16 %v4187, %v4181
    %v4944 = vpack.c.b16 %v4188, %v4182
    %v4945 = vpack.c.b16 %v4189, %v4183
    %v4946 = vpack.c.b16 %v4196, %v4190
    %v4947 = vpack.c.b16 %v4197, %v4191
    %v4948 = vpack.c.b16 %v4198, %v4192
    %v4949 = vpack.c.b16 %v4199, %v4193
    %v4950 = vpack.c.b16 %v4200, %v4194
    %v4951 = vpack.c.b16 %v4201, %v4195
    %v4952 = vpack.c.b16 %v4208, %v4202
    %v4953 = vpack.c.b16 %v4209, %v4203
    %v4954 = vpack.c.b16 %v4210, %v4204
    %v4955 = vpack.c.b16 %v4211, %v4205
    %v4956 = vpack.c.b16 %v4212, %v4206
    %v4957 = vpack.c.b16 %v4213, %v4207
    %v4958 = vpack.c.b16 %v4220, %v4214
    %v4959 = vpack.c.b16 %v4221, %v4215
    %v4960 = vpack.c.b16 %v4222, %v4216
    %v4961 = vpack.c.b16 %v4223, %v4217
    %v4962 = vpack.c.b16 %v4224, %v4218
    %v4963 = vpack.c.b16 %v4225, %v4219
    %v4964 = vpack.c.b16 %v4232, %v4226
    %v4965 = vpack.c.b16 %v4233, %v4227
    %v4966 = vpack.c.b16 %v4234, %v4228
    %v4967 = vpack.c.b16 %v4235, %v4229
    %v4968 = vpack.c.b16 %v4236, %v4230
    %v4969 = vpack.c.b16 %v4237, %v4231
    %v4970 = vpack.c.b16 %v4244, %v4238
    %v4971 = vpack.c.b16 %v4245, %v4239
    %v4972 = vpack.c.b16 %v4246, %v4240
    %v4973 = vpack.c.b16 %v4247, %v4241
    %v4974 = vpack.c.b16 %v4248, %v4242
    %v4975 = vpack.c.b16 %v4249, %v4243
    %v4976 = vpack.c.b16 %v4256, %v4250
    %v4977 = vpack.c.b16 %v4257, %v4251
    %v4978 = vpack.c.b16 %v4258, %v4252
    %v4979 = vpack.c.b16 %v4259, %v4253
    %v4980 = vpack.c.b16 %v4260, %v4254
    %v4981 = vpack.c.b16 %v4261, %v4255
    %5702 = vmatprep.subr.bf16.mxu0 %v4263
    %5703 = vmatpush1.bf16.msra.mxu0 %v4262
    %5704 = vmatprep.subr.bf16.mxu0 %v4269
    %5705 = vmatpush1.bf16.msra.mxu0 %v4268
    %5706 = vmatprep.subr.bf16.mxu0 %v4275
    %5707 = vmatpush1.bf16.msra.mxu0 %v4274
    %5708 = vmatprep.subr.bf16.mxu0 %v4281
    %5709 = vmatpush1.bf16.msra.mxu0 %v4280
    %5710 = vmatprep.subr.bf16.mxu0 %v4287
    %5711 = vmatpush1.bf16.msra.mxu0 %v4286
    %5712 = vmatprep.subr.bf16.mxu0 %v4293
    %5713 = vmatpush1.bf16.msra.mxu0 %v4292
    %5714 = vmatprep.subr.bf16.mxu0 %v4299
    %5715 = vmatpush1.bf16.msra.mxu0 %v4298
    %5716 = vmatprep.subr.bf16.mxu0 %v4305
    %5717 = vmatpush1.bf16.msra.mxu0 %v4304
    %5718 = vmatprep.subr.bf16.mxu0 %v4311
    %5719 = vmatpush1.bf16.msra.mxu0 %v4310
    %5720 = vmatprep.subr.bf16.mxu0 %v4317
    %5721 = vmatpush1.bf16.msra.mxu0 %v4316
    %5722 = vmatprep.subr.bf16.mxu0 %v4323
    %5723 = vmatpush1.bf16.msra.mxu0 %v4322
    %5724 = vmatprep.subr.bf16.mxu0 %v4329
    %5725 = vmatpush1.bf16.msra.mxu0 %v4328
    %5726 = vmatprep.subr.bf16.mxu0 %v4335
    %5727 = vmatpush1.bf16.msra.mxu0 %v4334
    %5728 = vmatprep.subr.bf16.mxu0 %v4341
    %5729 = vmatpush1.bf16.msra.mxu0 %v4340
    %5730 = vmatprep.subr.bf16.mxu0 %v4347
    %5731 = vmatpush1.bf16.msra.mxu0 %v4346
    %5732 = vmatprep.subr.bf16.mxu0 %v4353
    %5733 = vmatpush1.bf16.msra.mxu0 %v4352
    %5734 = vmatprep.mubr.bf16.mxu0 %v1836
    %5735 = vmatmul.mubr.bf16.gmra.mrb[0].mxu0 %v1832
    %v5736 = vpop.f32.mrb[0].mxu0
    %v5737 = vadd.f32 0.0, %v5736
    %v5738 = vpop.f32.mrb[0].mxu0
    %v5739 = vadd.f32 0.0, %v5738
    %v5740 = vpop.f32.mrb[0].mxu0
    %v5741 = vadd.f32 0.0, %v5740
    %v5742 = vpop.f32.mrb[0].mxu0
    %v5743 = vadd.f32 0.0, %v5742
    %5744 = vmatprep.mubr.bf16.mxu0 %v2012
    %5745 = vmatmul.mubr.bf16.gmra.mrb[0].mxu0 %v1998
    %v5746 = vpop.f32.mrb[0].mxu0
    %v5747 = vadd.f32 0.0, %v5746
    %v5748 = vpop.f32.mrb[0].mxu0
    %v5749 = vadd.f32 0.0, %v5748
    %v5750 = vpop.f32.mrb[0].mxu0
    %v5751 = vpop.f32.mrb[0].mxu0
    %5752 = vdwg.mxu0
    %5753 = vmatprep.subr.bf16.mxu0 %v4359
    %5754 = vmatpush1.bf16.msra.mxu0 %v4358
    %5755 = vmatprep.subr.bf16.mxu0 %v4365
    %5756 = vmatpush1.bf16.msra.mxu0 %v4364
    %5757 = vmatprep.subr.bf16.mxu0 %v4371
    %5758 = vmatpush1.bf16.msra.mxu0 %v4370
    %5759 = vmatprep.subr.bf16.mxu0 %v4377
    %5760 = vmatpush1.bf16.msra.mxu0 %v4376
    %5761 = vmatprep.subr.bf16.mxu0 %v4383
    %5762 = vmatpush1.bf16.msra.mxu0 %v4382
    %5763 = vmatprep.subr.bf16.mxu0 %v4389
    %5764 = vmatpush1.bf16.msra.mxu0 %v4388
    %5765 = vmatprep.subr.bf16.mxu0 %v4395
    %5766 = vmatpush1.bf16.msra.mxu0 %v4394
    %5767 = vmatprep.subr.bf16.mxu0 %v4401
    %5768 = vmatpush1.bf16.msra.mxu0 %v4400
    %5769 = vmatprep.subr.bf16.mxu0 %v4407
    %5770 = vmatpush1.bf16.msra.mxu0 %v4406
    %5771 = vmatprep.subr.bf16.mxu0 %v4413
    %5772 = vmatpush1.bf16.msra.mxu0 %v4412
    %5773 = vmatprep.subr.bf16.mxu0 %v4419
    %5774 = vmatpush1.bf16.msra.mxu0 %v4418
    %5775 = vmatprep.subr.bf16.mxu0 %v4425
    %5776 = vmatpush1.bf16.msra.mxu0 %v4424
    %5777 = vmatprep.subr.bf16.mxu0 %v4431
    %5778 = vmatpush1.bf16.msra.mxu0 %v4430
    %5779 = vmatprep.subr.bf16.mxu0 %v4437
    %5780 = vmatpush1.bf16.msra.mxu0 %v4436
    %5781 = vmatprep.subr.bf16.mxu0 %v4443
    %5782 = vmatpush1.bf16.msra.mxu0 %v4442
    %5783 = vmatprep.subr.bf16.mxu0 %v4449
    %5784 = vmatpush1.bf16.msra.mxu0 %v4448
    %5785 = vmatprep.mubr.bf16.mxu0 %v1837
    %5786 = vmatmul.mubr.bf16.gmra.mrb[0].mxu0 %v1833
    %v5787 = vpop.f32.mrb[0].mxu0
    %v5788 = vadd.f32 %v5737, %v5787
    %v5789 = vpop.f32.mrb[0].mxu0
    %v5790 = vadd.f32 %v5739, %v5789
    %v5791 = vpop.f32.mrb[0].mxu0
    %v5792 = vadd.f32 %v5741, %v5791
    %v5793 = vpop.f32.mrb[0].mxu0
    %v5794 = vadd.f32 %v5743, %v5793
    %5795 = vmatprep.mubr.bf16.mxu0 %v2022
    %5796 = vmatmul.mubr.bf16.gmra.mrb[0].mxu0 %v2020
    %v5797 = vpop.f32.mrb[0].mxu0
    %v5798 = vadd.f32 %v5747, %v5797
    %v5799 = vpop.f32.mrb[0].mxu0
    %v5800 = vadd.f32 %v5749, %v5799
    %v5801 = vpop.f32.mrb[0].mxu0
    %v5802 = vpop.f32.mrb[0].mxu0
    %5803 = vdwg.mxu0
    %5804 = vmatprep.subr.bf16.mxu0 %v4455
    %5805 = vmatpush1.bf16.msra.mxu0 %v4454
    %5806 = vmatprep.subr.bf16.mxu0 %v4461
    %5807 = vmatpush1.bf16.msra.mxu0 %v4460
    %5808 = vmatprep.subr.bf16.mxu0 %v4467
    %5809 = vmatpush1.bf16.msra.mxu0 %v4466
    %5810 = vmatprep.subr.bf16.mxu0 %v4473
    %5811 = vmatpush1.bf16.msra.mxu0 %v4472
    %5812 = vmatprep.subr.bf16.mxu0 %v4479
    %5813 = vmatpush1.bf16.msra.mxu0 %v4478
    %5814 = vmatprep.subr.bf16.mxu0 %v4485
    %5815 = vmatpush1.bf16.msra.mxu0 %v4484
    %5816 = vmatprep.subr.bf16.mxu0 %v4491
    %5817 = vmatpush1.bf16.msra.mxu0 %v4490
    %5818 = vmatprep.subr.bf16.mxu0 %v4497
    %5819 = vmatpush1.bf16.msra.mxu0 %v4496
    %5820 = vmatprep.subr.bf16.mxu0 %v4503
    %5821 = vmatpush1.bf16.msra.mxu0 %v4502
    %5822 = vmatprep.subr.bf16.mxu0 %v4509
    %5823 = vmatpush1.bf16.msra.mxu0 %v4508
    %5824 = vmatprep.subr.bf16.mxu0 %v4515
    %5825 = vmatpush1.bf16.msra.mxu0 %v4514
    %5826 = vmatprep.subr.bf16.mxu0 %v4521
    %5827 = vmatpush1.bf16.msra.mxu0 %v4520
    %5828 = vmatprep.subr.bf16.mxu0 %v4527
    %5829 = vmatpush1.bf16.msra.mxu0 %v4526
    %5830 = vmatprep.subr.bf16.mxu0 %v4533
    %5831 = vmatpush1.bf16.msra.mxu0 %v4532
    %5832 = vmatprep.subr.bf16.mxu0 %v4539
    %5833 = vmatpush1.bf16.msra.mxu0 %v4538
    %5834 = vmatprep.subr.bf16.mxu0 %v4545
    %5835 = vmatpush1.bf16.msra.mxu0 %v4544
    %5836 = vmatprep.mubr.bf16.mxu0 %v1838
    %5837 = vmatmul.mubr.bf16.gmra.mrb[0].mxu0 %v1834
    %v5838 = vpop.f32.mrb[0].mxu0
    %v5839 = vadd.f32 %v5788, %v5838
    %v5840 = vpop.f32.mrb[0].mxu0
    %v5841 = vadd.f32 %v5790, %v5840
    %v5842 = vpop.f32.mrb[0].mxu0
    %v5843 = vadd.f32 %v5792, %v5842
    %v5844 = vpop.f32.mrb[0].mxu0
    %v5845 = vadd.f32 %v5794, %v5844
    %5846 = vmatprep.mubr.bf16.mxu0 %v2019
    %5847 = vmatmul.mubr.bf16.gmra.mrb[0].mxu0 %v2005
    %v5848 = vpop.f32.mrb[0].mxu0
    %v5849 = vadd.f32 %v5798, %v5848
    %v5850 = vpop.f32.mrb[0].mxu0
    %v5851 = vadd.f32 %v5800, %v5850
    %v5852 = vpop.f32.mrb[0].mxu0
    %v5853 = vpop.f32.mrb[0].mxu0
    %5854 = vdwg.mxu0
    %5855 = vmatprep.subr.bf16.mxu0 %v4551
    %5856 = vmatpush1.bf16.msra.mxu0 %v4550
    %5857 = vmatprep.subr.bf16.mxu0 %v4557
    %5858 = vmatpush1.bf16.msra.mxu0 %v4556
    %5859 = vmatprep.subr.bf16.mxu0 %v4563
    %5860 = vmatpush1.bf16.msra.mxu0 %v4562
    %5861 = vmatprep.subr.bf16.mxu0 %v4569
    %5862 = vmatpush1.bf16.msra.mxu0 %v4568
    %5863 = vmatprep.subr.bf16.mxu0 %v4575
    %5864 = vmatpush1.bf16.msra.mxu0 %v4574
    %5865 = vmatprep.subr.bf16.mxu0 %v4581
    %5866 = vmatpush1.bf16.msra.mxu0 %v4580
    %5867 = vmatprep.subr.bf16.mxu0 %v4587
    %5868 = vmatpush1.bf16.msra.mxu0 %v4586
    %5869 = vmatprep.subr.bf16.mxu0 %v4593
    %5870 = vmatpush1.bf16.msra.mxu0 %v4592
    %5871 = vmatprep.subr.bf16.mxu0 %v4599
    %5872 = vmatpush1.bf16.msra.mxu0 %v4598
    %5873 = vmatprep.subr.bf16.mxu0 %v4605
    %5874 = vmatpush1.bf16.msra.mxu0 %v4604
    %5875 = vmatprep.subr.bf16.mxu0 %v4611
    %5876 = vmatpush1.bf16.msra.mxu0 %v4610
    %5877 = vmatprep.subr.bf16.mxu0 %v4617
    %5878 = vmatpush1.bf16.msra.mxu0 %v4616
    %5879 = vmatprep.subr.bf16.mxu0 %v4623
    %5880 = vmatpush1.bf16.msra.mxu0 %v4622
    %5881 = vmatprep.subr.bf16.mxu0 %v4629
    %5882 = vmatpush1.bf16.msra.mxu0 %v4628
    %5883 = vmatprep.subr.bf16.mxu0 %v4635
    %5884 = vmatpush1.bf16.msra.mxu0 %v4634
    %5885 = vmatprep.subr.bf16.mxu0 %v4641
    %5886 = vmatpush1.bf16.msra.mxu0 %v4640
    %5887 = vmatprep.mubr.bf16.mxu0 %v1839
    %5888 = vmatmul.mubr.bf16.gmra.mrb[0].mxu0 %v1835
    %v5889 = vpop.f32.mrb[0].mxu0
    %v5890 = vadd.f32 %v5839, %v5889
    %v5891 = vpop.f32.mrb[0].mxu0
    %v5892 = vadd.f32 %v5841, %v5891
    %v5893 = vpop.f32.mrb[0].mxu0
    %v5894 = vadd.f32 %v5843, %v5893
    %v5895 = vpop.f32.mrb[0].mxu0
    %v5896 = vadd.f32 %v5845, %v5895
    %5897 = vmatprep.mubr.bf16.mxu0 %v2023
    %5898 = vmatmul.mubr.bf16.gmra.mrb[0].mxu0 %v2021
    %v5899 = vpop.f32.mrb[0].mxu0
    %v5900 = vadd.f32 %v5849, %v5899
    %v5901 = vpop.f32.mrb[0].mxu0
    %v5902 = vadd.f32 %v5851, %v5901
    %v5903 = vpop.f32.mrb[0].mxu0
    %v5904 = vpop.f32.mrb[0].mxu0
    %5905 = vdwg.mxu0
    %5906 = vmatprep.subr.bf16.mxu0 %v4647
    %5907 = vmatpush1.bf16.msra.mxu0 %v4646
    %5908 = vmatprep.subr.bf16.mxu0 %v4653
    %5909 = vmatpush1.bf16.msra.mxu0 %v4652
    %5910 = vmatprep.subr.bf16.mxu0 %v4659
    %5911 = vmatpush1.bf16.msra.mxu0 %v4658
    %5912 = vmatprep.subr.bf16.mxu0 %v4665
    %5913 = vmatpush1.bf16.msra.mxu0 %v4664
    %5914 = vmatprep.subr.bf16.mxu0 %v4671
    %5915 = vmatpush1.bf16.msra.mxu0 %v4670
    %5916 = vmatprep.subr.bf16.mxu0 %v4677
    %5917 = vmatpush1.bf16.msra.mxu0 %v4676
    %5918 = vmatprep.subr.bf16.mxu0 %v4683
    %5919 = vmatpush1.bf16.msra.mxu0 %v4682
    %5920 = vmatprep.subr.bf16.mxu0 %v4689
    %5921 = vmatpush1.bf16.msra.mxu0 %v4688
    %5922 = vmatprep.subr.bf16.mxu0 %v4695
    %5923 = vmatpush1.bf16.msra.mxu0 %v4694
    %5924 = vmatprep.subr.bf16.mxu0 %v4701
    %5925 = vmatpush1.bf16.msra.mxu0 %v4700
    %5926 = vmatprep.subr.bf16.mxu0 %v4707
    %5927 = vmatpush1.bf16.msra.mxu0 %v4706
    %5928 = vmatprep.subr.bf16.mxu0 %v4713
    %5929 = vmatpush1.bf16.msra.mxu0 %v4712
    %5930 = vmatprep.subr.bf16.mxu0 %v4719
    %5931 = vmatpush1.bf16.msra.mxu0 %v4718
    %5932 = vmatprep.subr.bf16.mxu0 %v4725
    %5933 = vmatpush1.bf16.msra.mxu0 %v4724
    %5934 = vmatprep.subr.bf16.mxu0 %v4731
    %5935 = vmatpush1.bf16.msra.mxu0 %v4730
    %5936 = vmatprep.subr.bf16.mxu0 %v4737
    %5937 = vmatpush1.bf16.msra.mxu0 %v4736
    %5938 = vmatprep.mubr.bf16.mxu0 %v1972
    %5939 = vmatmul.mubr.bf16.gmra.mrb[0].mxu0 %v1968
    %v5940 = vpop.f32.mrb[0].mxu0
    %v5941 = vadd.f32 %v5890, %v5940
    %v5942 = vpop.f32.mrb[0].mxu0
    %v5943 = vadd.f32 %v5892, %v5942
    %v5944 = vpop.f32.mrb[0].mxu0
    %v5945 = vadd.f32 %v5894, %v5944
    %v5946 = vpop.f32.mrb[0].mxu0
    %v5947 = vadd.f32 %v5896, %v5946
    %5948 = vmatprep.mubr.bf16.mxu0 %v2061
    %5949 = vmatmul.mubr.bf16.gmra.mrb[0].mxu0 %v2047
    %v5950 = vpop.f32.mrb[0].mxu0
    %v5951 = vadd.f32 %v5900, %v5950
    %v5952 = vpop.f32.mrb[0].mxu0
    %v5953 = vadd.f32 %v5902, %v5952
    %v5954 = vpop.f32.mrb[0].mxu0
    %v5955 = vpop.f32.mrb[0].mxu0
    %5956 = vdwg.mxu0
    %5957 = vmatprep.subr.bf16.mxu0 %v4743
    %5958 = vmatpush1.bf16.msra.mxu0 %v4742
    %5959 = vmatprep.subr.bf16.mxu0 %v4749
    %5960 = vmatpush1.bf16.msra.mxu0 %v4748
    %5961 = vmatprep.subr.bf16.mxu0 %v4755
    %5962 = vmatpush1.bf16.msra.mxu0 %v4754
    %5963 = vmatprep.subr.bf16.mxu0 %v4761
    %5964 = vmatpush1.bf16.msra.mxu0 %v4760
    %5965 = vmatprep.subr.bf16.mxu0 %v4767
    %5966 = vmatpush1.bf16.msra.mxu0 %v4766
    %5967 = vmatprep.subr.bf16.mxu0 %v4773
    %5968 = vmatpush1.bf16.msra.mxu0 %v4772
    %5969 = vmatprep.subr.bf16.mxu0 %v4779
    %5970 = vmatpush1.bf16.msra.mxu0 %v4778
    %5971 = vmatprep.subr.bf16.mxu0 %v4785
    %5972 = vmatpush1.bf16.msra.mxu0 %v4784
    %5973 = vmatprep.subr.bf16.mxu0 %v4791
    %5974 = vmatpush1.bf16.msra.mxu0 %v4790
    %5975 = vmatprep.subr.bf16.mxu0 %v4797
    %5976 = vmatpush1.bf16.msra.mxu0 %v4796
    %5977 = vmatprep.subr.bf16.mxu0 %v4803
    %5978 = vmatpush1.bf16.msra.mxu0 %v4802
    %5979 = vmatprep.subr.bf16.mxu0 %v4809
    %5980 = vmatpush1.bf16.msra.mxu0 %v4808
    %5981 = vmatprep.subr.bf16.mxu0 %v4815
    %5982 = vmatpush1.bf16.msra.mxu0 %v4814
    %5983 = vmatprep.subr.bf16.mxu0 %v4821
    %5984 = vmatpush1.bf16.msra.mxu0 %v4820
    %5985 = vmatprep.subr.bf16.mxu0 %v4827
    %5986 = vmatpush1.bf16.msra.mxu0 %v4826
    %5987 = vmatprep.subr.bf16.mxu0 %v4833
    %5988 = vmatpush1.bf16.msra.mxu0 %v4832
    %5989 = vmatprep.mubr.bf16.mxu0 %v1973
    %5990 = vmatmul.mubr.bf16.gmra.mrb[0].mxu0 %v1969
    %v5991 = vpop.f32.mrb[0].mxu0
    %v5992 = vadd.f32 %v5941, %v5991
    %v5993 = vpop.f32.mrb[0].mxu0
    %v5994 = vadd.f32 %v5943, %v5993
    %v5995 = vpop.f32.mrb[0].mxu0
    %v5996 = vadd.f32 %v5945, %v5995
    %v5997 = vpop.f32.mrb[0].mxu0
    %v5998 = vadd.f32 %v5947, %v5997
    %5999 = vmatprep.mubr.bf16.mxu0 %v2071
    %6000 = vmatmul.mubr.bf16.gmra.mrb[0].mxu0 %v2069
    %v6001 = vpop.f32.mrb[0].mxu0
    %v6002 = vadd.f32 %v5951, %v6001
    %v6003 = vpop.f32.mrb[0].mxu0
    %v6004 = vadd.f32 %v5953, %v6003
    %v6005 = vpop.f32.mrb[0].mxu0
    %v6006 = vpop.f32.mrb[0].mxu0
    %6007 = vdwg.mxu0
    %6008 = vmatprep.subr.bf16.mxu0 %v4839
    %6009 = vmatpush1.bf16.msra.mxu0 %v4838
    %6010 = vmatprep.subr.bf16.mxu0 %v4845
    %6011 = vmatpush1.bf16.msra.mxu0 %v4844
    %6012 = vmatprep.subr.bf16.mxu0 %v4851
    %6013 = vmatpush1.bf16.msra.mxu0 %v4850
    %6014 = vmatprep.subr.bf16.mxu0 %v4857
    %6015 = vmatpush1.bf16.msra.mxu0 %v4856
    %6016 = vmatprep.subr.bf16.mxu0 %v4863
    %6017 = vmatpush1.bf16.msra.mxu0 %v4862
    %6018 = vmatprep.subr.bf16.mxu0 %v4869
    %6019 = vmatpush1.bf16.msra.mxu0 %v4868
    %6020 = vmatprep.subr.bf16.mxu0 %v4875
    %6021 = vmatpush1.bf16.msra.mxu0 %v4874
    %6022 = vmatprep.subr.bf16.mxu0 %v4881
    %6023 = vmatpush1.bf16.msra.mxu0 %v4880
    %6024 = vmatprep.subr.bf16.mxu0 %v4887
    %6025 = vmatpush1.bf16.msra.mxu0 %v4886
    %6026 = vmatprep.subr.bf16.mxu0 %v4893
    %6027 = vmatpush1.bf16.msra.mxu0 %v4892
    %6028 = vmatprep.subr.bf16.mxu0 %v4899
    %6029 = vmatpush1.bf16.msra.mxu0 %v4898
    %6030 = vmatprep.subr.bf16.mxu0 %v4905
    %6031 = vmatpush1.bf16.msra.mxu0 %v4904
    %6032 = vmatprep.subr.bf16.mxu0 %v4911
    %6033 = vmatpush1.bf16.msra.mxu0 %v4910
    %6034 = vmatprep.subr.bf16.mxu0 %v4917
    %6035 = vmatpush1.bf16.msra.mxu0 %v4916
    %6036 = vmatprep.subr.bf16.mxu0 %v4923
    %6037 = vmatpush1.bf16.msra.mxu0 %v4922
    %6038 = vmatprep.subr.bf16.mxu0 %v4929
    %6039 = vmatpush1.bf16.msra.mxu0 %v4928
    %6040 = vmatprep.mubr.bf16.mxu0 %v1974
    %6041 = vmatmul.mubr.bf16.gmra.mrb[0].mxu0 %v1970
    %v6042 = vpop.f32.mrb[0].mxu0
    %v6043 = vadd.f32 %v5992, %v6042
    %v6044 = vpop.f32.mrb[0].mxu0
    %v6045 = vadd.f32 %v5994, %v6044
    %v6046 = vpop.f32.mrb[0].mxu0
    %v6047 = vadd.f32 %v5996, %v6046
    %v6048 = vpop.f32.mrb[0].mxu0
    %v6049 = vadd.f32 %v5998, %v6048
    %6050 = vmatprep.mubr.bf16.mxu0 %v2068
    %6051 = vmatmul.mubr.bf16.gmra.mrb[0].mxu0 %v2054
    %v6052 = vpop.f32.mrb[0].mxu0
    %v6053 = vadd.f32 %v6002, %v6052
    %v6054 = vpop.f32.mrb[0].mxu0
    %v6055 = vadd.f32 %v6004, %v6054
    %v6056 = vpop.f32.mrb[0].mxu0
    %v6057 = vpop.f32.mrb[0].mxu0
    %6058 = vdwg.mxu0
    %6059 = vmatprep.subr.bf16.mxu0 %v4935
    %6060 = vmatpush1.bf16.msra.mxu0 %v4934
    %6061 = vmatprep.subr.bf16.mxu0 %v4941
    %6062 = vmatpush1.bf16.msra.mxu0 %v4940
    %6063 = vmatprep.subr.bf16.mxu0 %v4947
    %6064 = vmatpush1.bf16.msra.mxu0 %v4946
    %6065 = vmatprep.subr.bf16.mxu0 %v4953
    %6066 = vmatpush1.bf16.msra.mxu0 %v4952
    %6067 = vmatprep.subr.bf16.mxu0 %v4959
    %6068 = vmatpush1.bf16.msra.mxu0 %v4958
    %6069 = vmatprep.subr.bf16.mxu0 %v4965
    %6070 = vmatpush1.bf16.msra.mxu0 %v4964
    %6071 = vmatprep.subr.bf16.mxu0 %v4971
    %6072 = vmatpush1.bf16.msra.mxu0 %v4970
    %6073 = vmatprep.subr.bf16.mxu0 %v4977
    %6074 = vmatpush1.bf16.msra.mxu0 %v4976
    %6075 = vmatprep.subr.bf16.mxu0 0
    %6076 = vmatpush1.bf16.msra.mxu0 0
    %6077 = vmatprep.subr.bf16.mxu0 0
    %6078 = vmatpush1.bf16.msra.mxu0 0
    %6079 = vmatprep.subr.bf16.mxu0 0
    %6080 = vmatpush1.bf16.msra.mxu0 0
    %6081 = vmatprep.subr.bf16.mxu0 0
    %6082 = vmatpush1.bf16.msra.mxu0 0
    %6083 = vmatprep.subr.bf16.mxu0 0
    %6084 = vmatpush1.bf16.msra.mxu0 0
    %6085 = vmatprep.subr.bf16.mxu0 0
    %6086 = vmatpush1.bf16.msra.mxu0 0
    %6087 = vmatprep.subr.bf16.mxu0 0
    %6088 = vmatpush1.bf16.msra.mxu0 0
    %6089 = vmatprep.subr.bf16.mxu0 0
    %6090 = vmatpush1.bf16.msra.mxu0 0
    %6091 = vmatprep.mubr.bf16.mxu0 0
    %6092 = vmatmul.mubr.bf16.gmra.mrb[0].mxu0 %v1971
    %v6093 = vpop.f32.mrb[0].mxu0
    %v6094 = vadd.f32 %v6043, %v6093
    %v6095 = vpop.f32.mrb[0].mxu0
    %v6096 = vadd.f32 %v6045, %v6095
    %v6097 = vpop.f32.mrb[0].mxu0
    %v6098 = vadd.f32 %v6047, %v6097
    %v6099 = vpop.f32.mrb[0].mxu0
    %v6100 = vadd.f32 %v6049, %v6099
    %6101 = vmatprep.mubr.bf16.mxu0 0
    %6102 = vmatmul.mubr.bf16.gmra.mrb[0].mxu0 %v2070
    %v6103 = vpop.f32.mrb[0].mxu0
    %v6104 = vadd.f32 %v6053, %v6103
    %v6105 = vpop.f32.mrb[0].mxu0
    %v6106 = vadd.f32 %v6055, %v6105
    %v6107 = vpop.f32.mrb[0].mxu0
    %v6108 = vpop.f32.mrb[0].mxu0
    %6109 = vdwg.mxu0
    %6110 = vmatprep.subr.bf16.mxu0 %v4265
    %6111 = vmatpush1.bf16.msra.mxu0 %v4264
    %6112 = vmatprep.subr.bf16.mxu0 %v4271
    %6113 = vmatpush1.bf16.msra.mxu0 %v4270
    %6114 = vmatprep.subr.bf16.mxu0 %v4277
    %6115 = vmatpush1.bf16.msra.mxu0 %v4276
    %6116 = vmatprep.subr.bf16.mxu0 %v4283
    %6117 = vmatpush1.bf16.msra.mxu0 %v4282
    %6118 = vmatprep.subr.bf16.mxu0 %v4289
    %6119 = vmatpush1.bf16.msra.mxu0 %v4288
    %6120 = vmatprep.subr.bf16.mxu0 %v4295
    %6121 = vmatpush1.bf16.msra.mxu0 %v4294
    %6122 = vmatprep.subr.bf16.mxu0 %v4301
    %6123 = vmatpush1.bf16.msra.mxu0 %v4300
    %6124 = vmatprep.subr.bf16.mxu0 %v4307
    %6125 = vmatpush1.bf16.msra.mxu0 %v4306
    %6126 = vmatprep.subr.bf16.mxu0 %v4313
    %6127 = vmatpush1.bf16.msra.mxu0 %v4312
    %6128 = vmatprep.subr.bf16.mxu0 %v4319
    %6129 = vmatpush1.bf16.msra.mxu0 %v4318
    %6130 = vmatprep.subr.bf16.mxu0 %v4325
    %6131 = vmatpush1.bf16.msra.mxu0 %v4324
    %6132 = vmatprep.subr.bf16.mxu0 %v4331
    %6133 = vmatpush1.bf16.msra.mxu0 %v4330
    %6134 = vmatprep.subr.bf16.mxu0 %v4337
    %6135 = vmatpush1.bf16.msra.mxu0 %v4336
    %6136 = vmatprep.subr.bf16.mxu0 %v4343
    %6137 = vmatpush1.bf16.msra.mxu0 %v4342
    %6138 = vmatprep.subr.bf16.mxu0 %v4349
    %6139 = vmatpush1.bf16.msra.mxu0 %v4348
    %6140 = vmatprep.subr.bf16.mxu0 %v4355
    %6141 = vmatpush1.bf16.msra.mxu0 %v4354
    %6142 = vmatprep.mubr.bf16.mxu0 %v1836
    %6143 = vmatmul.mubr.bf16.gmra.mrb[0].mxu0 %v1832
    %v6144 = vpop.f32.mrb[0].mxu0
    %v6145 = vadd.f32 0.0, %v6144
    %v6146 = vpop.f32.mrb[0].mxu0
    %v6147 = vadd.f32 0.0, %v6146
    %v6148 = vpop.f32.mrb[0].mxu0
    %v6149 = vadd.f32 0.0, %v6148
    %v6150 = vpop.f32.mrb[0].mxu0
    %v6151 = vadd.f32 0.0, %v6150
    %6152 = vmatprep.mubr.bf16.mxu0 %v2012
    %6153 = vmatmul.mubr.bf16.gmra.mrb[0].mxu0 %v1998
    %v6154 = vpop.f32.mrb[0].mxu0
    %v6155 = vadd.f32 0.0, %v6154
    %v6156 = vpop.f32.mrb[0].mxu0
    %v6157 = vadd.f32 0.0, %v6156
    %v6158 = vpop.f32.mrb[0].mxu0
    %v6159 = vpop.f32.mrb[0].mxu0
    %6160 = vdwg.mxu0
    %6161 = vmatprep.subr.bf16.mxu0 %v4361
    %6162 = vmatpush1.bf16.msra.mxu0 %v4360
    %6163 = vmatprep.subr.bf16.mxu0 %v4367
    %6164 = vmatpush1.bf16.msra.mxu0 %v4366
    %6165 = vmatprep.subr.bf16.mxu0 %v4373
    %6166 = vmatpush1.bf16.msra.mxu0 %v4372
    %6167 = vmatprep.subr.bf16.mxu0 %v4379
    %6168 = vmatpush1.bf16.msra.mxu0 %v4378
    %6169 = vmatprep.subr.bf16.mxu0 %v4385
    %6170 = vmatpush1.bf16.msra.mxu0 %v4384
    %6171 = vmatprep.subr.bf16.mxu0 %v4391
    %6172 = vmatpush1.bf16.msra.mxu0 %v4390
    %6173 = vmatprep.subr.bf16.mxu0 %v4397
    %6174 = vmatpush1.bf16.msra.mxu0 %v4396
    %6175 = vmatprep.subr.bf16.mxu0 %v4403
    %6176 = vmatpush1.bf16.msra.mxu0 %v4402
    %6177 = vmatprep.subr.bf16.mxu0 %v4409
    %6178 = vmatpush1.bf16.msra.mxu0 %v4408
    %6179 = vmatprep.subr.bf16.mxu0 %v4415
    %6180 = vmatpush1.bf16.msra.mxu0 %v4414
    %6181 = vmatprep.subr.bf16.mxu0 %v4421
    %6182 = vmatpush1.bf16.msra.mxu0 %v4420
    %6183 = vmatprep.subr.bf16.mxu0 %v4427
    %6184 = vmatpush1.bf16.msra.mxu0 %v4426
    %6185 = vmatprep.subr.bf16.mxu0 %v4433
    %6186 = vmatpush1.bf16.msra.mxu0 %v4432
    %6187 = vmatprep.subr.bf16.mxu0 %v4439
    %6188 = vmatpush1.bf16.msra.mxu0 %v4438
    %6189 = vmatprep.subr.bf16.mxu0 %v4445
    %6190 = vmatpush1.bf16.msra.mxu0 %v4444
    %6191 = vmatprep.subr.bf16.mxu0 %v4451
    %6192 = vmatpush1.bf16.msra.mxu0 %v4450
    %6193 = vmatprep.mubr.bf16.mxu0 %v1837
    %6194 = vmatmul.mubr.bf16.gmra.mrb[0].mxu0 %v1833
    %v6195 = vpop.f32.mrb[0].mxu0
    %v6196 = vadd.f32 %v6145, %v6195
    %v6197 = vpop.f32.mrb[0].mxu0
    %v6198 = vadd.f32 %v6147, %v6197
    %v6199 = vpop.f32.mrb[0].mxu0
    %v6200 = vadd.f32 %v6149, %v6199
    %v6201 = vpop.f32.mrb[0].mxu0
    %v6202 = vadd.f32 %v6151, %v6201
    %6203 = vmatprep.mubr.bf16.mxu0 %v2022
    %6204 = vmatmul.mubr.bf16.gmra.mrb[0].mxu0 %v2020
    %v6205 = vpop.f32.mrb[0].mxu0
    %v6206 = vadd.f32 %v6155, %v6205
    %v6207 = vpop.f32.mrb[0].mxu0
    %v6208 = vadd.f32 %v6157, %v6207
    %v6209 = vpop.f32.mrb[0].mxu0
    %v6210 = vpop.f32.mrb[0].mxu0
    %6211 = vdwg.mxu0
    %6212 = vmatprep.subr.bf16.mxu0 %v4457
    %6213 = vmatpush1.bf16.msra.mxu0 %v4456
    %6214 = vmatprep.subr.bf16.mxu0 %v4463
    %6215 = vmatpush1.bf16.msra.mxu0 %v4462
    %6216 = vmatprep.subr.bf16.mxu0 %v4469
    %6217 = vmatpush1.bf16.msra.mxu0 %v4468
    %6218 = vmatprep.subr.bf16.mxu0 %v4475
    %6219 = vmatpush1.bf16.msra.mxu0 %v4474
    %6220 = vmatprep.subr.bf16.mxu0 %v4481
    %6221 = vmatpush1.bf16.msra.mxu0 %v4480
    %6222 = vmatprep.subr.bf16.mxu0 %v4487
    %6223 = vmatpush1.bf16.msra.mxu0 %v4486
    %6224 = vmatprep.subr.bf16.mxu0 %v4493
    %6225 = vmatpush1.bf16.msra.mxu0 %v4492
    %6226 = vmatprep.subr.bf16.mxu0 %v4499
    %6227 = vmatpush1.bf16.msra.mxu0 %v4498
    %6228 = vmatprep.subr.bf16.mxu0 %v4505
    %6229 = vmatpush1.bf16.msra.mxu0 %v4504
    %6230 = vmatprep.subr.bf16.mxu0 %v4511
    %6231 = vmatpush1.bf16.msra.mxu0 %v4510
    %6232 = vmatprep.subr.bf16.mxu0 %v4517
    %6233 = vmatpush1.bf16.msra.mxu0 %v4516
    %6234 = vmatprep.subr.bf16.mxu0 %v4523
    %6235 = vmatpush1.bf16.msra.mxu0 %v4522
    %6236 = vmatprep.subr.bf16.mxu0 %v4529
    %6237 = vmatpush1.bf16.msra.mxu0 %v4528
    %6238 = vmatprep.subr.bf16.mxu0 %v4535
    %6239 = vmatpush1.bf16.msra.mxu0 %v4534
    %6240 = vmatprep.subr.bf16.mxu0 %v4541
    %6241 = vmatpush1.bf16.msra.mxu0 %v4540
    %6242 = vmatprep.subr.bf16.mxu0 %v4547
    %6243 = vmatpush1.bf16.msra.mxu0 %v4546
    %6244 = vmatprep.mubr.bf16.mxu0 %v1838
    %6245 = vmatmul.mubr.bf16.gmra.mrb[0].mxu0 %v1834
    %v6246 = vpop.f32.mrb[0].mxu0
    %v6247 = vadd.f32 %v6196, %v6246
    %v6248 = vpop.f32.mrb[0].mxu0
    %v6249 = vadd.f32 %v6198, %v6248
    %v6250 = vpop.f32.mrb[0].mxu0
    %v6251 = vadd.f32 %v6200, %v6250
    %v6252 = vpop.f32.mrb[0].mxu0
    %v6253 = vadd.f32 %v6202, %v6252
    %6254 = vmatprep.mubr.bf16.mxu0 %v2019
    %6255 = vmatmul.mubr.bf16.gmra.mrb[0].mxu0 %v2005
    %v6256 = vpop.f32.mrb[0].mxu0
    %v6257 = vadd.f32 %v6206, %v6256
    %v6258 = vpop.f32.mrb[0].mxu0
    %v6259 = vadd.f32 %v6208, %v6258
    %v6260 = vpop.f32.mrb[0].mxu0
    %v6261 = vpop.f32.mrb[0].mxu0
    %6262 = vdwg.mxu0
    %6263 = vmatprep.subr.bf16.mxu0 %v4553
    %6264 = vmatpush1.bf16.msra.mxu0 %v4552
    %6265 = vmatprep.subr.bf16.mxu0 %v4559
    %6266 = vmatpush1.bf16.msra.mxu0 %v4558
    %6267 = vmatprep.subr.bf16.mxu0 %v4565
    %6268 = vmatpush1.bf16.msra.mxu0 %v4564
    %6269 = vmatprep.subr.bf16.mxu0 %v4571
    %6270 = vmatpush1.bf16.msra.mxu0 %v4570
    %6271 = vmatprep.subr.bf16.mxu0 %v4577
    %6272 = vmatpush1.bf16.msra.mxu0 %v4576
    %6273 = vmatprep.subr.bf16.mxu0 %v4583
    %6274 = vmatpush1.bf16.msra.mxu0 %v4582
    %6275 = vmatprep.subr.bf16.mxu0 %v4589
    %6276 = vmatpush1.bf16.msra.mxu0 %v4588
    %6277 = vmatprep.subr.bf16.mxu0 %v4595
    %6278 = vmatpush1.bf16.msra.mxu0 %v4594
    %6279 = vmatprep.subr.bf16.mxu0 %v4601
    %6280 = vmatpush1.bf16.msra.mxu0 %v4600
    %6281 = vmatprep.subr.bf16.mxu0 %v4607
    %6282 = vmatpush1.bf16.msra.mxu0 %v4606
    %6283 = vmatprep.subr.bf16.mxu0 %v4613
    %6284 = vmatpush1.bf16.msra.mxu0 %v4612
    %6285 = vmatprep.subr.bf16.mxu0 %v4619
    %6286 = vmatpush1.bf16.msra.mxu0 %v4618
    %6287 = vmatprep.subr.bf16.mxu0 %v4625
    %6288 = vmatpush1.bf16.msra.mxu0 %v4624
    %6289 = vmatprep.subr.bf16.mxu0 %v4631
    %6290 = vmatpush1.bf16.msra.mxu0 %v4630
    %6291 = vmatprep.subr.bf16.mxu0 %v4637
    %6292 = vmatpush1.bf16.msra.mxu0 %v4636
    %6293 = vmatprep.subr.bf16.mxu0 %v4643
    %6294 = vmatpush1.bf16.msra.mxu0 %v4642
    %6295 = vmatprep.mubr.bf16.mxu0 %v1839
    %6296 = vmatmul.mubr.bf16.gmra.mrb[0].mxu0 %v1835
    %v6297 = vpop.f32.mrb[0].mxu0
    %v6298 = vadd.f32 %v6247, %v6297
    %v6299 = vpop.f32.mrb[0].mxu0
    %v6300 = vadd.f32 %v6249, %v6299
    %v6301 = vpop.f32.mrb[0].mxu0
    %v6302 = vadd.f32 %v6251, %v6301
    %v6303 = vpop.f32.mrb[0].mxu0
    %v6304 = vadd.f32 %v6253, %v6303
    %6305 = vmatprep.mubr.bf16.mxu0 %v2023
    %6306 = vmatmul.mubr.bf16.gmra.mrb[0].mxu0 %v2021
    %v6307 = vpop.f32.mrb[0].mxu0
    %v6308 = vadd.f32 %v6257, %v6307
    %v6309 = vpop.f32.mrb[0].mxu0
    %v6310 = vadd.f32 %v6259, %v6309
    %v6311 = vpop.f32.mrb[0].mxu0
    %v6312 = vpop.f32.mrb[0].mxu0
    %6313 = vdwg.mxu0
    %6314 = vmatprep.subr.bf16.mxu0 %v4649
    %6315 = vmatpush1.bf16.msra.mxu0 %v4648
    %6316 = vmatprep.subr.bf16.mxu0 %v4655
    %6317 = vmatpush1.bf16.msra.mxu0 %v4654
    %6318 = vmatprep.subr.bf16.mxu0 %v4661
    %6319 = vmatpush1.bf16.msra.mxu0 %v4660
    %6320 = vmatprep.subr.bf16.mxu0 %v4667
    %6321 = vmatpush1.bf16.msra.mxu0 %v4666
    %6322 = vmatprep.subr.bf16.mxu0 %v4673
    %6323 = vmatpush1.bf16.msra.mxu0 %v4672
    %6324 = vmatprep.subr.bf16.mxu0 %v4679
    %6325 = vmatpush1.bf16.msra.mxu0 %v4678
    %6326 = vmatprep.subr.bf16.mxu0 %v4685
    %6327 = vmatpush1.bf16.msra.mxu0 %v4684
    %6328 = vmatprep.subr.bf16.mxu0 %v4691
    %6329 = vmatpush1.bf16.msra.mxu0 %v4690
    %6330 = vmatprep.subr.bf16.mxu0 %v4697
    %6331 = vmatpush1.bf16.msra.mxu0 %v4696
    %6332 = vmatprep.subr.bf16.mxu0 %v4703
    %6333 = vmatpush1.bf16.msra.mxu0 %v4702
    %6334 = vmatprep.subr.bf16.mxu0 %v4709
    %6335 = vmatpush1.bf16.msra.mxu0 %v4708
    %6336 = vmatprep.subr.bf16.mxu0 %v4715
    %6337 = vmatpush1.bf16.msra.mxu0 %v4714
    %6338 = vmatprep.subr.bf16.mxu0 %v4721
    %6339 = vmatpush1.bf16.msra.mxu0 %v4720
    %6340 = vmatprep.subr.bf16.mxu0 %v4727
    %6341 = vmatpush1.bf16.msra.mxu0 %v4726
    %6342 = vmatprep.subr.bf16.mxu0 %v4733
    %6343 = vmatpush1.bf16.msra.mxu0 %v4732
    %6344 = vmatprep.subr.bf16.mxu0 %v4739
    %6345 = vmatpush1.bf16.msra.mxu0 %v4738
    %6346 = vmatprep.mubr.bf16.mxu0 %v1972
    %6347 = vmatmul.mubr.bf16.gmra.mrb[0].mxu0 %v1968
    %v6348 = vpop.f32.mrb[0].mxu0
    %v6349 = vadd.f32 %v6298, %v6348
    %v6350 = vpop.f32.mrb[0].mxu0
    %v6351 = vadd.f32 %v6300, %v6350
    %v6352 = vpop.f32.mrb[0].mxu0
    %v6353 = vadd.f32 %v6302, %v6352
    %v6354 = vpop.f32.mrb[0].mxu0
    %v6355 = vadd.f32 %v6304, %v6354
    %6356 = vmatprep.mubr.bf16.mxu0 %v2061
    %6357 = vmatmul.mubr.bf16.gmra.mrb[0].mxu0 %v2047
    %v6358 = vpop.f32.mrb[0].mxu0
    %v6359 = vadd.f32 %v6308, %v6358
    %v6360 = vpop.f32.mrb[0].mxu0
    %v6361 = vadd.f32 %v6310, %v6360
    %v6362 = vpop.f32.mrb[0].mxu0
    %v6363 = vpop.f32.mrb[0].mxu0
    %6364 = vdwg.mxu0
    %6365 = vmatprep.subr.bf16.mxu0 %v4745
    %6366 = vmatpush1.bf16.msra.mxu0 %v4744
    %6367 = vmatprep.subr.bf16.mxu0 %v4751
    %6368 = vmatpush1.bf16.msra.mxu0 %v4750
    %6369 = vmatprep.subr.bf16.mxu0 %v4757
    %6370 = vmatpush1.bf16.msra.mxu0 %v4756
    %6371 = vmatprep.subr.bf16.mxu0 %v4763
    %6372 = vmatpush1.bf16.msra.mxu0 %v4762
    %6373 = vmatprep.subr.bf16.mxu0 %v4769
    %6374 = vmatpush1.bf16.msra.mxu0 %v4768
    %6375 = vmatprep.subr.bf16.mxu0 %v4775
    %6376 = vmatpush1.bf16.msra.mxu0 %v4774
    %6377 = vmatprep.subr.bf16.mxu0 %v4781
    %6378 = vmatpush1.bf16.msra.mxu0 %v4780
    %6379 = vmatprep.subr.bf16.mxu0 %v4787
    %6380 = vmatpush1.bf16.msra.mxu0 %v4786
    %6381 = vmatprep.subr.bf16.mxu0 %v4793
    %6382 = vmatpush1.bf16.msra.mxu0 %v4792
    %6383 = vmatprep.subr.bf16.mxu0 %v4799
    %6384 = vmatpush1.bf16.msra.mxu0 %v4798
    %6385 = vmatprep.subr.bf16.mxu0 %v4805
    %6386 = vmatpush1.bf16.msra.mxu0 %v4804
    %6387 = vmatprep.subr.bf16.mxu0 %v4811
    %6388 = vmatpush1.bf16.msra.mxu0 %v4810
    %6389 = vmatprep.subr.bf16.mxu0 %v4817
    %6390 = vmatpush1.bf16.msra.mxu0 %v4816
    %6391 = vmatprep.subr.bf16.mxu0 %v4823
    %6392 = vmatpush1.bf16.msra.mxu0 %v4822
    %6393 = vmatprep.subr.bf16.mxu0 %v4829
    %6394 = vmatpush1.bf16.msra.mxu0 %v4828
    %6395 = vmatprep.subr.bf16.mxu0 %v4835
    %6396 = vmatpush1.bf16.msra.mxu0 %v4834
    %6397 = vmatprep.mubr.bf16.mxu0 %v1973
    %6398 = vmatmul.mubr.bf16.gmra.mrb[0].mxu0 %v1969
    %v6399 = vpop.f32.mrb[0].mxu0
    %v6400 = vadd.f32 %v6349, %v6399
    %v6401 = vpop.f32.mrb[0].mxu0
    %v6402 = vadd.f32 %v6351, %v6401
    %v6403 = vpop.f32.mrb[0].mxu0
    %v6404 = vadd.f32 %v6353, %v6403
    %v6405 = vpop.f32.mrb[0].mxu0
    %v6406 = vadd.f32 %v6355, %v6405
    %6407 = vmatprep.mubr.bf16.mxu0 %v2071
    %6408 = vmatmul.mubr.bf16.gmra.mrb[0].mxu0 %v2069
    %v6409 = vpop.f32.mrb[0].mxu0
    %v6410 = vadd.f32 %v6359, %v6409
    %v6411 = vpop.f32.mrb[0].mxu0
    %v6412 = vadd.f32 %v6361, %v6411
    %v6413 = vpop.f32.mrb[0].mxu0
    %v6414 = vpop.f32.mrb[0].mxu0
    %6415 = vdwg.mxu0
    %6416 = vmatprep.subr.bf16.mxu0 %v4841
    %6417 = vmatpush1.bf16.msra.mxu0 %v4840
    %6418 = vmatprep.subr.bf16.mxu0 %v4847
    %6419 = vmatpush1.bf16.msra.mxu0 %v4846
    %6420 = vmatprep.subr.bf16.mxu0 %v4853
    %6421 = vmatpush1.bf16.msra.mxu0 %v4852
    %6422 = vmatprep.subr.bf16.mxu0 %v4859
    %6423 = vmatpush1.bf16.msra.mxu0 %v4858
    %6424 = vmatprep.subr.bf16.mxu0 %v4865
    %6425 = vmatpush1.bf16.msra.mxu0 %v4864
    %6426 = vmatprep.subr.bf16.mxu0 %v4871
    %6427 = vmatpush1.bf16.msra.mxu0 %v4870
    %6428 = vmatprep.subr.bf16.mxu0 %v4877
    %6429 = vmatpush1.bf16.msra.mxu0 %v4876
    %6430 = vmatprep.subr.bf16.mxu0 %v4883
    %6431 = vmatpush1.bf16.msra.mxu0 %v4882
    %6432 = vmatprep.subr.bf16.mxu0 %v4889
    %6433 = vmatpush1.bf16.msra.mxu0 %v4888
    %6434 = vmatprep.subr.bf16.mxu0 %v4895
    %6435 = vmatpush1.bf16.msra.mxu0 %v4894
    %6436 = vmatprep.subr.bf16.mxu0 %v4901
    %6437 = vmatpush1.bf16.msra.mxu0 %v4900
    %6438 = vmatprep.subr.bf16.mxu0 %v4907
    %6439 = vmatpush1.bf16.msra.mxu0 %v4906
    %6440 = vmatprep.subr.bf16.mxu0 %v4913
    %6441 = vmatpush1.bf16.msra.mxu0 %v4912
    %6442 = vmatprep.subr.bf16.mxu0 %v4919
    %6443 = vmatpush1.bf16.msra.mxu0 %v4918
    %6444 = vmatprep.subr.bf16.mxu0 %v4925
    %6445 = vmatpush1.bf16.msra.mxu0 %v4924
    %6446 = vmatprep.subr.bf16.mxu0 %v4931
    %6447 = vmatpush1.bf16.msra.mxu0 %v4930
    %6448 = vmatprep.mubr.bf16.mxu0 %v1974
    %6449 = vmatmul.mubr.bf16.gmra.mrb[0].mxu0 %v1970
    %v6450 = vpop.f32.mrb[0].mxu0
    %v6451 = vadd.f32 %v6400, %v6450
    %v6452 = vpop.f32.mrb[0].mxu0
    %v6453 = vadd.f32 %v6402, %v6452
    %v6454 = vpop.f32.mrb[0].mxu0
    %v6455 = vadd.f32 %v6404, %v6454
    %v6456 = vpop.f32.mrb[0].mxu0
    %v6457 = vadd.f32 %v6406, %v6456
    %6458 = vmatprep.mubr.bf16.mxu0 %v2068
    %6459 = vmatmul.mubr.bf16.gmra.mrb[0].mxu0 %v2054
    %v6460 = vpop.f32.mrb[0].mxu0
    %v6461 = vadd.f32 %v6410, %v6460
    %v6462 = vpop.f32.mrb[0].mxu0
    %v6463 = vadd.f32 %v6412, %v6462
    %v6464 = vpop.f32.mrb[0].mxu0
    %v6465 = vpop.f32.mrb[0].mxu0
    %6466 = vdwg.mxu0
    %6467 = vmatprep.subr.bf16.mxu0 %v4937
    %6468 = vmatpush1.bf16.msra.mxu0 %v4936
    %6469 = vmatprep.subr.bf16.mxu0 %v4943
    %6470 = vmatpush1.bf16.msra.mxu0 %v4942
    %6471 = vmatprep.subr.bf16.mxu0 %v4949
    %6472 = vmatpush1.bf16.msra.mxu0 %v4948
    %6473 = vmatprep.subr.bf16.mxu0 %v4955
    %6474 = vmatpush1.bf16.msra.mxu0 %v4954
    %6475 = vmatprep.subr.bf16.mxu0 %v4961
    %6476 = vmatpush1.bf16.msra.mxu0 %v4960
    %6477 = vmatprep.subr.bf16.mxu0 %v4967
    %6478 = vmatpush1.bf16.msra.mxu0 %v4966
    %6479 = vmatprep.subr.bf16.mxu0 %v4973
    %6480 = vmatpush1.bf16.msra.mxu0 %v4972
    %6481 = vmatprep.subr.bf16.mxu0 %v4979
    %6482 = vmatpush1.bf16.msra.mxu0 %v4978
    %6483 = vmatprep.subr.bf16.mxu0 0
    %6484 = vmatpush1.bf16.msra.mxu0 0
    %6485 = vmatprep.subr.bf16.mxu0 0
    %6486 = vmatpush1.bf16.msra.mxu0 0
    %6487 = vmatprep.subr.bf16.mxu0 0
    %6488 = vmatpush1.bf16.msra.mxu0 0
    %6489 = vmatprep.subr.bf16.mxu0 0
    %6490 = vmatpush1.bf16.msra.mxu0 0
    %6491 = vmatprep.subr.bf16.mxu0 0
    %6492 = vmatpush1.bf16.msra.mxu0 0
    %6493 = vmatprep.subr.bf16.mxu0 0
    %6494 = vmatpush1.bf16.msra.mxu0 0
    %6495 = vmatprep.subr.bf16.mxu0 0
    %6496 = vmatpush1.bf16.msra.mxu0 0
    %6497 = vmatprep.subr.bf16.mxu0 0
    %6498 = vmatpush1.bf16.msra.mxu0 0
    %6499 = vmatprep.mubr.bf16.mxu0 0
    %6500 = vmatmul.mubr.bf16.gmra.mrb[0].mxu0 %v1971
    %v6501 = vpop.f32.mrb[0].mxu0
    %v6502 = vadd.f32 %v6451, %v6501
    %v6503 = vpop.f32.mrb[0].mxu0
    %v6504 = vadd.f32 %v6453, %v6503
    %v6505 = vpop.f32.mrb[0].mxu0
    %v6506 = vadd.f32 %v6455, %v6505
    %v6507 = vpop.f32.mrb[0].mxu0
    %v6508 = vadd.f32 %v6457, %v6507
    %6509 = vmatprep.mubr.bf16.mxu0 0
    %6510 = vmatmul.mubr.bf16.gmra.mrb[0].mxu0 %v2070
    %v6511 = vpop.f32.mrb[0].mxu0
    %v6512 = vadd.f32 %v6461, %v6511
    %v6513 = vpop.f32.mrb[0].mxu0
    %v6514 = vadd.f32 %v6463, %v6513
    %v6515 = vpop.f32.mrb[0].mxu0
    %v6516 = vpop.f32.mrb[0].mxu0
    %6517 = vdwg.mxu0
    %6518 = vmatprep.subr.bf16.mxu0 %v4267
    %6519 = vmatpush1.bf16.msra.mxu0 %v4266
    %6520 = vmatprep.subr.bf16.mxu0 %v4273
    %6521 = vmatpush1.bf16.msra.mxu0 %v4272
    %6522 = vmatprep.subr.bf16.mxu0 %v4279
    %6523 = vmatpush1.bf16.msra.mxu0 %v4278
    %6524 = vmatprep.subr.bf16.mxu0 %v4285
    %6525 = vmatpush1.bf16.msra.mxu0 %v4284
    %6526 = vmatprep.subr.bf16.mxu0 %v4291
    %6527 = vmatpush1.bf16.msra.mxu0 %v4290
    %6528 = vmatprep.subr.bf16.mxu0 %v4297
    %6529 = vmatpush1.bf16.msra.mxu0 %v4296
    %6530 = vmatprep.subr.bf16.mxu0 %v4303
    %6531 = vmatpush1.bf16.msra.mxu0 %v4302
    %6532 = vmatprep.subr.bf16.mxu0 %v4309
    %6533 = vmatpush1.bf16.msra.mxu0 %v4308
    %6534 = vmatprep.subr.bf16.mxu0 %v4315
    %6535 = vmatpush1.bf16.msra.mxu0 %v4314
    %6536 = vmatprep.subr.bf16.mxu0 %v4321
    %6537 = vmatpush1.bf16.msra.mxu0 %v4320
    %6538 = vmatprep.subr.bf16.mxu0 %v4327
    %6539 = vmatpush1.bf16.msra.mxu0 %v4326
    %6540 = vmatprep.subr.bf16.mxu0 %v4333
    %6541 = vmatpush1.bf16.msra.mxu0 %v4332
    %6542 = vmatprep.subr.bf16.mxu0 %v4339
    %6543 = vmatpush1.bf16.msra.mxu0 %v4338
    %6544 = vmatprep.subr.bf16.mxu0 %v4345
    %6545 = vmatpush1.bf16.msra.mxu0 %v4344
    %6546 = vmatprep.subr.bf16.mxu0 %v4351
    %6547 = vmatpush1.bf16.msra.mxu0 %v4350
    %6548 = vmatprep.subr.bf16.mxu0 %v4357
    %6549 = vmatpush1.bf16.msra.mxu0 %v4356
    %6550 = vmatprep.mubr.bf16.mxu0 %v1836
    %6551 = vmatmul.mubr.bf16.gmra.mrb[0].mxu0 %v1832
    %v6552 = vpop.f32.mrb[0].mxu0
    %v6553 = vadd.f32 0.0, %v6552
    %v6554 = vpop.f32.mrb[0].mxu0
    %v6555 = vadd.f32 0.0, %v6554
    %v6556 = vpop.f32.mrb[0].mxu0
    %v6557 = vadd.f32 0.0, %v6556
    %v6558 = vpop.f32.mrb[0].mxu0
    %v6559 = vadd.f32 0.0, %v6558
    %6560 = vmatprep.mubr.bf16.mxu0 %v2012
    %6561 = vmatmul.mubr.bf16.gmra.mrb[0].mxu0 %v1998
    %v6562 = vpop.f32.mrb[0].mxu0
    %v6563 = vadd.f32 0.0, %v6562
    %v6564 = vpop.f32.mrb[0].mxu0
    %v6565 = vadd.f32 0.0, %v6564
    %v6566 = vpop.f32.mrb[0].mxu0
    %v6567 = vpop.f32.mrb[0].mxu0
    %6568 = vdwg.mxu0
    %6569 = vmatprep.subr.bf16.mxu0 %v4363
    %6570 = vmatpush1.bf16.msra.mxu0 %v4362
    %6571 = vmatprep.subr.bf16.mxu0 %v4369
    %6572 = vmatpush1.bf16.msra.mxu0 %v4368
    %6573 = vmatprep.subr.bf16.mxu0 %v4375
    %6574 = vmatpush1.bf16.msra.mxu0 %v4374
    %6575 = vmatprep.subr.bf16.mxu0 %v4381
    %6576 = vmatpush1.bf16.msra.mxu0 %v4380
    %6577 = vmatprep.subr.bf16.mxu0 %v4387
    %6578 = vmatpush1.bf16.msra.mxu0 %v4386
    %6579 = vmatprep.subr.bf16.mxu0 %v4393
    %6580 = vmatpush1.bf16.msra.mxu0 %v4392
    %6581 = vmatprep.subr.bf16.mxu0 %v4399
    %6582 = vmatpush1.bf16.msra.mxu0 %v4398
    %6583 = vmatprep.subr.bf16.mxu0 %v4405
    %6584 = vmatpush1.bf16.msra.mxu0 %v4404
    %6585 = vmatprep.subr.bf16.mxu0 %v4411
    %6586 = vmatpush1.bf16.msra.mxu0 %v4410
    %6587 = vmatprep.subr.bf16.mxu0 %v4417
    %6588 = vmatpush1.bf16.msra.mxu0 %v4416
    %6589 = vmatprep.subr.bf16.mxu0 %v4423
    %6590 = vmatpush1.bf16.msra.mxu0 %v4422
    %6591 = vmatprep.subr.bf16.mxu0 %v4429
    %6592 = vmatpush1.bf16.msra.mxu0 %v4428
    %6593 = vmatprep.subr.bf16.mxu0 %v4435
    %6594 = vmatpush1.bf16.msra.mxu0 %v4434
    %6595 = vmatprep.subr.bf16.mxu0 %v4441
    %6596 = vmatpush1.bf16.msra.mxu0 %v4440
    %6597 = vmatprep.subr.bf16.mxu0 %v4447
    %6598 = vmatpush1.bf16.msra.mxu0 %v4446
    %6599 = vmatprep.subr.bf16.mxu0 %v4453
    %6600 = vmatpush1.bf16.msra.mxu0 %v4452
    %6601 = vmatprep.mubr.bf16.mxu0 %v1837
    %6602 = vmatmul.mubr.bf16.gmra.mrb[0].mxu0 %v1833
    %v6603 = vpop.f32.mrb[0].mxu0
    %v6604 = vadd.f32 %v6553, %v6603
    %v6605 = vpop.f32.mrb[0].mxu0
    %v6606 = vadd.f32 %v6555, %v6605
    %v6607 = vpop.f32.mrb[0].mxu0
    %v6608 = vadd.f32 %v6557, %v6607
    %v6609 = vpop.f32.mrb[0].mxu0
    %v6610 = vadd.f32 %v6559, %v6609
    %6611 = vmatprep.mubr.bf16.mxu0 %v2022
    %6612 = vmatmul.mubr.bf16.gmra.mrb[0].mxu0 %v2020
    %v6613 = vpop.f32.mrb[0].mxu0
    %v6614 = vadd.f32 %v6563, %v6613
    %v6615 = vpop.f32.mrb[0].mxu0
    %v6616 = vadd.f32 %v6565, %v6615
    %v6617 = vpop.f32.mrb[0].mxu0
    %v6618 = vpop.f32.mrb[0].mxu0
    %6619 = vdwg.mxu0
    %6620 = vmatprep.subr.bf16.mxu0 %v4459
    %6621 = vmatpush1.bf16.msra.mxu0 %v4458
    %6622 = vmatprep.subr.bf16.mxu0 %v4465
    %6623 = vmatpush1.bf16.msra.mxu0 %v4464
    %6624 = vmatprep.subr.bf16.mxu0 %v4471
    %6625 = vmatpush1.bf16.msra.mxu0 %v4470
    %6626 = vmatprep.subr.bf16.mxu0 %v4477
    %6627 = vmatpush1.bf16.msra.mxu0 %v4476
    %6628 = vmatprep.subr.bf16.mxu0 %v4483
    %6629 = vmatpush1.bf16.msra.mxu0 %v4482
    %6630 = vmatprep.subr.bf16.mxu0 %v4489
    %6631 = vmatpush1.bf16.msra.mxu0 %v4488
    %6632 = vmatprep.subr.bf16.mxu0 %v4495
    %6633 = vmatpush1.bf16.msra.mxu0 %v4494
    %6634 = vmatprep.subr.bf16.mxu0 %v4501
    %6635 = vmatpush1.bf16.msra.mxu0 %v4500
    %6636 = vmatprep.subr.bf16.mxu0 %v4507
    %6637 = vmatpush1.bf16.msra.mxu0 %v4506
    %6638 = vmatprep.subr.bf16.mxu0 %v4513
    %6639 = vmatpush1.bf16.msra.mxu0 %v4512
    %6640 = vmatprep.subr.bf16.mxu0 %v4519
    %6641 = vmatpush1.bf16.msra.mxu0 %v4518
    %6642 = vmatprep.subr.bf16.mxu0 %v4525
    %6643 = vmatpush1.bf16.msra.mxu0 %v4524
    %6644 = vmatprep.subr.bf16.mxu0 %v4531
    %6645 = vmatpush1.bf16.msra.mxu0 %v4530
    %6646 = vmatprep.subr.bf16.mxu0 %v4537
    %6647 = vmatpush1.bf16.msra.mxu0 %v4536
    %6648 = vmatprep.subr.bf16.mxu0 %v4543
    %6649 = vmatpush1.bf16.msra.mxu0 %v4542
    %6650 = vmatprep.subr.bf16.mxu0 %v4549
    %6651 = vmatpush1.bf16.msra.mxu0 %v4548
    %6652 = vmatprep.mubr.bf16.mxu0 %v1838
    %6653 = vmatmul.mubr.bf16.gmra.mrb[0].mxu0 %v1834
    %v6654 = vpop.f32.mrb[0].mxu0
    %v6655 = vadd.f32 %v6604, %v6654
    %v6656 = vpop.f32.mrb[0].mxu0
    %v6657 = vadd.f32 %v6606, %v6656
    %v6658 = vpop.f32.mrb[0].mxu0
    %v6659 = vadd.f32 %v6608, %v6658
    %v6660 = vpop.f32.mrb[0].mxu0
    %v6661 = vadd.f32 %v6610, %v6660
    %6662 = vmatprep.mubr.bf16.mxu0 %v2019
    %6663 = vmatmul.mubr.bf16.gmra.mrb[0].mxu0 %v2005
    %v6664 = vpop.f32.mrb[0].mxu0
    %v6665 = vadd.f32 %v6614, %v6664
    %v6666 = vpop.f32.mrb[0].mxu0
    %v6667 = vadd.f32 %v6616, %v6666
    %v6668 = vpop.f32.mrb[0].mxu0
    %v6669 = vpop.f32.mrb[0].mxu0
    %6670 = vdwg.mxu0
    %6671 = vmatprep.subr.bf16.mxu0 %v4555
    %6672 = vmatpush1.bf16.msra.mxu0 %v4554
    %6673 = vmatprep.subr.bf16.mxu0 %v4561
    %6674 = vmatpush1.bf16.msra.mxu0 %v4560
    %6675 = vmatprep.subr.bf16.mxu0 %v4567
    %6676 = vmatpush1.bf16.msra.mxu0 %v4566
    %6677 = vmatprep.subr.bf16.mxu0 %v4573
    %6678 = vmatpush1.bf16.msra.mxu0 %v4572
    %6679 = vmatprep.subr.bf16.mxu0 %v4579
    %6680 = vmatpush1.bf16.msra.mxu0 %v4578
    %6681 = vmatprep.subr.bf16.mxu0 %v4585
    %6682 = vmatpush1.bf16.msra.mxu0 %v4584
    %6683 = vmatprep.subr.bf16.mxu0 %v4591
    %6684 = vmatpush1.bf16.msra.mxu0 %v4590
    %6685 = vmatprep.subr.bf16.mxu0 %v4597
    %6686 = vmatpush1.bf16.msra.mxu0 %v4596
    %6687 = vmatprep.subr.bf16.mxu0 %v4603
    %6688 = vmatpush1.bf16.msra.mxu0 %v4602
    %6689 = vmatprep.subr.bf16.mxu0 %v4609
    %6690 = vmatpush1.bf16.msra.mxu0 %v4608
    %6691 = vmatprep.subr.bf16.mxu0 %v4615
    %6692 = vmatpush1.bf16.msra.mxu0 %v4614
    %6693 = vmatprep.subr.bf16.mxu0 %v4621
    %6694 = vmatpush1.bf16.msra.mxu0 %v4620
    %6695 = vmatprep.subr.bf16.mxu0 %v4627
    %6696 = vmatpush1.bf16.msra.mxu0 %v4626
    %6697 = vmatprep.subr.bf16.mxu0 %v4633
    %6698 = vmatpush1.bf16.msra.mxu0 %v4632
    %6699 = vmatprep.subr.bf16.mxu0 %v4639
    %6700 = vmatpush1.bf16.msra.mxu0 %v4638
    %6701 = vmatprep.subr.bf16.mxu0 %v4645
    %6702 = vmatpush1.bf16.msra.mxu0 %v4644
    %6703 = vmatprep.mubr.bf16.mxu0 %v1839
    %6704 = vmatmul.mubr.bf16.gmra.mrb[0].mxu0 %v1835
    %v6705 = vpop.f32.mrb[0].mxu0
    %v6706 = vadd.f32 %v6655, %v6705
    %v6707 = vpop.f32.mrb[0].mxu0
    %v6708 = vadd.f32 %v6657, %v6707
    %v6709 = vpop.f32.mrb[0].mxu0
    %v6710 = vadd.f32 %v6659, %v6709
    %v6711 = vpop.f32.mrb[0].mxu0
    %v6712 = vadd.f32 %v6661, %v6711
    %6713 = vmatprep.mubr.bf16.mxu0 %v2023
    %6714 = vmatmul.mubr.bf16.gmra.mrb[0].mxu0 %v2021
    %v6715 = vpop.f32.mrb[0].mxu0
    %v6716 = vadd.f32 %v6665, %v6715
    %v6717 = vpop.f32.mrb[0].mxu0
    %v6718 = vadd.f32 %v6667, %v6717
    %v6719 = vpop.f32.mrb[0].mxu0
    %v6720 = vpop.f32.mrb[0].mxu0
    %6721 = vdwg.mxu0
    %6722 = vmatprep.subr.bf16.mxu0 %v4651
    %6723 = vmatpush1.bf16.msra.mxu0 %v4650
    %6724 = vmatprep.subr.bf16.mxu0 %v4657
    %6725 = vmatpush1.bf16.msra.mxu0 %v4656
    %6726 = vmatprep.subr.bf16.mxu0 %v4663
    %6727 = vmatpush1.bf16.msra.mxu0 %v4662
    %6728 = vmatprep.subr.bf16.mxu0 %v4669
    %6729 = vmatpush1.bf16.msra.mxu0 %v4668
    %6730 = vmatprep.subr.bf16.mxu0 %v4675
    %6731 = vmatpush1.bf16.msra.mxu0 %v4674
    %6732 = vmatprep.subr.bf16.mxu0 %v4681
    %6733 = vmatpush1.bf16.msra.mxu0 %v4680
    %6734 = vmatprep.subr.bf16.mxu0 %v4687
    %6735 = vmatpush1.bf16.msra.mxu0 %v4686
    %6736 = vmatprep.subr.bf16.mxu0 %v4693
    %6737 = vmatpush1.bf16.msra.mxu0 %v4692
    %6738 = vmatprep.subr.bf16.mxu0 %v4699
    %6739 = vmatpush1.bf16.msra.mxu0 %v4698
    %6740 = vmatprep.subr.bf16.mxu0 %v4705
    %6741 = vmatpush1.bf16.msra.mxu0 %v4704
    %6742 = vmatprep.subr.bf16.mxu0 %v4711
    %6743 = vmatpush1.bf16.msra.mxu0 %v4710
    %6744 = vmatprep.subr.bf16.mxu0 %v4717
    %6745 = vmatpush1.bf16.msra.mxu0 %v4716
    %6746 = vmatprep.subr.bf16.mxu0 %v4723
    %6747 = vmatpush1.bf16.msra.mxu0 %v4722
    %6748 = vmatprep.subr.bf16.mxu0 %v4729
    %6749 = vmatpush1.bf16.msra.mxu0 %v4728
    %6750 = vmatprep.subr.bf16.mxu0 %v4735
    %6751 = vmatpush1.bf16.msra.mxu0 %v4734
    %6752 = vmatprep.subr.bf16.mxu0 %v4741
    %6753 = vmatpush1.bf16.msra.mxu0 %v4740
    %6754 = vmatprep.mubr.bf16.mxu0 %v1972
    %6755 = vmatmul.mubr.bf16.gmra.mrb[0].mxu0 %v1968
    %v6756 = vpop.f32.mrb[0].mxu0
    %v6757 = vadd.f32 %v6706, %v6756
    %v6758 = vpop.f32.mrb[0].mxu0
    %v6759 = vadd.f32 %v6708, %v6758
    %v6760 = vpop.f32.mrb[0].mxu0
    %v6761 = vadd.f32 %v6710, %v6760
    %v6762 = vpop.f32.mrb[0].mxu0
    %v6763 = vadd.f32 %v6712, %v6762
    %6764 = vmatprep.mubr.bf16.mxu0 %v2061
    %6765 = vmatmul.mubr.bf16.gmra.mrb[0].mxu0 %v2047
    %v6766 = vpop.f32.mrb[0].mxu0
    %v6767 = vadd.f32 %v6716, %v6766
    %v6768 = vpop.f32.mrb[0].mxu0
    %v6769 = vadd.f32 %v6718, %v6768
    %v6770 = vpop.f32.mrb[0].mxu0
    %v6771 = vpop.f32.mrb[0].mxu0
    %6772 = vdwg.mxu0
    %6773 = vmatprep.subr.bf16.mxu0 %v4747
    %6774 = vmatpush1.bf16.msra.mxu0 %v4746
    %6775 = vmatprep.subr.bf16.mxu0 %v4753
    %6776 = vmatpush1.bf16.msra.mxu0 %v4752
    %6777 = vmatprep.subr.bf16.mxu0 %v4759
    %6778 = vmatpush1.bf16.msra.mxu0 %v4758
    %6779 = vmatprep.subr.bf16.mxu0 %v4765
    %6780 = vmatpush1.bf16.msra.mxu0 %v4764
    %6781 = vmatprep.subr.bf16.mxu0 %v4771
    %6782 = vmatpush1.bf16.msra.mxu0 %v4770
    %6783 = vmatprep.subr.bf16.mxu0 %v4777
    %6784 = vmatpush1.bf16.msra.mxu0 %v4776
    %6785 = vmatprep.subr.bf16.mxu0 %v4783
    %6786 = vmatpush1.bf16.msra.mxu0 %v4782
    %6787 = vmatprep.subr.bf16.mxu0 %v4789
    %6788 = vmatpush1.bf16.msra.mxu0 %v4788
    %6789 = vmatprep.subr.bf16.mxu0 %v4795
    %6790 = vmatpush1.bf16.msra.mxu0 %v4794
    %6791 = vmatprep.subr.bf16.mxu0 %v4801
    %6792 = vmatpush1.bf16.msra.mxu0 %v4800
    %6793 = vmatprep.subr.bf16.mxu0 %v4807
    %6794 = vmatpush1.bf16.msra.mxu0 %v4806
    %6795 = vmatprep.subr.bf16.mxu0 %v4813
    %6796 = vmatpush1.bf16.msra.mxu0 %v4812
    %6797 = vmatprep.subr.bf16.mxu0 %v4819
    %6798 = vmatpush1.bf16.msra.mxu0 %v4818
    %6799 = vmatprep.subr.bf16.mxu0 %v4825
    %6800 = vmatpush1.bf16.msra.mxu0 %v4824
    %6801 = vmatprep.subr.bf16.mxu0 %v4831
    %6802 = vmatpush1.bf16.msra.mxu0 %v4830
    %6803 = vmatprep.subr.bf16.mxu0 %v4837
    %6804 = vmatpush1.bf16.msra.mxu0 %v4836
    %6805 = vmatprep.mubr.bf16.mxu0 %v1973
    %6806 = vmatmul.mubr.bf16.gmra.mrb[0].mxu0 %v1969
    %v6807 = vpop.f32.mrb[0].mxu0
    %v6808 = vadd.f32 %v6757, %v6807
    %v6809 = vpop.f32.mrb[0].mxu0
    %v6810 = vadd.f32 %v6759, %v6809
    %v6811 = vpop.f32.mrb[0].mxu0
    %v6812 = vadd.f32 %v6761, %v6811
    %v6813 = vpop.f32.mrb[0].mxu0
    %v6814 = vadd.f32 %v6763, %v6813
    %6815 = vmatprep.mubr.bf16.mxu0 %v2071
    %6816 = vmatmul.mubr.bf16.gmra.mrb[0].mxu0 %v2069
    %v6817 = vpop.f32.mrb[0].mxu0
    %v6818 = vadd.f32 %v6767, %v6817
    %v6819 = vpop.f32.mrb[0].mxu0
    %v6820 = vadd.f32 %v6769, %v6819
    %v6821 = vpop.f32.mrb[0].mxu0
    %v6822 = vpop.f32.mrb[0].mxu0
    %6823 = vdwg.mxu0
    %6824 = vmatprep.subr.bf16.mxu0 %v4843
    %6825 = vmatpush1.bf16.msra.mxu0 %v4842
    %6826 = vmatprep.subr.bf16.mxu0 %v4849
    %6827 = vmatpush1.bf16.msra.mxu0 %v4848
    %6828 = vmatprep.subr.bf16.mxu0 %v4855
    %6829 = vmatpush1.bf16.msra.mxu0 %v4854
    %6830 = vmatprep.subr.bf16.mxu0 %v4861
    %6831 = vmatpush1.bf16.msra.mxu0 %v4860
    %6832 = vmatprep.subr.bf16.mxu0 %v4867
    %6833 = vmatpush1.bf16.msra.mxu0 %v4866
    %6834 = vmatprep.subr.bf16.mxu0 %v4873
    %6835 = vmatpush1.bf16.msra.mxu0 %v4872
    %6836 = vmatprep.subr.bf16.mxu0 %v4879
    %6837 = vmatpush1.bf16.msra.mxu0 %v4878
    %6838 = vmatprep.subr.bf16.mxu0 %v4885
    %6839 = vmatpush1.bf16.msra.mxu0 %v4884
    %6840 = vmatprep.subr.bf16.mxu0 %v4891
    %6841 = vmatpush1.bf16.msra.mxu0 %v4890
    %6842 = vmatprep.subr.bf16.mxu0 %v4897
    %6843 = vmatpush1.bf16.msra.mxu0 %v4896
    %6844 = vmatprep.subr.bf16.mxu0 %v4903
    %6845 = vmatpush1.bf16.msra.mxu0 %v4902
    %6846 = vmatprep.subr.bf16.mxu0 %v4909
    %6847 = vmatpush1.bf16.msra.mxu0 %v4908
    %6848 = vmatprep.subr.bf16.mxu0 %v4915
    %6849 = vmatpush1.bf16.msra.mxu0 %v4914
    %6850 = vmatprep.subr.bf16.mxu0 %v4921
    %6851 = vmatpush1.bf16.msra.mxu0 %v4920
    %6852 = vmatprep.subr.bf16.mxu0 %v4927
    %6853 = vmatpush1.bf16.msra.mxu0 %v4926
    %6854 = vmatprep.subr.bf16.mxu0 %v4933
    %6855 = vmatpush1.bf16.msra.mxu0 %v4932
    %6856 = vmatprep.mubr.bf16.mxu0 %v1974
    %6857 = vmatmul.mubr.bf16.gmra.mrb[0].mxu0 %v1970
    %v6858 = vpop.f32.mrb[0].mxu0
    %v6859 = vadd.f32 %v6808, %v6858
    %v6860 = vpop.f32.mrb[0].mxu0
    %v6861 = vadd.f32 %v6810, %v6860
    %v6862 = vpop.f32.mrb[0].mxu0
    %v6863 = vadd.f32 %v6812, %v6862
    %v6864 = vpop.f32.mrb[0].mxu0
    %v6865 = vadd.f32 %v6814, %v6864
    %6866 = vmatprep.mubr.bf16.mxu0 %v2068
    %6867 = vmatmul.mubr.bf16.gmra.mrb[0].mxu0 %v2054
    %v6868 = vpop.f32.mrb[0].mxu0
    %v6869 = vadd.f32 %v6818, %v6868
    %v6870 = vpop.f32.mrb[0].mxu0
    %v6871 = vadd.f32 %v6820, %v6870
    %v6872 = vpop.f32.mrb[0].mxu0
    %v6873 = vpop.f32.mrb[0].mxu0
    %6874 = vdwg.mxu0
    %6875 = vmatprep.subr.bf16.mxu0 %v4939
    %6876 = vmatpush1.bf16.msra.mxu0 %v4938
    %6877 = vmatprep.subr.bf16.mxu0 %v4945
    %6878 = vmatpush1.bf16.msra.mxu0 %v4944
    %6879 = vmatprep.subr.bf16.mxu0 %v4951
    %6880 = vmatpush1.bf16.msra.mxu0 %v4950
    %6881 = vmatprep.subr.bf16.mxu0 %v4957
    %6882 = vmatpush1.bf16.msra.mxu0 %v4956
    %6883 = vmatprep.subr.bf16.mxu0 %v4963
    %6884 = vmatpush1.bf16.msra.mxu0 %v4962
    %6885 = vmatprep.subr.bf16.mxu0 %v4969
    %6886 = vmatpush1.bf16.msra.mxu0 %v4968
    %6887 = vmatprep.subr.bf16.mxu0 %v4975
    %6888 = vmatpush1.bf16.msra.mxu0 %v4974
    %6889 = vmatprep.subr.bf16.mxu0 %v4981
    %6890 = vmatpush1.bf16.msra.mxu0 %v4980
    %6891 = vmatprep.subr.bf16.mxu0 0
    %6892 = vmatpush1.bf16.msra.mxu0 0
    %6893 = vmatprep.subr.bf16.mxu0 0
    %6894 = vmatpush1.bf16.msra.mxu0 0
    %6895 = vmatprep.subr.bf16.mxu0 0
    %6896 = vmatpush1.bf16.msra.mxu0 0
    %6897 = vmatprep.subr.bf16.mxu0 0
    %6898 = vmatpush1.bf16.msra.mxu0 0
    %6899 = vmatprep.subr.bf16.mxu0 0
    %6900 = vmatpush1.bf16.msra.mxu0 0
    %6901 = vmatprep.subr.bf16.mxu0 0
    %6902 = vmatpush1.bf16.msra.mxu0 0
    %6903 = vmatprep.subr.bf16.mxu0 0
    %6904 = vmatpush1.bf16.msra.mxu0 0
    %6905 = vmatprep.subr.bf16.mxu0 0
    %6906 = vmatpush1.bf16.msra.mxu0 0
    %6907 = vmatprep.mubr.bf16.mxu0 0
    %6908 = vmatmul.mubr.bf16.gmra.mrb[0].mxu0 %v1971
    %v6909 = vpop.f32.mrb[0].mxu0
    %v6910 = vadd.f32 %v6859, %v6909
    %v6911 = vpop.f32.mrb[0].mxu0
    %v6912 = vadd.f32 %v6861, %v6911
    %v6913 = vpop.f32.mrb[0].mxu0
    %v6914 = vadd.f32 %v6863, %v6913
    %v6915 = vpop.f32.mrb[0].mxu0
    %v6916 = vadd.f32 %v6865, %v6915
    %6917 = vmatprep.mubr.bf16.mxu0 0
    %6918 = vmatmul.mubr.bf16.gmra.mrb[0].mxu0 %v2070
    %v6919 = vpop.f32.mrb[0].mxu0
    %v6920 = vadd.f32 %v6869, %v6919
    %v6921 = vpop.f32.mrb[0].mxu0
    %v6922 = vadd.f32 %v6871, %v6921
    %v6923 = vpop.f32.mrb[0].mxu0
    %v6924 = vpop.f32.mrb[0].mxu0
    %6925 = vdwg.mxu0
    %v6944 = vcombine.low %v6094, %v6096
    %v6945 = vcombine.high %v6094, %v6096
    %v6946 = vcombine.low %v6502, %v6504
    %v6947 = vcombine.high %v6502, %v6504
    %v6948 = vcombine.low %v6910, %v6912
    %v6949 = vcombine.high %v6910, %v6912
    %v6951 = vunpack.c.l.s4 1966171168
    %v6952 = vunpack.c.0.s8 %v6951
    %v6953 = vlaneseq
    %v6954 = vshrl.u32 %v6953, 7
    %v6955 = vsub.s32 %v6952, %v6954
    %v6956 = vrot.slane %v6944, %v6955
    %v6958 = vunpack.c.l.s4 1966171168
    %v6959 = vunpack.c.0.s8 %v6958
    %v6960 = vlaneseq
    %v6961 = vshrl.u32 %v6960, 7
    %v6962 = vsub.s32 %v6959, %v6961
    %v6963 = vrot.slane %v6945, %v6962
    %v6965 = vunpack.c.l.s4 1966171168
    %v6966 = vunpack.c.0.s8 %v6965
    %v6967 = vlaneseq
    %v6968 = vshrl.u32 %v6967, 7
    %v6969 = vsub.s32 %v6966, %v6968
    %v6970 = vrot.slane %v6946, %v6969
    %v6972 = vunpack.c.l.s4 1966171168
    %v6973 = vunpack.c.0.s8 %v6972
    %v6974 = vlaneseq
    %v6975 = vshrl.u32 %v6974, 7
    %v6976 = vsub.s32 %v6973, %v6975
    %v6977 = vrot.slane %v6947, %v6976
    %v6979 = vunpack.c.l.s4 1966171168
    %v6980 = vunpack.c.0.s8 %v6979
    %v6981 = vlaneseq
    %v6982 = vshrl.u32 %v6981, 7
    %v6983 = vsub.s32 %v6980, %v6982
    %v6984 = vrot.slane %v6948, %v6983
    %v6986 = vunpack.c.l.s4 1966171168
    %v6987 = vunpack.c.0.s8 %v6986
    %v6988 = vlaneseq
    %v6989 = vshrl.u32 %v6988, 7
    %v6990 = vsub.s32 %v6987, %v6989
    %v6991 = vrot.slane %v6949, %v6990
    %v6992 = vcombine.low %v6956, %v6970
    %v6993 = vcombine.high %v6956, %v6970
    %v6994 = vcombine.low %v6963, %v6977
    %v6995 = vcombine.high %v6963, %v6977
    %v6996 = vcombine.high %v6984, %v6984
    %v6997 = vcombine.high %v6991, %v6991
    %v6999 = vunpack.c.l.s4 1966171168
    %v7000 = vunpack.c.0.s8 %v6999
    %v7001 = vlaneseq
    %v7002 = vshrl.u32 %v7001, 7
    %v7003 = vsub.s32 %v7000, %v7002
    %v7004 = vrot.slane %v6992, %v7003
    %v7006 = vunpack.c.l.s4 1966171168
    %v7007 = vunpack.c.0.s8 %v7006
    %v7008 = vlaneseq
    %v7009 = vshrl.u32 %v7008, 7
    %v7010 = vsub.s32 %v7007, %v7009
    %v7011 = vrot.slane %v6994, %v7010
    %v7013 = vunpack.c.l.s4 1966171168
    %v7014 = vunpack.c.0.s8 %v7013
    %v7015 = vlaneseq
    %v7016 = vshrl.u32 %v7015, 7
    %v7017 = vsub.s32 %v7014, %v7016
    %v7018 = vrot.slane %v6993, %v7017
    %v7020 = vunpack.c.l.s4 1966171168
    %v7021 = vunpack.c.0.s8 %v7020
    %v7022 = vlaneseq
    %v7023 = vshrl.u32 %v7022, 7
    %v7024 = vsub.s32 %v7021, %v7023
    %v7025 = vrot.slane %v6995, %v7024
    %v7027 = vunpack.c.l.s4 1966171168
    %v7028 = vunpack.c.0.s8 %v7027
    %v7029 = vlaneseq
    %v7030 = vshrl.u32 %v7029, 7
    %v7031 = vsub.s32 %v7028, %v7030
    %v7032 = vrot.slane %v6984, %v7031
    %v7034 = vunpack.c.l.s4 1966171168
    %v7035 = vunpack.c.0.s8 %v7034
    %v7036 = vlaneseq
    %v7037 = vshrl.u32 %v7036, 7
    %v7038 = vsub.s32 %v7035, %v7037
    %v7039 = vrot.slane %v6991, %v7038
    %v7041 = vunpack.c.l.s4 1966171168
    %v7042 = vunpack.c.0.s8 %v7041
    %v7043 = vlaneseq
    %v7044 = vshrl.u32 %v7043, 7
    %v7045 = vsub.s32 %v7042, %v7044
    %v7046 = vrot.slane %v6996, %v7045
    %v7048 = vunpack.c.l.s4 1966171168
    %v7049 = vunpack.c.0.s8 %v7048
    %v7050 = vlaneseq
    %v7051 = vshrl.u32 %v7050, 7
    %v7052 = vsub.s32 %v7049, %v7051
    %v7053 = vrot.slane %v6997, %v7052
    %v7054 = vcombine.low %v7004, %v7032
    %v7055 = vcombine.high %v7004, %v7032
    %v7056 = vcombine.low %v7011, %v7039
    %v7057 = vcombine.high %v7011, %v7039
    %v7058 = vcombine.low %v7018, %v7046
    %v7059 = vcombine.high %v7018, %v7046
    %v7060 = vcombine.low %v7025, %v7053
    %v7061 = vcombine.high %v7025, %v7053
    %v7062 = vcombine.low %v6098, %v6100
    %v7063 = vcombine.high %v6098, %v6100
    %v7064 = vcombine.low %v6506, %v6508
    %v7065 = vcombine.high %v6506, %v6508
    %v7066 = vcombine.low %v6914, %v6916
    %v7067 = vcombine.high %v6914, %v6916
    %v7069 = vunpack.c.l.s4 1966171168
    %v7070 = vunpack.c.0.s8 %v7069
    %v7071 = vlaneseq
    %v7072 = vshrl.u32 %v7071, 7
    %v7073 = vsub.s32 %v7070, %v7072
    %v7074 = vrot.slane %v7062, %v7073
    %v7076 = vunpack.c.l.s4 1966171168
    %v7077 = vunpack.c.0.s8 %v7076
    %v7078 = vlaneseq
    %v7079 = vshrl.u32 %v7078, 7
    %v7080 = vsub.s32 %v7077, %v7079
    %v7081 = vrot.slane %v7063, %v7080
    %v7083 = vunpack.c.l.s4 1966171168
    %v7084 = vunpack.c.0.s8 %v7083
    %v7085 = vlaneseq
    %v7086 = vshrl.u32 %v7085, 7
    %v7087 = vsub.s32 %v7084, %v7086
    %v7088 = vrot.slane %v7064, %v7087
    %v7090 = vunpack.c.l.s4 1966171168
    %v7091 = vunpack.c.0.s8 %v7090
    %v7092 = vlaneseq
    %v7093 = vshrl.u32 %v7092, 7
    %v7094 = vsub.s32 %v7091, %v7093
    %v7095 = vrot.slane %v7065, %v7094
    %v7097 = vunpack.c.l.s4 1966171168
    %v7098 = vunpack.c.0.s8 %v7097
    %v7099 = vlaneseq
    %v7100 = vshrl.u32 %v7099, 7
    %v7101 = vsub.s32 %v7098, %v7100
    %v7102 = vrot.slane %v7066, %v7101
    %v7104 = vunpack.c.l.s4 1966171168
    %v7105 = vunpack.c.0.s8 %v7104
    %v7106 = vlaneseq
    %v7107 = vshrl.u32 %v7106, 7
    %v7108 = vsub.s32 %v7105, %v7107
    %v7109 = vrot.slane %v7067, %v7108
    %v7110 = vcombine.low %v7074, %v7088
    %v7111 = vcombine.high %v7074, %v7088
    %v7112 = vcombine.low %v7081, %v7095
    %v7113 = vcombine.high %v7081, %v7095
    %v7114 = vcombine.high %v7102, %v7102
    %v7115 = vcombine.high %v7109, %v7109
    %v7117 = vunpack.c.l.s4 1966171168
    %v7118 = vunpack.c.0.s8 %v7117
    %v7119 = vlaneseq
    %v7120 = vshrl.u32 %v7119, 7
    %v7121 = vsub.s32 %v7118, %v7120
    %v7122 = vrot.slane %v7110, %v7121
    %v7124 = vunpack.c.l.s4 1966171168
    %v7125 = vunpack.c.0.s8 %v7124
    %v7126 = vlaneseq
    %v7127 = vshrl.u32 %v7126, 7
    %v7128 = vsub.s32 %v7125, %v7127
    %v7129 = vrot.slane %v7112, %v7128
    %v7131 = vunpack.c.l.s4 1966171168
    %v7132 = vunpack.c.0.s8 %v7131
    %v7133 = vlaneseq
    %v7134 = vshrl.u32 %v7133, 7
    %v7135 = vsub.s32 %v7132, %v7134
    %v7136 = vrot.slane %v7111, %v7135
    %v7138 = vunpack.c.l.s4 1966171168
    %v7139 = vunpack.c.0.s8 %v7138
    %v7140 = vlaneseq
    %v7141 = vshrl.u32 %v7140, 7
    %v7142 = vsub.s32 %v7139, %v7141
    %v7143 = vrot.slane %v7113, %v7142
    %v7145 = vunpack.c.l.s4 1966171168
    %v7146 = vunpack.c.0.s8 %v7145
    %v7147 = vlaneseq
    %v7148 = vshrl.u32 %v7147, 7
    %v7149 = vsub.s32 %v7146, %v7148
    %v7150 = vrot.slane %v7102, %v7149
    %v7152 = vunpack.c.l.s4 1966171168
    %v7153 = vunpack.c.0.s8 %v7152
    %v7154 = vlaneseq
    %v7155 = vshrl.u32 %v7154, 7
    %v7156 = vsub.s32 %v7153, %v7155
    %v7157 = vrot.slane %v7109, %v7156
    %v7159 = vunpack.c.l.s4 1966171168
    %v7160 = vunpack.c.0.s8 %v7159
    %v7161 = vlaneseq
    %v7162 = vshrl.u32 %v7161, 7
    %v7163 = vsub.s32 %v7160, %v7162
    %v7164 = vrot.slane %v7114, %v7163
    %v7166 = vunpack.c.l.s4 1966171168
    %v7167 = vunpack.c.0.s8 %v7166
    %v7168 = vlaneseq
    %v7169 = vshrl.u32 %v7168, 7
    %v7170 = vsub.s32 %v7167, %v7169
    %v7171 = vrot.slane %v7115, %v7170
    %v7172 = vcombine.low %v7122, %v7150
    %v7173 = vcombine.high %v7122, %v7150
    %v7174 = vcombine.low %v7129, %v7157
    %v7175 = vcombine.high %v7129, %v7157
    %v7176 = vcombine.low %v7136, %v7164
    %v7177 = vcombine.high %v7136, %v7164
    %v7178 = vcombine.low %v7143, %v7171
    %v7179 = vcombine.high %v7143, %v7171
    %v7180 = vcombine.low %v6104, %v6106
    %v7181 = vcombine.low %v6512, %v6514
    %v7182 = vcombine.low %v6920, %v6922
    %v7184 = vunpack.c.l.s4 1966171168
    %v7185 = vunpack.c.0.s8 %v7184
    %v7186 = vlaneseq
    %v7187 = vshrl.u32 %v7186, 7
    %v7188 = vsub.s32 %v7185, %v7187
    %v7189 = vrot.slane %v7180, %v7188
    %v7191 = vunpack.c.l.s4 1966171168
    %v7192 = vunpack.c.0.s8 %v7191
    %v7193 = vlaneseq
    %v7194 = vshrl.u32 %v7193, 7
    %v7195 = vsub.s32 %v7192, %v7194
    %v7196 = vrot.slane %v7181, %v7195
    %v7198 = vunpack.c.l.s4 1966171168
    %v7199 = vunpack.c.0.s8 %v7198
    %v7200 = vlaneseq
    %v7201 = vshrl.u32 %v7200, 7
    %v7202 = vsub.s32 %v7199, %v7201
    %v7203 = vrot.slane %v7182, %v7202
    %v7204 = vcombine.low %v7189, %v7196
    %v7205 = vcombine.high %v7189, %v7196
    %v7206 = vcombine.high %v7203, %v7203
    %v7208 = vunpack.c.l.s4 1966171168
    %v7209 = vunpack.c.0.s8 %v7208
    %v7210 = vlaneseq
    %v7211 = vshrl.u32 %v7210, 7
    %v7212 = vsub.s32 %v7209, %v7211
    %v7213 = vrot.slane %v7204, %v7212
    %v7215 = vunpack.c.l.s4 1966171168
    %v7216 = vunpack.c.0.s8 %v7215
    %v7217 = vlaneseq
    %v7218 = vshrl.u32 %v7217, 7
    %v7219 = vsub.s32 %v7216, %v7218
    %v7220 = vrot.slane %v7205, %v7219
    %v7222 = vunpack.c.l.s4 1966171168
    %v7223 = vunpack.c.0.s8 %v7222
    %v7224 = vlaneseq
    %v7225 = vshrl.u32 %v7224, 7
    %v7226 = vsub.s32 %v7223, %v7225
    %v7227 = vrot.slane %v7203, %v7226
    %v7229 = vunpack.c.l.s4 1966171168
    %v7230 = vunpack.c.0.s8 %v7229
    %v7231 = vlaneseq
    %v7232 = vshrl.u32 %v7231, 7
    %v7233 = vsub.s32 %v7230, %v7232
    %v7234 = vrot.slane %v7206, %v7233
    %v7235 = vcombine.low %v7213, %v7227
    %v7236 = vcombine.low %v7220, %v7234
    %v7237 = vlaneseq
    %v7238 = vshrl.u32 %v7237, 7
    %v7239 = vadd.s32 %v7238, 8
    %vm7240 = vcmp.ge.s32.totalorder %v7238, 1
    %vm7241 = vcmp.ge.s32.totalorder %v7239, 1
    %vm7242 = vcmp.le.s32.totalorder %v7238, 8
    %vm7243 = vcmp.le.s32.totalorder %v7239, 8
    %vm7244 = vmand %vm7240, %vm7242
    %vm7245 = vmand %vm7241, %vm7243
    %v7246 = vsel %vm7244, 1, 0
    %v7247 = vsel %vm7245, 1, 0
    %vm7248 = vcmp.eq.s32.totalorder %v7246, 1
    %vm7249 = vcmp.eq.s32.totalorder %v7247, 1
    %v7250 = vcombine.low %v7054, %v7058
    %v7251 = vcombine.low %v7055, %v7059
    %v7252 = vcombine.low %v7056, %v7060
    %v7253 = vcombine.low %v7057, %v7061
    %v7255 = vunpack.c.l.s4 1966171168
    %v7256 = vunpack.c.0.s8 %v7255
    %v7257 = vlaneseq
    %v7258 = vshrl.u32 %v7257, 7
    %v7259 = vsub.s32 %v7256, %v7258
    %v7260 = vrot.slane %v7250, %v7259
    %v7262 = vunpack.c.l.s4 1966171168
    %v7263 = vunpack.c.0.s8 %v7262
    %v7264 = vlaneseq
    %v7265 = vshrl.u32 %v7264, 7
    %v7266 = vsub.s32 %v7263, %v7265
    %v7267 = vrot.slane %v7251, %v7266
    %v7269 = vunpack.c.l.s4 1966171168
    %v7270 = vunpack.c.0.s8 %v7269
    %v7271 = vlaneseq
    %v7272 = vshrl.u32 %v7271, 7
    %v7273 = vsub.s32 %v7270, %v7272
    %v7274 = vrot.slane %v7252, %v7273
    %v7276 = vunpack.c.l.s4 1966171168
    %v7277 = vunpack.c.0.s8 %v7276
    %v7278 = vlaneseq
    %v7279 = vshrl.u32 %v7278, 7
    %v7280 = vsub.s32 %v7277, %v7279
    %v7281 = vrot.slane %v7253, %v7280
    %v7282 = vcombine.low %v7260, %v7267
    %v7283 = vcombine.high %v7260, %v7267
    %v7284 = vcombine.low %v7274, %v7281
    %v7285 = vcombine.high %v7274, %v7281
    %v7287 = vunpack.c.l.s4 1966171168
    %v7288 = vunpack.c.0.s8 %v7287
    %v7289 = vlaneseq
    %v7290 = vshrl.u32 %v7289, 7
    %v7291 = vsub.s32 %v7288, %v7290
    %v7292 = vrot.slane %v7282, %v7291
    %v7294 = vunpack.c.l.s4 1966171168
    %v7295 = vunpack.c.0.s8 %v7294
    %v7296 = vlaneseq
    %v7297 = vshrl.u32 %v7296, 7
    %v7298 = vsub.s32 %v7295, %v7297
    %v7299 = vrot.slane %v7283, %v7298
    %v7301 = vunpack.c.l.s4 1966171168
    %v7302 = vunpack.c.0.s8 %v7301
    %v7303 = vlaneseq
    %v7304 = vshrl.u32 %v7303, 7
    %v7305 = vsub.s32 %v7302, %v7304
    %v7306 = vrot.slane %v7284, %v7305
    %v7308 = vunpack.c.l.s4 1966171168
    %v7309 = vunpack.c.0.s8 %v7308
    %v7310 = vlaneseq
    %v7311 = vshrl.u32 %v7310, 7
    %v7312 = vsub.s32 %v7309, %v7311
    %v7313 = vrot.slane %v7285, %v7312
    %v7314 = vcombine.low %v7292, %v7306
    %v7315 = vcombine.low %v7299, %v7313
    %v7317 = vunpack.c.l.s4 1966171168
    %v7318 = vunpack.c.0.s8 %v7317
    %v7319 = vlaneseq
    %v7320 = vshrl.u32 %v7319, 7
    %v7321 = vsub.s32 %v7318, %v7320
    %v7322 = vrot.slane %v7172, %v7321
    %v7323 = vcombine.high %v7322, %v7322
    %v7325 = vunpack.c.l.s4 1966171168
    %v7326 = vunpack.c.0.s8 %v7325
    %v7327 = vlaneseq
    %v7328 = vshrl.u32 %v7327, 7
    %v7329 = vsub.s32 %v7326, %v7328
    %v7330 = vrot.slane %v7322, %v7329
    %v7332 = vunpack.c.l.s4 1966171168
    %v7333 = vunpack.c.0.s8 %v7332
    %v7334 = vlaneseq
    %v7335 = vshrl.u32 %v7334, 7
    %v7336 = vsub.s32 %v7333, %v7335
    %v7337 = vrot.slane %v7323, %v7336
    %v7338 = vcombine.low %v7176, %v7173
    %v7339 = vcombine.low %v7177, %v7174
    %v7340 = vcombine.low %v7178, %v7175
    %v7341 = vcombine.low %v7179, %v7235
    %v7343 = vunpack.c.l.s4 1966171168
    %v7344 = vunpack.c.0.s8 %v7343
    %v7345 = vlaneseq
    %v7346 = vshrl.u32 %v7345, 7
    %v7347 = vsub.s32 %v7344, %v7346
    %v7348 = vrot.slane %v7338, %v7347
    %v7350 = vunpack.c.l.s4 1966171168
    %v7351 = vunpack.c.0.s8 %v7350
    %v7352 = vlaneseq
    %v7353 = vshrl.u32 %v7352, 7
    %v7354 = vsub.s32 %v7351, %v7353
    %v7355 = vrot.slane %v7339, %v7354
    %v7357 = vunpack.c.l.s4 1966171168
    %v7358 = vunpack.c.0.s8 %v7357
    %v7359 = vlaneseq
    %v7360 = vshrl.u32 %v7359, 7
    %v7361 = vsub.s32 %v7358, %v7360
    %v7362 = vrot.slane %v7340, %v7361
    %v7364 = vunpack.c.l.s4 1966171168
    %v7365 = vunpack.c.0.s8 %v7364
    %v7366 = vlaneseq
    %v7367 = vshrl.u32 %v7366, 7
    %v7368 = vsub.s32 %v7365, %v7367
    %v7369 = vrot.slane %v7341, %v7368
    %v7370 = vcombine.low %v7348, %v7355
    %v7371 = vcombine.high %v7348, %v7355
    %v7372 = vcombine.low %v7362, %v7369
    %v7373 = vcombine.high %v7362, %v7369
    %v7375 = vunpack.c.l.s4 1966171168
    %v7376 = vunpack.c.0.s8 %v7375
    %v7377 = vlaneseq
    %v7378 = vshrl.u32 %v7377, 7
    %v7379 = vsub.s32 %v7376, %v7378
    %v7380 = vrot.slane %v7370, %v7379
    %v7382 = vunpack.c.l.s4 1966171168
    %v7383 = vunpack.c.0.s8 %v7382
    %v7384 = vlaneseq
    %v7385 = vshrl.u32 %v7384, 7
    %v7386 = vsub.s32 %v7383, %v7385
    %v7387 = vrot.slane %v7371, %v7386
    %v7389 = vunpack.c.l.s4 1966171168
    %v7390 = vunpack.c.0.s8 %v7389
    %v7391 = vlaneseq
    %v7392 = vshrl.u32 %v7391, 7
    %v7393 = vsub.s32 %v7390, %v7392
    %v7394 = vrot.slane %v7372, %v7393
    %v7396 = vunpack.c.l.s4 1966171168
    %v7397 = vunpack.c.0.s8 %v7396
    %v7398 = vlaneseq
    %v7399 = vshrl.u32 %v7398, 7
    %v7400 = vsub.s32 %v7397, %v7399
    %v7401 = vrot.slane %v7373, %v7400
    %v7402 = vcombine.low %v7380, %v7394
    %v7403 = vcombine.low %v7387, %v7401
    %v7405 = vunpack.c.l.s4 1966171168
    %v7406 = vunpack.c.0.s8 %v7405
    %v7407 = vlaneseq
    %v7408 = vshrl.u32 %v7407, 7
    %v7409 = vsub.s32 %v7406, %v7408
    %v7410 = vrot.slane %v7236, %v7409
    %v7411 = vcombine.high %v7410, %v7410
    %v7413 = vunpack.c.l.s4 1966171168
    %v7414 = vunpack.c.0.s8 %v7413
    %v7415 = vlaneseq
    %v7416 = vshrl.u32 %v7415, 7
    %v7417 = vsub.s32 %v7414, %v7416
    %v7418 = vrot.slane %v7410, %v7417
    %v7420 = vunpack.c.l.s4 1966171168
    %v7421 = vunpack.c.0.s8 %v7420
    %v7422 = vlaneseq
    %v7423 = vshrl.u32 %v7422, 7
    %v7424 = vsub.s32 %v7421, %v7423
    %v7425 = vrot.slane %v7411, %v7424
    %v7434 = vsel %vm7248, %v7314, -1e+30
    %v7435 = vsel %vm7248, %v7315, -1e+30
    %v7436 = vsel %vm7249, %v7330, -1e+30
    %v7437 = vsel %vm7249, %v7337, -1e+30
    %v7438 = vsel %vm7248, %v7402, -1e+30
    %v7439 = vsel %vm7248, %v7403, -1e+30
    %v7440 = vsel %vm7249, %v7418, -1e+30
    %v7441 = vsel %vm7249, %v7425, -1e+30
    %vm7442 = vcmask 1040384
    %v7443 = vsel %vm7442, %v7436, -inf
    %v7444 = vmax.f32 %v7434, %v7443
    %v7445 = vrot.slane %v7444, 4
    %v7446 = vmax.f32 %v7444, %v7445
    %v7447 = vrot.slane %v7446, 2
    %v7448 = vmax.f32 %v7446, %v7447
    %v7449 = vrot.slane %v7448, 1
    %v7450 = vmax.f32 %v7448, %v7449
    %v7451 = vsel %vm7442, %v7437, -inf
    %v7452 = vmax.f32 %v7435, %v7451
    %v7453 = vrot.slane %v7452, 4
    %v7454 = vmax.f32 %v7452, %v7453
    %v7455 = vrot.slane %v7454, 2
    %v7456 = vmax.f32 %v7454, %v7455
    %v7457 = vrot.slane %v7456, 1
    %v7458 = vmax.f32 %v7456, %v7457
    %v7459 = vsel %vm7442, %v7440, -inf
    %v7460 = vmax.f32 %v7438, %v7459
    %v7461 = vrot.slane %v7460, 4
    %v7462 = vmax.f32 %v7460, %v7461
    %v7463 = vrot.slane %v7462, 2
    %v7464 = vmax.f32 %v7462, %v7463
    %v7465 = vrot.slane %v7464, 1
    %v7466 = vmax.f32 %v7464, %v7465
    %v7467 = vsel %vm7442, %v7441, -inf
    %v7468 = vmax.f32 %v7439, %v7467
    %v7469 = vrot.slane %v7468, 4
    %v7470 = vmax.f32 %v7468, %v7469
    %v7471 = vrot.slane %v7470, 2
    %v7472 = vmax.f32 %v7470, %v7471
    %v7473 = vrot.slane %v7472, 1
    %v7474 = vmax.f32 %v7472, %v7473
    %v7475 = vld [vmem:[#allocation5] sm:$0x3]
    %v7477 = vlaneseq
    %v7478 = vshrl.u32 %v7477, 7
    %v7479 = vsub.s32 0, %v7478
    %v7480 = vrot.slane %v7475, %v7479
    %v7481 = vlaneseq
    %v7482 = vshrl.u32 %v7481, 7
    %v7483 = vsub.s32 1, %v7482
    %v7484 = vrot.slane %v7475, %v7483
    %v7487 = vadd.f32 %v7450, %v7480
    %v7488 = vadd.f32 %v7458, %v7484
    %v7489 = vadd.f32 %v7466, %v7480
    %v7490 = vadd.f32 %v7474, %v7484
    %v7491 = vmax.f32 %v7487, 0.0
    %v7492 = vmax.f32 %v7488, 0.0
    %v7493 = vmax.f32 %v7489, 0.0
    %v7494 = vmax.f32 %v7490, 0.0
    %v7495 = vld [vmem:[#allocation7] sm:$0x3]
    %v7497 = vlaneseq
    %v7498 = vshrl.u32 %v7497, 7
    %v7499 = vsub.s32 0, %v7498
    %v7500 = vrot.slane %v7495, %v7499
    %v7501 = vlaneseq
    %v7502 = vshrl.u32 %v7501, 7
    %v7503 = vsub.s32 1, %v7502
    %v7504 = vrot.slane %v7495, %v7503
    %v7507 = vmul.f32 %v7491, %v7500
    %v7508 = vmul.f32 %v7492, %v7504
    %v7509 = vmul.f32 %v7493, %v7500
    %v7510 = vmul.f32 %v7494, %v7504
    %v7515 = vrot.slane %v7509, 7
    %vm7516 = vcmask 1041409
    %v7517 = vsel %vm7516, %v7515, %v7507
    %v7518 = vrot.slane %v7510, 7
    %v7519 = vsel %vm7516, %v7518, %v7508
    %vm7522 = vcmask 1041408
    %v7523 = vsel %vm7522, %v7517, 0.0
    %v7524 = vsel %vm7522, %v7519, 0.0
    %v7525 = vadd.f32 %v7523, %v7524
    %7526 = vadd.xlane.f32.xlu0 %v7525
    %v7527 = vpop.xlane.xlu0 %7526
    %v7528 = vadd.f32 %v7527, 0.0
    %v7529 = vcombine.high %v7292, %v7306
    %v7530 = vcombine.high %v7299, %v7313
    %v7531 = vcombine.high %v7330, %v7330
    %v7532 = vcombine.high %v7337, %v7337
    %v7533 = vcombine.high %v7380, %v7394
    %v7534 = vcombine.high %v7387, %v7401
    %v7535 = vcombine.high %v7418, %v7418
    %v7536 = vcombine.high %v7425, %v7425
    %v7545 = vsel %vm7442, %v7531, -inf
    %v7546 = vmax.f32 %v7529, %v7545
    %v7547 = vrot.slane %v7546, 4
    %v7548 = vmax.f32 %v7546, %v7547
    %v7549 = vrot.slane %v7548, 2
    %v7550 = vmax.f32 %v7548, %v7549
    %v7551 = vrot.slane %v7550, 1
    %v7552 = vmax.f32 %v7550, %v7551
    %v7553 = vsel %vm7442, %v7532, -inf
    %v7554 = vmax.f32 %v7530, %v7553
    %v7555 = vrot.slane %v7554, 4
    %v7556 = vmax.f32 %v7554, %v7555
    %v7557 = vrot.slane %v7556, 2
    %v7558 = vmax.f32 %v7556, %v7557
    %v7559 = vrot.slane %v7558, 1
    %v7560 = vmax.f32 %v7558, %v7559
    %v7561 = vsel %vm7442, %v7535, -inf
    %v7562 = vmax.f32 %v7533, %v7561
    %v7563 = vrot.slane %v7562, 4
    %v7564 = vmax.f32 %v7562, %v7563
    %v7565 = vrot.slane %v7564, 2
    %v7566 = vmax.f32 %v7564, %v7565
    %v7567 = vrot.slane %v7566, 1
    %v7568 = vmax.f32 %v7566, %v7567
    %v7569 = vsel %vm7442, %v7536, -inf
    %v7570 = vmax.f32 %v7534, %v7569
    %v7571 = vrot.slane %v7570, 4
    %v7572 = vmax.f32 %v7570, %v7571
    %v7573 = vrot.slane %v7572, 2
    %v7574 = vmax.f32 %v7572, %v7573
    %v7575 = vrot.slane %v7574, 1
    %v7576 = vmax.f32 %v7574, %v7575
    %v7577 = vld [vmem:[#allocation5 + $0x2] sm:$0x3]
    %v7579 = vlaneseq
    %v7580 = vshrl.u32 %v7579, 7
    %v7581 = vsub.s32 0, %v7580
    %v7582 = vrot.slane %v7577, %v7581
    %v7583 = vlaneseq
    %v7584 = vshrl.u32 %v7583, 7
    %v7585 = vsub.s32 1, %v7584
    %v7586 = vrot.slane %v7577, %v7585
    %v7589 = vadd.f32 %v7552, %v7582
    %v7590 = vadd.f32 %v7560, %v7586
    %v7591 = vadd.f32 %v7568, %v7582
    %v7592 = vadd.f32 %v7576, %v7586
    %v7593 = vmax.f32 %v7589, 0.0
    %v7594 = vmax.f32 %v7590, 0.0
    %v7595 = vmax.f32 %v7591, 0.0
    %v7596 = vmax.f32 %v7592, 0.0
    %v7597 = vld [vmem:[#allocation7 + $0x2] sm:$0x3]
    %v7599 = vlaneseq
    %v7600 = vshrl.u32 %v7599, 7
    %v7601 = vsub.s32 0, %v7600
    %v7602 = vrot.slane %v7597, %v7601
    %v7603 = vlaneseq
    %v7604 = vshrl.u32 %v7603, 7
    %v7605 = vsub.s32 1, %v7604
    %v7606 = vrot.slane %v7597, %v7605
    %v7609 = vmul.f32 %v7593, %v7602
    %v7610 = vmul.f32 %v7594, %v7606
    %v7611 = vmul.f32 %v7595, %v7602
    %v7612 = vmul.f32 %v7596, %v7606
    %v7617 = vrot.slane %v7611, 7
    %v7618 = vsel %vm7516, %v7617, %v7609
    %v7619 = vrot.slane %v7612, 7
    %v7620 = vsel %vm7516, %v7619, %v7610
    %v7623 = vsel %vm7522, %v7618, 0.0
    %v7624 = vsel %vm7522, %v7620, 0.0
    %v7625 = vadd.f32 %v7623, %v7624
    %7626 = vadd.xlane.f32.xlu0 %v7625
    %v7627 = vpop.xlane.xlu0 %7626
    %v7628 = vadd.f32 %v7528, %v7627
    %vm7629 = vcmp.ge.s32.totalorder %v7238, 0
    %vm7630 = vcmp.ge.s32.totalorder %v7239, 0
    %vm7631 = vcmp.le.s32.totalorder %v7238, 7
    %vm7632 = vcmp.le.s32.totalorder %v7239, 7
    %vm7633 = vmand %vm7629, %vm7631
    %vm7634 = vmand %vm7630, %vm7632
    %v7635 = vsel %vm7633, 1, 0
    %v7636 = vsel %vm7634, 1, 0
    %vm7637 = vcmp.eq.s32.totalorder %v7635, 1
    %vm7638 = vcmp.eq.s32.totalorder %v7636, 1
    %v7639 = vcombine.high %v7054, %v7058
    %v7640 = vcombine.high %v7055, %v7059
    %v7641 = vcombine.high %v7056, %v7060
    %v7642 = vcombine.high %v7057, %v7061
    %v7644 = vunpack.c.l.s4 1966171168
    %v7645 = vunpack.c.0.s8 %v7644
    %v7646 = vlaneseq
    %v7647 = vshrl.u32 %v7646, 7
    %v7648 = vsub.s32 %v7645, %v7647
    %v7649 = vrot.slane %v7639, %v7648
    %v7651 = vunpack.c.l.s4 1966171168
    %v7652 = vunpack.c.0.s8 %v7651
    %v7653 = vlaneseq
    %v7654 = vshrl.u32 %v7653, 7
    %v7655 = vsub.s32 %v7652, %v7654
    %v7656 = vrot.slane %v7640, %v7655
    %v7658 = vunpack.c.l.s4 1966171168
    %v7659 = vunpack.c.0.s8 %v7658
    %v7660 = vlaneseq
    %v7661 = vshrl.u32 %v7660, 7
    %v7662 = vsub.s32 %v7659, %v7661
    %v7663 = vrot.slane %v7641, %v7662
    %v7665 = vunpack.c.l.s4 1966171168
    %v7666 = vunpack.c.0.s8 %v7665
    %v7667 = vlaneseq
    %v7668 = vshrl.u32 %v7667, 7
    %v7669 = vsub.s32 %v7666, %v7668
    %v7670 = vrot.slane %v7642, %v7669
    %v7671 = vcombine.low %v7649, %v7656
    %v7672 = vcombine.high %v7649, %v7656
    %v7673 = vcombine.low %v7663, %v7670
    %v7674 = vcombine.high %v7663, %v7670
    %v7676 = vunpack.c.l.s4 1966171168
    %v7677 = vunpack.c.0.s8 %v7676
    %v7678 = vlaneseq
    %v7679 = vshrl.u32 %v7678, 7
    %v7680 = vsub.s32 %v7677, %v7679
    %v7681 = vrot.slane %v7671, %v7680
    %v7683 = vunpack.c.l.s4 1966171168
    %v7684 = vunpack.c.0.s8 %v7683
    %v7685 = vlaneseq
    %v7686 = vshrl.u32 %v7685, 7
    %v7687 = vsub.s32 %v7684, %v7686
    %v7688 = vrot.slane %v7672, %v7687
    %v7690 = vunpack.c.l.s4 1966171168
    %v7691 = vunpack.c.0.s8 %v7690
    %v7692 = vlaneseq
    %v7693 = vshrl.u32 %v7692, 7
    %v7694 = vsub.s32 %v7691, %v7693
    %v7695 = vrot.slane %v7673, %v7694
    %v7697 = vunpack.c.l.s4 1966171168
    %v7698 = vunpack.c.0.s8 %v7697
    %v7699 = vlaneseq
    %v7700 = vshrl.u32 %v7699, 7
    %v7701 = vsub.s32 %v7698, %v7700
    %v7702 = vrot.slane %v7674, %v7701
    %v7703 = vcombine.low %v7681, %v7695
    %v7704 = vcombine.low %v7688, %v7702
    %v7705 = vcombine.high %v7172, %v7172
    %v7707 = vunpack.c.l.s4 1966171168
    %v7708 = vunpack.c.0.s8 %v7707
    %v7709 = vlaneseq
    %v7710 = vshrl.u32 %v7709, 7
    %v7711 = vsub.s32 %v7708, %v7710
    %v7712 = vrot.slane %v7705, %v7711
    %v7713 = vcombine.high %v7712, %v7712
    %v7715 = vunpack.c.l.s4 1966171168
    %v7716 = vunpack.c.0.s8 %v7715
    %v7717 = vlaneseq
    %v7718 = vshrl.u32 %v7717, 7
    %v7719 = vsub.s32 %v7716, %v7718
    %v7720 = vrot.slane %v7712, %v7719
    %v7722 = vunpack.c.l.s4 1966171168
    %v7723 = vunpack.c.0.s8 %v7722
    %v7724 = vlaneseq
    %v7725 = vshrl.u32 %v7724, 7
    %v7726 = vsub.s32 %v7723, %v7725
    %v7727 = vrot.slane %v7713, %v7726
    %v7728 = vcombine.high %v7176, %v7173
    %v7729 = vcombine.high %v7177, %v7174
    %v7730 = vcombine.high %v7178, %v7175
    %v7731 = vcombine.high %v7179, %v7235
    %v7733 = vunpack.c.l.s4 1966171168
    %v7734 = vunpack.c.0.s8 %v7733
    %v7735 = vlaneseq
    %v7736 = vshrl.u32 %v7735, 7
    %v7737 = vsub.s32 %v7734, %v7736
    %v7738 = vrot.slane %v7728, %v7737
    %v7740 = vunpack.c.l.s4 1966171168
    %v7741 = vunpack.c.0.s8 %v7740
    %v7742 = vlaneseq
    %v7743 = vshrl.u32 %v7742, 7
    %v7744 = vsub.s32 %v7741, %v7743
    %v7745 = vrot.slane %v7729, %v7744
    %v7747 = vunpack.c.l.s4 1966171168
    %v7748 = vunpack.c.0.s8 %v7747
    %v7749 = vlaneseq
    %v7750 = vshrl.u32 %v7749, 7
    %v7751 = vsub.s32 %v7748, %v7750
    %v7752 = vrot.slane %v7730, %v7751
    %v7754 = vunpack.c.l.s4 1966171168
    %v7755 = vunpack.c.0.s8 %v7754
    %v7756 = vlaneseq
    %v7757 = vshrl.u32 %v7756, 7
    %v7758 = vsub.s32 %v7755, %v7757
    %v7759 = vrot.slane %v7731, %v7758
    %v7760 = vcombine.low %v7738, %v7745
    %v7761 = vcombine.high %v7738, %v7745
    %v7762 = vcombine.low %v7752, %v7759
    %v7763 = vcombine.high %v7752, %v7759
    %v7765 = vunpack.c.l.s4 1966171168
    %v7766 = vunpack.c.0.s8 %v7765
    %v7767 = vlaneseq
    %v7768 = vshrl.u32 %v7767, 7
    %v7769 = vsub.s32 %v7766, %v7768
    %v7770 = vrot.slane %v7760, %v7769
    %v7772 = vunpack.c.l.s4 1966171168
    %v7773 = vunpack.c.0.s8 %v7772
    %v7774 = vlaneseq
    %v7775 = vshrl.u32 %v7774, 7
    %v7776 = vsub.s32 %v7773, %v7775
    %v7777 = vrot.slane %v7761, %v7776
    %v7779 = vunpack.c.l.s4 1966171168
    %v7780 = vunpack.c.0.s8 %v7779
    %v7781 = vlaneseq
    %v7782 = vshrl.u32 %v7781, 7
    %v7783 = vsub.s32 %v7780, %v7782
    %v7784 = vrot.slane %v7762, %v7783
    %v7786 = vunpack.c.l.s4 1966171168
    %v7787 = vunpack.c.0.s8 %v7786
    %v7788 = vlaneseq
    %v7789 = vshrl.u32 %v7788, 7
    %v7790 = vsub.s32 %v7787, %v7789
    %v7791 = vrot.slane %v7763, %v7790
    %v7792 = vcombine.low %v7770, %v7784
    %v7793 = vcombine.low %v7777, %v7791
    %v7794 = vcombine.high %v7236, %v7236
    %v7796 = vunpack.c.l.s4 1966171168
    %v7797 = vunpack.c.0.s8 %v7796
    %v7798 = vlaneseq
    %v7799 = vshrl.u32 %v7798, 7
    %v7800 = vsub.s32 %v7797, %v7799
    %v7801 = vrot.slane %v7794, %v7800
    %v7802 = vcombine.high %v7801, %v7801
    %v7804 = vunpack.c.l.s4 1966171168
    %v7805 = vunpack.c.0.s8 %v7804
    %v7806 = vlaneseq
    %v7807 = vshrl.u32 %v7806, 7
    %v7808 = vsub.s32 %v7805, %v7807
    %v7809 = vrot.slane %v7801, %v7808
    %v7811 = vunpack.c.l.s4 1966171168
    %v7812 = vunpack.c.0.s8 %v7811
    %v7813 = vlaneseq
    %v7814 = vshrl.u32 %v7813, 7
    %v7815 = vsub.s32 %v7812, %v7814
    %v7816 = vrot.slane %v7802, %v7815
    %v7825 = vsel %vm7637, %v7703, -1e+30
    %v7826 = vsel %vm7637, %v7704, -1e+30
    %v7827 = vsel %vm7638, %v7720, -1e+30
    %v7828 = vsel %vm7638, %v7727, -1e+30
    %v7829 = vsel %vm7637, %v7792, -1e+30
    %v7830 = vsel %vm7637, %v7793, -1e+30
    %v7831 = vsel %vm7638, %v7809, -1e+30
    %v7832 = vsel %vm7638, %v7816, -1e+30
    %v7833 = vsel %vm7442, %v7827, -inf
    %v7834 = vmax.f32 %v7825, %v7833
    %v7835 = vrot.slane %v7834, 4
    %v7836 = vmax.f32 %v7834, %v7835
    %v7837 = vrot.slane %v7836, 2
    %v7838 = vmax.f32 %v7836, %v7837
    %v7839 = vrot.slane %v7838, 1
    %v7840 = vmax.f32 %v7838, %v7839
    %v7841 = vsel %vm7442, %v7828, -inf
    %v7842 = vmax.f32 %v7826, %v7841
    %v7843 = vrot.slane %v7842, 4
    %v7844 = vmax.f32 %v7842, %v7843
    %v7845 = vrot.slane %v7844, 2
    %v7846 = vmax.f32 %v7844, %v7845
    %v7847 = vrot.slane %v7846, 1
    %v7848 = vmax.f32 %v7846, %v7847
    %v7849 = vsel %vm7442, %v7831, -inf
    %v7850 = vmax.f32 %v7829, %v7849
    %v7851 = vrot.slane %v7850, 4
    %v7852 = vmax.f32 %v7850, %v7851
    %v7853 = vrot.slane %v7852, 2
    %v7854 = vmax.f32 %v7852, %v7853
    %v7855 = vrot.slane %v7854, 1
    %v7856 = vmax.f32 %v7854, %v7855
    %v7857 = vsel %vm7442, %v7832, -inf
    %v7858 = vmax.f32 %v7830, %v7857
    %v7859 = vrot.slane %v7858, 4
    %v7860 = vmax.f32 %v7858, %v7859
    %v7861 = vrot.slane %v7860, 2
    %v7862 = vmax.f32 %v7860, %v7861
    %v7863 = vrot.slane %v7862, 1
    %v7864 = vmax.f32 %v7862, %v7863
    %v7865 = vld [vmem:[#allocation5 + $0x4] sm:$0x3]
    %v7867 = vlaneseq
    %v7868 = vshrl.u32 %v7867, 7
    %v7869 = vsub.s32 0, %v7868
    %v7870 = vrot.slane %v7865, %v7869
    %v7871 = vlaneseq
    %v7872 = vshrl.u32 %v7871, 7
    %v7873 = vsub.s32 1, %v7872
    %v7874 = vrot.slane %v7865, %v7873
    %v7877 = vadd.f32 %v7840, %v7870
    %v7878 = vadd.f32 %v7848, %v7874
    %v7879 = vadd.f32 %v7856, %v7870
    %v7880 = vadd.f32 %v7864, %v7874
    %v7881 = vmax.f32 %v7877, 0.0
    %v7882 = vmax.f32 %v7878, 0.0
    %v7883 = vmax.f32 %v7879, 0.0
    %v7884 = vmax.f32 %v7880, 0.0
    %v7885 = vld [vmem:[#allocation7 + $0x4] sm:$0x3]
    %v7887 = vlaneseq
    %v7888 = vshrl.u32 %v7887, 7
    %v7889 = vsub.s32 0, %v7888
    %v7890 = vrot.slane %v7885, %v7889
    %v7891 = vlaneseq
    %v7892 = vshrl.u32 %v7891, 7
    %v7893 = vsub.s32 1, %v7892
    %v7894 = vrot.slane %v7885, %v7893
    %v7897 = vmul.f32 %v7881, %v7890
    %v7898 = vmul.f32 %v7882, %v7894
    %v7899 = vmul.f32 %v7883, %v7890
    %v7900 = vmul.f32 %v7884, %v7894
    %v7905 = vrot.slane %v7899, 7
    %v7906 = vsel %vm7516, %v7905, %v7897
    %v7907 = vrot.slane %v7900, 7
    %v7908 = vsel %vm7516, %v7907, %v7898
    %v7911 = vsel %vm7522, %v7906, 0.0
    %v7912 = vsel %vm7522, %v7908, 0.0
    %v7913 = vadd.f32 %v7911, %v7912
    %7914 = vadd.xlane.f32.xlu0 %v7913
    %v7915 = vpop.xlane.xlu0 %7914
    %v7916 = vadd.f32 %v7628, %v7915
    %vm7917 = vcmask 1024
    %7918 = vst.msk [vmem:[%s4] sm:$0x3] %vm7917, %v7916
    // Predicated region
    $region30: #{forward.1} parent=1 // pred_check
      _
    $region31: #{forward.1} parent=1 // pred_check_branch
      %7920 = sbr.rel (0) target = $region33
    $region32: #{forward.1} parent=1 // pred_region
      _
    $region33: #{forward.1} parent=1 // pred_fallthru
      _
    // Predicated region
    $region34: #{forward.1} parent=1 // pred_check
      _
    $region35: #{forward.1} parent=1 // pred_check_branch
      %7922 = sbr.rel (0) target = $region37
    $region36: #{forward.1} parent=1 // pred_region
      _
    $region37: #{forward.1} parent=1 // pred_fallthru
      _
    %7923 = vsyncpa [#allocation4], 1
    %7924 = vsyncpa [#allocation6], 1

</llo_original>
